<compile_context>
chip_gen: v5e
topology: v5e:2x2
jax: 0.10.0
libtpu: 0.0.40
codegen_flags: <defaults>
</compile_context>

<pallas_src>
import jax
import jax.numpy as jnp
from jax.experimental import pallas as pl
from jax.experimental.pallas import tpu as pltpu

# ---- fixed geometry implied by the module (Linear(6*6*64, 128)) -------------
#   76x76 -> conv1(8x8,s4) -> 18x18 -> conv2(4x4,s2) -> 8x8 -> conv3(3x3,s1) -> 6x6
H_IN = 76
S2D = 4                      # conv1 stride == space-to-depth factor
P = H_IN // S2D              # 19: row pitch of every flattened spatial buffer
H1, H2, H3 = 18, 8, 6        # conv output heights/widths
C1, C2, C3 = 32, 64, 64      # conv output channels
MID = 128                    # fc hidden

N1 = H1 * P                  # 342 wide rows computed for conv1
N2 = H2 * P                  # 152 wide rows for conv2
N3 = H3 * P                  # 114 wide rows for conv3
IN_ROWS = P * P + 7          # 368 (361 valid rows, zero-padded to sublane mult)
A1_ROWS = 368                # conv2 strided reads reach row 60 + 2*151 = 362
A2_ROWS = 160                # conv3 reads reach row 40 + 113 = 153
A3_ROWS = 120

CONV1_OFFS = tuple(i * P + j for i in range(2) for j in range(2))
CONV2_OFFS = tuple(i * P + j for i in range(4) for j in range(4))
CONV3_OFFS = tuple(i * P + j for i in range(3) for j in range(3))


# ----------------------------- Pallas kernels --------------------------------
def _conv_stack_kernel(x_ref, w1_ref, b1_ref, w2_ref, b2_ref, w3_ref, b3_ref,
                       out_ref, a1_ref, a2_ref, a3_ref):
    f32 = jnp.float32
    # Zero only the scratch tails that later offset/strided reads may touch;
    # those reads only ever feed the discarded wrap-around columns, but keep
    # them finite.
    a1_ref[pl.ds(N1, A1_ROWS - N1), :] = jnp.zeros((A1_ROWS - N1, C1), f32)
    a2_ref[pl.ds(N2, A2_ROWS - N2), :] = jnp.zeros((A2_ROWS - N2, C2), f32)

    # conv1: 8x8 stride-4 == 2x2 stride-1 over the space-to-depth(4) input.
    acc = jnp.zeros((N1, C1), f32)
    for t, off in enumerate(CONV1_OFFS):
        acc = acc + jnp.dot(x_ref[0, pl.ds(off, N1), :], w1_ref[t],
                            preferred_element_type=f32)
    a1_ref[pl.ds(0, N1), :] = jnp.maximum(acc + b1_ref[...], 0.0)

    # conv2: 4x4 stride-2 -> 16 taps, each a stride-2 sublane load + matmul.
    acc = jnp.zeros((N2, C2), f32)
    for t, off in enumerate(CONV2_OFFS):
        lhs = a1_ref[pl.ds(off, N2, stride=2), :]
        acc = acc + jnp.dot(lhs, w2_ref[t], preferred_element_type=f32)
    a2_ref[pl.ds(0, N2), :] = jnp.maximum(acc + b2_ref[...], 0.0)

    # conv3: 3x3 stride-1 -> 9 taps, contiguous loads.
    acc = jnp.zeros((N3, C3), f32)
    for t, off in enumerate(CONV3_OFFS):
        acc = acc + jnp.dot(a2_ref[pl.ds(off, N3), :], w3_ref[t],
                            preferred_element_type=f32)
    a3_ref[pl.ds(0, N3), :] = jnp.maximum(acc + b3_ref[...], 0.0)

    # Extract the valid 6x6 region (drop the wide-row wrap columns).
    for h in range(H3):
        out_ref[0, h] = a3_ref[pl.ds(h * P, H3), :]


def _fc_kernel(x_ref, w4_ref, b4_ref, w5_ref, b5_ref, o_ref):
    h = jnp.dot(x_ref[...], w4_ref[...], preferred_element_type=jnp.float32)
    h = jnp.maximum(h + b4_ref[...], 0.0)
    o = jnp.dot(h, w5_ref[...], preferred_element_type=jnp.float32) + b5_ref[...]
    o_ref[...] = o.astype(o_ref.dtype)


# ------------------------------ wrappers --------------------------------------
def conv_stack(x_flat, w1p, b1, w2p, b2, w3p, b3):
    """x_flat: (B, 368, 16*Cin) space-to-depth'd, flattened, zero-padded input."""
    batch, _, kin = x_flat.shape
    flops = 2 * batch * (len(CONV1_OFFS) * N1 * kin * C1
                         + len(CONV2_OFFS) * N2 * C1 * C2
                         + len(CONV3_OFFS) * N3 * C2 * C3)
    nbytes = 4 * (x_flat.size + w1p.size + w2p.size + w3p.size
                  + b1.size + b2.size + b3.size + batch * H3 * H3 * C3)
    return pl.pallas_call(
        _conv_stack_kernel,
        out_shape=jax.ShapeDtypeStruct((batch, H3, H3, C3), jnp.float32),
        grid=(batch,),
        in_specs=[
            pl.BlockSpec((1, IN_ROWS, kin), lambda b: (b, 0, 0)),
            pl.BlockSpec(w1p.shape, lambda b: (0, 0, 0)),
            pl.BlockSpec((1, C1), lambda b: (0, 0)),
            pl.BlockSpec(w2p.shape, lambda b: (0, 0, 0)),
            pl.BlockSpec((1, C2), lambda b: (0, 0)),
            pl.BlockSpec(w3p.shape, lambda b: (0, 0, 0)),
            pl.BlockSpec((1, C3), lambda b: (0, 0)),
        ],
        out_specs=pl.BlockSpec((1, H3, H3, C3), lambda b: (b, 0, 0, 0)),
        scratch_shapes=[
            pltpu.VMEM((A1_ROWS, C1), jnp.float32),
            pltpu.VMEM((A2_ROWS, C2), jnp.float32),
            pltpu.VMEM((A3_ROWS, C3), jnp.float32),
        ],
        compiler_params=pltpu.CompilerParams(
            dimension_semantics=("parallel",)),
        cost_estimate=pl.CostEstimate(flops=int(flops), transcendentals=0,
                                      bytes_accessed=int(nbytes)),
    )(x_flat, w1p, b1.reshape(1, -1), w2p, b2.reshape(1, -1),
      w3p, b3.reshape(1, -1))


def fc_head(feats, w4p, b4, w5p, b5):
    batch, k = feats.shape
    nout = w5p.shape[1]
    flops = 2 * batch * (k * MID + MID * nout)
    nbytes = 4 * (feats.size + w4p.size + w5p.size + MID + nout + batch * nout)
    return pl.pallas_call(
        _fc_kernel,
        out_shape=jax.ShapeDtypeStruct((batch, nout), jnp.float32),
        grid=(1,),
        in_specs=[
            pl.BlockSpec((batch, k), lambda i: (0, 0)),
            pl.BlockSpec(w4p.shape, lambda i: (0, 0)),
            pl.BlockSpec((1, MID), lambda i: (0, 0)),
            pl.BlockSpec(w5p.shape, lambda i: (0, 0)),
            pl.BlockSpec((1, nout), lambda i: (0, 0)),
        ],
        out_specs=pl.BlockSpec((batch, nout), lambda i: (0, 0)),
        compiler_params=pltpu.CompilerParams(
            dimension_semantics=("arbitrary",)),
        cost_estimate=pl.CostEstimate(flops=int(flops), transcendentals=0,
                                      bytes_accessed=int(nbytes)),
    )(feats, w4p, b4.reshape(1, -1), w5p, b5.reshape(1, -1))


# --------------------------- params & packing --------------------------------
def init_params(key, input_size, output_size):
    ks = jax.random.split(key, 10)

    def u(k, shape, fan_in):
        bound = 1.0 / jnp.sqrt(fan_in)
        return jax.random.uniform(k, shape, jnp.float32, -bound, bound)

    p = {}
    p["w1"] = u(ks[0], (C1, input_size, 8, 8), input_size * 64)
    p["b1"] = u(ks[1], (C1,), input_size * 64)
    p["w2"] = u(ks[2], (C2, C1, 4, 4), C1 * 16)
    p["b2"] = u(ks[3], (C2,), C1 * 16)
    p["w3"] = u(ks[4], (C3, C2, 3, 3), C2 * 9)
    p["b3"] = u(ks[5], (C3,), C2 * 9)
    p["w4"] = u(ks[6], (MID, H3 * H3 * C3), H3 * H3 * C3)
    p["b4"] = u(ks[7], (MID,), H3 * H3 * C3)
    p["w5"] = u(ks[8], (output_size, MID), MID)
    p["b5"] = u(ks[9], (output_size,), MID)
    return p


def pack_params(p):
    """One-time weight packing: fold all transposes/permutations into weights."""
    cin = p["w1"].shape[1]
    # conv1 weight -> per-tap (i,j) of the 2x2 conv over space-to-depth input:
    # W1p[i*2+j, hp*4*cin + wp*cin + c, cout] = w1[cout, c, 4i+hp, 4j+wp]
    w1 = p["w1"].reshape(C1, cin, 2, S2D, 2, S2D)        # (cout,c,i,hp,j,wp)
    w1 = jnp.transpose(w1, (2, 4, 3, 5, 1, 0))           # (i,j,hp,wp,c,cout)
    w1p = w1.reshape(4, S2D * S2D * cin, C1)

    w2p = jnp.transpose(p["w2"], (2, 3, 1, 0)).reshape(16, C1, C2)
    w3p = jnp.transpose(p["w3"], (2, 3, 1, 0)).reshape(9, C2, C3)

    # fc1 rows reordered from PyTorch's (c,h,w) flatten to our (h,w,c) flatten.
    w4 = p["w4"].reshape(MID, C3, H3, H3)                # (m,c,h,w)
    w4p = jnp.transpose(w4, (2, 3, 1, 0)).reshape(H3 * H3 * C3, MID)
    w5p = jnp.transpose(p["w5"], (1, 0))
    return {"w1p": w1p, "b1": p["b1"], "w2p": w2p, "b2": p["b2"],
            "w3p": w3p, "b3": p["b3"], "w4p": w4p, "b4": p["b4"],
            "w5p": w5p, "b5": p["b5"]}


# ------------------------------- forward --------------------------------------
@jax.jit
def model_forward(x_nchw, pp):
    b, c, h, w = x_nchw.shape
    assert h == H_IN and w == H_IN, "module geometry requires 76x76 input"
    x = x_nchw.astype(jnp.float32)
    # NCHW -> space-to-depth(4) NHWC -> flatten spatial (row pitch 19) -> pad.
    x = x.reshape(b, c, P, S2D, P, S2D)                  # (b,c,hb,hp,wb,wp)
    x = jnp.transpose(x, (0, 2, 4, 3, 5, 1))             # (b,hb,wb,hp,wp,c)
    x = x.reshape(b, P * P, S2D * S2D * c)               # (b,361,16c)
    x = jnp.pad(x, ((0, 0), (0, IN_ROWS - P * P), (0, 0)))

    a3 = conv_stack(x, pp["w1p"], pp["b1"], pp["w2p"], pp["b2"],
                    pp["w3p"], pp["b3"])                 # (b,6,6,64) NHWC
    feats = a3.reshape(b, H3 * H3 * C3)                  # (h,w,c) order == w4p rows
    return fc_head(feats, pp["w4p"], pp["b4"], pp["w5p"], pp["b5"])


# ------------------------------ reference -------------------------------------
def reference_forward(x_nchw, p):
    x = x_nchw.astype(jnp.float32)

    def conv(x, w, b, stride):
        y = jax.lax.conv_general_dilated(
            x, w, window_strides=stride, padding="VALID",
            dimension_numbers=("NCHW", "OIHW", "NCHW"))
        return jax.nn.relu(y + b.reshape(1, -1, 1, 1))

    x = conv(x, p["w1"], p["b1"], (4, 4))
    x = conv(x, p["w2"], p["b2"], (2, 2))
    x = conv(x, p["w3"], p["b3"], (1, 1))
    x = x.reshape(x.shape[0], -1)
    x = jax.nn.relu(x @ p["w4"].T + p["b4"])
    return x @ p["w5"].T + p["b5"]


if __name__ == "__main__":
    input_size = 4      # stacked frames
    output_size = 6     # actions
    batch = 2

    key = jax.random.PRNGKey(0)
    pkey, xkey = jax.random.split(key)
    params = init_params(pkey, input_size, output_size)
    packed = pack_params(params)        # one-time pre-pack (kept out of jit)
    x = jax.random.normal(xkey, (batch, input_size, H_IN, H_IN), jnp.float32)

    out = jax.block_until_ready(model_forward(x, packed))
    assert out.shape == (batch, output_size), out.shape

    ref = jax.block_until_ready(reference_forward(x, params))
    err = float(jnp.max(jnp.abs(out - ref)))
    assert jnp.allclose(out, ref, rtol=1e-3, atol=1e-3), err
    print("KERNEL_OK")
</pallas_src>

<mosaic_0001>
module attributes {stable_mosaic.version = 11 : i64} {
  func.func @_conv_stack_kernel(%arg0: i32, %arg1: memref<1x368x64xf32, #tpu.memory_space<vmem>>, %arg2: memref<4x64x32xf32, #tpu.memory_space<vmem>>, %arg3: memref<1x32xf32, #tpu.memory_space<vmem>>, %arg4: memref<16x32x64xf32, #tpu.memory_space<vmem>>, %arg5: memref<1x64xf32, #tpu.memory_space<vmem>>, %arg6: memref<9x64x64xf32, #tpu.memory_space<vmem>>, %arg7: memref<1x64xf32, #tpu.memory_space<vmem>>, %arg8: memref<1x6x6x64xf32, #tpu.memory_space<vmem>>, %arg9: memref<368x32xf32, #tpu.memory_space<vmem>>, %arg10: memref<160x64xf32, #tpu.memory_space<vmem>>, %arg11: memref<120x64xf32, #tpu.memory_space<vmem>>) attributes {dimension_semantics = [#tpu.dimension_semantics<parallel>], iteration_bounds = array<i64: 2>, scalar_prefetch = 0 : i64, scratch_operands = 3 : i64, tpu.core_type = #tpu.core_type<tc>, window_params = [{transform_indices = @transform_0, window_bounds = array<i64: 1, 368, 64>}, {pipeline_mode = #tpu.pipeline_mode<synchronous>, transform_indices = @transform_1, window_bounds = array<i64: 4, 64, 32>}, {pipeline_mode = #tpu.pipeline_mode<synchronous>, transform_indices = @transform_2, window_bounds = array<i64: 1, 32>}, {pipeline_mode = #tpu.pipeline_mode<synchronous>, transform_indices = @transform_3, window_bounds = array<i64: 16, 32, 64>}, {pipeline_mode = #tpu.pipeline_mode<synchronous>, transform_indices = @transform_4, window_bounds = array<i64: 1, 64>}, {pipeline_mode = #tpu.pipeline_mode<synchronous>, transform_indices = @transform_5, window_bounds = array<i64: 9, 64, 64>}, {pipeline_mode = #tpu.pipeline_mode<synchronous>, transform_indices = @transform_6, window_bounds = array<i64: 1, 64>}, {transform_indices = @transform_7, window_bounds = array<i64: 1, 6, 6, 64>}]} {
    %cst = arith.constant 0.000000e+00 : f32
    %0 = vector.broadcast %cst : f32 to vector<26x32xf32>
    %c342 = arith.constant 342 : index
    %c0 = arith.constant 0 : index
    %1 = vector.load %arg9[%c342, %c0] : memref<368x32xf32, #tpu.memory_space<vmem>>, vector<26x32xf32>
    tpu.vector_store %arg9[%c342, %c0], %0 {strides = array<i32>} : memref<368x32xf32, #tpu.memory_space<vmem>>, vector<26x32xf32>,
    %cst_0 = arith.constant 0.000000e+00 : f32
    %2 = vector.broadcast %cst_0 : f32 to vector<8x64xf32>
    %c152 = arith.constant 152 : index
    %c0_1 = arith.constant 0 : index
    %3 = vector.load %arg10[%c152, %c0_1] : memref<160x64xf32, #tpu.memory_space<vmem>>, vector<8x64xf32>
    tpu.vector_store %arg10[%c152, %c0_1], %2 {strides = array<i32>} : memref<160x64xf32, #tpu.memory_space<vmem>>, vector<8x64xf32>,
    %cst_2 = arith.constant 0.000000e+00 : f32
    %4 = vector.broadcast %cst_2 : f32 to vector<342x32xf32>
    %c0_3 = arith.constant 0 : index
    %c0_4 = arith.constant 0 : index
    %c0_5 = arith.constant 0 : index
    %5 = vector.load %arg1[%c0_3, %c0_4, %c0_5] : memref<1x368x64xf32, #tpu.memory_space<vmem>>, vector<1x342x64xf32>
    %6 = vector.shape_cast %5 : vector<1x342x64xf32> to vector<342x64xf32>
    %c0_6 = arith.constant 0 : index
    %c0_7 = arith.constant 0 : index
    %c0_8 = arith.constant 0 : index
    %7 = vector.load %arg2[%c0_6, %c0_7, %c0_8] : memref<4x64x32xf32, #tpu.memory_space<vmem>>, vector<1x64x32xf32>
    %8 = vector.shape_cast %7 : vector<1x64x32xf32> to vector<64x32xf32>
    %cst_9 = arith.constant dense<0.000000e+00> : vector<342x32xf32>
    %9 = tpu.matmul %6, %8, %cst_9 {dimension_numbers = #tpu.dot_dimension_numbers<[1], [0], [0], [1], [0, 0, 1, 1], [], []>} : vector<342x64xf32>, vector<64x32xf32>, vector<342x32xf32> -> vector<342x32xf32>
    %10 = arith.addf %4, %9 : vector<342x32xf32>
    %c0_10 = arith.constant 0 : index
    %c1 = arith.constant 1 : index
    %c0_11 = arith.constant 0 : index
    %11 = vector.load %arg1[%c0_10, %c1, %c0_11] : memref<1x368x64xf32, #tpu.memory_space<vmem>>, vector<1x342x64xf32>
    %12 = vector.shape_cast %11 : vector<1x342x64xf32> to vector<342x64xf32>
    %c1_12 = arith.constant 1 : index
    %c0_13 = arith.constant 0 : index
    %c0_14 = arith.constant 0 : index
    %13 = vector.load %arg2[%c1_12, %c0_13, %c0_14] : memref<4x64x32xf32, #tpu.memory_space<vmem>>, vector<1x64x32xf32>
    %14 = vector.shape_cast %13 : vector<1x64x32xf32> to vector<64x32xf32>
    %cst_15 = arith.constant dense<0.000000e+00> : vector<342x32xf32>
    %15 = tpu.matmul %12, %14, %cst_15 {dimension_numbers = #tpu.dot_dimension_numbers<[1], [0], [0], [1], [0, 0, 1, 1], [], []>} : vector<342x64xf32>, vector<64x32xf32>, vector<342x32xf32> -> vector<342x32xf32>
    %16 = arith.addf %10, %15 : vector<342x32xf32>
    %c0_16 = arith.constant 0 : index
    %c19 = arith.constant 19 : index
    %c0_17 = arith.constant 0 : index
    %17 = vector.load %arg1[%c0_16, %c19, %c0_17] : memref<1x368x64xf32, #tpu.memory_space<vmem>>, vector<1x342x64xf32>
    %18 = vector.shape_cast %17 : vector<1x342x64xf32> to vector<342x64xf32>
    %c2 = arith.constant 2 : index
    %c0_18 = arith.constant 0 : index
    %c0_19 = arith.constant 0 : index
    %19 = vector.load %arg2[%c2, %c0_18, %c0_19] : memref<4x64x32xf32, #tpu.memory_space<vmem>>, vector<1x64x32xf32>
    %20 = vector.shape_cast %19 : vector<1x64x32xf32> to vector<64x32xf32>
    %cst_20 = arith.constant dense<0.000000e+00> : vector<342x32xf32>
    %21 = tpu.matmul %18, %20, %cst_20 {dimension_numbers = #tpu.dot_dimension_numbers<[1], [0], [0], [1], [0, 0, 1, 1], [], []>} : vector<342x64xf32>, vector<64x32xf32>, vector<342x32xf32> -> vector<342x32xf32>
    %22 = arith.addf %16, %21 : vector<342x32xf32>
    %c0_21 = arith.constant 0 : index
    %c20 = arith.constant 20 : index
    %c0_22 = arith.constant 0 : index
    %23 = vector.load %arg1[%c0_21, %c20, %c0_22] : memref<1x368x64xf32, #tpu.memory_space<vmem>>, vector<1x342x64xf32>
    %24 = vector.shape_cast %23 : vector<1x342x64xf32> to vector<342x64xf32>
    %c3 = arith.constant 3 : index
    %c0_23 = arith.constant 0 : index
    %c0_24 = arith.constant 0 : index
    %25 = vector.load %arg2[%c3, %c0_23, %c0_24] : memref<4x64x32xf32, #tpu.memory_space<vmem>>, vector<1x64x32xf32>
    %26 = vector.shape_cast %25 : vector<1x64x32xf32> to vector<64x32xf32>
    %cst_25 = arith.constant dense<0.000000e+00> : vector<342x32xf32>
    %27 = tpu.matmul %24, %26, %cst_25 {dimension_numbers = #tpu.dot_dimension_numbers<[1], [0], [0], [1], [0, 0, 1, 1], [], []>} : vector<342x64xf32>, vector<64x32xf32>, vector<342x32xf32> -> vector<342x32xf32>
    %28 = arith.addf %22, %27 : vector<342x32xf32>
    %c0_26 = arith.constant 0 : index
    %c0_27 = arith.constant 0 : index
    %29 = vector.load %arg3[%c0_26, %c0_27] : memref<1x32xf32, #tpu.memory_space<vmem>>, vector<1x32xf32>
    %30 = vector.broadcast %29 : vector<1x32xf32> to vector<342x32xf32>
    %31 = arith.addf %28, %30 : vector<342x32xf32>
    %cst_28 = arith.constant 0.000000e+00 : f32
    %32 = vector.broadcast %cst_28 : f32 to vector<342x32xf32>
    %33 = arith.maximumf %31, %32 : vector<342x32xf32>
    %c0_29 = arith.constant 0 : index
    %c0_30 = arith.constant 0 : index
    %34 = vector.load %arg9[%c0_29, %c0_30] : memref<368x32xf32, #tpu.memory_space<vmem>>, vector<342x32xf32>
    tpu.vector_store %arg9[%c0_29, %c0_30], %33 {strides = array<i32>} : memref<368x32xf32, #tpu.memory_space<vmem>>, vector<342x32xf32>,
    %cst_31 = arith.constant 0.000000e+00 : f32
    %35 = vector.broadcast %cst_31 : f32 to vector<152x64xf32>
    %c0_32 = arith.constant 0 : index
    %c0_33 = arith.constant 0 : index
    %36 = tpu.strided_load %arg9[%c0_32, %c0_33] {strides = array<i32: 2, 1>} : memref<368x32xf32, #tpu.memory_space<vmem>>, vector<152x32xf32>
    %c0_34 = arith.constant 0 : index
    %c0_35 = arith.constant 0 : index
    %c0_36 = arith.constant 0 : index
    %37 = vector.load %arg4[%c0_34, %c0_35, %c0_36] : memref<16x32x64xf32, #tpu.memory_space<vmem>>, vector<1x32x64xf32>
    %38 = vector.shape_cast %37 : vector<1x32x64xf32> to vector<32x64xf32>
    %cst_37 = arith.constant dense<0.000000e+00> : vector<152x64xf32>
    %39 = tpu.matmul %36, %38, %cst_37 {dimension_numbers = #tpu.dot_dimension_numbers<[1], [0], [0], [1], [0, 0, 1, 1], [], []>} : vector<152x32xf32>, vector<32x64xf32>, vector<152x64xf32> -> vector<152x64xf32>
    %40 = arith.addf %35, %39 : vector<152x64xf32>
    %c1_38 = arith.constant 1 : index
    %c0_39 = arith.constant 0 : index
    %41 = tpu.strided_load %arg9[%c1_38, %c0_39] {strides = array<i32: 2, 1>} : memref<368x32xf32, #tpu.memory_space<vmem>>, vector<152x32xf32>
    %c1_40 = arith.constant 1 : index
    %c0_41 = arith.constant 0 : index
    %c0_42 = arith.constant 0 : index
    %42 = vector.load %arg4[%c1_40, %c0_41, %c0_42] : memref<16x32x64xf32, #tpu.memory_space<vmem>>, vector<1x32x64xf32>
    %43 = vector.shape_cast %42 : vector<1x32x64xf32> to vector<32x64xf32>
    %cst_43 = arith.constant dense<0.000000e+00> : vector<152x64xf32>
    %44 = tpu.matmul %41, %43, %cst_43 {dimension_numbers = #tpu.dot_dimension_numbers<[1], [0], [0], [1], [0, 0, 1, 1], [], []>} : vector<152x32xf32>, vector<32x64xf32>, vector<152x64xf32> -> vector<152x64xf32>
    %45 = arith.addf %40, %44 : vector<152x64xf32>
    %c2_44 = arith.constant 2 : index
    %c0_45 = arith.constant 0 : index
    %46 = tpu.strided_load %arg9[%c2_44, %c0_45] {strides = array<i32: 2, 1>} : memref<368x32xf32, #tpu.memory_space<vmem>>, vector<152x32xf32>
    %c2_46 = arith.constant 2 : index
    %c0_47 = arith.constant 0 : index
    %c0_48 = arith.constant 0 : index
    %47 = vector.load %arg4[%c2_46, %c0_47, %c0_48] : memref<16x32x64xf32, #tpu.memory_space<vmem>>, vector<1x32x64xf32>
    %48 = vector.shape_cast %47 : vector<1x32x64xf32> to vector<32x64xf32>
    %cst_49 = arith.constant dense<0.000000e+00> : vector<152x64xf32>
    %49 = tpu.matmul %46, %48, %cst_49 {dimension_numbers = #tpu.dot_dimension_numbers<[1], [0], [0], [1], [0, 0, 1, 1], [], []>} : vector<152x32xf32>, vector<32x64xf32>, vector<152x64xf32> -> vector<152x64xf32>
    %50 = arith.addf %45, %49 : vector<152x64xf32>
    %c3_50 = arith.constant 3 : index
    %c0_51 = arith.constant 0 : index
    %51 = tpu.strided_load %arg9[%c3_50, %c0_51] {strides = array<i32: 2, 1>} : memref<368x32xf32, #tpu.memory_space<vmem>>, vector<152x32xf32>
    %c3_52 = arith.constant 3 : index
    %c0_53 = arith.constant 0 : index
    %c0_54 = arith.constant 0 : index
    %52 = vector.load %arg4[%c3_52, %c0_53, %c0_54] : memref<16x32x64xf32, #tpu.memory_space<vmem>>, vector<1x32x64xf32>
    %53 = vector.shape_cast %52 : vector<1x32x64xf32> to vector<32x64xf32>
    %cst_55 = arith.constant dense<0.000000e+00> : vector<152x64xf32>
    %54 = tpu.matmul %51, %53, %cst_55 {dimension_numbers = #tpu.dot_dimension_numbers<[1], [0], [0], [1], [0, 0, 1, 1], [], []>} : vector<152x32xf32>, vector<32x64xf32>, vector<152x64xf32> -> vector<152x64xf32>
    %55 = arith.addf %50, %54 : vector<152x64xf32>
    %c19_56 = arith.constant 19 : index
    %c0_57 = arith.constant 0 : index
    %56 = tpu.strided_load %arg9[%c19_56, %c0_57] {strides = array<i32: 2, 1>} : memref<368x32xf32, #tpu.memory_space<vmem>>, vector<152x32xf32>
    %c4 = arith.constant 4 : index
    %c0_58 = arith.constant 0 : index
    %c0_59 = arith.constant 0 : index
    %57 = vector.load %arg4[%c4, %c0_58, %c0_59] : memref<16x32x64xf32, #tpu.memory_space<vmem>>, vector<1x32x64xf32>
    %58 = vector.shape_cast %57 : vector<1x32x64xf32> to vector<32x64xf32>
    %cst_60 = arith.constant dense<0.000000e+00> : vector<152x64xf32>
    %59 = tpu.matmul %56, %58, %cst_60 {dimension_numbers = #tpu.dot_dimension_numbers<[1], [0], [0], [1], [0, 0, 1, 1], [], []>} : vector<152x32xf32>, vector<32x64xf32>, vector<152x64xf32> -> vector<152x64xf32>
    %60 = arith.addf %55, %59 : vector<152x64xf32>
    %c20_61 = arith.constant 20 : index
    %c0_62 = arith.constant 0 : index
    %61 = tpu.strided_load %arg9[%c20_61, %c0_62] {strides = array<i32: 2, 1>} : memref<368x32xf32, #tpu.memory_space<vmem>>, vector<152x32xf32>
    %c5 = arith.constant 5 : index
    %c0_63 = arith.constant 0 : index
    %c0_64 = arith.constant 0 : index
    %62 = vector.load %arg4[%c5, %c0_63, %c0_64] : memref<16x32x64xf32, #tpu.memory_space<vmem>>, vector<1x32x64xf32>
    %63 = vector.shape_cast %62 : vector<1x32x64xf32> to vector<32x64xf32>
    %cst_65 = arith.constant dense<0.000000e+00> : vector<152x64xf32>
    %64 = tpu.matmul %61, %63, %cst_65 {dimension_numbers = #tpu.dot_dimension_numbers<[1], [0], [0], [1], [0, 0, 1, 1], [], []>} : vector<152x32xf32>, vector<32x64xf32>, vector<152x64xf32> -> vector<152x64xf32>
    %65 = arith.addf %60, %64 : vector<152x64xf32>
    %c21 = arith.constant 21 : index
    %c0_66 = arith.constant 0 : index
    %66 = tpu.strided_load %arg9[%c21, %c0_66] {strides = array<i32: 2, 1>} : memref<368x32xf32, #tpu.memory_space<vmem>>, vector<152x32xf32>
    %c6 = arith.constant 6 : index
    %c0_67 = arith.constant 0 : index
    %c0_68 = arith.constant 0 : index
    %67 = vector.load %arg4[%c6, %c0_67, %c0_68] : memref<16x32x64xf32, #tpu.memory_space<vmem>>, vector<1x32x64xf32>
    %68 = vector.shape_cast %67 : vector<1x32x64xf32> to vector<32x64xf32>
    %cst_69 = arith.constant dense<0.000000e+00> : vector<152x64xf32>
    %69 = tpu.matmul %66, %68, %cst_69 {dimension_numbers = #tpu.dot_dimension_numbers<[1], [0], [0], [1], [0, 0, 1, 1], [], []>} : vector<152x32xf32>, vector<32x64xf32>, vector<152x64xf32> -> vector<152x64xf32>
    %70 = arith.addf %65, %69 : vector<152x64xf32>
    %c22 = arith.constant 22 : index
    %c0_70 = arith.constant 0 : index
    %71 = tpu.strided_load %arg9[%c22, %c0_70] {strides = array<i32: 2, 1>} : memref<368x32xf32, #tpu.memory_space<vmem>>, vector<152x32xf32>
    %c7 = arith.constant 7 : index
    %c0_71 = arith.constant 0 : index
    %c0_72 = arith.constant 0 : index
    %72 = vector.load %arg4[%c7, %c0_71, %c0_72] : memref<16x32x64xf32, #tpu.memory_space<vmem>>, vector<1x32x64xf32>
    %73 = vector.shape_cast %72 : vector<1x32x64xf32> to vector<32x64xf32>
    %cst_73 = arith.constant dense<0.000000e+00> : vector<152x64xf32>
    %74 = tpu.matmul %71, %73, %cst_73 {dimension_numbers = #tpu.dot_dimension_numbers<[1], [0], [0], [1], [0, 0, 1, 1], [], []>} : vector<152x32xf32>, vector<32x64xf32>, vector<152x64xf32> -> vector<152x64xf32>
    %75 = arith.addf %70, %74 : vector<152x64xf32>
    %c38 = arith.constant 38 : index
    %c0_74 = arith.constant 0 : index
    %76 = tpu.strided_load %arg9[%c38, %c0_74] {strides = array<i32: 2, 1>} : memref<368x32xf32, #tpu.memory_space<vmem>>, vector<152x32xf32>
    %c8 = arith.constant 8 : index
    %c0_75 = arith.constant 0 : index
    %c0_76 = arith.constant 0 : index
    %77 = vector.load %arg4[%c8, %c0_75, %c0_76] : memref<16x32x64xf32, #tpu.memory_space<vmem>>, vector<1x32x64xf32>
    %78 = vector.shape_cast %77 : vector<1x32x64xf32> to vector<32x64xf32>
    %cst_77 = arith.constant dense<0.000000e+00> : vector<152x64xf32>
    %79 = tpu.matmul %76, %78, %cst_77 {dimension_numbers = #tpu.dot_dimension_numbers<[1], [0], [0], [1], [0, 0, 1, 1], [], []>} : vector<152x32xf32>, vector<32x64xf32>, vector<152x64xf32> -> vector<152x64xf32>
    %80 = arith.addf %75, %79 : vector<152x64xf32>
    %c39 = arith.constant 39 : index
    %c0_78 = arith.constant 0 : index
    %81 = tpu.strided_load %arg9[%c39, %c0_78] {strides = array<i32: 2, 1>} : memref<368x32xf32, #tpu.memory_space<vmem>>, vector<152x32xf32>
    %c9 = arith.constant 9 : index
    %c0_79 = arith.constant 0 : index
    %c0_80 = arith.constant 0 : index
    %82 = vector.load %arg4[%c9, %c0_79, %c0_80] : memref<16x32x64xf32, #tpu.memory_space<vmem>>, vector<1x32x64xf32>
    %83 = vector.shape_cast %82 : vector<1x32x64xf32> to vector<32x64xf32>
    %cst_81 = arith.constant dense<0.000000e+00> : vector<152x64xf32>
    %84 = tpu.matmul %81, %83, %cst_81 {dimension_numbers = #tpu.dot_dimension_numbers<[1], [0], [0], [1], [0, 0, 1, 1], [], []>} : vector<152x32xf32>, vector<32x64xf32>, vector<152x64xf32> -> vector<152x64xf32>
    %85 = arith.addf %80, %84 : vector<152x64xf32>
    %c40 = arith.constant 40 : index
    %c0_82 = arith.constant 0 : index
    %86 = tpu.strided_load %arg9[%c40, %c0_82] {strides = array<i32: 2, 1>} : memref<368x32xf32, #tpu.memory_space<vmem>>, vector<152x32xf32>
    %c10 = arith.constant 10 : index
    %c0_83 = arith.constant 0 : index
    %c0_84 = arith.constant 0 : index
    %87 = vector.load %arg4[%c10, %c0_83, %c0_84] : memref<16x32x64xf32, #tpu.memory_space<vmem>>, vector<1x32x64xf32>
    %88 = vector.shape_cast %87 : vector<1x32x64xf32> to vector<32x64xf32>
    %cst_85 = arith.constant dense<0.000000e+00> : vector<152x64xf32>
    %89 = tpu.matmul %86, %88, %cst_85 {dimension_numbers = #tpu.dot_dimension_numbers<[1], [0], [0], [1], [0, 0, 1, 1], [], []>} : vector<152x32xf32>, vector<32x64xf32>, vector<152x64xf32> -> vector<152x64xf32>
    %90 = arith.addf %85, %89 : vector<152x64xf32>
    %c41 = arith.constant 41 : index
    %c0_86 = arith.constant 0 : index
    %91 = tpu.strided_load %arg9[%c41, %c0_86] {strides = array<i32: 2, 1>} : memref<368x32xf32, #tpu.memory_space<vmem>>, vector<152x32xf32>
    %c11 = arith.constant 11 : index
    %c0_87 = arith.constant 0 : index
    %c0_88 = arith.constant 0 : index
    %92 = vector.load %arg4[%c11, %c0_87, %c0_88] : memref<16x32x64xf32, #tpu.memory_space<vmem>>, vector<1x32x64xf32>
    %93 = vector.shape_cast %92 : vector<1x32x64xf32> to vector<32x64xf32>
    %cst_89 = arith.constant dense<0.000000e+00> : vector<152x64xf32>
    %94 = tpu.matmul %91, %93, %cst_89 {dimension_numbers = #tpu.dot_dimension_numbers<[1], [0], [0], [1], [0, 0, 1, 1], [], []>} : vector<152x32xf32>, vector<32x64xf32>, vector<152x64xf32> -> vector<152x64xf32>
    %95 = arith.addf %90, %94 : vector<152x64xf32>
    %c57 = arith.constant 57 : index
    %c0_90 = arith.constant 0 : index
    %96 = tpu.strided_load %arg9[%c57, %c0_90] {strides = array<i32: 2, 1>} : memref<368x32xf32, #tpu.memory_space<vmem>>, vector<152x32xf32>
    %c12 = arith.constant 12 : index
    %c0_91 = arith.constant 0 : index
    %c0_92 = arith.constant 0 : index
    %97 = vector.load %arg4[%c12, %c0_91, %c0_92] : memref<16x32x64xf32, #tpu.memory_space<vmem>>, vector<1x32x64xf32>
    %98 = vector.shape_cast %97 : vector<1x32x64xf32> to vector<32x64xf32>
    %cst_93 = arith.constant dense<0.000000e+00> : vector<152x64xf32>
    %99 = tpu.matmul %96, %98, %cst_93 {dimension_numbers = #tpu.dot_dimension_numbers<[1], [0], [0], [1], [0, 0, 1, 1], [], []>} : vector<152x32xf32>, vector<32x64xf32>, vector<152x64xf32> -> vector<152x64xf32>
    %100 = arith.addf %95, %99 : vector<152x64xf32>
    %c58 = arith.constant 58 : index
    %c0_94 = arith.constant 0 : index
    %101 = tpu.strided_load %arg9[%c58, %c0_94] {strides = array<i32: 2, 1>} : memref<368x32xf32, #tpu.memory_space<vmem>>, vector<152x32xf32>
    %c13 = arith.constant 13 : index
    %c0_95 = arith.constant 0 : index
    %c0_96 = arith.constant 0 : index
    %102 = vector.load %arg4[%c13, %c0_95, %c0_96] : memref<16x32x64xf32, #tpu.memory_space<vmem>>, vector<1x32x64xf32>
    %103 = vector.shape_cast %102 : vector<1x32x64xf32> to vector<32x64xf32>
    %cst_97 = arith.constant dense<0.000000e+00> : vector<152x64xf32>
    %104 = tpu.matmul %101, %103, %cst_97 {dimension_numbers = #tpu.dot_dimension_numbers<[1], [0], [0], [1], [0, 0, 1, 1], [], []>} : vector<152x32xf32>, vector<32x64xf32>, vector<152x64xf32> -> vector<152x64xf32>
    %105 = arith.addf %100, %104 : vector<152x64xf32>
    %c59 = arith.constant 59 : index
    %c0_98 = arith.constant 0 : index
    %106 = tpu.strided_load %arg9[%c59, %c0_98] {strides = array<i32: 2, 1>} : memref<368x32xf32, #tpu.memory_space<vmem>>, vector<152x32xf32>
    %c14 = arith.constant 14 : index
    %c0_99 = arith.constant 0 : index
    %c0_100 = arith.constant 0 : index
    %107 = vector.load %arg4[%c14, %c0_99, %c0_100] : memref<16x32x64xf32, #tpu.memory_space<vmem>>, vector<1x32x64xf32>
    %108 = vector.shape_cast %107 : vector<1x32x64xf32> to vector<32x64xf32>
    %cst_101 = arith.constant dense<0.000000e+00> : vector<152x64xf32>
    %109 = tpu.matmul %106, %108, %cst_101 {dimension_numbers = #tpu.dot_dimension_numbers<[1], [0], [0], [1], [0, 0, 1, 1], [], []>} : vector<152x32xf32>, vector<32x64xf32>, vector<152x64xf32> -> vector<152x64xf32>
    %110 = arith.addf %105, %109 : vector<152x64xf32>
    %c60 = arith.constant 60 : index
    %c0_102 = arith.constant 0 : index
    %111 = tpu.strided_load %arg9[%c60, %c0_102] {strides = array<i32: 2, 1>} : memref<368x32xf32, #tpu.memory_space<vmem>>, vector<152x32xf32>
    %c15 = arith.constant 15 : index
    %c0_103 = arith.constant 0 : index
    %c0_104 = arith.constant 0 : index
    %112 = vector.load %arg4[%c15, %c0_103, %c0_104] : memref<16x32x64xf32, #tpu.memory_space<vmem>>, vector<1x32x64xf32>
    %113 = vector.shape_cast %112 : vector<1x32x64xf32> to vector<32x64xf32>
    %cst_105 = arith.constant dense<0.000000e+00> : vector<152x64xf32>
    %114 = tpu.matmul %111, %113, %cst_105 {dimension_numbers = #tpu.dot_dimension_numbers<[1], [0], [0], [1], [0, 0, 1, 1], [], []>} : vector<152x32xf32>, vector<32x64xf32>, vector<152x64xf32> -> vector<152x64xf32>
    %115 = arith.addf %110, %114 : vector<152x64xf32>
    %c0_106 = arith.constant 0 : index
    %c0_107 = arith.constant 0 : index
    %116 = vector.load %arg5[%c0_106, %c0_107] : memref<1x64xf32, #tpu.memory_space<vmem>>, vector<1x64xf32>
    %117 = vector.broadcast %116 : vector<1x64xf32> to vector<152x64xf32>
    %118 = arith.addf %115, %117 : vector<152x64xf32>
    %cst_108 = arith.constant 0.000000e+00 : f32
    %119 = vector.broadcast %cst_108 : f32 to vector<152x64xf32>
    %120 = arith.maximumf %118, %119 : vector<152x64xf32>
    %c0_109 = arith.constant 0 : index
    %c0_110 = arith.constant 0 : index
    %121 = vector.load %arg10[%c0_109, %c0_110] : memref<160x64xf32, #tpu.memory_space<vmem>>, vector<152x64xf32>
    tpu.vector_store %arg10[%c0_109, %c0_110], %120 {strides = array<i32>} : memref<160x64xf32, #tpu.memory_space<vmem>>, vector<152x64xf32>,
    %cst_111 = arith.constant 0.000000e+00 : f32
    %122 = vector.broadcast %cst_111 : f32 to vector<114x64xf32>
    %c0_112 = arith.constant 0 : index
    %c0_113 = arith.constant 0 : index
    %123 = vector.load %arg10[%c0_112, %c0_113] : memref<160x64xf32, #tpu.memory_space<vmem>>, vector<114x64xf32>
    %c0_114 = arith.constant 0 : index
    %c0_115 = arith.constant 0 : index
    %c0_116 = arith.constant 0 : index
    %124 = vector.load %arg6[%c0_114, %c0_115, %c0_116] : memref<9x64x64xf32, #tpu.memory_space<vmem>>, vector<1x64x64xf32>
    %125 = vector.shape_cast %124 : vector<1x64x64xf32> to vector<64x64xf32>
    %cst_117 = arith.constant dense<0.000000e+00> : vector<114x64xf32>
    %126 = tpu.matmul %123, %125, %cst_117 {dimension_numbers = #tpu.dot_dimension_numbers<[1], [0], [0], [1], [0, 0, 1, 1], [], []>} : vector<114x64xf32>, vector<64x64xf32>, vector<114x64xf32> -> vector<114x64xf32>
    %127 = arith.addf %122, %126 : vector<114x64xf32>
    %c1_118 = arith.constant 1 : index
    %c0_119 = arith.constant 0 : index
    %128 = vector.load %arg10[%c1_118, %c0_119] : memref<160x64xf32, #tpu.memory_space<vmem>>, vector<114x64xf32>
    %c1_120 = arith.constant 1 : index
    %c0_121 = arith.constant 0 : index
    %c0_122 = arith.constant 0 : index
    %129 = vector.load %arg6[%c1_120, %c0_121, %c0_122] : memref<9x64x64xf32, #tpu.memory_space<vmem>>, vector<1x64x64xf32>
    %130 = vector.shape_cast %129 : vector<1x64x64xf32> to vector<64x64xf32>
    %cst_123 = arith.constant dense<0.000000e+00> : vector<114x64xf32>
    %131 = tpu.matmul %128, %130, %cst_123 {dimension_numbers = #tpu.dot_dimension_numbers<[1], [0], [0], [1], [0, 0, 1, 1], [], []>} : vector<114x64xf32>, vector<64x64xf32>, vector<114x64xf32> -> vector<114x64xf32>
    %132 = arith.addf %127, %131 : vector<114x64xf32>
    %c2_124 = arith.constant 2 : index
    %c0_125 = arith.constant 0 : index
    %133 = vector.load %arg10[%c2_124, %c0_125] : memref<160x64xf32, #tpu.memory_space<vmem>>, vector<114x64xf32>
    %c2_126 = arith.constant 2 : index
    %c0_127 = arith.constant 0 : index
    %c0_128 = arith.constant 0 : index
    %134 = vector.load %arg6[%c2_126, %c0_127, %c0_128] : memref<9x64x64xf32, #tpu.memory_space<vmem>>, vector<1x64x64xf32>
    %135 = vector.shape_cast %134 : vector<1x64x64xf32> to vector<64x64xf32>
    %cst_129 = arith.constant dense<0.000000e+00> : vector<114x64xf32>
    %136 = tpu.matmul %133, %135, %cst_129 {dimension_numbers = #tpu.dot_dimension_numbers<[1], [0], [0], [1], [0, 0, 1, 1], [], []>} : vector<114x64xf32>, vector<64x64xf32>, vector<114x64xf32> -> vector<114x64xf32>
    %137 = arith.addf %132, %136 : vector<114x64xf32>
    %c19_130 = arith.constant 19 : index
    %c0_131 = arith.constant 0 : index
    %138 = vector.load %arg10[%c19_130, %c0_131] : memref<160x64xf32, #tpu.memory_space<vmem>>, vector<114x64xf32>
    %c3_132 = arith.constant 3 : index
    %c0_133 = arith.constant 0 : index
    %c0_134 = arith.constant 0 : index
    %139 = vector.load %arg6[%c3_132, %c0_133, %c0_134] : memref<9x64x64xf32, #tpu.memory_space<vmem>>, vector<1x64x64xf32>
    %140 = vector.shape_cast %139 : vector<1x64x64xf32> to vector<64x64xf32>
    %cst_135 = arith.constant dense<0.000000e+00> : vector<114x64xf32>
    %141 = tpu.matmul %138, %140, %cst_135 {dimension_numbers = #tpu.dot_dimension_numbers<[1], [0], [0], [1], [0, 0, 1, 1], [], []>} : vector<114x64xf32>, vector<64x64xf32>, vector<114x64xf32> -> vector<114x64xf32>
    %142 = arith.addf %137, %141 : vector<114x64xf32>
    %c20_136 = arith.constant 20 : index
    %c0_137 = arith.constant 0 : index
    %143 = vector.load %arg10[%c20_136, %c0_137] : memref<160x64xf32, #tpu.memory_space<vmem>>, vector<114x64xf32>
    %c4_138 = arith.constant 4 : index
    %c0_139 = arith.constant 0 : index
    %c0_140 = arith.constant 0 : index
    %144 = vector.load %arg6[%c4_138, %c0_139, %c0_140] : memref<9x64x64xf32, #tpu.memory_space<vmem>>, vector<1x64x64xf32>
    %145 = vector.shape_cast %144 : vector<1x64x64xf32> to vector<64x64xf32>
    %cst_141 = arith.constant dense<0.000000e+00> : vector<114x64xf32>
    %146 = tpu.matmul %143, %145, %cst_141 {dimension_numbers = #tpu.dot_dimension_numbers<[1], [0], [0], [1], [0, 0, 1, 1], [], []>} : vector<114x64xf32>, vector<64x64xf32>, vector<114x64xf32> -> vector<114x64xf32>
    %147 = arith.addf %142, %146 : vector<114x64xf32>
    %c21_142 = arith.constant 21 : index
    %c0_143 = arith.constant 0 : index
    %148 = vector.load %arg10[%c21_142, %c0_143] : memref<160x64xf32, #tpu.memory_space<vmem>>, vector<114x64xf32>
    %c5_144 = arith.constant 5 : index
    %c0_145 = arith.constant 0 : index
    %c0_146 = arith.constant 0 : index
    %149 = vector.load %arg6[%c5_144, %c0_145, %c0_146] : memref<9x64x64xf32, #tpu.memory_space<vmem>>, vector<1x64x64xf32>
    %150 = vector.shape_cast %149 : vector<1x64x64xf32> to vector<64x64xf32>
    %cst_147 = arith.constant dense<0.000000e+00> : vector<114x64xf32>
    %151 = tpu.matmul %148, %150, %cst_147 {dimension_numbers = #tpu.dot_dimension_numbers<[1], [0], [0], [1], [0, 0, 1, 1], [], []>} : vector<114x64xf32>, vector<64x64xf32>, vector<114x64xf32> -> vector<114x64xf32>
    %152 = arith.addf %147, %151 : vector<114x64xf32>
    %c38_148 = arith.constant 38 : index
    %c0_149 = arith.constant 0 : index
    %153 = vector.load %arg10[%c38_148, %c0_149] : memref<160x64xf32, #tpu.memory_space<vmem>>, vector<114x64xf32>
    %c6_150 = arith.constant 6 : index
    %c0_151 = arith.constant 0 : index
    %c0_152 = arith.constant 0 : index
    %154 = vector.load %arg6[%c6_150, %c0_151, %c0_152] : memref<9x64x64xf32, #tpu.memory_space<vmem>>, vector<1x64x64xf32>
    %155 = vector.shape_cast %154 : vector<1x64x64xf32> to vector<64x64xf32>
    %cst_153 = arith.constant dense<0.000000e+00> : vector<114x64xf32>
    %156 = tpu.matmul %153, %155, %cst_153 {dimension_numbers = #tpu.dot_dimension_numbers<[1], [0], [0], [1], [0, 0, 1, 1], [], []>} : vector<114x64xf32>, vector<64x64xf32>, vector<114x64xf32> -> vector<114x64xf32>
    %157 = arith.addf %152, %156 : vector<114x64xf32>
    %c39_154 = arith.constant 39 : index
    %c0_155 = arith.constant 0 : index
    %158 = vector.load %arg10[%c39_154, %c0_155] : memref<160x64xf32, #tpu.memory_space<vmem>>, vector<114x64xf32>
    %c7_156 = arith.constant 7 : index
    %c0_157 = arith.constant 0 : index
    %c0_158 = arith.constant 0 : index
    %159 = vector.load %arg6[%c7_156, %c0_157, %c0_158] : memref<9x64x64xf32, #tpu.memory_space<vmem>>, vector<1x64x64xf32>
    %160 = vector.shape_cast %159 : vector<1x64x64xf32> to vector<64x64xf32>
    %cst_159 = arith.constant dense<0.000000e+00> : vector<114x64xf32>
    %161 = tpu.matmul %158, %160, %cst_159 {dimension_numbers = #tpu.dot_dimension_numbers<[1], [0], [0], [1], [0, 0, 1, 1], [], []>} : vector<114x64xf32>, vector<64x64xf32>, vector<114x64xf32> -> vector<114x64xf32>
    %162 = arith.addf %157, %161 : vector<114x64xf32>
    %c40_160 = arith.constant 40 : index
    %c0_161 = arith.constant 0 : index
    %163 = vector.load %arg10[%c40_160, %c0_161] : memref<160x64xf32, #tpu.memory_space<vmem>>, vector<114x64xf32>
    %c8_162 = arith.constant 8 : index
    %c0_163 = arith.constant 0 : index
    %c0_164 = arith.constant 0 : index
    %164 = vector.load %arg6[%c8_162, %c0_163, %c0_164] : memref<9x64x64xf32, #tpu.memory_space<vmem>>, vector<1x64x64xf32>
    %165 = vector.shape_cast %164 : vector<1x64x64xf32> to vector<64x64xf32>
    %cst_165 = arith.constant dense<0.000000e+00> : vector<114x64xf32>
    %166 = tpu.matmul %163, %165, %cst_165 {dimension_numbers = #tpu.dot_dimension_numbers<[1], [0], [0], [1], [0, 0, 1, 1], [], []>} : vector<114x64xf32>, vector<64x64xf32>, vector<114x64xf32> -> vector<114x64xf32>
    %167 = arith.addf %162, %166 : vector<114x64xf32>
    %c0_166 = arith.constant 0 : index
    %c0_167 = arith.constant 0 : index
    %168 = vector.load %arg7[%c0_166, %c0_167] : memref<1x64xf32, #tpu.memory_space<vmem>>, vector<1x64xf32>
    %169 = vector.broadcast %168 : vector<1x64xf32> to vector<114x64xf32>
    %170 = arith.addf %167, %169 : vector<114x64xf32>
    %cst_168 = arith.constant 0.000000e+00 : f32
    %171 = vector.broadcast %cst_168 : f32 to vector<114x64xf32>
    %172 = arith.maximumf %170, %171 : vector<114x64xf32>
    %c0_169 = arith.constant 0 : index
    %c0_170 = arith.constant 0 : index
    %173 = vector.load %arg11[%c0_169, %c0_170] : memref<120x64xf32, #tpu.memory_space<vmem>>, vector<114x64xf32>
    tpu.vector_store %arg11[%c0_169, %c0_170], %172 {strides = array<i32>} : memref<120x64xf32, #tpu.memory_space<vmem>>, vector<114x64xf32>,
    %c0_171 = arith.constant 0 : index
    %c0_172 = arith.constant 0 : index
    %174 = vector.load %arg11[%c0_171, %c0_172] : memref<120x64xf32, #tpu.memory_space<vmem>>, vector<6x64xf32>
    %c0_173 = arith.constant 0 : index
    %c0_174 = arith.constant 0 : index
    %c0_175 = arith.constant 0 : index
    %c0_176 = arith.constant 0 : index
    %175 = vector.load %arg8[%c0_173, %c0_174, %c0_175, %c0_176] : memref<1x6x6x64xf32, #tpu.memory_space<vmem>>, vector<1x1x6x64xf32>
    %176 = vector.shape_cast %175 : vector<1x1x6x64xf32> to vector<6x64xf32>
    %177 = vector.shape_cast %174 : vector<6x64xf32> to vector<1x1x6x64xf32>
    tpu.vector_store %arg8[%c0_173, %c0_174, %c0_175, %c0_176], %177 {strides = array<i32>} : memref<1x6x6x64xf32, #tpu.memory_space<vmem>>, vector<1x1x6x64xf32>,
    %c19_177 = arith.constant 19 : index
    %c0_178 = arith.constant 0 : index
    %178 = vector.load %arg11[%c19_177, %c0_178] : memref<120x64xf32, #tpu.memory_space<vmem>>, vector<6x64xf32>
    %c0_179 = arith.constant 0 : index
    %c1_180 = arith.constant 1 : index
    %c0_181 = arith.constant 0 : index
    %c0_182 = arith.constant 0 : index
    %179 = vector.load %arg8[%c0_179, %c1_180, %c0_181, %c0_182] : memref<1x6x6x64xf32, #tpu.memory_space<vmem>>, vector<1x1x6x64xf32>
    %180 = vector.shape_cast %179 : vector<1x1x6x64xf32> to vector<6x64xf32>
    %181 = vector.shape_cast %178 : vector<6x64xf32> to vector<1x1x6x64xf32>
    tpu.vector_store %arg8[%c0_179, %c1_180, %c0_181, %c0_182], %181 {strides = array<i32>} : memref<1x6x6x64xf32, #tpu.memory_space<vmem>>, vector<1x1x6x64xf32>,
    %c38_183 = arith.constant 38 : index
    %c0_184 = arith.constant 0 : index
    %182 = vector.load %arg11[%c38_183, %c0_184] : memref<120x64xf32, #tpu.memory_space<vmem>>, vector<6x64xf32>
    %c0_185 = arith.constant 0 : index
    %c2_186 = arith.constant 2 : index
    %c0_187 = arith.constant 0 : index
    %c0_188 = arith.constant 0 : index
    %183 = vector.load %arg8[%c0_185, %c2_186, %c0_187, %c0_188] : memref<1x6x6x64xf32, #tpu.memory_space<vmem>>, vector<1x1x6x64xf32>
    %184 = vector.shape_cast %183 : vector<1x1x6x64xf32> to vector<6x64xf32>
    %185 = vector.shape_cast %182 : vector<6x64xf32> to vector<1x1x6x64xf32>
    tpu.vector_store %arg8[%c0_185, %c2_186, %c0_187, %c0_188], %185 {strides = array<i32>} : memref<1x6x6x64xf32, #tpu.memory_space<vmem>>, vector<1x1x6x64xf32>,
    %c57_189 = arith.constant 57 : index
    %c0_190 = arith.constant 0 : index
    %186 = vector.load %arg11[%c57_189, %c0_190] : memref<120x64xf32, #tpu.memory_space<vmem>>, vector<6x64xf32>
    %c0_191 = arith.constant 0 : index
    %c3_192 = arith.constant 3 : index
    %c0_193 = arith.constant 0 : index
    %c0_194 = arith.constant 0 : index
    %187 = vector.load %arg8[%c0_191, %c3_192, %c0_193, %c0_194] : memref<1x6x6x64xf32, #tpu.memory_space<vmem>>, vector<1x1x6x64xf32>
    %188 = vector.shape_cast %187 : vector<1x1x6x64xf32> to vector<6x64xf32>
    %189 = vector.shape_cast %186 : vector<6x64xf32> to vector<1x1x6x64xf32>
    tpu.vector_store %arg8[%c0_191, %c3_192, %c0_193, %c0_194], %189 {strides = array<i32>} : memref<1x6x6x64xf32, #tpu.memory_space<vmem>>, vector<1x1x6x64xf32>,
    %c76 = arith.constant 76 : index
    %c0_195 = arith.constant 0 : index
    %190 = vector.load %arg11[%c76, %c0_195] : memref<120x64xf32, #tpu.memory_space<vmem>>, vector<6x64xf32>
    %c0_196 = arith.constant 0 : index
    %c4_197 = arith.constant 4 : index
    %c0_198 = arith.constant 0 : index
    %c0_199 = arith.constant 0 : index
    %191 = vector.load %arg8[%c0_196, %c4_197, %c0_198, %c0_199] : memref<1x6x6x64xf32, #tpu.memory_space<vmem>>, vector<1x1x6x64xf32>
    %192 = vector.shape_cast %191 : vector<1x1x6x64xf32> to vector<6x64xf32>
    %193 = vector.shape_cast %190 : vector<6x64xf32> to vector<1x1x6x64xf32>
    tpu.vector_store %arg8[%c0_196, %c4_197, %c0_198, %c0_199], %193 {strides = array<i32>} : memref<1x6x6x64xf32, #tpu.memory_space<vmem>>, vector<1x1x6x64xf32>,
    %c95 = arith.constant 95 : index
    %c0_200 = arith.constant 0 : index
    %194 = vector.load %arg11[%c95, %c0_200] : memref<120x64xf32, #tpu.memory_space<vmem>>, vector<6x64xf32>
    %c0_201 = arith.constant 0 : index
    %c5_202 = arith.constant 5 : index
    %c0_203 = arith.constant 0 : index
    %c0_204 = arith.constant 0 : index
    %195 = vector.load %arg8[%c0_201, %c5_202, %c0_203, %c0_204] : memref<1x6x6x64xf32, #tpu.memory_space<vmem>>, vector<1x1x6x64xf32>
    %196 = vector.shape_cast %195 : vector<1x1x6x64xf32> to vector<6x64xf32>
    %197 = vector.shape_cast %194 : vector<6x64xf32> to vector<1x1x6x64xf32>
    tpu.vector_store %arg8[%c0_201, %c5_202, %c0_203, %c0_204], %197 {strides = array<i32>} : memref<1x6x6x64xf32, #tpu.memory_space<vmem>>, vector<1x1x6x64xf32>,
    return
  }
  func.func @transform_0(%arg0: i32) -> (i32, i32, i32) {
    %c0_i32 = arith.constant 0 : i32
    %c0_i32_0 = arith.constant 0 : i32
    %c0_i32_1 = arith.constant 0 : i32
    return %arg0, %c0_i32, %c0_i32_0 : i32, i32, i32
  }
  func.func @transform_1(%arg0: i32) -> (i32, i32, i32) {
    %c0_i32 = arith.constant 0 : i32
    %c0_i32_0 = arith.constant 0 : i32
    %c0_i32_1 = arith.constant 0 : i32
    %c0_i32_2 = arith.constant 0 : i32
    return %c0_i32, %c0_i32_0, %c0_i32_1 : i32, i32, i32
  }
  func.func @transform_2(%arg0: i32) -> (i32, i32) {
    %c0_i32 = arith.constant 0 : i32
    %c0_i32_0 = arith.constant 0 : i32
    %c0_i32_1 = arith.constant 0 : i32
    return %c0_i32, %c0_i32_0 : i32, i32
  }
  func.func @transform_3(%arg0: i32) -> (i32, i32, i32) {
    %c0_i32 = arith.constant 0 : i32
    %c0_i32_0 = arith.constant 0 : i32
    %c0_i32_1 = arith.constant 0 : i32
    %c0_i32_2 = arith.constant 0 : i32
    return %c0_i32, %c0_i32_0, %c0_i32_1 : i32, i32, i32
  }
  func.func @transform_4(%arg0: i32) -> (i32, i32) {
    %c0_i32 = arith.constant 0 : i32
    %c0_i32_0 = arith.constant 0 : i32
    %c0_i32_1 = arith.constant 0 : i32
    return %c0_i32, %c0_i32_0 : i32, i32
  }
  func.func @transform_5(%arg0: i32) -> (i32, i32, i32) {
    %c0_i32 = arith.constant 0 : i32
    %c0_i32_0 = arith.constant 0 : i32
    %c0_i32_1 = arith.constant 0 : i32
    %c0_i32_2 = arith.constant 0 : i32
    return %c0_i32, %c0_i32_0, %c0_i32_1 : i32, i32, i32
  }
  func.func @transform_6(%arg0: i32) -> (i32, i32) {
    %c0_i32 = arith.constant 0 : i32
    %c0_i32_0 = arith.constant 0 : i32
    %c0_i32_1 = arith.constant 0 : i32
    return %c0_i32, %c0_i32_0 : i32, i32
  }
  func.func @transform_7(%arg0: i32) -> (i32, i32, i32, i32) {
    %c0_i32 = arith.constant 0 : i32
    %c0_i32_0 = arith.constant 0 : i32
    %c0_i32_1 = arith.constant 0 : i32
    %c0_i32_2 = arith.constant 0 : i32
    return %arg0, %c0_i32, %c0_i32_0, %c0_i32_1 : i32, i32, i32, i32
  }
}

module attributes {stable_mosaic.version = 11 : i64} {
  func.func @_fc_kernel(%arg0: i32, %arg1: memref<2x2304xf32, #tpu.memory_space<vmem>>, %arg2: memref<2304x128xf32, #tpu.memory_space<vmem>>, %arg3: memref<1x128xf32, #tpu.memory_space<vmem>>, %arg4: memref<128x6xf32, #tpu.memory_space<vmem>>, %arg5: memref<1x6xf32, #tpu.memory_space<vmem>>, %arg6: memref<2x6xf32, #tpu.memory_space<vmem>>) attributes {dimension_semantics = [#tpu.dimension_semantics<arbitrary>], iteration_bounds = array<i64: 1>, scalar_prefetch = 0 : i64, scratch_operands = 0 : i64, tpu.core_type = #tpu.core_type<tc>, window_params = [{pipeline_mode = #tpu.pipeline_mode<synchronous>, transform_indices = @transform_0, window_bounds = array<i64: 2, 2304>}, {pipeline_mode = #tpu.pipeline_mode<synchronous>, transform_indices = @transform_1, window_bounds = array<i64: 2304, 128>}, {pipeline_mode = #tpu.pipeline_mode<synchronous>, transform_indices = @transform_2, window_bounds = array<i64: 1, 128>}, {pipeline_mode = #tpu.pipeline_mode<synchronous>, transform_indices = @transform_3, window_bounds = array<i64: 128, 6>}, {pipeline_mode = #tpu.pipeline_mode<synchronous>, transform_indices = @transform_4, window_bounds = array<i64: 1, 6>}, {pipeline_mode = #tpu.pipeline_mode<synchronous>, transform_indices = @transform_5, window_bounds = array<i64: 2, 6>}]} {
    %c0 = arith.constant 0 : index
    %c0_0 = arith.constant 0 : index
    %0 = vector.load %arg1[%c0, %c0_0] : memref<2x2304xf32, #tpu.memory_space<vmem>>, vector<2x2304xf32>
    %c0_1 = arith.constant 0 : index
    %c0_2 = arith.constant 0 : index
    %1 = vector.load %arg2[%c0_1, %c0_2] : memref<2304x128xf32, #tpu.memory_space<vmem>>, vector<2304x128xf32>
    %cst = arith.constant dense<0.000000e+00> : vector<2x128xf32>
    %2 = tpu.matmul %0, %1, %cst {dimension_numbers = #tpu.dot_dimension_numbers<[1], [0], [0], [1], [0, 0, 1, 1], [], []>} : vector<2x2304xf32>, vector<2304x128xf32>, vector<2x128xf32> -> vector<2x128xf32>
    %c0_3 = arith.constant 0 : index
    %c0_4 = arith.constant 0 : index
    %3 = vector.load %arg3[%c0_3, %c0_4] : memref<1x128xf32, #tpu.memory_space<vmem>>, vector<1x128xf32>
    %4 = vector.broadcast %3 : vector<1x128xf32> to vector<2x128xf32>
    %5 = arith.addf %2, %4 : vector<2x128xf32>
    %cst_5 = arith.constant 0.000000e+00 : f32
    %6 = vector.broadcast %cst_5 : f32 to vector<2x128xf32>
    %7 = arith.maximumf %5, %6 : vector<2x128xf32>
    %c0_6 = arith.constant 0 : index
    %c0_7 = arith.constant 0 : index
    %8 = vector.load %arg4[%c0_6, %c0_7] : memref<128x6xf32, #tpu.memory_space<vmem>>, vector<128x6xf32>
    %cst_8 = arith.constant dense<0.000000e+00> : vector<2x6xf32>
    %9 = tpu.matmul %7, %8, %cst_8 {dimension_numbers = #tpu.dot_dimension_numbers<[1], [0], [0], [1], [0, 0, 1, 1], [], []>} : vector<2x128xf32>, vector<128x6xf32>, vector<2x6xf32> -> vector<2x6xf32>
    %c0_9 = arith.constant 0 : index
    %c0_10 = arith.constant 0 : index
    %10 = vector.load %arg5[%c0_9, %c0_10] : memref<1x6xf32, #tpu.memory_space<vmem>>, vector<1x6xf32>
    %11 = vector.broadcast %10 : vector<1x6xf32> to vector<2x6xf32>
    %12 = arith.addf %9, %11 : vector<2x6xf32>
    %c0_11 = arith.constant 0 : index
    %c0_12 = arith.constant 0 : index
    %13 = vector.load %arg6[%c0_11, %c0_12] : memref<2x6xf32, #tpu.memory_space<vmem>>, vector<2x6xf32>
    tpu.vector_store %arg6[%c0_11, %c0_12], %12 {strides = array<i32>} : memref<2x6xf32, #tpu.memory_space<vmem>>, vector<2x6xf32>,
    return
  }
  func.func @transform_0(%arg0: i32) -> (i32, i32) {
    %c0_i32 = arith.constant 0 : i32
    %c0_i32_0 = arith.constant 0 : i32
    %c0_i32_1 = arith.constant 0 : i32
    return %c0_i32, %c0_i32_0 : i32, i32
  }
  func.func @transform_1(%arg0: i32) -> (i32, i32) {
    %c0_i32 = arith.constant 0 : i32
    %c0_i32_0 = arith.constant 0 : i32
    %c0_i32_1 = arith.constant 0 : i32
    return %c0_i32, %c0_i32_0 : i32, i32
  }
  func.func @transform_2(%arg0: i32) -> (i32, i32) {
    %c0_i32 = arith.constant 0 : i32
    %c0_i32_0 = arith.constant 0 : i32
    %c0_i32_1 = arith.constant 0 : i32
    return %c0_i32, %c0_i32_0 : i32, i32
  }
  func.func @transform_3(%arg0: i32) -> (i32, i32) {
    %c0_i32 = arith.constant 0 : i32
    %c0_i32_0 = arith.constant 0 : i32
    %c0_i32_1 = arith.constant 0 : i32
    return %c0_i32, %c0_i32_0 : i32, i32
  }
  func.func @transform_4(%arg0: i32) -> (i32, i32) {
    %c0_i32 = arith.constant 0 : i32
    %c0_i32_0 = arith.constant 0 : i32
    %c0_i32_1 = arith.constant 0 : i32
    return %c0_i32, %c0_i32_0 : i32, i32
  }
  func.func @transform_5(%arg0: i32) -> (i32, i32) {
    %c0_i32 = arith.constant 0 : i32
    %c0_i32_0 = arith.constant 0 : i32
    %c0_i32_1 = arith.constant 0 : i32
    return %c0_i32, %c0_i32_0 : i32, i32
  }
}

</mosaic_0001>

<llo_original>
// kernel: model_forward.3
$region0: #{model_forward.3}
  #allocation0 [shape = 'u32[]', space=smem, size = 0x4, offset = 0x4, fixed_abs, tag = 'smem constant byte address 0x4 - core index']
  #allocation1 [shape = 'u32[72,128]{1,0:T(1,128)}', space=vmem, size = 0x9000, scoped, tag = 'internal scratch']
  %s0 = inlined_call_operand.vmem [shape: f32[2,2304], index: 0, kind: input, shape index: {}]
  %s1 = inlined_call_operand.vmem [shape: f32[2304,128], index: 1, kind: input, shape index: {}]
  %s2 = inlined_call_operand.vmem [shape: f32[1,128], index: 2, kind: input, shape index: {}]
  %s3 = inlined_call_operand.vmem [shape: f32[128,6], index: 3, kind: input, shape index: {}]
  %s4 = inlined_call_operand.vmem [shape: f32[1,6], index: 4, kind: input, shape index: {}]
  %s5 = inlined_call_operand.hbm [shape: f32[2,6], index: 5, kind: output, shape index: {}]
  %s6 = sld [smem:[#allocation0]]
  $region30: #{model_forward.3} parent=0
    _
  %s8 = ssub.s32 1, %s6
  %s9 = scalar_select 0, %s8, %s6
  $region1: #{model_forward.3} parent=0
    #allocation2 [shape = 'u8[1024]{0}', space=vmem, size = 0x400, scoped, tag = 'output window, operand 0, single buffered']
    #allocation3 [shape = 's32[1]{0}', space=sflag, size = 0x4, scoped, tag = 'scoped memory for model_forward.3']
    %10 = vsyncpa [#allocation3], 0
    // Predicated region
    $region2: #{model_forward.3} parent=1 // pred_check
      _
    $region3: #{model_forward.3} parent=1 // pred_check_branch
      %12 = sbr.rel (0) target = $region5
    $region4: #{model_forward.3} parent=1 // pred_region
      _
    $region5: #{model_forward.3} parent=1 // pred_fallthru
      _
    // Predicated region
    $region6: #{model_forward.3} parent=1 // pred_check
      _
    $region7: #{model_forward.3} parent=1 // pred_check_branch
      %14 = sbr.rel (0) target = $region9
    $region8: #{model_forward.3} parent=1 // pred_region
      _
    $region9: #{model_forward.3} parent=1 // pred_fallthru
      _
    // Predicated region
    $region10: #{model_forward.3} parent=1 // pred_check
      _
    $region11: #{model_forward.3} parent=1 // pred_check_branch
      %16 = sbr.rel (0) target = $region13
    $region12: #{model_forward.3} parent=1 // pred_region
      _
    $region13: #{model_forward.3} parent=1 // pred_fallthru
      _
    // Predicated region
    $region14: #{model_forward.3} parent=1 // pred_check
      _
    $region15: #{model_forward.3} parent=1 // pred_check_branch
      %18 = sbr.rel (0) target = $region17
    $region16: #{model_forward.3} parent=1 // pred_region
      _
    $region17: #{model_forward.3} parent=1 // pred_fallthru
      _
    // Predicated region
    $region18: #{model_forward.3} parent=1 // pred_check
      _
    $region19: #{model_forward.3} parent=1 // pred_check_branch
      %20 = sbr.rel (0) target = $region21
    $region20: #{model_forward.3} parent=1 // pred_region
      _
    $region21: #{model_forward.3} parent=1 // pred_fallthru
      _
    %v21 = vld [vmem:[%s0] sm:$0xff]
    %v22 = vld [vmem:[%s0 + $0x8] sm:$0xff]
    %v23 = vld [vmem:[%s0 + $0x10] sm:$0xff]
    %v24 = vld [vmem:[%s0 + $0x18] sm:$0xff]
    %v25 = vld [vmem:[%s0 + $0x20] sm:$0xf]
    %v26 = vld [vmem:[%s1] sm:$0xff]
    %v27 = vld [vmem:[%s1 + $0x8] sm:$0xff]
    %v28 = vld [vmem:[%s1 + $0x10] sm:$0xff]
    %v29 = vld [vmem:[%s1 + $0x18] sm:$0xff]
    %v30 = vld [vmem:[%s1 + $0x20] sm:$0xff]
    %v31 = vld [vmem:[%s1 + $0x28] sm:$0xff]
    %v32 = vld [vmem:[%s1 + $0x30] sm:$0xff]
    %v33 = vld [vmem:[%s1 + $0x38] sm:$0xff]
    %v34 = vld [vmem:[%s1 + $0x40] sm:$0xff]
    %v35 = vld [vmem:[%s1 + $0x48] sm:$0xff]
    %v36 = vld [vmem:[%s1 + $0x50] sm:$0xff]
    %v37 = vld [vmem:[%s1 + $0x58] sm:$0xff]
    %v38 = vld [vmem:[%s1 + $0x60] sm:$0xff]
    %v39 = vld [vmem:[%s1 + $0x68] sm:$0xff]
    %v40 = vld [vmem:[%s1 + $0x70] sm:$0xff]
    %v41 = vld [vmem:[%s1 + $0x78] sm:$0xff]
    %v42 = vld [vmem:[%s1 + $0x80] sm:$0xff]
    %v43 = vld [vmem:[%s1 + $0x88] sm:$0xff]
    %v44 = vld [vmem:[%s1 + $0x90] sm:$0xff]
    %v45 = vld [vmem:[%s1 + $0x98] sm:$0xff]
    %v46 = vld [vmem:[%s1 + $0xa0] sm:$0xff]
    %v47 = vld [vmem:[%s1 + $0xa8] sm:$0xff]
    %v48 = vld [vmem:[%s1 + $0xb0] sm:$0xff]
    %v49 = vld [vmem:[%s1 + $0xb8] sm:$0xff]
    %v50 = vld [vmem:[%s1 + $0xc0] sm:$0xff]
    %v51 = vld [vmem:[%s1 + $0xc8] sm:$0xff]
    %v52 = vld [vmem:[%s1 + $0xd0] sm:$0xff]
    %v53 = vld [vmem:[%s1 + $0xd8] sm:$0xff]
    %v54 = vld [vmem:[%s1 + $0xe0] sm:$0xff]
    %v55 = vld [vmem:[%s1 + $0xe8] sm:$0xff]
    %v56 = vld [vmem:[%s1 + $0xf0] sm:$0xff]
    %v57 = vld [vmem:[%s1 + $0xf8] sm:$0xff]
    %v58 = vld [vmem:[%s1 + $0x100] sm:$0xff]
    %v59 = vld [vmem:[%s1 + $0x108] sm:$0xff]
    %v60 = vld [vmem:[%s1 + $0x110] sm:$0xff]
    %v61 = vld [vmem:[%s1 + $0x118] sm:$0xff]
    %v62 = vld [vmem:[%s1 + $0x120] sm:$0xff]
    %v63 = vld [vmem:[%s1 + $0x128] sm:$0xff]
    %v64 = vld [vmem:[%s1 + $0x130] sm:$0xff]
    %v65 = vld [vmem:[%s1 + $0x138] sm:$0xff]
    %v66 = vld [vmem:[%s1 + $0x140] sm:$0xff]
    %v67 = vld [vmem:[%s1 + $0x148] sm:$0xff]
    %v68 = vld [vmem:[%s1 + $0x150] sm:$0xff]
    %v69 = vld [vmem:[%s1 + $0x158] sm:$0xff]
    %v70 = vld [vmem:[%s1 + $0x160] sm:$0xff]
    %v71 = vld [vmem:[%s1 + $0x168] sm:$0xff]
    %v72 = vld [vmem:[%s1 + $0x170] sm:$0xff]
    %v73 = vld [vmem:[%s1 + $0x178] sm:$0xff]
    %v74 = vld [vmem:[%s1 + $0x180] sm:$0xff]
    %v75 = vld [vmem:[%s1 + $0x188] sm:$0xff]
    %v76 = vld [vmem:[%s1 + $0x190] sm:$0xff]
    %v77 = vld [vmem:[%s1 + $0x198] sm:$0xff]
    %v78 = vld [vmem:[%s1 + $0x1a0] sm:$0xff]
    %v79 = vld [vmem:[%s1 + $0x1a8] sm:$0xff]
    %v80 = vld [vmem:[%s1 + $0x1b0] sm:$0xff]
    %v81 = vld [vmem:[%s1 + $0x1b8] sm:$0xff]
    %v82 = vld [vmem:[%s1 + $0x1c0] sm:$0xff]
    %v83 = vld [vmem:[%s1 + $0x1c8] sm:$0xff]
    %v84 = vld [vmem:[%s1 + $0x1d0] sm:$0xff]
    %v85 = vld [vmem:[%s1 + $0x1d8] sm:$0xff]
    %v86 = vld [vmem:[%s1 + $0x1e0] sm:$0xff]
    %v87 = vld [vmem:[%s1 + $0x1e8] sm:$0xff]
    %v88 = vld [vmem:[%s1 + $0x1f0] sm:$0xff]
    %v89 = vld [vmem:[%s1 + $0x1f8] sm:$0xff]
    %v90 = vld [vmem:[%s1 + $0x200] sm:$0xff]
    %v91 = vld [vmem:[%s1 + $0x208] sm:$0xff]
    %v92 = vld [vmem:[%s1 + $0x210] sm:$0xff]
    %v93 = vld [vmem:[%s1 + $0x218] sm:$0xff]
    %v94 = vld [vmem:[%s1 + $0x220] sm:$0xff]
    %v95 = vld [vmem:[%s1 + $0x228] sm:$0xff]
    %v96 = vld [vmem:[%s1 + $0x230] sm:$0xff]
    %v97 = vld [vmem:[%s1 + $0x238] sm:$0xff]
    %v98 = vld [vmem:[%s1 + $0x240] sm:$0xff]
    %v99 = vld [vmem:[%s1 + $0x248] sm:$0xff]
    %v100 = vld [vmem:[%s1 + $0x250] sm:$0xff]
    %v101 = vld [vmem:[%s1 + $0x258] sm:$0xff]
    %v102 = vld [vmem:[%s1 + $0x260] sm:$0xff]
    %v103 = vld [vmem:[%s1 + $0x268] sm:$0xff]
    %v104 = vld [vmem:[%s1 + $0x270] sm:$0xff]
    %v105 = vld [vmem:[%s1 + $0x278] sm:$0xff]
    %v106 = vld [vmem:[%s1 + $0x280] sm:$0xff]
    %v107 = vld [vmem:[%s1 + $0x288] sm:$0xff]
    %v108 = vld [vmem:[%s1 + $0x290] sm:$0xff]
    %v109 = vld [vmem:[%s1 + $0x298] sm:$0xff]
    %v110 = vld [vmem:[%s1 + $0x2a0] sm:$0xff]
    %v111 = vld [vmem:[%s1 + $0x2a8] sm:$0xff]
    %v112 = vld [vmem:[%s1 + $0x2b0] sm:$0xff]
    %v113 = vld [vmem:[%s1 + $0x2b8] sm:$0xff]
    %v114 = vld [vmem:[%s1 + $0x2c0] sm:$0xff]
    %v115 = vld [vmem:[%s1 + $0x2c8] sm:$0xff]
    %v116 = vld [vmem:[%s1 + $0x2d0] sm:$0xff]
    %v117 = vld [vmem:[%s1 + $0x2d8] sm:$0xff]
    %v118 = vld [vmem:[%s1 + $0x2e0] sm:$0xff]
    %v119 = vld [vmem:[%s1 + $0x2e8] sm:$0xff]
    %v120 = vld [vmem:[%s1 + $0x2f0] sm:$0xff]
    %v121 = vld [vmem:[%s1 + $0x2f8] sm:$0xff]
    %v122 = vld [vmem:[%s1 + $0x300] sm:$0xff]
    %v123 = vld [vmem:[%s1 + $0x308] sm:$0xff]
    %v124 = vld [vmem:[%s1 + $0x310] sm:$0xff]
    %v125 = vld [vmem:[%s1 + $0x318] sm:$0xff]
    %v126 = vld [vmem:[%s1 + $0x320] sm:$0xff]
    %v127 = vld [vmem:[%s1 + $0x328] sm:$0xff]
    %v128 = vld [vmem:[%s1 + $0x330] sm:$0xff]
    %v129 = vld [vmem:[%s1 + $0x338] sm:$0xff]
    %v130 = vld [vmem:[%s1 + $0x340] sm:$0xff]
    %v131 = vld [vmem:[%s1 + $0x348] sm:$0xff]
    %v132 = vld [vmem:[%s1 + $0x350] sm:$0xff]
    %v133 = vld [vmem:[%s1 + $0x358] sm:$0xff]
    %v134 = vld [vmem:[%s1 + $0x360] sm:$0xff]
    %v135 = vld [vmem:[%s1 + $0x368] sm:$0xff]
    %v136 = vld [vmem:[%s1 + $0x370] sm:$0xff]
    %v137 = vld [vmem:[%s1 + $0x378] sm:$0xff]
    %v138 = vld [vmem:[%s1 + $0x380] sm:$0xff]
    %v139 = vld [vmem:[%s1 + $0x388] sm:$0xff]
    %v140 = vld [vmem:[%s1 + $0x390] sm:$0xff]
    %v141 = vld [vmem:[%s1 + $0x398] sm:$0xff]
    %v142 = vld [vmem:[%s1 + $0x3a0] sm:$0xff]
    %v143 = vld [vmem:[%s1 + $0x3a8] sm:$0xff]
    %v144 = vld [vmem:[%s1 + $0x3b0] sm:$0xff]
    %v145 = vld [vmem:[%s1 + $0x3b8] sm:$0xff]
    %v146 = vld [vmem:[%s1 + $0x3c0] sm:$0xff]
    %v147 = vld [vmem:[%s1 + $0x3c8] sm:$0xff]
    %v148 = vld [vmem:[%s1 + $0x3d0] sm:$0xff]
    %v149 = vld [vmem:[%s1 + $0x3d8] sm:$0xff]
    %v150 = vld [vmem:[%s1 + $0x3e0] sm:$0xff]
    %v151 = vld [vmem:[%s1 + $0x3e8] sm:$0xff]
    %v152 = vld [vmem:[%s1 + $0x3f0] sm:$0xff]
    %v153 = vld [vmem:[%s1 + $0x3f8] sm:$0xff]
    %v154 = vld [vmem:[%s1 + $0x400] sm:$0xff]
    %v155 = vld [vmem:[%s1 + $0x408] sm:$0xff]
    %v156 = vld [vmem:[%s1 + $0x410] sm:$0xff]
    %v157 = vld [vmem:[%s1 + $0x418] sm:$0xff]
    %v158 = vld [vmem:[%s1 + $0x420] sm:$0xff]
    %v159 = vld [vmem:[%s1 + $0x428] sm:$0xff]
    %v160 = vld [vmem:[%s1 + $0x430] sm:$0xff]
    %v161 = vld [vmem:[%s1 + $0x438] sm:$0xff]
    %v162 = vld [vmem:[%s1 + $0x440] sm:$0xff]
    %v163 = vld [vmem:[%s1 + $0x448] sm:$0xff]
    %v164 = vld [vmem:[%s1 + $0x450] sm:$0xff]
    %v165 = vld [vmem:[%s1 + $0x458] sm:$0xff]
    %v166 = vld [vmem:[%s1 + $0x460] sm:$0xff]
    %v167 = vld [vmem:[%s1 + $0x468] sm:$0xff]
    %v168 = vld [vmem:[%s1 + $0x470] sm:$0xff]
    %v169 = vld [vmem:[%s1 + $0x478] sm:$0xff]
    %v170 = vld [vmem:[%s1 + $0x480] sm:$0xff]
    %v171 = vld [vmem:[%s1 + $0x488] sm:$0xff]
    %v172 = vld [vmem:[%s1 + $0x490] sm:$0xff]
    %v173 = vld [vmem:[%s1 + $0x498] sm:$0xff]
    %v174 = vld [vmem:[%s1 + $0x4a0] sm:$0xff]
    %v175 = vld [vmem:[%s1 + $0x4a8] sm:$0xff]
    %v176 = vld [vmem:[%s1 + $0x4b0] sm:$0xff]
    %v177 = vld [vmem:[%s1 + $0x4b8] sm:$0xff]
    %v178 = vld [vmem:[%s1 + $0x4c0] sm:$0xff]
    %v179 = vld [vmem:[%s1 + $0x4c8] sm:$0xff]
    %v180 = vld [vmem:[%s1 + $0x4d0] sm:$0xff]
    %v181 = vld [vmem:[%s1 + $0x4d8] sm:$0xff]
    %v182 = vld [vmem:[%s1 + $0x4e0] sm:$0xff]
    %v183 = vld [vmem:[%s1 + $0x4e8] sm:$0xff]
    %v184 = vld [vmem:[%s1 + $0x4f0] sm:$0xff]
    %v185 = vld [vmem:[%s1 + $0x4f8] sm:$0xff]
    %v186 = vld [vmem:[%s1 + $0x500] sm:$0xff]
    %v187 = vld [vmem:[%s1 + $0x508] sm:$0xff]
    %v188 = vld [vmem:[%s1 + $0x510] sm:$0xff]
    %v189 = vld [vmem:[%s1 + $0x518] sm:$0xff]
    %v190 = vld [vmem:[%s1 + $0x520] sm:$0xff]
    %v191 = vld [vmem:[%s1 + $0x528] sm:$0xff]
    %v192 = vld [vmem:[%s1 + $0x530] sm:$0xff]
    %v193 = vld [vmem:[%s1 + $0x538] sm:$0xff]
    %v194 = vld [vmem:[%s1 + $0x540] sm:$0xff]
    %v195 = vld [vmem:[%s1 + $0x548] sm:$0xff]
    %v196 = vld [vmem:[%s1 + $0x550] sm:$0xff]
    %v197 = vld [vmem:[%s1 + $0x558] sm:$0xff]
    %v198 = vld [vmem:[%s1 + $0x560] sm:$0xff]
    %v199 = vld [vmem:[%s1 + $0x568] sm:$0xff]
    %v200 = vld [vmem:[%s1 + $0x570] sm:$0xff]
    %v201 = vld [vmem:[%s1 + $0x578] sm:$0xff]
    %v202 = vld [vmem:[%s1 + $0x580] sm:$0xff]
    %v203 = vld [vmem:[%s1 + $0x588] sm:$0xff]
    %v204 = vld [vmem:[%s1 + $0x590] sm:$0xff]
    %v205 = vld [vmem:[%s1 + $0x598] sm:$0xff]
    %v206 = vld [vmem:[%s1 + $0x5a0] sm:$0xff]
    %v207 = vld [vmem:[%s1 + $0x5a8] sm:$0xff]
    %v208 = vld [vmem:[%s1 + $0x5b0] sm:$0xff]
    %v209 = vld [vmem:[%s1 + $0x5b8] sm:$0xff]
    %v210 = vld [vmem:[%s1 + $0x5c0] sm:$0xff]
    %v211 = vld [vmem:[%s1 + $0x5c8] sm:$0xff]
    %v212 = vld [vmem:[%s1 + $0x5d0] sm:$0xff]
    %v213 = vld [vmem:[%s1 + $0x5d8] sm:$0xff]
    %v214 = vld [vmem:[%s1 + $0x5e0] sm:$0xff]
    %v215 = vld [vmem:[%s1 + $0x5e8] sm:$0xff]
    %v216 = vld [vmem:[%s1 + $0x5f0] sm:$0xff]
    %v217 = vld [vmem:[%s1 + $0x5f8] sm:$0xff]
    %v218 = vld [vmem:[%s1 + $0x600] sm:$0xff]
    %v219 = vld [vmem:[%s1 + $0x608] sm:$0xff]
    %v220 = vld [vmem:[%s1 + $0x610] sm:$0xff]
    %v221 = vld [vmem:[%s1 + $0x618] sm:$0xff]
    %v222 = vld [vmem:[%s1 + $0x620] sm:$0xff]
    %v223 = vld [vmem:[%s1 + $0x628] sm:$0xff]
    %v224 = vld [vmem:[%s1 + $0x630] sm:$0xff]
    %v225 = vld [vmem:[%s1 + $0x638] sm:$0xff]
    %v226 = vld [vmem:[%s1 + $0x640] sm:$0xff]
    %v227 = vld [vmem:[%s1 + $0x648] sm:$0xff]
    %v228 = vld [vmem:[%s1 + $0x650] sm:$0xff]
    %v229 = vld [vmem:[%s1 + $0x658] sm:$0xff]
    %v230 = vld [vmem:[%s1 + $0x660] sm:$0xff]
    %v231 = vld [vmem:[%s1 + $0x668] sm:$0xff]
    %v232 = vld [vmem:[%s1 + $0x670] sm:$0xff]
    %v233 = vld [vmem:[%s1 + $0x678] sm:$0xff]
    %v234 = vld [vmem:[%s1 + $0x680] sm:$0xff]
    %v235 = vld [vmem:[%s1 + $0x688] sm:$0xff]
    %v236 = vld [vmem:[%s1 + $0x690] sm:$0xff]
    %v237 = vld [vmem:[%s1 + $0x698] sm:$0xff]
    %v238 = vld [vmem:[%s1 + $0x6a0] sm:$0xff]
    %v239 = vld [vmem:[%s1 + $0x6a8] sm:$0xff]
    %v240 = vld [vmem:[%s1 + $0x6b0] sm:$0xff]
    %v241 = vld [vmem:[%s1 + $0x6b8] sm:$0xff]
    %v242 = vld [vmem:[%s1 + $0x6c0] sm:$0xff]
    %v243 = vld [vmem:[%s1 + $0x6c8] sm:$0xff]
    %v244 = vld [vmem:[%s1 + $0x6d0] sm:$0xff]
    %v245 = vld [vmem:[%s1 + $0x6d8] sm:$0xff]
    %v246 = vld [vmem:[%s1 + $0x6e0] sm:$0xff]
    %v247 = vld [vmem:[%s1 + $0x6e8] sm:$0xff]
    %v248 = vld [vmem:[%s1 + $0x6f0] sm:$0xff]
    %v249 = vld [vmem:[%s1 + $0x6f8] sm:$0xff]
    %v250 = vld [vmem:[%s1 + $0x700] sm:$0xff]
    %v251 = vld [vmem:[%s1 + $0x708] sm:$0xff]
    %v252 = vld [vmem:[%s1 + $0x710] sm:$0xff]
    %v253 = vld [vmem:[%s1 + $0x718] sm:$0xff]
    %v254 = vld [vmem:[%s1 + $0x720] sm:$0xff]
    %v255 = vld [vmem:[%s1 + $0x728] sm:$0xff]
    %v256 = vld [vmem:[%s1 + $0x730] sm:$0xff]
    %v257 = vld [vmem:[%s1 + $0x738] sm:$0xff]
    %v258 = vld [vmem:[%s1 + $0x740] sm:$0xff]
    %v259 = vld [vmem:[%s1 + $0x748] sm:$0xff]
    %v260 = vld [vmem:[%s1 + $0x750] sm:$0xff]
    %v261 = vld [vmem:[%s1 + $0x758] sm:$0xff]
    %v262 = vld [vmem:[%s1 + $0x760] sm:$0xff]
    %v263 = vld [vmem:[%s1 + $0x768] sm:$0xff]
    %v264 = vld [vmem:[%s1 + $0x770] sm:$0xff]
    %v265 = vld [vmem:[%s1 + $0x778] sm:$0xff]
    %v266 = vld [vmem:[%s1 + $0x780] sm:$0xff]
    %v267 = vld [vmem:[%s1 + $0x788] sm:$0xff]
    %v268 = vld [vmem:[%s1 + $0x790] sm:$0xff]
    %v269 = vld [vmem:[%s1 + $0x798] sm:$0xff]
    %v270 = vld [vmem:[%s1 + $0x7a0] sm:$0xff]
    %v271 = vld [vmem:[%s1 + $0x7a8] sm:$0xff]
    %v272 = vld [vmem:[%s1 + $0x7b0] sm:$0xff]
    %v273 = vld [vmem:[%s1 + $0x7b8] sm:$0xff]
    %v274 = vld [vmem:[%s1 + $0x7c0] sm:$0xff]
    %v275 = vld [vmem:[%s1 + $0x7c8] sm:$0xff]
    %v276 = vld [vmem:[%s1 + $0x7d0] sm:$0xff]
    %v277 = vld [vmem:[%s1 + $0x7d8] sm:$0xff]
    %v278 = vld [vmem:[%s1 + $0x7e0] sm:$0xff]
    %v279 = vld [vmem:[%s1 + $0x7e8] sm:$0xff]
    %v280 = vld [vmem:[%s1 + $0x7f0] sm:$0xff]
    %v281 = vld [vmem:[%s1 + $0x7f8] sm:$0xff]
    %v282 = vld [vmem:[%s1 + $0x800] sm:$0xff]
    %v283 = vld [vmem:[%s1 + $0x808] sm:$0xff]
    %v284 = vld [vmem:[%s1 + $0x810] sm:$0xff]
    %v285 = vld [vmem:[%s1 + $0x818] sm:$0xff]
    %v286 = vld [vmem:[%s1 + $0x820] sm:$0xff]
    %v287 = vld [vmem:[%s1 + $0x828] sm:$0xff]
    %v288 = vld [vmem:[%s1 + $0x830] sm:$0xff]
    %v289 = vld [vmem:[%s1 + $0x838] sm:$0xff]
    %v290 = vld [vmem:[%s1 + $0x840] sm:$0xff]
    %v291 = vld [vmem:[%s1 + $0x848] sm:$0xff]
    %v292 = vld [vmem:[%s1 + $0x850] sm:$0xff]
    %v293 = vld [vmem:[%s1 + $0x858] sm:$0xff]
    %v294 = vld [vmem:[%s1 + $0x860] sm:$0xff]
    %v295 = vld [vmem:[%s1 + $0x868] sm:$0xff]
    %v296 = vld [vmem:[%s1 + $0x870] sm:$0xff]
    %v297 = vld [vmem:[%s1 + $0x878] sm:$0xff]
    %v298 = vld [vmem:[%s1 + $0x880] sm:$0xff]
    %v299 = vld [vmem:[%s1 + $0x888] sm:$0xff]
    %v300 = vld [vmem:[%s1 + $0x890] sm:$0xff]
    %v301 = vld [vmem:[%s1 + $0x898] sm:$0xff]
    %v302 = vld [vmem:[%s1 + $0x8a0] sm:$0xff]
    %v303 = vld [vmem:[%s1 + $0x8a8] sm:$0xff]
    %v304 = vld [vmem:[%s1 + $0x8b0] sm:$0xff]
    %v305 = vld [vmem:[%s1 + $0x8b8] sm:$0xff]
    %v306 = vld [vmem:[%s1 + $0x8c0] sm:$0xff]
    %v307 = vld [vmem:[%s1 + $0x8c8] sm:$0xff]
    %v308 = vld [vmem:[%s1 + $0x8d0] sm:$0xff]
    %v309 = vld [vmem:[%s1 + $0x8d8] sm:$0xff]
    %v310 = vld [vmem:[%s1 + $0x8e0] sm:$0xff]
    %v311 = vld [vmem:[%s1 + $0x8e8] sm:$0xff]
    %v312 = vld [vmem:[%s1 + $0x8f0] sm:$0xff]
    %v313 = vld [vmem:[%s1 + $0x8f8] sm:$0xff]
    %v314 = vld [vmem:[%s2] sm:$0x1]
    %v316 = vperm.slane %v314, 0
    %323 = vst [vmem:[#allocation1] ss:$4 sm:$0xff] %v21
    %s324 = scalar_lea.vmem [#allocation1], 32
    %325 = vst [vmem:[%s324] ss:$4 sm:$0xff] %v22
    %v326 = vld.sshfl [vmem:[#allocation1] sm:$0xff pattern:$0x73625140]
    %v327 = vld.sshfl [vmem:[#allocation1 + $0x8] sm:$0xff pattern:$0x73625140]
    %v328 = vld.sshfl [vmem:[#allocation1 + $0x10] sm:$0xff pattern:$0x73625140]
    %v329 = vld.sshfl [vmem:[#allocation1 + $0x18] sm:$0xff pattern:$0x73625140]
    %v330 = vld.sshfl [vmem:[#allocation1 + $0x20] sm:$0xff pattern:$0x73625140]
    %v331 = vld.sshfl [vmem:[#allocation1 + $0x28] sm:$0xff pattern:$0x73625140]
    %v332 = vld.sshfl [vmem:[#allocation1 + $0x30] sm:$0xff pattern:$0x73625140]
    %v333 = vld.sshfl [vmem:[#allocation1 + $0x38] sm:$0xff pattern:$0x73625140]
    %334 = vst [vmem:[#allocation1] ss:$4 sm:$0xff] %v23
    %335 = vst [vmem:[%s324] ss:$4 sm:$0xff] %v24
    %v336 = vld.sshfl [vmem:[#allocation1] sm:$0xff pattern:$0x73625140]
    %v337 = vld.sshfl [vmem:[#allocation1 + $0x8] sm:$0xff pattern:$0x73625140]
    %v338 = vld.sshfl [vmem:[#allocation1 + $0x10] sm:$0xff pattern:$0x73625140]
    %v339 = vld.sshfl [vmem:[#allocation1 + $0x18] sm:$0xff pattern:$0x73625140]
    %v340 = vld.sshfl [vmem:[#allocation1 + $0x20] sm:$0xff pattern:$0x73625140]
    %v341 = vld.sshfl [vmem:[#allocation1 + $0x28] sm:$0xff pattern:$0x73625140]
    %v342 = vld.sshfl [vmem:[#allocation1 + $0x30] sm:$0xff pattern:$0x73625140]
    %v343 = vld.sshfl [vmem:[#allocation1 + $0x38] sm:$0xff pattern:$0x73625140]
    %344 = vst [vmem:[#allocation1] ss:$4 sm:$0xff] %v25
    %v345 = vld.sshfl [vmem:[#allocation1] sm:$0xff pattern:$0x73625140]
    %v346 = vld.sshfl [vmem:[#allocation1 + $0x8] sm:$0xff pattern:$0x73625140]
    %365 = vmatpush.msra.mxu0 %v41
    %366 = vmatpush.msra.mxu0 %v40
    %367 = vmatpush.msra.mxu0 %v39
    %368 = vmatpush.msra.mxu0 %v38
    %369 = vmatpush.msra.mxu0 %v37
    %370 = vmatpush.msra.mxu0 %v36
    %371 = vmatpush.msra.mxu0 %v35
    %372 = vmatpush.msra.mxu0 %v34
    %373 = vmatpush.msra.mxu0 %v33
    %374 = vmatpush.msra.mxu0 %v32
    %375 = vmatpush.msra.mxu0 %v31
    %376 = vmatpush.msra.mxu0 %v30
    %377 = vmatpush.msra.mxu0 %v29
    %378 = vmatpush.msra.mxu0 %v28
    %379 = vmatpush.msra.mxu0 %v27
    %380 = vmatpush.msra.mxu0 %v26
    %381 = vmatmul.f32.gmra.mxu0 %v326
    %v382 = vpop.f32.mrf.mxu0
    %v383 = vadd.f32 %v316, %v382
    %384 = vdwg.mxu0
    %385 = vmatpush.msra.mxu0 %v57
    %386 = vmatpush.msra.mxu0 %v56
    %387 = vmatpush.msra.mxu0 %v55
    %388 = vmatpush.msra.mxu0 %v54
    %389 = vmatpush.msra.mxu0 %v53
    %390 = vmatpush.msra.mxu0 %v52
    %391 = vmatpush.msra.mxu0 %v51
    %392 = vmatpush.msra.mxu0 %v50
    %393 = vmatpush.msra.mxu0 %v49
    %394 = vmatpush.msra.mxu0 %v48
    %395 = vmatpush.msra.mxu0 %v47
    %396 = vmatpush.msra.mxu0 %v46
    %397 = vmatpush.msra.mxu0 %v45
    %398 = vmatpush.msra.mxu0 %v44
    %399 = vmatpush.msra.mxu0 %v43
    %400 = vmatpush.msra.mxu0 %v42
    %401 = vmatmul.f32.gmra.mxu0 %v327
    %v402 = vpop.f32.mrf.mxu0
    %v403 = vadd.f32 %v383, %v402
    %404 = vdwg.mxu0
    %405 = vmatpush.msra.mxu0 %v73
    %406 = vmatpush.msra.mxu0 %v72
    %407 = vmatpush.msra.mxu0 %v71
    %408 = vmatpush.msra.mxu0 %v70
    %409 = vmatpush.msra.mxu0 %v69
    %410 = vmatpush.msra.mxu0 %v68
    %411 = vmatpush.msra.mxu0 %v67
    %412 = vmatpush.msra.mxu0 %v66
    %413 = vmatpush.msra.mxu0 %v65
    %414 = vmatpush.msra.mxu0 %v64
    %415 = vmatpush.msra.mxu0 %v63
    %416 = vmatpush.msra.mxu0 %v62
    %417 = vmatpush.msra.mxu0 %v61
    %418 = vmatpush.msra.mxu0 %v60
    %419 = vmatpush.msra.mxu0 %v59
    %420 = vmatpush.msra.mxu0 %v58
    %421 = vmatmul.f32.gmra.mxu0 %v328
    %v422 = vpop.f32.mrf.mxu0
    %v423 = vadd.f32 %v403, %v422
    %424 = vdwg.mxu0
    %425 = vmatpush.msra.mxu0 %v89
    %426 = vmatpush.msra.mxu0 %v88
    %427 = vmatpush.msra.mxu0 %v87
    %428 = vmatpush.msra.mxu0 %v86
    %429 = vmatpush.msra.mxu0 %v85
    %430 = vmatpush.msra.mxu0 %v84
    %431 = vmatpush.msra.mxu0 %v83
    %432 = vmatpush.msra.mxu0 %v82
    %433 = vmatpush.msra.mxu0 %v81
    %434 = vmatpush.msra.mxu0 %v80
    %435 = vmatpush.msra.mxu0 %v79
    %436 = vmatpush.msra.mxu0 %v78
    %437 = vmatpush.msra.mxu0 %v77
    %438 = vmatpush.msra.mxu0 %v76
    %439 = vmatpush.msra.mxu0 %v75
    %440 = vmatpush.msra.mxu0 %v74
    %441 = vmatmul.f32.gmra.mxu0 %v329
    %v442 = vpop.f32.mrf.mxu0
    %v443 = vadd.f32 %v423, %v442
    %444 = vdwg.mxu0
    %445 = vmatpush.msra.mxu0 %v105
    %446 = vmatpush.msra.mxu0 %v104
    %447 = vmatpush.msra.mxu0 %v103
    %448 = vmatpush.msra.mxu0 %v102
    %449 = vmatpush.msra.mxu0 %v101
    %450 = vmatpush.msra.mxu0 %v100
    %451 = vmatpush.msra.mxu0 %v99
    %452 = vmatpush.msra.mxu0 %v98
    %453 = vmatpush.msra.mxu0 %v97
    %454 = vmatpush.msra.mxu0 %v96
    %455 = vmatpush.msra.mxu0 %v95
    %456 = vmatpush.msra.mxu0 %v94
    %457 = vmatpush.msra.mxu0 %v93
    %458 = vmatpush.msra.mxu0 %v92
    %459 = vmatpush.msra.mxu0 %v91
    %460 = vmatpush.msra.mxu0 %v90
    %461 = vmatmul.f32.gmra.mxu0 %v330
    %v462 = vpop.f32.mrf.mxu0
    %v463 = vadd.f32 %v443, %v462
    %464 = vdwg.mxu0
    %465 = vmatpush.msra.mxu0 %v121
    %466 = vmatpush.msra.mxu0 %v120
    %467 = vmatpush.msra.mxu0 %v119
    %468 = vmatpush.msra.mxu0 %v118
    %469 = vmatpush.msra.mxu0 %v117
    %470 = vmatpush.msra.mxu0 %v116
    %471 = vmatpush.msra.mxu0 %v115
    %472 = vmatpush.msra.mxu0 %v114
    %473 = vmatpush.msra.mxu0 %v113
    %474 = vmatpush.msra.mxu0 %v112
    %475 = vmatpush.msra.mxu0 %v111
    %476 = vmatpush.msra.mxu0 %v110
    %477 = vmatpush.msra.mxu0 %v109
    %478 = vmatpush.msra.mxu0 %v108
    %479 = vmatpush.msra.mxu0 %v107
    %480 = vmatpush.msra.mxu0 %v106
    %481 = vmatmul.f32.gmra.mxu0 %v331
    %v482 = vpop.f32.mrf.mxu0
    %v483 = vadd.f32 %v463, %v482
    %484 = vdwg.mxu0
    %485 = vmatpush.msra.mxu0 %v137
    %486 = vmatpush.msra.mxu0 %v136
    %487 = vmatpush.msra.mxu0 %v135
    %488 = vmatpush.msra.mxu0 %v134
    %489 = vmatpush.msra.mxu0 %v133
    %490 = vmatpush.msra.mxu0 %v132
    %491 = vmatpush.msra.mxu0 %v131
    %492 = vmatpush.msra.mxu0 %v130
    %493 = vmatpush.msra.mxu0 %v129
    %494 = vmatpush.msra.mxu0 %v128
    %495 = vmatpush.msra.mxu0 %v127
    %496 = vmatpush.msra.mxu0 %v126
    %497 = vmatpush.msra.mxu0 %v125
    %498 = vmatpush.msra.mxu0 %v124
    %499 = vmatpush.msra.mxu0 %v123
    %500 = vmatpush.msra.mxu0 %v122
    %501 = vmatmul.f32.gmra.mxu0 %v332
    %v502 = vpop.f32.mrf.mxu0
    %v503 = vadd.f32 %v483, %v502
    %504 = vdwg.mxu0
    %505 = vmatpush.msra.mxu0 %v153
    %506 = vmatpush.msra.mxu0 %v152
    %507 = vmatpush.msra.mxu0 %v151
    %508 = vmatpush.msra.mxu0 %v150
    %509 = vmatpush.msra.mxu0 %v149
    %510 = vmatpush.msra.mxu0 %v148
    %511 = vmatpush.msra.mxu0 %v147
    %512 = vmatpush.msra.mxu0 %v146
    %513 = vmatpush.msra.mxu0 %v145
    %514 = vmatpush.msra.mxu0 %v144
    %515 = vmatpush.msra.mxu0 %v143
    %516 = vmatpush.msra.mxu0 %v142
    %517 = vmatpush.msra.mxu0 %v141
    %518 = vmatpush.msra.mxu0 %v140
    %519 = vmatpush.msra.mxu0 %v139
    %520 = vmatpush.msra.mxu0 %v138
    %521 = vmatmul.f32.gmra.mxu0 %v333
    %v522 = vpop.f32.mrf.mxu0
    %v523 = vadd.f32 %v503, %v522
    %524 = vdwg.mxu0
    %525 = vmatpush.msra.mxu0 %v169
    %526 = vmatpush.msra.mxu0 %v168
    %527 = vmatpush.msra.mxu0 %v167
    %528 = vmatpush.msra.mxu0 %v166
    %529 = vmatpush.msra.mxu0 %v165
    %530 = vmatpush.msra.mxu0 %v164
    %531 = vmatpush.msra.mxu0 %v163
    %532 = vmatpush.msra.mxu0 %v162
    %533 = vmatpush.msra.mxu0 %v161
    %534 = vmatpush.msra.mxu0 %v160
    %535 = vmatpush.msra.mxu0 %v159
    %536 = vmatpush.msra.mxu0 %v158
    %537 = vmatpush.msra.mxu0 %v157
    %538 = vmatpush.msra.mxu0 %v156
    %539 = vmatpush.msra.mxu0 %v155
    %540 = vmatpush.msra.mxu0 %v154
    %541 = vmatmul.f32.gmra.mxu0 %v336
    %v542 = vpop.f32.mrf.mxu0
    %v543 = vadd.f32 %v523, %v542
    %544 = vdwg.mxu0
    %545 = vmatpush.msra.mxu0 %v185
    %546 = vmatpush.msra.mxu0 %v184
    %547 = vmatpush.msra.mxu0 %v183
    %548 = vmatpush.msra.mxu0 %v182
    %549 = vmatpush.msra.mxu0 %v181
    %550 = vmatpush.msra.mxu0 %v180
    %551 = vmatpush.msra.mxu0 %v179
    %552 = vmatpush.msra.mxu0 %v178
    %553 = vmatpush.msra.mxu0 %v177
    %554 = vmatpush.msra.mxu0 %v176
    %555 = vmatpush.msra.mxu0 %v175
    %556 = vmatpush.msra.mxu0 %v174
    %557 = vmatpush.msra.mxu0 %v173
    %558 = vmatpush.msra.mxu0 %v172
    %559 = vmatpush.msra.mxu0 %v171
    %560 = vmatpush.msra.mxu0 %v170
    %561 = vmatmul.f32.gmra.mxu0 %v337
    %v562 = vpop.f32.mrf.mxu0
    %v563 = vadd.f32 %v543, %v562
    %564 = vdwg.mxu0
    %565 = vmatpush.msra.mxu0 %v201
    %566 = vmatpush.msra.mxu0 %v200
    %567 = vmatpush.msra.mxu0 %v199
    %568 = vmatpush.msra.mxu0 %v198
    %569 = vmatpush.msra.mxu0 %v197
    %570 = vmatpush.msra.mxu0 %v196
    %571 = vmatpush.msra.mxu0 %v195
    %572 = vmatpush.msra.mxu0 %v194
    %573 = vmatpush.msra.mxu0 %v193
    %574 = vmatpush.msra.mxu0 %v192
    %575 = vmatpush.msra.mxu0 %v191
    %576 = vmatpush.msra.mxu0 %v190
    %577 = vmatpush.msra.mxu0 %v189
    %578 = vmatpush.msra.mxu0 %v188
    %579 = vmatpush.msra.mxu0 %v187
    %580 = vmatpush.msra.mxu0 %v186
    %581 = vmatmul.f32.gmra.mxu0 %v338
    %v582 = vpop.f32.mrf.mxu0
    %v583 = vadd.f32 %v563, %v582
    %584 = vdwg.mxu0
    %585 = vmatpush.msra.mxu0 %v217
    %586 = vmatpush.msra.mxu0 %v216
    %587 = vmatpush.msra.mxu0 %v215
    %588 = vmatpush.msra.mxu0 %v214
    %589 = vmatpush.msra.mxu0 %v213
    %590 = vmatpush.msra.mxu0 %v212
    %591 = vmatpush.msra.mxu0 %v211
    %592 = vmatpush.msra.mxu0 %v210
    %593 = vmatpush.msra.mxu0 %v209
    %594 = vmatpush.msra.mxu0 %v208
    %595 = vmatpush.msra.mxu0 %v207
    %596 = vmatpush.msra.mxu0 %v206
    %597 = vmatpush.msra.mxu0 %v205
    %598 = vmatpush.msra.mxu0 %v204
    %599 = vmatpush.msra.mxu0 %v203
    %600 = vmatpush.msra.mxu0 %v202
    %601 = vmatmul.f32.gmra.mxu0 %v339
    %v602 = vpop.f32.mrf.mxu0
    %v603 = vadd.f32 %v583, %v602
    %604 = vdwg.mxu0
    %605 = vmatpush.msra.mxu0 %v233
    %606 = vmatpush.msra.mxu0 %v232
    %607 = vmatpush.msra.mxu0 %v231
    %608 = vmatpush.msra.mxu0 %v230
    %609 = vmatpush.msra.mxu0 %v229
    %610 = vmatpush.msra.mxu0 %v228
    %611 = vmatpush.msra.mxu0 %v227
    %612 = vmatpush.msra.mxu0 %v226
    %613 = vmatpush.msra.mxu0 %v225
    %614 = vmatpush.msra.mxu0 %v224
    %615 = vmatpush.msra.mxu0 %v223
    %616 = vmatpush.msra.mxu0 %v222
    %617 = vmatpush.msra.mxu0 %v221
    %618 = vmatpush.msra.mxu0 %v220
    %619 = vmatpush.msra.mxu0 %v219
    %620 = vmatpush.msra.mxu0 %v218
    %621 = vmatmul.f32.gmra.mxu0 %v340
    %v622 = vpop.f32.mrf.mxu0
    %v623 = vadd.f32 %v603, %v622
    %624 = vdwg.mxu0
    %625 = vmatpush.msra.mxu0 %v249
    %626 = vmatpush.msra.mxu0 %v248
    %627 = vmatpush.msra.mxu0 %v247
    %628 = vmatpush.msra.mxu0 %v246
    %629 = vmatpush.msra.mxu0 %v245
    %630 = vmatpush.msra.mxu0 %v244
    %631 = vmatpush.msra.mxu0 %v243
    %632 = vmatpush.msra.mxu0 %v242
    %633 = vmatpush.msra.mxu0 %v241
    %634 = vmatpush.msra.mxu0 %v240
    %635 = vmatpush.msra.mxu0 %v239
    %636 = vmatpush.msra.mxu0 %v238
    %637 = vmatpush.msra.mxu0 %v237
    %638 = vmatpush.msra.mxu0 %v236
    %639 = vmatpush.msra.mxu0 %v235
    %640 = vmatpush.msra.mxu0 %v234
    %641 = vmatmul.f32.gmra.mxu0 %v341
    %v642 = vpop.f32.mrf.mxu0
    %v643 = vadd.f32 %v623, %v642
    %644 = vdwg.mxu0
    %645 = vmatpush.msra.mxu0 %v265
    %646 = vmatpush.msra.mxu0 %v264
    %647 = vmatpush.msra.mxu0 %v263
    %648 = vmatpush.msra.mxu0 %v262
    %649 = vmatpush.msra.mxu0 %v261
    %650 = vmatpush.msra.mxu0 %v260
    %651 = vmatpush.msra.mxu0 %v259
    %652 = vmatpush.msra.mxu0 %v258
    %653 = vmatpush.msra.mxu0 %v257
    %654 = vmatpush.msra.mxu0 %v256
    %655 = vmatpush.msra.mxu0 %v255
    %656 = vmatpush.msra.mxu0 %v254
    %657 = vmatpush.msra.mxu0 %v253
    %658 = vmatpush.msra.mxu0 %v252
    %659 = vmatpush.msra.mxu0 %v251
    %660 = vmatpush.msra.mxu0 %v250
    %661 = vmatmul.f32.gmra.mxu0 %v342
    %v662 = vpop.f32.mrf.mxu0
    %v663 = vadd.f32 %v643, %v662
    %664 = vdwg.mxu0
    %665 = vmatpush.msra.mxu0 %v281
    %666 = vmatpush.msra.mxu0 %v280
    %667 = vmatpush.msra.mxu0 %v279
    %668 = vmatpush.msra.mxu0 %v278
    %669 = vmatpush.msra.mxu0 %v277
    %670 = vmatpush.msra.mxu0 %v276
    %671 = vmatpush.msra.mxu0 %v275
    %672 = vmatpush.msra.mxu0 %v274
    %673 = vmatpush.msra.mxu0 %v273
    %674 = vmatpush.msra.mxu0 %v272
    %675 = vmatpush.msra.mxu0 %v271
    %676 = vmatpush.msra.mxu0 %v270
    %677 = vmatpush.msra.mxu0 %v269
    %678 = vmatpush.msra.mxu0 %v268
    %679 = vmatpush.msra.mxu0 %v267
    %680 = vmatpush.msra.mxu0 %v266
    %681 = vmatmul.f32.gmra.mxu0 %v343
    %v682 = vpop.f32.mrf.mxu0
    %v683 = vadd.f32 %v663, %v682
    %684 = vdwg.mxu0
    %685 = vmatpush.msra.mxu0 %v297
    %686 = vmatpush.msra.mxu0 %v296
    %687 = vmatpush.msra.mxu0 %v295
    %688 = vmatpush.msra.mxu0 %v294
    %689 = vmatpush.msra.mxu0 %v293
    %690 = vmatpush.msra.mxu0 %v292
    %691 = vmatpush.msra.mxu0 %v291
    %692 = vmatpush.msra.mxu0 %v290
    %693 = vmatpush.msra.mxu0 %v289
    %694 = vmatpush.msra.mxu0 %v288
    %695 = vmatpush.msra.mxu0 %v287
    %696 = vmatpush.msra.mxu0 %v286
    %697 = vmatpush.msra.mxu0 %v285
    %698 = vmatpush.msra.mxu0 %v284
    %699 = vmatpush.msra.mxu0 %v283
    %700 = vmatpush.msra.mxu0 %v282
    %701 = vmatmul.f32.gmra.mxu0 %v345
    %v702 = vpop.f32.mrf.mxu0
    %v703 = vadd.f32 %v683, %v702
    %704 = vdwg.mxu0
    %705 = vmatpush.msra.mxu0 %v313
    %706 = vmatpush.msra.mxu0 %v312
    %707 = vmatpush.msra.mxu0 %v311
    %708 = vmatpush.msra.mxu0 %v310
    %709 = vmatpush.msra.mxu0 %v309
    %710 = vmatpush.msra.mxu0 %v308
    %711 = vmatpush.msra.mxu0 %v307
    %712 = vmatpush.msra.mxu0 %v306
    %713 = vmatpush.msra.mxu0 %v305
    %714 = vmatpush.msra.mxu0 %v304
    %715 = vmatpush.msra.mxu0 %v303
    %716 = vmatpush.msra.mxu0 %v302
    %717 = vmatpush.msra.mxu0 %v301
    %718 = vmatpush.msra.mxu0 %v300
    %719 = vmatpush.msra.mxu0 %v299
    %720 = vmatpush.msra.mxu0 %v298
    %721 = vmatmul.f32.gmra.mxu0 %v346
    %v722 = vpop.f32.mrf.mxu0
    %v723 = vadd.f32 %v703, %v722
    %724 = vdwg.mxu0
    %v725 = vmax.f32 %v723, 0.0
    %v726 = vld [vmem:[%s3] sm:$0xff]
    %v727 = vld [vmem:[%s3 + $0x8] sm:$0xff]
    %v728 = vld [vmem:[%s3 + $0x10] sm:$0xff]
    %v729 = vld [vmem:[%s3 + $0x18] sm:$0xff]
    %v730 = vld [vmem:[%s3 + $0x20] sm:$0xff]
    %v731 = vld [vmem:[%s3 + $0x28] sm:$0xff]
    %v732 = vld [vmem:[%s3 + $0x30] sm:$0xff]
    %v733 = vld [vmem:[%s3 + $0x38] sm:$0xff]
    %v734 = vld [vmem:[%s3 + $0x40] sm:$0xff]
    %v735 = vld [vmem:[%s3 + $0x48] sm:$0xff]
    %v736 = vld [vmem:[%s3 + $0x50] sm:$0xff]
    %v737 = vld [vmem:[%s3 + $0x58] sm:$0xff]
    %v738 = vld [vmem:[%s3 + $0x60] sm:$0xff]
    %v739 = vld [vmem:[%s3 + $0x68] sm:$0xff]
    %v740 = vld [vmem:[%s3 + $0x70] sm:$0xff]
    %v741 = vld [vmem:[%s3 + $0x78] sm:$0xff]
    %v742 = vld [vmem:[%s4] sm:$0x1]
    %v744 = vperm.slane %v742, 0
    %746 = vmatpush.msra.mxu0 %v741
    %747 = vmatpush.msra.mxu0 %v740
    %748 = vmatpush.msra.mxu0 %v739
    %749 = vmatpush.msra.mxu0 %v738
    %750 = vmatpush.msra.mxu0 %v737
    %751 = vmatpush.msra.mxu0 %v736
    %752 = vmatpush.msra.mxu0 %v735
    %753 = vmatpush.msra.mxu0 %v734
    %754 = vmatpush.msra.mxu0 %v733
    %755 = vmatpush.msra.mxu0 %v732
    %756 = vmatpush.msra.mxu0 %v731
    %757 = vmatpush.msra.mxu0 %v730
    %758 = vmatpush.msra.mxu0 %v729
    %759 = vmatpush.msra.mxu0 %v728
    %760 = vmatpush.msra.mxu0 %v727
    %761 = vmatpush.msra.mxu0 %v726
    %762 = vmatmul.f32.gmra.mxu0 %v725
    %v763 = vpop.f32.mrf.mxu0
    %v764 = vadd.f32 %v744, %v763
    %765 = vdwg.mxu0
    %vm766 = vcmask 41984
    %767 = vst.msk [vmem:[#allocation2] sm:$0x3] %vm766, %v764
    // Predicated region
    $region22: #{model_forward.3} parent=1 // pred_check
      _
    $region23: #{model_forward.3} parent=1 // pred_check_branch
      %769 = sbr.rel (0) target = $region25
    $region24: #{model_forward.3} parent=1 // pred_region
      %771 = vsyncadd [#allocation3], 0
      %s773 = sshll.u32 [#allocation2], 4
      %s774 = int_to_ptr.vmem [resolvable:$true] %s773
      %s775 = sshll.u32 %s5, 4
      %s776 = int_to_ptr.hbm [resolvable:$true] %s775
      %778 = dma.vmem_to_hbm [thread:$0]  %s774, 32, %s776, [#allocation3]
    $region25: #{model_forward.3} parent=1 // pred_fallthru
      _
    // Predicated region
    $region26: #{model_forward.3} parent=1 // pred_check
      _
    $region27: #{model_forward.3} parent=1 // pred_check_branch
      %780 = sbr.rel (0) target = $region29
    $region28: #{model_forward.3} parent=1 // pred_region
      %782 = dma.done [#allocation3], 32
    $region29: #{model_forward.3} parent=1 // pred_fallthru
      _
    %783 = vsyncpa [#allocation3], 1

// kernel: model_forward.2
$region0: #{model_forward.2}
  #allocation0 [shape = 'u32[]', space=smem, size = 0x4, offset = 0x4, fixed_abs, tag = 'smem constant byte address 0x4 - core index']
  #allocation1 [shape = 'u32[72,128]{1,0:T(1,128)}', space=vmem, size = 0x9000, scoped, tag = 'internal scratch']
  #allocation2 [shape = 'f32[368,32]{1,0:T(8,128)}', space=vmem, size = 0x2e000, scoped, tag = 'scratch operand']
  #allocation3 [shape = 'f32[160,64]{1,0:T(8,128)}', space=vmem, size = 0x14000, scoped, tag = 'scratch operand']
  #allocation4 [shape = 'f32[120,64]{1,0:T(8,128)}', space=vmem, size = 0xf000, scoped, tag = 'scratch operand']
  %s0 = inlined_call_operand.vmem [shape: f32[2,368,64], index: 0, kind: input, shape index: {}]
  %s1 = inlined_call_operand.vmem [shape: f32[4,64,32], index: 1, kind: input, shape index: {}]
  %s2 = inlined_call_operand.vmem [shape: f32[1,32], index: 2, kind: input, shape index: {}]
  %s3 = inlined_call_operand.vmem [shape: f32[16,32,64], index: 3, kind: input, shape index: {}]
  %s4 = inlined_call_operand.vmem [shape: f32[1,64], index: 4, kind: input, shape index: {}]
  %s5 = inlined_call_operand.vmem [shape: f32[9,64,64], index: 5, kind: input, shape index: {}]
  %s6 = inlined_call_operand.vmem [shape: f32[1,64], index: 6, kind: input, shape index: {}]
  %s7 = inlined_call_operand.vmem [shape: f32[2,6,6,64], index: 7, kind: output, shape index: {}]
  %s8 = sld [smem:[#allocation0]]
  $region61: #{model_forward.2} parent=0
    _
  %s10 = ssub.s32 1, %s8
  %s11 = scalar_select 0, %s10, %s8
  loop: start=0, step=1, limit=4
  $region2: #{model_forward.2} parent=0 // loop_pre_header
    _
  $region3: #{model_forward.2} parent=0 // loop_header
    %s13 = sphi 0, %s17
    %p14 = scmp.ge.s32.totalorder %s13, 4
    %s23 = sphi 0, %s25
    %s26 = sphi 0, %s23
    %s27 = sphi 0, %s26
    %s43 = sphi 0, %s27
    %s47 = sphi 0, %s47
    %s49 = sphi 0, %s47
    %s50 = sphi 0, %s49
    %s64 = sphi 0, %s50
    %s68 = sphi 0, %s68
    %s70 = sphi 0, %s68
    %s71 = sphi 0, %s70
    %s85 = sphi 0, %s71
    %s89 = sphi 0, %s89
    %s91 = sphi 0, %s89
    %s92 = sphi 0, %s91
    %s106 = sphi 0, %s92
    %s110 = sphi 0, %s110
    %s112 = sphi 0, %s110
    %s113 = sphi 0, %s112
    %s127 = sphi 0, %s113
    %s131 = sphi 0, %s131
    %s133 = sphi 0, %s131
    %s134 = sphi 0, %s133
    %s148 = sphi 0, %s134
    %s152 = sphi 0, %s152
    %s154 = sphi 0, %s152
    %s155 = sphi 0, %s154
    %s169 = sphi 0, %s155
    %s175 = sphi 0, %s177
    %s178 = sphi 0, %s175
    %s179 = sphi 0, %s178
    %s195 = sphi 0, %s179
  $region4: #{model_forward.2} parent=0 // loop_header_branch
    %16 = sbr.rel (%p14) target = $region8
  $region5: #{model_forward.2} parent=0 // loop_body
    %s18 = ssub.s32 %s13, 1
    %s19 = ssub.s32 %s13, 2
    %s20 = sadd.s32 %s13, 1
    %s21 = ssub.s32 %s13, %s20
    %p22 = scmp.eq.s32.totalorder %s21, 0
    %s24 = sadd.s32 %s23, 1
    %s25 = scalar_select %p22, %s23, %s24
    %p28 = pneg %p22
    %p29 = scmp.eq.s32.totalorder %s13, 1
    %p30 = por %p28, %p29
    %p31 = scmp.ne.s32.totalorder %s23, %s26
    %p32 = scmp.eq.s32.totalorder %s13, 0
    %p33 = por %p31, %p32
    %p34 = scmp.ne.s32.totalorder %s23, %s26
    %p35 = scmp.eq.s32.totalorder %s18, 1
    %p36 = por %p34, %p35
    %p37 = scmp.ne.s32.totalorder %s26, %s27
    %p38 = scmp.eq.s32.totalorder %s18, 0
    %p39 = por %p37, %p38
    %p40 = scmp.ne.s32.totalorder %s26, %s27
    %p41 = scmp.eq.s32.totalorder %s19, 1
    %p42 = por %p40, %p41
    %p44 = scmp.ne.s32.totalorder %s27, %s43
    %p45 = scmp.eq.s32.totalorder %s19, 0
    %p46 = por %p44, %p45
    %s48 = sadd.s32 %s47, 1
    %p51 = scmp.eq.s32.totalorder %s13, 1
    %p52 = scmp.ne.s32.totalorder %s47, %s49
    %p53 = scmp.eq.s32.totalorder %s13, 0
    %p54 = por %p52, %p53
    %p55 = scmp.ne.s32.totalorder %s47, %s49
    %p56 = scmp.eq.s32.totalorder %s18, 1
    %p57 = por %p55, %p56
    %p58 = scmp.ne.s32.totalorder %s49, %s50
    %p59 = scmp.eq.s32.totalorder %s18, 0
    %p60 = por %p58, %p59
    %p61 = scmp.ne.s32.totalorder %s49, %s50
    %p62 = scmp.eq.s32.totalorder %s19, 1
    %p63 = por %p61, %p62
    %p65 = scmp.ne.s32.totalorder %s50, %s64
    %p66 = scmp.eq.s32.totalorder %s19, 0
    %p67 = por %p65, %p66
    %s69 = sadd.s32 %s68, 1
    %p72 = scmp.eq.s32.totalorder %s13, 1
    %p73 = scmp.ne.s32.totalorder %s68, %s70
    %p74 = scmp.eq.s32.totalorder %s13, 0
    %p75 = por %p73, %p74
    %p76 = scmp.ne.s32.totalorder %s68, %s70
    %p77 = scmp.eq.s32.totalorder %s18, 1
    %p78 = por %p76, %p77
    %p79 = scmp.ne.s32.totalorder %s70, %s71
    %p80 = scmp.eq.s32.totalorder %s18, 0
    %p81 = por %p79, %p80
    %p82 = scmp.ne.s32.totalorder %s70, %s71
    %p83 = scmp.eq.s32.totalorder %s19, 1
    %p84 = por %p82, %p83
    %p86 = scmp.ne.s32.totalorder %s71, %s85
    %p87 = scmp.eq.s32.totalorder %s19, 0
    %p88 = por %p86, %p87
    %s90 = sadd.s32 %s89, 1
    %p93 = scmp.eq.s32.totalorder %s13, 1
    %p94 = scmp.ne.s32.totalorder %s89, %s91
    %p95 = scmp.eq.s32.totalorder %s13, 0
    %p96 = por %p94, %p95
    %p97 = scmp.ne.s32.totalorder %s89, %s91
    %p98 = scmp.eq.s32.totalorder %s18, 1
    %p99 = por %p97, %p98
    %p100 = scmp.ne.s32.totalorder %s91, %s92
    %p101 = scmp.eq.s32.totalorder %s18, 0
    %p102 = por %p100, %p101
    %p103 = scmp.ne.s32.totalorder %s91, %s92
    %p104 = scmp.eq.s32.totalorder %s19, 1
    %p105 = por %p103, %p104
    %p107 = scmp.ne.s32.totalorder %s92, %s106
    %p108 = scmp.eq.s32.totalorder %s19, 0
    %p109 = por %p107, %p108
    %s111 = sadd.s32 %s110, 1
    %p114 = scmp.eq.s32.totalorder %s13, 1
    %p115 = scmp.ne.s32.totalorder %s110, %s112
    %p116 = scmp.eq.s32.totalorder %s13, 0
    %p117 = por %p115, %p116
    %p118 = scmp.ne.s32.totalorder %s110, %s112
    %p119 = scmp.eq.s32.totalorder %s18, 1
    %p120 = por %p118, %p119
    %p121 = scmp.ne.s32.totalorder %s112, %s113
    %p122 = scmp.eq.s32.totalorder %s18, 0
    %p123 = por %p121, %p122
    %p124 = scmp.ne.s32.totalorder %s112, %s113
    %p125 = scmp.eq.s32.totalorder %s19, 1
    %p126 = por %p124, %p125
    %p128 = scmp.ne.s32.totalorder %s113, %s127
    %p129 = scmp.eq.s32.totalorder %s19, 0
    %p130 = por %p128, %p129
    %s132 = sadd.s32 %s131, 1
    %p135 = scmp.eq.s32.totalorder %s13, 1
    %p136 = scmp.ne.s32.totalorder %s131, %s133
    %p137 = scmp.eq.s32.totalorder %s13, 0
    %p138 = por %p136, %p137
    %p139 = scmp.ne.s32.totalorder %s131, %s133
    %p140 = scmp.eq.s32.totalorder %s18, 1
    %p141 = por %p139, %p140
    %p142 = scmp.ne.s32.totalorder %s133, %s134
    %p143 = scmp.eq.s32.totalorder %s18, 0
    %p144 = por %p142, %p143
    %p145 = scmp.ne.s32.totalorder %s133, %s134
    %p146 = scmp.eq.s32.totalorder %s19, 1
    %p147 = por %p145, %p146
    %p149 = scmp.ne.s32.totalorder %s134, %s148
    %p150 = scmp.eq.s32.totalorder %s19, 0
    %p151 = por %p149, %p150
    %s153 = sadd.s32 %s152, 1
    %p156 = scmp.eq.s32.totalorder %s13, 1
    %p157 = scmp.ne.s32.totalorder %s152, %s154
    %p158 = scmp.eq.s32.totalorder %s13, 0
    %p159 = por %p157, %p158
    %p160 = scmp.ne.s32.totalorder %s152, %s154
    %p161 = scmp.eq.s32.totalorder %s18, 1
    %p162 = por %p160, %p161
    %p163 = scmp.ne.s32.totalorder %s154, %s155
    %p164 = scmp.eq.s32.totalorder %s18, 0
    %p165 = por %p163, %p164
    %p166 = scmp.ne.s32.totalorder %s154, %s155
    %p167 = scmp.eq.s32.totalorder %s19, 1
    %p168 = por %p166, %p167
    %p170 = scmp.ne.s32.totalorder %s155, %s169
    %p171 = scmp.eq.s32.totalorder %s19, 0
    %p172 = por %p170, %p171
    %s173 = ssub.s32 %s13, %s20
    %p174 = scmp.eq.s32.totalorder %s173, 0
    %s176 = sadd.s32 %s175, 1
    %s177 = scalar_select %p174, %s175, %s176
    %p180 = pneg %p174
    %p181 = scmp.eq.s32.totalorder %s13, 1
    %p182 = por %p180, %p181
    %p183 = scmp.ne.s32.totalorder %s175, %s178
    %p184 = scmp.eq.s32.totalorder %s13, 0
    %p185 = por %p183, %p184
    %p186 = scmp.ne.s32.totalorder %s175, %s178
    %p187 = scmp.eq.s32.totalorder %s18, 1
    %p188 = por %p186, %p187
    %p189 = scmp.ne.s32.totalorder %s178, %s179
    %p190 = scmp.eq.s32.totalorder %s18, 0
    %p191 = por %p189, %p190
    %p192 = scmp.ne.s32.totalorder %s178, %s179
    %p193 = scmp.eq.s32.totalorder %s19, 1
    %p194 = por %p192, %p193
    %p196 = scmp.ne.s32.totalorder %s179, %s195
    %p197 = scmp.eq.s32.totalorder %s19, 0
    %p198 = por %p196, %p197
    %p199 = scmp.le.s32.totalorder 1, %s13
    %p200 = scmp.lt.s32.totalorder %s13, 3
    %p201 = pnand %p199, %p200
    %p202 = pneg %p201
    // Predicated region
    $region9: #{model_forward.2} parent=5 // pred_check
      _
    $region10: #{model_forward.2} parent=5 // pred_check_branch
      %204 = sbr.rel (%p201) target = $region12
    $region11: #{model_forward.2} parent=5 // pred_region
      %s205 = ssub.s32 %s13, 1
      // Predicated region
      $region13: #{model_forward.2} parent=11 // pred_check
        %p206 = pneg %p60
      $region14: #{model_forward.2} parent=11 // pred_check_branch
        %208 = sbr.rel (%p206) target = $region16
      $region15: #{model_forward.2} parent=11 // pred_region
        _
      $region16: #{model_forward.2} parent=11 // pred_fallthru
        _
      // Predicated region
      $region17: #{model_forward.2} parent=11 // pred_check
        %p209 = pneg %p81
      $region18: #{model_forward.2} parent=11 // pred_check_branch
        %211 = sbr.rel (%p209) target = $region20
      $region19: #{model_forward.2} parent=11 // pred_region
        _
      $region20: #{model_forward.2} parent=11 // pred_fallthru
        _
      // Predicated region
      $region21: #{model_forward.2} parent=11 // pred_check
        %p212 = pneg %p102
      $region22: #{model_forward.2} parent=11 // pred_check_branch
        %214 = sbr.rel (%p212) target = $region24
      $region23: #{model_forward.2} parent=11 // pred_region
        _
      $region24: #{model_forward.2} parent=11 // pred_fallthru
        _
      // Predicated region
      $region25: #{model_forward.2} parent=11 // pred_check
        %p215 = pneg %p123
      $region26: #{model_forward.2} parent=11 // pred_check_branch
        %217 = sbr.rel (%p215) target = $region28
      $region27: #{model_forward.2} parent=11 // pred_region
        _
      $region28: #{model_forward.2} parent=11 // pred_fallthru
        _
      // Predicated region
      $region29: #{model_forward.2} parent=11 // pred_check
        %p218 = pneg %p144
      $region30: #{model_forward.2} parent=11 // pred_check_branch
        %220 = sbr.rel (%p218) target = $region32
      $region31: #{model_forward.2} parent=11 // pred_region
        _
      $region32: #{model_forward.2} parent=11 // pred_fallthru
        _
      // Predicated region
      $region33: #{model_forward.2} parent=11 // pred_check
        %p221 = pneg %p165
      $region34: #{model_forward.2} parent=11 // pred_check_branch
        %223 = sbr.rel (%p221) target = $region36
      $region35: #{model_forward.2} parent=11 // pred_region
        _
      $region36: #{model_forward.2} parent=11 // pred_fallthru
        _
    $region12: #{model_forward.2} parent=5 // pred_fallthru
      _
    %p224 = scmp.lt.s32.totalorder %s13, 2
    // Predicated region
    $region37: #{model_forward.2} parent=5 // pred_check
      %p225 = pneg %p224
    $region38: #{model_forward.2} parent=5 // pred_check_branch
      %227 = sbr.rel (%p225) target = $region40
    $region39: #{model_forward.2} parent=5 // pred_region
      // Predicated region
      $region41: #{model_forward.2} parent=39 // pred_check
        %p228 = pneg %p33
      $region42: #{model_forward.2} parent=39 // pred_check_branch
        %230 = sbr.rel (%p228) target = $region44
      $region43: #{model_forward.2} parent=39 // pred_region
        %p231 = scmp.lt.s32.totalorder %s13, 1
        %s232 = scalar_select %p231, %s13, 1
        %s233 = smul.addr %s232, 46
        %s234 = smul.addr %s233, 8
        %s235 = scalar_lea.vmem %s0, %s234
      $region44: #{model_forward.2} parent=39 // pred_fallthru
        _
    $region40: #{model_forward.2} parent=5 // pred_fallthru
      _
    %p236 = scmp.le.s32.totalorder 1, %s13
    %p237 = scmp.lt.s32.totalorder %s13, 3
    %p238 = pnand %p236, %p237
    %p239 = pneg %p238
    // Predicated region
    $region45: #{model_forward.2} parent=5 // pred_check
      _
    $region46: #{model_forward.2} parent=5 // pred_check_branch
      %241 = sbr.rel (%p238) target = $region48
    $region47: #{model_forward.2} parent=5 // pred_region
      %s242 = ssub.s32 %s13, 1
      %p243 = scmp.lt.s32.totalorder %s18, 1
      %s244 = scalar_select %p243, %s18, 1
      %s245 = smul.addr %s244, 46
      %s246 = smul.addr %s245, 8
      %s247 = scalar_lea.vmem %s0, %s246
      %p248 = pneg %p39
      %p249 = pneg %p36
      %p250 = pneg %p60
      %p251 = pneg %p57
      %p252 = pneg %p81
      %p253 = pneg %p78
      %p254 = pneg %p102
      %p255 = pneg %p99
      %p256 = pneg %p123
      %p257 = pneg %p120
      %p258 = pneg %p144
      %p259 = pneg %p141
      %p260 = pneg %p165
      %p261 = pneg %p162
      %p262 = pneg %p191
      %p263 = pneg %p188
      %p264 = scmp.lt.s32.totalorder %s18, 1
      %s265 = scalar_select %p264, %s18, 1
      %s266 = smul.addr %s265, 6
      %s267 = smul.addr %s266, 8
      %s268 = scalar_lea.vmem %s7, %s267
      %p269 = scmp.lt.s32.totalorder %s18, 1
      %s270 = scalar_select %p269, %s18, 1
      %s271 = smul.addr %s270, 46
      %s272 = smul.addr %s271, 8
      %s273 = scalar_lea.vmem %s0, %s272
      %p274 = scmp.lt.s32.totalorder %s18, 1
      %s275 = scalar_select %p274, %s18, 1
      %s276 = smul.addr %s275, 6
      %s277 = smul.addr %s276, 8
      %s278 = scalar_lea.vmem %s7, %s277
      %vm279 = vcmask 261120
      %280 = vst.msk [vmem:[#allocation2 + $0x156] sm:$0xff] %vm279, 0.0
      %281 = vst.msk [vmem:[#allocation2 + $0x15e] sm:$0xff] %vm279, 0.0
      %282 = vst.msk [vmem:[#allocation2 + $0x166] sm:$0xff] %vm279, 0.0
      %vm283 = vcmask 254976
      %284 = vst.msk [vmem:[#allocation2 + $0x16e] sm:$0x3] %vm283, 0.0
      %vm285 = vcmask 523264
      %286 = vst.msk [vmem:[#allocation3 + $0x98] sm:$0xff] %vm285, 0.0
      %v287 = vld [vmem:[%s273] sm:$0xff]
      %v288 = vld [vmem:[%s273 + $0x8] sm:$0xff]
      %v289 = vld [vmem:[%s273 + $0x10] sm:$0xff]
      %v290 = vld [vmem:[%s273 + $0x18] sm:$0xff]
      %v291 = vld [vmem:[%s273 + $0x20] sm:$0xff]
      %v292 = vld [vmem:[%s273 + $0x28] sm:$0xff]
      %v293 = vld [vmem:[%s273 + $0x30] sm:$0xff]
      %v294 = vld [vmem:[%s273 + $0x38] sm:$0xff]
      %v295 = vld [vmem:[%s273 + $0x40] sm:$0xff]
      %v296 = vld [vmem:[%s273 + $0x48] sm:$0xff]
      %v297 = vld [vmem:[%s273 + $0x50] sm:$0xff]
      %v298 = vld [vmem:[%s273 + $0x58] sm:$0xff]
      %v299 = vld [vmem:[%s273 + $0x60] sm:$0xff]
      %v300 = vld [vmem:[%s273 + $0x68] sm:$0xff]
      %v301 = vld [vmem:[%s273 + $0x70] sm:$0xff]
      %v302 = vld [vmem:[%s273 + $0x78] sm:$0xff]
      %v303 = vld [vmem:[%s273 + $0x80] sm:$0xff]
      %v304 = vld [vmem:[%s273 + $0x88] sm:$0xff]
      %v305 = vld [vmem:[%s273 + $0x90] sm:$0xff]
      %v306 = vld [vmem:[%s273 + $0x98] sm:$0xff]
      %v307 = vld [vmem:[%s273 + $0xa0] sm:$0xff]
      %v308 = vld [vmem:[%s273 + $0xa8] sm:$0xff]
      %v309 = vld [vmem:[%s273 + $0xb0] sm:$0xff]
      %v310 = vld [vmem:[%s273 + $0xb8] sm:$0xff]
      %v311 = vld [vmem:[%s273 + $0xc0] sm:$0xff]
      %v312 = vld [vmem:[%s273 + $0xc8] sm:$0xff]
      %v313 = vld [vmem:[%s273 + $0xd0] sm:$0xff]
      %v314 = vld [vmem:[%s273 + $0xd8] sm:$0xff]
      %v315 = vld [vmem:[%s273 + $0xe0] sm:$0xff]
      %v316 = vld [vmem:[%s273 + $0xe8] sm:$0xff]
      %v317 = vld [vmem:[%s273 + $0xf0] sm:$0xff]
      %v318 = vld [vmem:[%s273 + $0xf8] sm:$0xff]
      %v319 = vld [vmem:[%s273 + $0x100] sm:$0xff]
      %v320 = vld [vmem:[%s273 + $0x108] sm:$0xff]
      %v321 = vld [vmem:[%s273 + $0x110] sm:$0xff]
      %v322 = vld [vmem:[%s273 + $0x118] sm:$0xff]
      %v323 = vld [vmem:[%s273 + $0x120] sm:$0xff]
      %v324 = vld [vmem:[%s273 + $0x128] sm:$0xff]
      %v325 = vld [vmem:[%s273 + $0x130] sm:$0xff]
      %v326 = vld [vmem:[%s273 + $0x138] sm:$0xff]
      %v327 = vld [vmem:[%s273 + $0x140] sm:$0xff]
      %v328 = vld [vmem:[%s273 + $0x148] sm:$0xff]
      %v329 = vld [vmem:[%s273 + $0x150] sm:$0x3f]
      %v330 = vld [vmem:[%s1] sm:$0xff]
      %v331 = vld [vmem:[%s1 + $0x8] sm:$0xff]
      %v332 = vld [vmem:[%s1 + $0x10] sm:$0xff]
      %v333 = vld [vmem:[%s1 + $0x18] sm:$0xff]
      %v334 = vld [vmem:[%s1 + $0x20] sm:$0xff]
      %v335 = vld [vmem:[%s1 + $0x28] sm:$0xff]
      %v336 = vld [vmem:[%s1 + $0x30] sm:$0xff]
      %v337 = vld [vmem:[%s1 + $0x38] sm:$0xff]
      %v338 = vld [vmem:[%s273 + $0x1] sm:$0xff]
      %v339 = vld [vmem:[%s273 + $0x9] sm:$0xff]
      %v340 = vld [vmem:[%s273 + $0x11] sm:$0xff]
      %v341 = vld [vmem:[%s273 + $0x19] sm:$0xff]
      %v342 = vld [vmem:[%s273 + $0x21] sm:$0xff]
      %v343 = vld [vmem:[%s273 + $0x29] sm:$0xff]
      %v344 = vld [vmem:[%s273 + $0x31] sm:$0xff]
      %v345 = vld [vmem:[%s273 + $0x39] sm:$0xff]
      %v346 = vld [vmem:[%s273 + $0x41] sm:$0xff]
      %v347 = vld [vmem:[%s273 + $0x49] sm:$0xff]
      %v348 = vld [vmem:[%s273 + $0x51] sm:$0xff]
      %v349 = vld [vmem:[%s273 + $0x59] sm:$0xff]
      %v350 = vld [vmem:[%s273 + $0x61] sm:$0xff]
      %v351 = vld [vmem:[%s273 + $0x69] sm:$0xff]
      %v352 = vld [vmem:[%s273 + $0x71] sm:$0xff]
      %v353 = vld [vmem:[%s273 + $0x79] sm:$0xff]
      %v354 = vld [vmem:[%s273 + $0x81] sm:$0xff]
      %v355 = vld [vmem:[%s273 + $0x89] sm:$0xff]
      %v356 = vld [vmem:[%s273 + $0x91] sm:$0xff]
      %v357 = vld [vmem:[%s273 + $0x99] sm:$0xff]
      %v358 = vld [vmem:[%s273 + $0xa1] sm:$0xff]
      %v359 = vld [vmem:[%s273 + $0xa9] sm:$0xff]
      %v360 = vld [vmem:[%s273 + $0xb1] sm:$0xff]
      %v361 = vld [vmem:[%s273 + $0xb9] sm:$0xff]
      %v362 = vld [vmem:[%s273 + $0xc1] sm:$0xff]
      %v363 = vld [vmem:[%s273 + $0xc9] sm:$0xff]
      %v364 = vld [vmem:[%s273 + $0xd1] sm:$0xff]
      %v365 = vld [vmem:[%s273 + $0xd9] sm:$0xff]
      %v366 = vld [vmem:[%s273 + $0xe1] sm:$0xff]
      %v367 = vld [vmem:[%s273 + $0xe9] sm:$0xff]
      %v368 = vld [vmem:[%s273 + $0xf1] sm:$0xff]
      %v369 = vld [vmem:[%s273 + $0xf9] sm:$0xff]
      %v370 = vld [vmem:[%s273 + $0x101] sm:$0xff]
      %v371 = vld [vmem:[%s273 + $0x109] sm:$0xff]
      %v372 = vld [vmem:[%s273 + $0x111] sm:$0xff]
      %v373 = vld [vmem:[%s273 + $0x119] sm:$0xff]
      %v374 = vld [vmem:[%s273 + $0x121] sm:$0xff]
      %v375 = vld [vmem:[%s273 + $0x129] sm:$0xff]
      %v376 = vld [vmem:[%s273 + $0x131] sm:$0xff]
      %v377 = vld [vmem:[%s273 + $0x139] sm:$0xff]
      %v378 = vld [vmem:[%s273 + $0x141] sm:$0xff]
      %v379 = vld [vmem:[%s273 + $0x149] sm:$0xff]
      %v380 = vld [vmem:[%s273 + $0x151] sm:$0x3f]
      %s381 = scalar_lea.vmem %s1, 64
      %v382 = vld [vmem:[%s381] sm:$0xff]
      %v383 = vld [vmem:[%s381 + $0x8] sm:$0xff]
      %v384 = vld [vmem:[%s381 + $0x10] sm:$0xff]
      %v385 = vld [vmem:[%s381 + $0x18] sm:$0xff]
      %v386 = vld [vmem:[%s381 + $0x20] sm:$0xff]
      %v387 = vld [vmem:[%s381 + $0x28] sm:$0xff]
      %v388 = vld [vmem:[%s381 + $0x30] sm:$0xff]
      %v389 = vld [vmem:[%s381 + $0x38] sm:$0xff]
      %v391 = vsel %vm285, %v338, 0
      %v394 = vsel %vm285, %v339, 0
      %v397 = vsel %vm285, %v340, 0
      %v400 = vsel %vm285, %v341, 0
      %v403 = vsel %vm285, %v342, 0
      %v406 = vsel %vm285, %v343, 0
      %v409 = vsel %vm285, %v344, 0
      %v412 = vsel %vm285, %v345, 0
      %v415 = vsel %vm285, %v346, 0
      %v418 = vsel %vm285, %v347, 0
      %v421 = vsel %vm285, %v348, 0
      %v424 = vsel %vm285, %v349, 0
      %v427 = vsel %vm285, %v350, 0
      %v430 = vsel %vm285, %v351, 0
      %v433 = vsel %vm285, %v352, 0
      %v436 = vsel %vm285, %v353, 0
      %v439 = vsel %vm285, %v354, 0
      %v442 = vsel %vm285, %v355, 0
      %v445 = vsel %vm285, %v356, 0
      %v448 = vsel %vm285, %v357, 0
      %v451 = vsel %vm285, %v358, 0
      %v454 = vsel %vm285, %v359, 0
      %v457 = vsel %vm285, %v360, 0
      %v460 = vsel %vm285, %v361, 0
      %v463 = vsel %vm285, %v362, 0
      %v466 = vsel %vm285, %v363, 0
      %v469 = vsel %vm285, %v364, 0
      %v472 = vsel %vm285, %v365, 0
      %v475 = vsel %vm285, %v366, 0
      %v478 = vsel %vm285, %v367, 0
      %v481 = vsel %vm285, %v368, 0
      %v484 = vsel %vm285, %v369, 0
      %v487 = vsel %vm285, %v370, 0
      %v490 = vsel %vm285, %v371, 0
      %v493 = vsel %vm285, %v372, 0
      %v496 = vsel %vm285, %v373, 0
      %v499 = vsel %vm285, %v374, 0
      %v502 = vsel %vm285, %v375, 0
      %v505 = vsel %vm285, %v376, 0
      %v508 = vsel %vm285, %v377, 0
      %v511 = vsel %vm285, %v378, 0
      %v514 = vsel %vm285, %v379, 0
      %v517 = vsel %vm285, %v380, 0
      %519 = vmatpush.msra.mxu0 0.0
      %520 = vmatpush.msra.mxu0 0.0
      %521 = vmatpush.msra.mxu0 0.0
      %522 = vmatpush.msra.mxu0 0.0
      %523 = vmatpush.msra.mxu0 0.0
      %524 = vmatpush.msra.mxu0 0.0
      %525 = vmatpush.msra.mxu0 0.0
      %526 = vmatpush.msra.mxu0 0.0
      %527 = vmatpush.msra.mxu0 %v389
      %528 = vmatpush.msra.mxu0 %v388
      %529 = vmatpush.msra.mxu0 %v387
      %530 = vmatpush.msra.mxu0 %v386
      %531 = vmatpush.msra.mxu0 %v385
      %532 = vmatpush.msra.mxu0 %v384
      %533 = vmatpush.msra.mxu0 %v383
      %534 = vmatpush.msra.mxu0 %v382
      %535 = vmatmul.f32.gmra.mxu0 %v391
      %v536 = vpop.f32.mrf.mxu0
      %v537 = vadd.f32 0.0, %v536
      %538 = vmatmul.f32.gmra.mxu0 %v394
      %v539 = vpop.f32.mrf.mxu0
      %v540 = vadd.f32 0.0, %v539
      %541 = vmatmul.f32.gmra.mxu0 %v397
      %v542 = vpop.f32.mrf.mxu0
      %v543 = vadd.f32 0.0, %v542
      %544 = vmatmul.f32.gmra.mxu0 %v400
      %v545 = vpop.f32.mrf.mxu0
      %v546 = vadd.f32 0.0, %v545
      %547 = vmatmul.f32.gmra.mxu0 %v403
      %v548 = vpop.f32.mrf.mxu0
      %v549 = vadd.f32 0.0, %v548
      %550 = vmatmul.f32.gmra.mxu0 %v406
      %v551 = vpop.f32.mrf.mxu0
      %v552 = vadd.f32 0.0, %v551
      %553 = vmatmul.f32.gmra.mxu0 %v409
      %v554 = vpop.f32.mrf.mxu0
      %v555 = vadd.f32 0.0, %v554
      %556 = vmatmul.f32.gmra.mxu0 %v412
      %v557 = vpop.f32.mrf.mxu0
      %v558 = vadd.f32 0.0, %v557
      %559 = vmatmul.f32.gmra.mxu0 %v415
      %v560 = vpop.f32.mrf.mxu0
      %v561 = vadd.f32 0.0, %v560
      %562 = vmatmul.f32.gmra.mxu0 %v418
      %v563 = vpop.f32.mrf.mxu0
      %v564 = vadd.f32 0.0, %v563
      %565 = vmatmul.f32.gmra.mxu0 %v421
      %v566 = vpop.f32.mrf.mxu0
      %v567 = vadd.f32 0.0, %v566
      %568 = vmatmul.f32.gmra.mxu0 %v424
      %v569 = vpop.f32.mrf.mxu0
      %v570 = vadd.f32 0.0, %v569
      %571 = vmatmul.f32.gmra.mxu0 %v427
      %v572 = vpop.f32.mrf.mxu0
      %v573 = vadd.f32 0.0, %v572
      %574 = vmatmul.f32.gmra.mxu0 %v430
      %v575 = vpop.f32.mrf.mxu0
      %v576 = vadd.f32 0.0, %v575
      %577 = vmatmul.f32.gmra.mxu0 %v433
      %v578 = vpop.f32.mrf.mxu0
      %v579 = vadd.f32 0.0, %v578
      %580 = vmatmul.f32.gmra.mxu0 %v436
      %v581 = vpop.f32.mrf.mxu0
      %v582 = vadd.f32 0.0, %v581
      %583 = vmatmul.f32.gmra.mxu0 %v439
      %v584 = vpop.f32.mrf.mxu0
      %v585 = vadd.f32 0.0, %v584
      %586 = vmatmul.f32.gmra.mxu0 %v442
      %v587 = vpop.f32.mrf.mxu0
      %v588 = vadd.f32 0.0, %v587
      %589 = vmatmul.f32.gmra.mxu0 %v445
      %v590 = vpop.f32.mrf.mxu0
      %v591 = vadd.f32 0.0, %v590
      %592 = vmatmul.f32.gmra.mxu0 %v448
      %v593 = vpop.f32.mrf.mxu0
      %v594 = vadd.f32 0.0, %v593
      %595 = vmatmul.f32.gmra.mxu0 %v451
      %v596 = vpop.f32.mrf.mxu0
      %v597 = vadd.f32 0.0, %v596
      %598 = vmatmul.f32.gmra.mxu0 %v454
      %v599 = vpop.f32.mrf.mxu0
      %v600 = vadd.f32 0.0, %v599
      %601 = vmatmul.f32.gmra.mxu0 %v457
      %v602 = vpop.f32.mrf.mxu0
      %v603 = vadd.f32 0.0, %v602
      %604 = vmatmul.f32.gmra.mxu0 %v460
      %v605 = vpop.f32.mrf.mxu0
      %v606 = vadd.f32 0.0, %v605
      %607 = vmatmul.f32.gmra.mxu0 %v463
      %v608 = vpop.f32.mrf.mxu0
      %v609 = vadd.f32 0.0, %v608
      %610 = vmatmul.f32.gmra.mxu0 %v466
      %v611 = vpop.f32.mrf.mxu0
      %v612 = vadd.f32 0.0, %v611
      %613 = vmatmul.f32.gmra.mxu0 %v469
      %v614 = vpop.f32.mrf.mxu0
      %v615 = vadd.f32 0.0, %v614
      %616 = vmatmul.f32.gmra.mxu0 %v472
      %v617 = vpop.f32.mrf.mxu0
      %v618 = vadd.f32 0.0, %v617
      %619 = vmatmul.f32.gmra.mxu0 %v475
      %v620 = vpop.f32.mrf.mxu0
      %v621 = vadd.f32 0.0, %v620
      %622 = vmatmul.f32.gmra.mxu0 %v478
      %v623 = vpop.f32.mrf.mxu0
      %v624 = vadd.f32 0.0, %v623
      %625 = vmatmul.f32.gmra.mxu0 %v481
      %v626 = vpop.f32.mrf.mxu0
      %v627 = vadd.f32 0.0, %v626
      %628 = vmatmul.f32.gmra.mxu0 %v484
      %v629 = vpop.f32.mrf.mxu0
      %v630 = vadd.f32 0.0, %v629
      %631 = vmatmul.f32.gmra.mxu0 %v487
      %v632 = vpop.f32.mrf.mxu0
      %v633 = vadd.f32 0.0, %v632
      %634 = vmatmul.f32.gmra.mxu0 %v490
      %v635 = vpop.f32.mrf.mxu0
      %v636 = vadd.f32 0.0, %v635
      %637 = vmatmul.f32.gmra.mxu0 %v493
      %v638 = vpop.f32.mrf.mxu0
      %v639 = vadd.f32 0.0, %v638
      %640 = vmatmul.f32.gmra.mxu0 %v496
      %v641 = vpop.f32.mrf.mxu0
      %v642 = vadd.f32 0.0, %v641
      %643 = vmatmul.f32.gmra.mxu0 %v499
      %v644 = vpop.f32.mrf.mxu0
      %v645 = vadd.f32 0.0, %v644
      %646 = vmatmul.f32.gmra.mxu0 %v502
      %v647 = vpop.f32.mrf.mxu0
      %v648 = vadd.f32 0.0, %v647
      %649 = vmatmul.f32.gmra.mxu0 %v505
      %v650 = vpop.f32.mrf.mxu0
      %v651 = vadd.f32 0.0, %v650
      %652 = vmatmul.f32.gmra.mxu0 %v508
      %v653 = vpop.f32.mrf.mxu0
      %v654 = vadd.f32 0.0, %v653
      %655 = vmatmul.f32.gmra.mxu0 %v511
      %v656 = vpop.f32.mrf.mxu0
      %v657 = vadd.f32 0.0, %v656
      %658 = vmatmul.f32.gmra.mxu0 %v514
      %v659 = vpop.f32.mrf.mxu0
      %v660 = vadd.f32 0.0, %v659
      %661 = vmatmul.f32.gmra.mxu0 %v517
      %v662 = vpop.f32.mrf.mxu0
      %v663 = vadd.f32 0.0, %v662
      %664 = vdwg.mxu0
      %v666 = vsel %vm285, %v287, 0
      %v669 = vsel %vm285, %v288, 0
      %v672 = vsel %vm285, %v289, 0
      %v675 = vsel %vm285, %v290, 0
      %v678 = vsel %vm285, %v291, 0
      %v681 = vsel %vm285, %v292, 0
      %v684 = vsel %vm285, %v293, 0
      %v687 = vsel %vm285, %v294, 0
      %v690 = vsel %vm285, %v295, 0
      %v693 = vsel %vm285, %v296, 0
      %v696 = vsel %vm285, %v297, 0
      %v699 = vsel %vm285, %v298, 0
      %v702 = vsel %vm285, %v299, 0
      %v705 = vsel %vm285, %v300, 0
      %v708 = vsel %vm285, %v301, 0
      %v711 = vsel %vm285, %v302, 0
      %v714 = vsel %vm285, %v303, 0
      %v717 = vsel %vm285, %v304, 0
      %v720 = vsel %vm285, %v305, 0
      %v723 = vsel %vm285, %v306, 0
      %v726 = vsel %vm285, %v307, 0
      %v729 = vsel %vm285, %v308, 0
      %v732 = vsel %vm285, %v309, 0
      %v735 = vsel %vm285, %v310, 0
      %v738 = vsel %vm285, %v311, 0
      %v741 = vsel %vm285, %v312, 0
      %v744 = vsel %vm285, %v313, 0
      %v747 = vsel %vm285, %v314, 0
      %v750 = vsel %vm285, %v315, 0
      %v753 = vsel %vm285, %v316, 0
      %v756 = vsel %vm285, %v317, 0
      %v759 = vsel %vm285, %v318, 0
      %v762 = vsel %vm285, %v319, 0
      %v765 = vsel %vm285, %v320, 0
      %v768 = vsel %vm285, %v321, 0
      %v771 = vsel %vm285, %v322, 0
      %v774 = vsel %vm285, %v323, 0
      %v777 = vsel %vm285, %v324, 0
      %v780 = vsel %vm285, %v325, 0
      %v783 = vsel %vm285, %v326, 0
      %v786 = vsel %vm285, %v327, 0
      %v789 = vsel %vm285, %v328, 0
      %v792 = vsel %vm285, %v329, 0
      %794 = vmatpush.msra.mxu0 0.0
      %795 = vmatpush.msra.mxu0 0.0
      %796 = vmatpush.msra.mxu0 0.0
      %797 = vmatpush.msra.mxu0 0.0
      %798 = vmatpush.msra.mxu0 0.0
      %799 = vmatpush.msra.mxu0 0.0
      %800 = vmatpush.msra.mxu0 0.0
      %801 = vmatpush.msra.mxu0 0.0
      %802 = vmatpush.msra.mxu0 %v337
      %803 = vmatpush.msra.mxu0 %v336
      %804 = vmatpush.msra.mxu0 %v335
      %805 = vmatpush.msra.mxu0 %v334
      %806 = vmatpush.msra.mxu0 %v333
      %807 = vmatpush.msra.mxu0 %v332
      %808 = vmatpush.msra.mxu0 %v331
      %809 = vmatpush.msra.mxu0 %v330
      %810 = vmatmul.f32.gmra.mxu0 %v666
      %v811 = vpop.f32.mrf.mxu0
      %v812 = vadd.f32 %v537, %v811
      %813 = vmatmul.f32.gmra.mxu0 %v669
      %v814 = vpop.f32.mrf.mxu0
      %v815 = vadd.f32 %v540, %v814
      %816 = vmatmul.f32.gmra.mxu0 %v672
      %v817 = vpop.f32.mrf.mxu0
      %v818 = vadd.f32 %v543, %v817
      %819 = vmatmul.f32.gmra.mxu0 %v675
      %v820 = vpop.f32.mrf.mxu0
      %v821 = vadd.f32 %v546, %v820
      %822 = vmatmul.f32.gmra.mxu0 %v678
      %v823 = vpop.f32.mrf.mxu0
      %v824 = vadd.f32 %v549, %v823
      %825 = vmatmul.f32.gmra.mxu0 %v681
      %v826 = vpop.f32.mrf.mxu0
      %v827 = vadd.f32 %v552, %v826
      %828 = vmatmul.f32.gmra.mxu0 %v684
      %v829 = vpop.f32.mrf.mxu0
      %v830 = vadd.f32 %v555, %v829
      %831 = vmatmul.f32.gmra.mxu0 %v687
      %v832 = vpop.f32.mrf.mxu0
      %v833 = vadd.f32 %v558, %v832
      %834 = vmatmul.f32.gmra.mxu0 %v690
      %v835 = vpop.f32.mrf.mxu0
      %v836 = vadd.f32 %v561, %v835
      %837 = vmatmul.f32.gmra.mxu0 %v693
      %v838 = vpop.f32.mrf.mxu0
      %v839 = vadd.f32 %v564, %v838
      %840 = vmatmul.f32.gmra.mxu0 %v696
      %v841 = vpop.f32.mrf.mxu0
      %v842 = vadd.f32 %v567, %v841
      %843 = vmatmul.f32.gmra.mxu0 %v699
      %v844 = vpop.f32.mrf.mxu0
      %v845 = vadd.f32 %v570, %v844
      %846 = vmatmul.f32.gmra.mxu0 %v702
      %v847 = vpop.f32.mrf.mxu0
      %v848 = vadd.f32 %v573, %v847
      %849 = vmatmul.f32.gmra.mxu0 %v705
      %v850 = vpop.f32.mrf.mxu0
      %v851 = vadd.f32 %v576, %v850
      %852 = vmatmul.f32.gmra.mxu0 %v708
      %v853 = vpop.f32.mrf.mxu0
      %v854 = vadd.f32 %v579, %v853
      %855 = vmatmul.f32.gmra.mxu0 %v711
      %v856 = vpop.f32.mrf.mxu0
      %v857 = vadd.f32 %v582, %v856
      %858 = vmatmul.f32.gmra.mxu0 %v714
      %v859 = vpop.f32.mrf.mxu0
      %v860 = vadd.f32 %v585, %v859
      %861 = vmatmul.f32.gmra.mxu0 %v717
      %v862 = vpop.f32.mrf.mxu0
      %v863 = vadd.f32 %v588, %v862
      %864 = vmatmul.f32.gmra.mxu0 %v720
      %v865 = vpop.f32.mrf.mxu0
      %v866 = vadd.f32 %v591, %v865
      %867 = vmatmul.f32.gmra.mxu0 %v723
      %v868 = vpop.f32.mrf.mxu0
      %v869 = vadd.f32 %v594, %v868
      %870 = vmatmul.f32.gmra.mxu0 %v726
      %v871 = vpop.f32.mrf.mxu0
      %v872 = vadd.f32 %v597, %v871
      %873 = vmatmul.f32.gmra.mxu0 %v729
      %v874 = vpop.f32.mrf.mxu0
      %v875 = vadd.f32 %v600, %v874
      %876 = vmatmul.f32.gmra.mxu0 %v732
      %v877 = vpop.f32.mrf.mxu0
      %v878 = vadd.f32 %v603, %v877
      %879 = vmatmul.f32.gmra.mxu0 %v735
      %v880 = vpop.f32.mrf.mxu0
      %v881 = vadd.f32 %v606, %v880
      %882 = vmatmul.f32.gmra.mxu0 %v738
      %v883 = vpop.f32.mrf.mxu0
      %v884 = vadd.f32 %v609, %v883
      %885 = vmatmul.f32.gmra.mxu0 %v741
      %v886 = vpop.f32.mrf.mxu0
      %v887 = vadd.f32 %v612, %v886
      %888 = vmatmul.f32.gmra.mxu0 %v744
      %v889 = vpop.f32.mrf.mxu0
      %v890 = vadd.f32 %v615, %v889
      %891 = vmatmul.f32.gmra.mxu0 %v747
      %v892 = vpop.f32.mrf.mxu0
      %v893 = vadd.f32 %v618, %v892
      %894 = vmatmul.f32.gmra.mxu0 %v750
      %v895 = vpop.f32.mrf.mxu0
      %v896 = vadd.f32 %v621, %v895
      %897 = vmatmul.f32.gmra.mxu0 %v753
      %v898 = vpop.f32.mrf.mxu0
      %v899 = vadd.f32 %v624, %v898
      %900 = vmatmul.f32.gmra.mxu0 %v756
      %v901 = vpop.f32.mrf.mxu0
      %v902 = vadd.f32 %v627, %v901
      %903 = vmatmul.f32.gmra.mxu0 %v759
      %v904 = vpop.f32.mrf.mxu0
      %v905 = vadd.f32 %v630, %v904
      %906 = vmatmul.f32.gmra.mxu0 %v762
      %v907 = vpop.f32.mrf.mxu0
      %v908 = vadd.f32 %v633, %v907
      %909 = vmatmul.f32.gmra.mxu0 %v765
      %v910 = vpop.f32.mrf.mxu0
      %v911 = vadd.f32 %v636, %v910
      %912 = vmatmul.f32.gmra.mxu0 %v768
      %v913 = vpop.f32.mrf.mxu0
      %v914 = vadd.f32 %v639, %v913
      %915 = vmatmul.f32.gmra.mxu0 %v771
      %v916 = vpop.f32.mrf.mxu0
      %v917 = vadd.f32 %v642, %v916
      %918 = vmatmul.f32.gmra.mxu0 %v774
      %v919 = vpop.f32.mrf.mxu0
      %v920 = vadd.f32 %v645, %v919
      %921 = vmatmul.f32.gmra.mxu0 %v777
      %v922 = vpop.f32.mrf.mxu0
      %v923 = vadd.f32 %v648, %v922
      %924 = vmatmul.f32.gmra.mxu0 %v780
      %v925 = vpop.f32.mrf.mxu0
      %v926 = vadd.f32 %v651, %v925
      %927 = vmatmul.f32.gmra.mxu0 %v783
      %v928 = vpop.f32.mrf.mxu0
      %v929 = vadd.f32 %v654, %v928
      %930 = vmatmul.f32.gmra.mxu0 %v786
      %v931 = vpop.f32.mrf.mxu0
      %v932 = vadd.f32 %v657, %v931
      %933 = vmatmul.f32.gmra.mxu0 %v789
      %v934 = vpop.f32.mrf.mxu0
      %v935 = vadd.f32 %v660, %v934
      %936 = vmatmul.f32.gmra.mxu0 %v792
      %v937 = vpop.f32.mrf.mxu0
      %v938 = vadd.f32 %v663, %v937
      %939 = vdwg.mxu0
      %v940 = vld [vmem:[%s273 + $0x13] sm:$0xff]
      %v941 = vld [vmem:[%s273 + $0x1b] sm:$0xff]
      %v942 = vld [vmem:[%s273 + $0x23] sm:$0xff]
      %v943 = vld [vmem:[%s273 + $0x2b] sm:$0xff]
      %v944 = vld [vmem:[%s273 + $0x33] sm:$0xff]
      %v945 = vld [vmem:[%s273 + $0x3b] sm:$0xff]
      %v946 = vld [vmem:[%s273 + $0x43] sm:$0xff]
      %v947 = vld [vmem:[%s273 + $0x4b] sm:$0xff]
      %v948 = vld [vmem:[%s273 + $0x53] sm:$0xff]
      %v949 = vld [vmem:[%s273 + $0x5b] sm:$0xff]
      %v950 = vld [vmem:[%s273 + $0x63] sm:$0xff]
      %v951 = vld [vmem:[%s273 + $0x6b] sm:$0xff]
      %v952 = vld [vmem:[%s273 + $0x73] sm:$0xff]
      %v953 = vld [vmem:[%s273 + $0x7b] sm:$0xff]
      %v954 = vld [vmem:[%s273 + $0x83] sm:$0xff]
      %v955 = vld [vmem:[%s273 + $0x8b] sm:$0xff]
      %v956 = vld [vmem:[%s273 + $0x93] sm:$0xff]
      %v957 = vld [vmem:[%s273 + $0x9b] sm:$0xff]
      %v958 = vld [vmem:[%s273 + $0xa3] sm:$0xff]
      %v959 = vld [vmem:[%s273 + $0xab] sm:$0xff]
      %v960 = vld [vmem:[%s273 + $0xb3] sm:$0xff]
      %v961 = vld [vmem:[%s273 + $0xbb] sm:$0xff]
      %v962 = vld [vmem:[%s273 + $0xc3] sm:$0xff]
      %v963 = vld [vmem:[%s273 + $0xcb] sm:$0xff]
      %v964 = vld [vmem:[%s273 + $0xd3] sm:$0xff]
      %v965 = vld [vmem:[%s273 + $0xdb] sm:$0xff]
      %v966 = vld [vmem:[%s273 + $0xe3] sm:$0xff]
      %v967 = vld [vmem:[%s273 + $0xeb] sm:$0xff]
      %v968 = vld [vmem:[%s273 + $0xf3] sm:$0xff]
      %v969 = vld [vmem:[%s273 + $0xfb] sm:$0xff]
      %v970 = vld [vmem:[%s273 + $0x103] sm:$0xff]
      %v971 = vld [vmem:[%s273 + $0x10b] sm:$0xff]
      %v972 = vld [vmem:[%s273 + $0x113] sm:$0xff]
      %v973 = vld [vmem:[%s273 + $0x11b] sm:$0xff]
      %v974 = vld [vmem:[%s273 + $0x123] sm:$0xff]
      %v975 = vld [vmem:[%s273 + $0x12b] sm:$0xff]
      %v976 = vld [vmem:[%s273 + $0x133] sm:$0xff]
      %v977 = vld [vmem:[%s273 + $0x13b] sm:$0xff]
      %v978 = vld [vmem:[%s273 + $0x143] sm:$0xff]
      %v979 = vld [vmem:[%s273 + $0x14b] sm:$0xff]
      %v980 = vld [vmem:[%s273 + $0x153] sm:$0xff]
      %v981 = vld [vmem:[%s273 + $0x15b] sm:$0xff]
      %v982 = vld [vmem:[%s273 + $0x163] sm:$0x3f]
      %s983 = scalar_lea.vmem %s1, 128
      %v984 = vld [vmem:[%s983] sm:$0xff]
      %v985 = vld [vmem:[%s983 + $0x8] sm:$0xff]
      %v986 = vld [vmem:[%s983 + $0x10] sm:$0xff]
      %v987 = vld [vmem:[%s983 + $0x18] sm:$0xff]
      %v988 = vld [vmem:[%s983 + $0x20] sm:$0xff]
      %v989 = vld [vmem:[%s983 + $0x28] sm:$0xff]
      %v990 = vld [vmem:[%s983 + $0x30] sm:$0xff]
      %v991 = vld [vmem:[%s983 + $0x38] sm:$0xff]
      %v993 = vsel %vm285, %v940, 0
      %v996 = vsel %vm285, %v941, 0
      %v999 = vsel %vm285, %v942, 0
      %v1002 = vsel %vm285, %v943, 0
      %v1005 = vsel %vm285, %v944, 0
      %v1008 = vsel %vm285, %v945, 0
      %v1011 = vsel %vm285, %v946, 0
      %v1014 = vsel %vm285, %v947, 0
      %v1017 = vsel %vm285, %v948, 0
      %v1020 = vsel %vm285, %v949, 0
      %v1023 = vsel %vm285, %v950, 0
      %v1026 = vsel %vm285, %v951, 0
      %v1029 = vsel %vm285, %v952, 0
      %v1032 = vsel %vm285, %v953, 0
      %v1035 = vsel %vm285, %v954, 0
      %v1038 = vsel %vm285, %v955, 0
      %v1041 = vsel %vm285, %v956, 0
      %v1044 = vsel %vm285, %v957, 0
      %v1047 = vsel %vm285, %v958, 0
      %v1050 = vsel %vm285, %v959, 0
      %v1053 = vsel %vm285, %v960, 0
      %v1056 = vsel %vm285, %v961, 0
      %v1059 = vsel %vm285, %v962, 0
      %v1062 = vsel %vm285, %v963, 0
      %v1065 = vsel %vm285, %v964, 0
      %v1068 = vsel %vm285, %v965, 0
      %v1071 = vsel %vm285, %v966, 0
      %v1074 = vsel %vm285, %v967, 0
      %v1077 = vsel %vm285, %v968, 0
      %v1080 = vsel %vm285, %v969, 0
      %v1083 = vsel %vm285, %v970, 0
      %v1086 = vsel %vm285, %v971, 0
      %v1089 = vsel %vm285, %v972, 0
      %v1092 = vsel %vm285, %v973, 0
      %v1095 = vsel %vm285, %v974, 0
      %v1098 = vsel %vm285, %v975, 0
      %v1101 = vsel %vm285, %v976, 0
      %v1104 = vsel %vm285, %v977, 0
      %v1107 = vsel %vm285, %v978, 0
      %v1110 = vsel %vm285, %v979, 0
      %v1113 = vsel %vm285, %v980, 0
      %v1116 = vsel %vm285, %v981, 0
      %v1119 = vsel %vm285, %v982, 0
      %1121 = vmatpush.msra.mxu0 0.0
      %1122 = vmatpush.msra.mxu0 0.0
      %1123 = vmatpush.msra.mxu0 0.0
      %1124 = vmatpush.msra.mxu0 0.0
      %1125 = vmatpush.msra.mxu0 0.0
      %1126 = vmatpush.msra.mxu0 0.0
      %1127 = vmatpush.msra.mxu0 0.0
      %1128 = vmatpush.msra.mxu0 0.0
      %1129 = vmatpush.msra.mxu0 %v991
      %1130 = vmatpush.msra.mxu0 %v990
      %1131 = vmatpush.msra.mxu0 %v989
      %1132 = vmatpush.msra.mxu0 %v988
      %1133 = vmatpush.msra.mxu0 %v987
      %1134 = vmatpush.msra.mxu0 %v986
      %1135 = vmatpush.msra.mxu0 %v985
      %1136 = vmatpush.msra.mxu0 %v984
      %1137 = vmatmul.f32.gmra.mxu0 %v993
      %v1138 = vpop.f32.mrf.mxu0
      %v1139 = vadd.f32 0.0, %v1138
      %1140 = vmatmul.f32.gmra.mxu0 %v996
      %v1141 = vpop.f32.mrf.mxu0
      %v1142 = vadd.f32 0.0, %v1141
      %1143 = vmatmul.f32.gmra.mxu0 %v999
      %v1144 = vpop.f32.mrf.mxu0
      %v1145 = vadd.f32 0.0, %v1144
      %1146 = vmatmul.f32.gmra.mxu0 %v1002
      %v1147 = vpop.f32.mrf.mxu0
      %v1148 = vadd.f32 0.0, %v1147
      %1149 = vmatmul.f32.gmra.mxu0 %v1005
      %v1150 = vpop.f32.mrf.mxu0
      %v1151 = vadd.f32 0.0, %v1150
      %1152 = vmatmul.f32.gmra.mxu0 %v1008
      %v1153 = vpop.f32.mrf.mxu0
      %v1154 = vadd.f32 0.0, %v1153
      %1155 = vmatmul.f32.gmra.mxu0 %v1011
      %v1156 = vpop.f32.mrf.mxu0
      %v1157 = vadd.f32 0.0, %v1156
      %1158 = vmatmul.f32.gmra.mxu0 %v1014
      %v1159 = vpop.f32.mrf.mxu0
      %v1160 = vadd.f32 0.0, %v1159
      %1161 = vmatmul.f32.gmra.mxu0 %v1017
      %v1162 = vpop.f32.mrf.mxu0
      %v1163 = vadd.f32 0.0, %v1162
      %1164 = vmatmul.f32.gmra.mxu0 %v1020
      %v1165 = vpop.f32.mrf.mxu0
      %v1166 = vadd.f32 0.0, %v1165
      %1167 = vmatmul.f32.gmra.mxu0 %v1023
      %v1168 = vpop.f32.mrf.mxu0
      %v1169 = vadd.f32 0.0, %v1168
      %1170 = vmatmul.f32.gmra.mxu0 %v1026
      %v1171 = vpop.f32.mrf.mxu0
      %v1172 = vadd.f32 0.0, %v1171
      %1173 = vmatmul.f32.gmra.mxu0 %v1029
      %v1174 = vpop.f32.mrf.mxu0
      %v1175 = vadd.f32 0.0, %v1174
      %1176 = vmatmul.f32.gmra.mxu0 %v1032
      %v1177 = vpop.f32.mrf.mxu0
      %v1178 = vadd.f32 0.0, %v1177
      %1179 = vmatmul.f32.gmra.mxu0 %v1035
      %v1180 = vpop.f32.mrf.mxu0
      %v1181 = vadd.f32 0.0, %v1180
      %1182 = vmatmul.f32.gmra.mxu0 %v1038
      %v1183 = vpop.f32.mrf.mxu0
      %v1184 = vadd.f32 0.0, %v1183
      %1185 = vmatmul.f32.gmra.mxu0 %v1041
      %v1186 = vpop.f32.mrf.mxu0
      %v1187 = vadd.f32 0.0, %v1186
      %1188 = vmatmul.f32.gmra.mxu0 %v1044
      %v1189 = vpop.f32.mrf.mxu0
      %v1190 = vadd.f32 0.0, %v1189
      %1191 = vmatmul.f32.gmra.mxu0 %v1047
      %v1192 = vpop.f32.mrf.mxu0
      %v1193 = vadd.f32 0.0, %v1192
      %1194 = vmatmul.f32.gmra.mxu0 %v1050
      %v1195 = vpop.f32.mrf.mxu0
      %v1196 = vadd.f32 0.0, %v1195
      %1197 = vmatmul.f32.gmra.mxu0 %v1053
      %v1198 = vpop.f32.mrf.mxu0
      %v1199 = vadd.f32 0.0, %v1198
      %1200 = vmatmul.f32.gmra.mxu0 %v1056
      %v1201 = vpop.f32.mrf.mxu0
      %v1202 = vadd.f32 0.0, %v1201
      %1203 = vmatmul.f32.gmra.mxu0 %v1059
      %v1204 = vpop.f32.mrf.mxu0
      %v1205 = vadd.f32 0.0, %v1204
      %1206 = vmatmul.f32.gmra.mxu0 %v1062
      %v1207 = vpop.f32.mrf.mxu0
      %v1208 = vadd.f32 0.0, %v1207
      %1209 = vmatmul.f32.gmra.mxu0 %v1065
      %v1210 = vpop.f32.mrf.mxu0
      %v1211 = vadd.f32 0.0, %v1210
      %1212 = vmatmul.f32.gmra.mxu0 %v1068
      %v1213 = vpop.f32.mrf.mxu0
      %v1214 = vadd.f32 0.0, %v1213
      %1215 = vmatmul.f32.gmra.mxu0 %v1071
      %v1216 = vpop.f32.mrf.mxu0
      %v1217 = vadd.f32 0.0, %v1216
      %1218 = vmatmul.f32.gmra.mxu0 %v1074
      %v1219 = vpop.f32.mrf.mxu0
      %v1220 = vadd.f32 0.0, %v1219
      %1221 = vmatmul.f32.gmra.mxu0 %v1077
      %v1222 = vpop.f32.mrf.mxu0
      %v1223 = vadd.f32 0.0, %v1222
      %1224 = vmatmul.f32.gmra.mxu0 %v1080
      %v1225 = vpop.f32.mrf.mxu0
      %v1226 = vadd.f32 0.0, %v1225
      %1227 = vmatmul.f32.gmra.mxu0 %v1083
      %v1228 = vpop.f32.mrf.mxu0
      %v1229 = vadd.f32 0.0, %v1228
      %1230 = vmatmul.f32.gmra.mxu0 %v1086
      %v1231 = vpop.f32.mrf.mxu0
      %v1232 = vadd.f32 0.0, %v1231
      %1233 = vmatmul.f32.gmra.mxu0 %v1089
      %v1234 = vpop.f32.mrf.mxu0
      %v1235 = vadd.f32 0.0, %v1234
      %1236 = vmatmul.f32.gmra.mxu0 %v1092
      %v1237 = vpop.f32.mrf.mxu0
      %v1238 = vadd.f32 0.0, %v1237
      %1239 = vmatmul.f32.gmra.mxu0 %v1095
      %v1240 = vpop.f32.mrf.mxu0
      %v1241 = vadd.f32 0.0, %v1240
      %1242 = vmatmul.f32.gmra.mxu0 %v1098
      %v1243 = vpop.f32.mrf.mxu0
      %v1244 = vadd.f32 0.0, %v1243
      %1245 = vmatmul.f32.gmra.mxu0 %v1101
      %v1246 = vpop.f32.mrf.mxu0
      %v1247 = vadd.f32 0.0, %v1246
      %1248 = vmatmul.f32.gmra.mxu0 %v1104
      %v1249 = vpop.f32.mrf.mxu0
      %v1250 = vadd.f32 0.0, %v1249
      %1251 = vmatmul.f32.gmra.mxu0 %v1107
      %v1252 = vpop.f32.mrf.mxu0
      %v1253 = vadd.f32 0.0, %v1252
      %1254 = vmatmul.f32.gmra.mxu0 %v1110
      %v1255 = vpop.f32.mrf.mxu0
      %v1256 = vadd.f32 0.0, %v1255
      %1257 = vmatmul.f32.gmra.mxu0 %v1113
      %v1258 = vpop.f32.mrf.mxu0
      %v1259 = vadd.f32 0.0, %v1258
      %1260 = vmatmul.f32.gmra.mxu0 %v1116
      %v1261 = vpop.f32.mrf.mxu0
      %v1262 = vadd.f32 0.0, %v1261
      %1263 = vmatmul.f32.gmra.mxu0 %v1119
      %v1264 = vpop.f32.mrf.mxu0
      %v1265 = vadd.f32 0.0, %v1264
      %1266 = vdwg.mxu0
      %v1267 = vadd.f32 %v812, %v1139
      %v1268 = vadd.f32 %v815, %v1142
      %v1269 = vadd.f32 %v818, %v1145
      %v1270 = vadd.f32 %v821, %v1148
      %v1271 = vadd.f32 %v824, %v1151
      %v1272 = vadd.f32 %v827, %v1154
      %v1273 = vadd.f32 %v830, %v1157
      %v1274 = vadd.f32 %v833, %v1160
      %v1275 = vadd.f32 %v836, %v1163
      %v1276 = vadd.f32 %v839, %v1166
      %v1277 = vadd.f32 %v842, %v1169
      %v1278 = vadd.f32 %v845, %v1172
      %v1279 = vadd.f32 %v848, %v1175
      %v1280 = vadd.f32 %v851, %v1178
      %v1281 = vadd.f32 %v854, %v1181
      %v1282 = vadd.f32 %v857, %v1184
      %v1283 = vadd.f32 %v860, %v1187
      %v1284 = vadd.f32 %v863, %v1190
      %v1285 = vadd.f32 %v866, %v1193
      %v1286 = vadd.f32 %v869, %v1196
      %v1287 = vadd.f32 %v872, %v1199
      %v1288 = vadd.f32 %v875, %v1202
      %v1289 = vadd.f32 %v878, %v1205
      %v1290 = vadd.f32 %v881, %v1208
      %v1291 = vadd.f32 %v884, %v1211
      %v1292 = vadd.f32 %v887, %v1214
      %v1293 = vadd.f32 %v890, %v1217
      %v1294 = vadd.f32 %v893, %v1220
      %v1295 = vadd.f32 %v896, %v1223
      %v1296 = vadd.f32 %v899, %v1226
      %v1297 = vadd.f32 %v902, %v1229
      %v1298 = vadd.f32 %v905, %v1232
      %v1299 = vadd.f32 %v908, %v1235
      %v1300 = vadd.f32 %v911, %v1238
      %v1301 = vadd.f32 %v914, %v1241
      %v1302 = vadd.f32 %v917, %v1244
      %v1303 = vadd.f32 %v920, %v1247
      %v1304 = vadd.f32 %v923, %v1250
      %v1305 = vadd.f32 %v926, %v1253
      %v1306 = vadd.f32 %v929, %v1256
      %v1307 = vadd.f32 %v932, %v1259
      %v1308 = vadd.f32 %v935, %v1262
      %v1309 = vadd.f32 %v938, %v1265
      %v1310 = vld [vmem:[%s273 + $0x14] sm:$0xff]
      %v1311 = vld [vmem:[%s273 + $0x1c] sm:$0xff]
      %v1312 = vld [vmem:[%s273 + $0x24] sm:$0xff]
      %v1313 = vld [vmem:[%s273 + $0x2c] sm:$0xff]
      %v1314 = vld [vmem:[%s273 + $0x34] sm:$0xff]
      %v1315 = vld [vmem:[%s273 + $0x3c] sm:$0xff]
      %v1316 = vld [vmem:[%s273 + $0x44] sm:$0xff]
      %v1317 = vld [vmem:[%s273 + $0x4c] sm:$0xff]
      %v1318 = vld [vmem:[%s273 + $0x54] sm:$0xff]
      %v1319 = vld [vmem:[%s273 + $0x5c] sm:$0xff]
      %v1320 = vld [vmem:[%s273 + $0x64] sm:$0xff]
      %v1321 = vld [vmem:[%s273 + $0x6c] sm:$0xff]
      %v1322 = vld [vmem:[%s273 + $0x74] sm:$0xff]
      %v1323 = vld [vmem:[%s273 + $0x7c] sm:$0xff]
      %v1324 = vld [vmem:[%s273 + $0x84] sm:$0xff]
      %v1325 = vld [vmem:[%s273 + $0x8c] sm:$0xff]
      %v1326 = vld [vmem:[%s273 + $0x94] sm:$0xff]
      %v1327 = vld [vmem:[%s273 + $0x9c] sm:$0xff]
      %v1328 = vld [vmem:[%s273 + $0xa4] sm:$0xff]
      %v1329 = vld [vmem:[%s273 + $0xac] sm:$0xff]
      %v1330 = vld [vmem:[%s273 + $0xb4] sm:$0xff]
      %v1331 = vld [vmem:[%s273 + $0xbc] sm:$0xff]
      %v1332 = vld [vmem:[%s273 + $0xc4] sm:$0xff]
      %v1333 = vld [vmem:[%s273 + $0xcc] sm:$0xff]
      %v1334 = vld [vmem:[%s273 + $0xd4] sm:$0xff]
      %v1335 = vld [vmem:[%s273 + $0xdc] sm:$0xff]
      %v1336 = vld [vmem:[%s273 + $0xe4] sm:$0xff]
      %v1337 = vld [vmem:[%s273 + $0xec] sm:$0xff]
      %v1338 = vld [vmem:[%s273 + $0xf4] sm:$0xff]
      %v1339 = vld [vmem:[%s273 + $0xfc] sm:$0xff]
      %v1340 = vld [vmem:[%s273 + $0x104] sm:$0xff]
      %v1341 = vld [vmem:[%s273 + $0x10c] sm:$0xff]
      %v1342 = vld [vmem:[%s273 + $0x114] sm:$0xff]
      %v1343 = vld [vmem:[%s273 + $0x11c] sm:$0xff]
      %v1344 = vld [vmem:[%s273 + $0x124] sm:$0xff]
      %v1345 = vld [vmem:[%s273 + $0x12c] sm:$0xff]
      %v1346 = vld [vmem:[%s273 + $0x134] sm:$0xff]
      %v1347 = vld [vmem:[%s273 + $0x13c] sm:$0xff]
      %v1348 = vld [vmem:[%s273 + $0x144] sm:$0xff]
      %v1349 = vld [vmem:[%s273 + $0x14c] sm:$0xff]
      %v1350 = vld [vmem:[%s273 + $0x154] sm:$0xff]
      %v1351 = vld [vmem:[%s273 + $0x15c] sm:$0xff]
      %v1352 = vld [vmem:[%s273 + $0x164] sm:$0x3f]
      %s1353 = scalar_lea.vmem %s1, 192
      %v1354 = vld [vmem:[%s1353] sm:$0xff]
      %v1355 = vld [vmem:[%s1353 + $0x8] sm:$0xff]
      %v1356 = vld [vmem:[%s1353 + $0x10] sm:$0xff]
      %v1357 = vld [vmem:[%s1353 + $0x18] sm:$0xff]
      %v1358 = vld [vmem:[%s1353 + $0x20] sm:$0xff]
      %v1359 = vld [vmem:[%s1353 + $0x28] sm:$0xff]
      %v1360 = vld [vmem:[%s1353 + $0x30] sm:$0xff]
      %v1361 = vld [vmem:[%s1353 + $0x38] sm:$0xff]
      %v1363 = vsel %vm285, %v1310, 0
      %v1366 = vsel %vm285, %v1311, 0
      %v1369 = vsel %vm285, %v1312, 0
      %v1372 = vsel %vm285, %v1313, 0
      %v1375 = vsel %vm285, %v1314, 0
      %v1378 = vsel %vm285, %v1315, 0
      %v1381 = vsel %vm285, %v1316, 0
      %v1384 = vsel %vm285, %v1317, 0
      %v1387 = vsel %vm285, %v1318, 0
      %v1390 = vsel %vm285, %v1319, 0
      %v1393 = vsel %vm285, %v1320, 0
      %v1396 = vsel %vm285, %v1321, 0
      %v1399 = vsel %vm285, %v1322, 0
      %v1402 = vsel %vm285, %v1323, 0
      %v1405 = vsel %vm285, %v1324, 0
      %v1408 = vsel %vm285, %v1325, 0
      %v1411 = vsel %vm285, %v1326, 0
      %v1414 = vsel %vm285, %v1327, 0
      %v1417 = vsel %vm285, %v1328, 0
      %v1420 = vsel %vm285, %v1329, 0
      %v1423 = vsel %vm285, %v1330, 0
      %v1426 = vsel %vm285, %v1331, 0
      %v1429 = vsel %vm285, %v1332, 0
      %v1432 = vsel %vm285, %v1333, 0
      %v1435 = vsel %vm285, %v1334, 0
      %v1438 = vsel %vm285, %v1335, 0
      %v1441 = vsel %vm285, %v1336, 0
      %v1444 = vsel %vm285, %v1337, 0
      %v1447 = vsel %vm285, %v1338, 0
      %v1450 = vsel %vm285, %v1339, 0
      %v1453 = vsel %vm285, %v1340, 0
      %v1456 = vsel %vm285, %v1341, 0
      %v1459 = vsel %vm285, %v1342, 0
      %v1462 = vsel %vm285, %v1343, 0
      %v1465 = vsel %vm285, %v1344, 0
      %v1468 = vsel %vm285, %v1345, 0
      %v1471 = vsel %vm285, %v1346, 0
      %v1474 = vsel %vm285, %v1347, 0
      %v1477 = vsel %vm285, %v1348, 0
      %v1480 = vsel %vm285, %v1349, 0
      %v1483 = vsel %vm285, %v1350, 0
      %v1486 = vsel %vm285, %v1351, 0
      %v1489 = vsel %vm285, %v1352, 0
      %1491 = vmatpush.msra.mxu0 0.0
      %1492 = vmatpush.msra.mxu0 0.0
      %1493 = vmatpush.msra.mxu0 0.0
      %1494 = vmatpush.msra.mxu0 0.0
      %1495 = vmatpush.msra.mxu0 0.0
      %1496 = vmatpush.msra.mxu0 0.0
      %1497 = vmatpush.msra.mxu0 0.0
      %1498 = vmatpush.msra.mxu0 0.0
      %1499 = vmatpush.msra.mxu0 %v1361
      %1500 = vmatpush.msra.mxu0 %v1360
      %1501 = vmatpush.msra.mxu0 %v1359
      %1502 = vmatpush.msra.mxu0 %v1358
      %1503 = vmatpush.msra.mxu0 %v1357
      %1504 = vmatpush.msra.mxu0 %v1356
      %1505 = vmatpush.msra.mxu0 %v1355
      %1506 = vmatpush.msra.mxu0 %v1354
      %1507 = vmatmul.f32.gmra.mxu0 %v1363
      %v1508 = vpop.f32.mrf.mxu0
      %v1509 = vadd.f32 0.0, %v1508
      %1510 = vmatmul.f32.gmra.mxu0 %v1366
      %v1511 = vpop.f32.mrf.mxu0
      %v1512 = vadd.f32 0.0, %v1511
      %1513 = vmatmul.f32.gmra.mxu0 %v1369
      %v1514 = vpop.f32.mrf.mxu0
      %v1515 = vadd.f32 0.0, %v1514
      %1516 = vmatmul.f32.gmra.mxu0 %v1372
      %v1517 = vpop.f32.mrf.mxu0
      %v1518 = vadd.f32 0.0, %v1517
      %1519 = vmatmul.f32.gmra.mxu0 %v1375
      %v1520 = vpop.f32.mrf.mxu0
      %v1521 = vadd.f32 0.0, %v1520
      %1522 = vmatmul.f32.gmra.mxu0 %v1378
      %v1523 = vpop.f32.mrf.mxu0
      %v1524 = vadd.f32 0.0, %v1523
      %1525 = vmatmul.f32.gmra.mxu0 %v1381
      %v1526 = vpop.f32.mrf.mxu0
      %v1527 = vadd.f32 0.0, %v1526
      %1528 = vmatmul.f32.gmra.mxu0 %v1384
      %v1529 = vpop.f32.mrf.mxu0
      %v1530 = vadd.f32 0.0, %v1529
      %1531 = vmatmul.f32.gmra.mxu0 %v1387
      %v1532 = vpop.f32.mrf.mxu0
      %v1533 = vadd.f32 0.0, %v1532
      %1534 = vmatmul.f32.gmra.mxu0 %v1390
      %v1535 = vpop.f32.mrf.mxu0
      %v1536 = vadd.f32 0.0, %v1535
      %1537 = vmatmul.f32.gmra.mxu0 %v1393
      %v1538 = vpop.f32.mrf.mxu0
      %v1539 = vadd.f32 0.0, %v1538
      %1540 = vmatmul.f32.gmra.mxu0 %v1396
      %v1541 = vpop.f32.mrf.mxu0
      %v1542 = vadd.f32 0.0, %v1541
      %1543 = vmatmul.f32.gmra.mxu0 %v1399
      %v1544 = vpop.f32.mrf.mxu0
      %v1545 = vadd.f32 0.0, %v1544
      %1546 = vmatmul.f32.gmra.mxu0 %v1402
      %v1547 = vpop.f32.mrf.mxu0
      %v1548 = vadd.f32 0.0, %v1547
      %1549 = vmatmul.f32.gmra.mxu0 %v1405
      %v1550 = vpop.f32.mrf.mxu0
      %v1551 = vadd.f32 0.0, %v1550
      %1552 = vmatmul.f32.gmra.mxu0 %v1408
      %v1553 = vpop.f32.mrf.mxu0
      %v1554 = vadd.f32 0.0, %v1553
      %1555 = vmatmul.f32.gmra.mxu0 %v1411
      %v1556 = vpop.f32.mrf.mxu0
      %v1557 = vadd.f32 0.0, %v1556
      %1558 = vmatmul.f32.gmra.mxu0 %v1414
      %v1559 = vpop.f32.mrf.mxu0
      %v1560 = vadd.f32 0.0, %v1559
      %1561 = vmatmul.f32.gmra.mxu0 %v1417
      %v1562 = vpop.f32.mrf.mxu0
      %v1563 = vadd.f32 0.0, %v1562
      %1564 = vmatmul.f32.gmra.mxu0 %v1420
      %v1565 = vpop.f32.mrf.mxu0
      %v1566 = vadd.f32 0.0, %v1565
      %1567 = vmatmul.f32.gmra.mxu0 %v1423
      %v1568 = vpop.f32.mrf.mxu0
      %v1569 = vadd.f32 0.0, %v1568
      %1570 = vmatmul.f32.gmra.mxu0 %v1426
      %v1571 = vpop.f32.mrf.mxu0
      %v1572 = vadd.f32 0.0, %v1571
      %1573 = vmatmul.f32.gmra.mxu0 %v1429
      %v1574 = vpop.f32.mrf.mxu0
      %v1575 = vadd.f32 0.0, %v1574
      %1576 = vmatmul.f32.gmra.mxu0 %v1432
      %v1577 = vpop.f32.mrf.mxu0
      %v1578 = vadd.f32 0.0, %v1577
      %1579 = vmatmul.f32.gmra.mxu0 %v1435
      %v1580 = vpop.f32.mrf.mxu0
      %v1581 = vadd.f32 0.0, %v1580
      %1582 = vmatmul.f32.gmra.mxu0 %v1438
      %v1583 = vpop.f32.mrf.mxu0
      %v1584 = vadd.f32 0.0, %v1583
      %1585 = vmatmul.f32.gmra.mxu0 %v1441
      %v1586 = vpop.f32.mrf.mxu0
      %v1587 = vadd.f32 0.0, %v1586
      %1588 = vmatmul.f32.gmra.mxu0 %v1444
      %v1589 = vpop.f32.mrf.mxu0
      %v1590 = vadd.f32 0.0, %v1589
      %1591 = vmatmul.f32.gmra.mxu0 %v1447
      %v1592 = vpop.f32.mrf.mxu0
      %v1593 = vadd.f32 0.0, %v1592
      %1594 = vmatmul.f32.gmra.mxu0 %v1450
      %v1595 = vpop.f32.mrf.mxu0
      %v1596 = vadd.f32 0.0, %v1595
      %1597 = vmatmul.f32.gmra.mxu0 %v1453
      %v1598 = vpop.f32.mrf.mxu0
      %v1599 = vadd.f32 0.0, %v1598
      %1600 = vmatmul.f32.gmra.mxu0 %v1456
      %v1601 = vpop.f32.mrf.mxu0
      %v1602 = vadd.f32 0.0, %v1601
      %1603 = vmatmul.f32.gmra.mxu0 %v1459
      %v1604 = vpop.f32.mrf.mxu0
      %v1605 = vadd.f32 0.0, %v1604
      %1606 = vmatmul.f32.gmra.mxu0 %v1462
      %v1607 = vpop.f32.mrf.mxu0
      %v1608 = vadd.f32 0.0, %v1607
      %1609 = vmatmul.f32.gmra.mxu0 %v1465
      %v1610 = vpop.f32.mrf.mxu0
      %v1611 = vadd.f32 0.0, %v1610
      %1612 = vmatmul.f32.gmra.mxu0 %v1468
      %v1613 = vpop.f32.mrf.mxu0
      %v1614 = vadd.f32 0.0, %v1613
      %1615 = vmatmul.f32.gmra.mxu0 %v1471
      %v1616 = vpop.f32.mrf.mxu0
      %v1617 = vadd.f32 0.0, %v1616
      %1618 = vmatmul.f32.gmra.mxu0 %v1474
      %v1619 = vpop.f32.mrf.mxu0
      %v1620 = vadd.f32 0.0, %v1619
      %1621 = vmatmul.f32.gmra.mxu0 %v1477
      %v1622 = vpop.f32.mrf.mxu0
      %v1623 = vadd.f32 0.0, %v1622
      %1624 = vmatmul.f32.gmra.mxu0 %v1480
      %v1625 = vpop.f32.mrf.mxu0
      %v1626 = vadd.f32 0.0, %v1625
      %1627 = vmatmul.f32.gmra.mxu0 %v1483
      %v1628 = vpop.f32.mrf.mxu0
      %v1629 = vadd.f32 0.0, %v1628
      %1630 = vmatmul.f32.gmra.mxu0 %v1486
      %v1631 = vpop.f32.mrf.mxu0
      %v1632 = vadd.f32 0.0, %v1631
      %1633 = vmatmul.f32.gmra.mxu0 %v1489
      %v1634 = vpop.f32.mrf.mxu0
      %v1635 = vadd.f32 0.0, %v1634
      %1636 = vdwg.mxu0
      %v1637 = vadd.f32 %v1267, %v1509
      %v1638 = vadd.f32 %v1268, %v1512
      %v1639 = vadd.f32 %v1269, %v1515
      %v1640 = vadd.f32 %v1270, %v1518
      %v1641 = vadd.f32 %v1271, %v1521
      %v1642 = vadd.f32 %v1272, %v1524
      %v1643 = vadd.f32 %v1273, %v1527
      %v1644 = vadd.f32 %v1274, %v1530
      %v1645 = vadd.f32 %v1275, %v1533
      %v1646 = vadd.f32 %v1276, %v1536
      %v1647 = vadd.f32 %v1277, %v1539
      %v1648 = vadd.f32 %v1278, %v1542
      %v1649 = vadd.f32 %v1279, %v1545
      %v1650 = vadd.f32 %v1280, %v1548
      %v1651 = vadd.f32 %v1281, %v1551
      %v1652 = vadd.f32 %v1282, %v1554
      %v1653 = vadd.f32 %v1283, %v1557
      %v1654 = vadd.f32 %v1284, %v1560
      %v1655 = vadd.f32 %v1285, %v1563
      %v1656 = vadd.f32 %v1286, %v1566
      %v1657 = vadd.f32 %v1287, %v1569
      %v1658 = vadd.f32 %v1288, %v1572
      %v1659 = vadd.f32 %v1289, %v1575
      %v1660 = vadd.f32 %v1290, %v1578
      %v1661 = vadd.f32 %v1291, %v1581
      %v1662 = vadd.f32 %v1292, %v1584
      %v1663 = vadd.f32 %v1293, %v1587
      %v1664 = vadd.f32 %v1294, %v1590
      %v1665 = vadd.f32 %v1295, %v1593
      %v1666 = vadd.f32 %v1296, %v1596
      %v1667 = vadd.f32 %v1297, %v1599
      %v1668 = vadd.f32 %v1298, %v1602
      %v1669 = vadd.f32 %v1299, %v1605
      %v1670 = vadd.f32 %v1300, %v1608
      %v1671 = vadd.f32 %v1301, %v1611
      %v1672 = vadd.f32 %v1302, %v1614
      %v1673 = vadd.f32 %v1303, %v1617
      %v1674 = vadd.f32 %v1304, %v1620
      %v1675 = vadd.f32 %v1305, %v1623
      %v1676 = vadd.f32 %v1306, %v1626
      %v1677 = vadd.f32 %v1307, %v1629
      %v1678 = vadd.f32 %v1308, %v1632
      %v1679 = vadd.f32 %v1309, %v1635
      %v1680 = vld [vmem:[%s2] sm:$0x1]
      %v1682 = vperm.slane %v1680, 0
      %v1684 = vadd.f32 %v1637, %v1682
      %v1685 = vadd.f32 %v1638, %v1682
      %v1686 = vadd.f32 %v1639, %v1682
      %v1687 = vadd.f32 %v1640, %v1682
      %v1688 = vadd.f32 %v1641, %v1682
      %v1689 = vadd.f32 %v1642, %v1682
      %v1690 = vadd.f32 %v1643, %v1682
      %v1691 = vadd.f32 %v1644, %v1682
      %v1692 = vadd.f32 %v1645, %v1682
      %v1693 = vadd.f32 %v1646, %v1682
      %v1694 = vadd.f32 %v1647, %v1682
      %v1695 = vadd.f32 %v1648, %v1682
      %v1696 = vadd.f32 %v1649, %v1682
      %v1697 = vadd.f32 %v1650, %v1682
      %v1698 = vadd.f32 %v1651, %v1682
      %v1699 = vadd.f32 %v1652, %v1682
      %v1700 = vadd.f32 %v1653, %v1682
      %v1701 = vadd.f32 %v1654, %v1682
      %v1702 = vadd.f32 %v1655, %v1682
      %v1703 = vadd.f32 %v1656, %v1682
      %v1704 = vadd.f32 %v1657, %v1682
      %v1705 = vadd.f32 %v1658, %v1682
      %v1706 = vadd.f32 %v1659, %v1682
      %v1707 = vadd.f32 %v1660, %v1682
      %v1708 = vadd.f32 %v1661, %v1682
      %v1709 = vadd.f32 %v1662, %v1682
      %v1710 = vadd.f32 %v1663, %v1682
      %v1711 = vadd.f32 %v1664, %v1682
      %v1712 = vadd.f32 %v1665, %v1682
      %v1713 = vadd.f32 %v1666, %v1682
      %v1714 = vadd.f32 %v1667, %v1682
      %v1715 = vadd.f32 %v1668, %v1682
      %v1716 = vadd.f32 %v1669, %v1682
      %v1717 = vadd.f32 %v1670, %v1682
      %v1718 = vadd.f32 %v1671, %v1682
      %v1719 = vadd.f32 %v1672, %v1682
      %v1720 = vadd.f32 %v1673, %v1682
      %v1721 = vadd.f32 %v1674, %v1682
      %v1722 = vadd.f32 %v1675, %v1682
      %v1723 = vadd.f32 %v1676, %v1682
      %v1724 = vadd.f32 %v1677, %v1682
      %v1725 = vadd.f32 %v1678, %v1682
      %v1726 = vadd.f32 %v1679, %v1682
      %v1727 = vmax.f32 %v1684, 0.0
      %v1728 = vmax.f32 %v1685, 0.0
      %v1729 = vmax.f32 %v1686, 0.0
      %v1730 = vmax.f32 %v1687, 0.0
      %v1731 = vmax.f32 %v1688, 0.0
      %v1732 = vmax.f32 %v1689, 0.0
      %v1733 = vmax.f32 %v1690, 0.0
      %v1734 = vmax.f32 %v1691, 0.0
      %v1735 = vmax.f32 %v1692, 0.0
      %v1736 = vmax.f32 %v1693, 0.0
      %v1737 = vmax.f32 %v1694, 0.0
      %v1738 = vmax.f32 %v1695, 0.0
      %v1739 = vmax.f32 %v1696, 0.0
      %v1740 = vmax.f32 %v1697, 0.0
      %v1741 = vmax.f32 %v1698, 0.0
      %v1742 = vmax.f32 %v1699, 0.0
      %v1743 = vmax.f32 %v1700, 0.0
      %v1744 = vmax.f32 %v1701, 0.0
      %v1745 = vmax.f32 %v1702, 0.0
      %v1746 = vmax.f32 %v1703, 0.0
      %v1747 = vmax.f32 %v1704, 0.0
      %v1748 = vmax.f32 %v1705, 0.0
      %v1749 = vmax.f32 %v1706, 0.0
      %v1750 = vmax.f32 %v1707, 0.0
      %v1751 = vmax.f32 %v1708, 0.0
      %v1752 = vmax.f32 %v1709, 0.0
      %v1753 = vmax.f32 %v1710, 0.0
      %v1754 = vmax.f32 %v1711, 0.0
      %v1755 = vmax.f32 %v1712, 0.0
      %v1756 = vmax.f32 %v1713, 0.0
      %v1757 = vmax.f32 %v1714, 0.0
      %v1758 = vmax.f32 %v1715, 0.0
      %v1759 = vmax.f32 %v1716, 0.0
      %v1760 = vmax.f32 %v1717, 0.0
      %v1761 = vmax.f32 %v1718, 0.0
      %v1762 = vmax.f32 %v1719, 0.0
      %v1763 = vmax.f32 %v1720, 0.0
      %v1764 = vmax.f32 %v1721, 0.0
      %v1765 = vmax.f32 %v1722, 0.0
      %v1766 = vmax.f32 %v1723, 0.0
      %v1767 = vmax.f32 %v1724, 0.0
      %v1768 = vmax.f32 %v1725, 0.0
      %v1769 = vmax.f32 %v1726, 0.0
      %1770 = vst.msk [vmem:[#allocation2] sm:$0xff] %vm279, %v1727
      %1771 = vst.msk [vmem:[#allocation2 + $0x8] sm:$0xff] %vm279, %v1728
      %1772 = vst.msk [vmem:[#allocation2 + $0x10] sm:$0xff] %vm279, %v1729
      %1773 = vst.msk [vmem:[#allocation2 + $0x18] sm:$0xff] %vm279, %v1730
      %1774 = vst.msk [vmem:[#allocation2 + $0x20] sm:$0xff] %vm279, %v1731
      %1775 = vst.msk [vmem:[#allocation2 + $0x28] sm:$0xff] %vm279, %v1732
      %1776 = vst.msk [vmem:[#allocation2 + $0x30] sm:$0xff] %vm279, %v1733
      %1777 = vst.msk [vmem:[#allocation2 + $0x38] sm:$0xff] %vm279, %v1734
      %1778 = vst.msk [vmem:[#allocation2 + $0x40] sm:$0xff] %vm279, %v1735
      %1779 = vst.msk [vmem:[#allocation2 + $0x48] sm:$0xff] %vm279, %v1736
      %1780 = vst.msk [vmem:[#allocation2 + $0x50] sm:$0xff] %vm279, %v1737
      %1781 = vst.msk [vmem:[#allocation2 + $0x58] sm:$0xff] %vm279, %v1738
      %1782 = vst.msk [vmem:[#allocation2 + $0x60] sm:$0xff] %vm279, %v1739
      %1783 = vst.msk [vmem:[#allocation2 + $0x68] sm:$0xff] %vm279, %v1740
      %1784 = vst.msk [vmem:[#allocation2 + $0x70] sm:$0xff] %vm279, %v1741
      %1785 = vst.msk [vmem:[#allocation2 + $0x78] sm:$0xff] %vm279, %v1742
      %1786 = vst.msk [vmem:[#allocation2 + $0x80] sm:$0xff] %vm279, %v1743
      %1787 = vst.msk [vmem:[#allocation2 + $0x88] sm:$0xff] %vm279, %v1744
      %1788 = vst.msk [vmem:[#allocation2 + $0x90] sm:$0xff] %vm279, %v1745
      %1789 = vst.msk [vmem:[#allocation2 + $0x98] sm:$0xff] %vm279, %v1746
      %1790 = vst.msk [vmem:[#allocation2 + $0xa0] sm:$0xff] %vm279, %v1747
      %1791 = vst.msk [vmem:[#allocation2 + $0xa8] sm:$0xff] %vm279, %v1748
      %1792 = vst.msk [vmem:[#allocation2 + $0xb0] sm:$0xff] %vm279, %v1749
      %1793 = vst.msk [vmem:[#allocation2 + $0xb8] sm:$0xff] %vm279, %v1750
      %1794 = vst.msk [vmem:[#allocation2 + $0xc0] sm:$0xff] %vm279, %v1751
      %1795 = vst.msk [vmem:[#allocation2 + $0xc8] sm:$0xff] %vm279, %v1752
      %1796 = vst.msk [vmem:[#allocation2 + $0xd0] sm:$0xff] %vm279, %v1753
      %1797 = vst.msk [vmem:[#allocation2 + $0xd8] sm:$0xff] %vm279, %v1754
      %1798 = vst.msk [vmem:[#allocation2 + $0xe0] sm:$0xff] %vm279, %v1755
      %1799 = vst.msk [vmem:[#allocation2 + $0xe8] sm:$0xff] %vm279, %v1756
      %1800 = vst.msk [vmem:[#allocation2 + $0xf0] sm:$0xff] %vm279, %v1757
      %1801 = vst.msk [vmem:[#allocation2 + $0xf8] sm:$0xff] %vm279, %v1758
      %1802 = vst.msk [vmem:[#allocation2 + $0x100] sm:$0xff] %vm279, %v1759
      %1803 = vst.msk [vmem:[#allocation2 + $0x108] sm:$0xff] %vm279, %v1760
      %1804 = vst.msk [vmem:[#allocation2 + $0x110] sm:$0xff] %vm279, %v1761
      %1805 = vst.msk [vmem:[#allocation2 + $0x118] sm:$0xff] %vm279, %v1762
      %1806 = vst.msk [vmem:[#allocation2 + $0x120] sm:$0xff] %vm279, %v1763
      %1807 = vst.msk [vmem:[#allocation2 + $0x128] sm:$0xff] %vm279, %v1764
      %1808 = vst.msk [vmem:[#allocation2 + $0x130] sm:$0xff] %vm279, %v1765
      %1809 = vst.msk [vmem:[#allocation2 + $0x138] sm:$0xff] %vm279, %v1766
      %1810 = vst.msk [vmem:[#allocation2 + $0x140] sm:$0xff] %vm279, %v1767
      %1811 = vst.msk [vmem:[#allocation2 + $0x148] sm:$0xff] %vm279, %v1768
      %vm1812 = vcmask 259072
      %1813 = vst.msk [vmem:[#allocation2 + $0x150] sm:$0x3f] %vm1812, %v1769
      %v1814 = vld [vmem:[#allocation2] ss:$2 sm:$0xff]
      %s1815 = scalar_lea.vmem [#allocation2], 16
      %v1816 = vld [vmem:[%s1815] ss:$2 sm:$0xff]
      %s1817 = scalar_lea.vmem [#allocation2], 32
      %v1818 = vld [vmem:[%s1817] ss:$2 sm:$0xff]
      %s1819 = scalar_lea.vmem [#allocation2], 48
      %v1820 = vld [vmem:[%s1819] ss:$2 sm:$0xff]
      %s1821 = scalar_lea.vmem [#allocation2], 64
      %v1822 = vld [vmem:[%s1821] ss:$2 sm:$0xff]
      %s1823 = scalar_lea.vmem [#allocation2], 80
      %v1824 = vld [vmem:[%s1823] ss:$2 sm:$0xff]
      %s1825 = scalar_lea.vmem [#allocation2], 96
      %v1826 = vld [vmem:[%s1825] ss:$2 sm:$0xff]
      %s1827 = scalar_lea.vmem [#allocation2], 112
      %v1828 = vld [vmem:[%s1827] ss:$2 sm:$0xff]
      %s1829 = scalar_lea.vmem [#allocation2], 128
      %v1830 = vld [vmem:[%s1829] ss:$2 sm:$0xff]
      %s1831 = scalar_lea.vmem [#allocation2], 144
      %v1832 = vld [vmem:[%s1831] ss:$2 sm:$0xff]
      %s1833 = scalar_lea.vmem [#allocation2], 160
      %v1834 = vld [vmem:[%s1833] ss:$2 sm:$0xff]
      %s1835 = scalar_lea.vmem [#allocation2], 176
      %v1836 = vld [vmem:[%s1835] ss:$2 sm:$0xff]
      %s1837 = scalar_lea.vmem [#allocation2], 192
      %v1838 = vld [vmem:[%s1837] ss:$2 sm:$0xff]
      %s1839 = scalar_lea.vmem [#allocation2], 208
      %v1840 = vld [vmem:[%s1839] ss:$2 sm:$0xff]
      %s1841 = scalar_lea.vmem [#allocation2], 224
      %v1842 = vld [vmem:[%s1841] ss:$2 sm:$0xff]
      %s1843 = scalar_lea.vmem [#allocation2], 240
      %v1844 = vld [vmem:[%s1843] ss:$2 sm:$0xff]
      %s1845 = scalar_lea.vmem [#allocation2], 256
      %v1846 = vld [vmem:[%s1845] ss:$2 sm:$0xff]
      %s1847 = scalar_lea.vmem [#allocation2], 272
      %v1848 = vld [vmem:[%s1847] ss:$2 sm:$0xff]
      %s1849 = scalar_lea.vmem [#allocation2], 288
      %v1850 = vld [vmem:[%s1849] ss:$2 sm:$0xff]
      %v1851 = vld [vmem:[%s3] sm:$0xff]
      %v1852 = vld [vmem:[%s3 + $0x8] sm:$0xff]
      %v1853 = vld [vmem:[%s3 + $0x10] sm:$0xff]
      %v1854 = vld [vmem:[%s3 + $0x18] sm:$0xff]
      %s1855 = scalar_lea.vmem [#allocation2], 1
      %v1856 = vld [vmem:[%s1855] ss:$2 sm:$0xff]
      %s1857 = scalar_lea.vmem [#allocation2], 17
      %v1858 = vld [vmem:[%s1857] ss:$2 sm:$0xff]
      %s1859 = scalar_lea.vmem [#allocation2], 33
      %v1860 = vld [vmem:[%s1859] ss:$2 sm:$0xff]
      %s1861 = scalar_lea.vmem [#allocation2], 49
      %v1862 = vld [vmem:[%s1861] ss:$2 sm:$0xff]
      %s1863 = scalar_lea.vmem [#allocation2], 65
      %v1864 = vld [vmem:[%s1863] ss:$2 sm:$0xff]
      %s1865 = scalar_lea.vmem [#allocation2], 81
      %v1866 = vld [vmem:[%s1865] ss:$2 sm:$0xff]
      %s1867 = scalar_lea.vmem [#allocation2], 97
      %v1868 = vld [vmem:[%s1867] ss:$2 sm:$0xff]
      %s1869 = scalar_lea.vmem [#allocation2], 113
      %v1870 = vld [vmem:[%s1869] ss:$2 sm:$0xff]
      %s1871 = scalar_lea.vmem [#allocation2], 129
      %v1872 = vld [vmem:[%s1871] ss:$2 sm:$0xff]
      %s1873 = scalar_lea.vmem [#allocation2], 145
      %v1874 = vld [vmem:[%s1873] ss:$2 sm:$0xff]
      %s1875 = scalar_lea.vmem [#allocation2], 161
      %v1876 = vld [vmem:[%s1875] ss:$2 sm:$0xff]
      %s1877 = scalar_lea.vmem [#allocation2], 177
      %v1878 = vld [vmem:[%s1877] ss:$2 sm:$0xff]
      %s1879 = scalar_lea.vmem [#allocation2], 193
      %v1880 = vld [vmem:[%s1879] ss:$2 sm:$0xff]
      %s1881 = scalar_lea.vmem [#allocation2], 209
      %v1882 = vld [vmem:[%s1881] ss:$2 sm:$0xff]
      %s1883 = scalar_lea.vmem [#allocation2], 225
      %v1884 = vld [vmem:[%s1883] ss:$2 sm:$0xff]
      %s1885 = scalar_lea.vmem [#allocation2], 241
      %v1886 = vld [vmem:[%s1885] ss:$2 sm:$0xff]
      %s1887 = scalar_lea.vmem [#allocation2], 257
      %v1888 = vld [vmem:[%s1887] ss:$2 sm:$0xff]
      %s1889 = scalar_lea.vmem [#allocation2], 273
      %v1890 = vld [vmem:[%s1889] ss:$2 sm:$0xff]
      %s1891 = scalar_lea.vmem [#allocation2], 289
      %v1892 = vld [vmem:[%s1891] ss:$2 sm:$0xff]
      %s1893 = scalar_lea.vmem %s3, 32
      %v1894 = vld [vmem:[%s1893] sm:$0xff]
      %v1895 = vld [vmem:[%s1893 + $0x8] sm:$0xff]
      %v1896 = vld [vmem:[%s1893 + $0x10] sm:$0xff]
      %v1897 = vld [vmem:[%s1893 + $0x18] sm:$0xff]
      %v1899 = vsel %vm279, %v1856, 0
      %v1902 = vsel %vm279, %v1858, 0
      %v1905 = vsel %vm279, %v1860, 0
      %v1908 = vsel %vm279, %v1862, 0
      %v1911 = vsel %vm279, %v1864, 0
      %v1914 = vsel %vm279, %v1866, 0
      %v1917 = vsel %vm279, %v1868, 0
      %v1920 = vsel %vm279, %v1870, 0
      %v1923 = vsel %vm279, %v1872, 0
      %v1926 = vsel %vm279, %v1874, 0
      %v1929 = vsel %vm279, %v1876, 0
      %v1932 = vsel %vm279, %v1878, 0
      %v1935 = vsel %vm279, %v1880, 0
      %v1938 = vsel %vm279, %v1882, 0
      %v1941 = vsel %vm279, %v1884, 0
      %v1944 = vsel %vm279, %v1886, 0
      %v1947 = vsel %vm279, %v1888, 0
      %v1950 = vsel %vm279, %v1890, 0
      %v1953 = vsel %vm279, %v1892, 0
      %1955 = vmatpush.msra.mxu0 0.0
      %1956 = vmatpush.msra.mxu0 0.0
      %1957 = vmatpush.msra.mxu0 0.0
      %1958 = vmatpush.msra.mxu0 0.0
      %1959 = vmatpush.msra.mxu0 0.0
      %1960 = vmatpush.msra.mxu0 0.0
      %1961 = vmatpush.msra.mxu0 0.0
      %1962 = vmatpush.msra.mxu0 0.0
      %1963 = vmatpush.msra.mxu0 0.0
      %1964 = vmatpush.msra.mxu0 0.0
      %1965 = vmatpush.msra.mxu0 0.0
      %1966 = vmatpush.msra.mxu0 0.0
      %1967 = vmatpush.msra.mxu0 %v1897
      %1968 = vmatpush.msra.mxu0 %v1896
      %1969 = vmatpush.msra.mxu0 %v1895
      %1970 = vmatpush.msra.mxu0 %v1894
      %1971 = vmatmul.f32.gmra.mxu0 %v1899
      %v1972 = vpop.f32.mrf.mxu0
      %v1973 = vadd.f32 0.0, %v1972
      %1974 = vmatmul.f32.gmra.mxu0 %v1902
      %v1975 = vpop.f32.mrf.mxu0
      %v1976 = vadd.f32 0.0, %v1975
      %1977 = vmatmul.f32.gmra.mxu0 %v1905
      %v1978 = vpop.f32.mrf.mxu0
      %v1979 = vadd.f32 0.0, %v1978
      %1980 = vmatmul.f32.gmra.mxu0 %v1908
      %v1981 = vpop.f32.mrf.mxu0
      %v1982 = vadd.f32 0.0, %v1981
      %1983 = vmatmul.f32.gmra.mxu0 %v1911
      %v1984 = vpop.f32.mrf.mxu0
      %v1985 = vadd.f32 0.0, %v1984
      %1986 = vmatmul.f32.gmra.mxu0 %v1914
      %v1987 = vpop.f32.mrf.mxu0
      %v1988 = vadd.f32 0.0, %v1987
      %1989 = vmatmul.f32.gmra.mxu0 %v1917
      %v1990 = vpop.f32.mrf.mxu0
      %v1991 = vadd.f32 0.0, %v1990
      %1992 = vmatmul.f32.gmra.mxu0 %v1920
      %v1993 = vpop.f32.mrf.mxu0
      %v1994 = vadd.f32 0.0, %v1993
      %1995 = vmatmul.f32.gmra.mxu0 %v1923
      %v1996 = vpop.f32.mrf.mxu0
      %v1997 = vadd.f32 0.0, %v1996
      %1998 = vmatmul.f32.gmra.mxu0 %v1926
      %v1999 = vpop.f32.mrf.mxu0
      %v2000 = vadd.f32 0.0, %v1999
      %2001 = vmatmul.f32.gmra.mxu0 %v1929
      %v2002 = vpop.f32.mrf.mxu0
      %v2003 = vadd.f32 0.0, %v2002
      %2004 = vmatmul.f32.gmra.mxu0 %v1932
      %v2005 = vpop.f32.mrf.mxu0
      %v2006 = vadd.f32 0.0, %v2005
      %2007 = vmatmul.f32.gmra.mxu0 %v1935
      %v2008 = vpop.f32.mrf.mxu0
      %v2009 = vadd.f32 0.0, %v2008
      %2010 = vmatmul.f32.gmra.mxu0 %v1938
      %v2011 = vpop.f32.mrf.mxu0
      %v2012 = vadd.f32 0.0, %v2011
      %2013 = vmatmul.f32.gmra.mxu0 %v1941
      %v2014 = vpop.f32.mrf.mxu0
      %v2015 = vadd.f32 0.0, %v2014
      %2016 = vmatmul.f32.gmra.mxu0 %v1944
      %v2017 = vpop.f32.mrf.mxu0
      %v2018 = vadd.f32 0.0, %v2017
      %2019 = vmatmul.f32.gmra.mxu0 %v1947
      %v2020 = vpop.f32.mrf.mxu0
      %v2021 = vadd.f32 0.0, %v2020
      %2022 = vmatmul.f32.gmra.mxu0 %v1950
      %v2023 = vpop.f32.mrf.mxu0
      %v2024 = vadd.f32 0.0, %v2023
      %2025 = vmatmul.f32.gmra.mxu0 %v1953
      %v2026 = vpop.f32.mrf.mxu0
      %v2027 = vadd.f32 0.0, %v2026
      %2028 = vdwg.mxu0
      %v2030 = vsel %vm279, %v1814, 0
      %v2033 = vsel %vm279, %v1816, 0
      %v2036 = vsel %vm279, %v1818, 0
      %v2039 = vsel %vm279, %v1820, 0
      %v2042 = vsel %vm279, %v1822, 0
      %v2045 = vsel %vm279, %v1824, 0
      %v2048 = vsel %vm279, %v1826, 0
      %v2051 = vsel %vm279, %v1828, 0
      %v2054 = vsel %vm279, %v1830, 0
      %v2057 = vsel %vm279, %v1832, 0
      %v2060 = vsel %vm279, %v1834, 0
      %v2063 = vsel %vm279, %v1836, 0
      %v2066 = vsel %vm279, %v1838, 0
      %v2069 = vsel %vm279, %v1840, 0
      %v2072 = vsel %vm279, %v1842, 0
      %v2075 = vsel %vm279, %v1844, 0
      %v2078 = vsel %vm279, %v1846, 0
      %v2081 = vsel %vm279, %v1848, 0
      %v2084 = vsel %vm279, %v1850, 0
      %2086 = vmatpush.msra.mxu0 0.0
      %2087 = vmatpush.msra.mxu0 0.0
      %2088 = vmatpush.msra.mxu0 0.0
      %2089 = vmatpush.msra.mxu0 0.0
      %2090 = vmatpush.msra.mxu0 0.0
      %2091 = vmatpush.msra.mxu0 0.0
      %2092 = vmatpush.msra.mxu0 0.0
      %2093 = vmatpush.msra.mxu0 0.0
      %2094 = vmatpush.msra.mxu0 0.0
      %2095 = vmatpush.msra.mxu0 0.0
      %2096 = vmatpush.msra.mxu0 0.0
      %2097 = vmatpush.msra.mxu0 0.0
      %2098 = vmatpush.msra.mxu0 %v1854
      %2099 = vmatpush.msra.mxu0 %v1853
      %2100 = vmatpush.msra.mxu0 %v1852
      %2101 = vmatpush.msra.mxu0 %v1851
      %2102 = vmatmul.f32.gmra.mxu0 %v2030
      %v2103 = vpop.f32.mrf.mxu0
      %v2104 = vadd.f32 %v1973, %v2103
      %2105 = vmatmul.f32.gmra.mxu0 %v2033
      %v2106 = vpop.f32.mrf.mxu0
      %v2107 = vadd.f32 %v1976, %v2106
      %2108 = vmatmul.f32.gmra.mxu0 %v2036
      %v2109 = vpop.f32.mrf.mxu0
      %v2110 = vadd.f32 %v1979, %v2109
      %2111 = vmatmul.f32.gmra.mxu0 %v2039
      %v2112 = vpop.f32.mrf.mxu0
      %v2113 = vadd.f32 %v1982, %v2112
      %2114 = vmatmul.f32.gmra.mxu0 %v2042
      %v2115 = vpop.f32.mrf.mxu0
      %v2116 = vadd.f32 %v1985, %v2115
      %2117 = vmatmul.f32.gmra.mxu0 %v2045
      %v2118 = vpop.f32.mrf.mxu0
      %v2119 = vadd.f32 %v1988, %v2118
      %2120 = vmatmul.f32.gmra.mxu0 %v2048
      %v2121 = vpop.f32.mrf.mxu0
      %v2122 = vadd.f32 %v1991, %v2121
      %2123 = vmatmul.f32.gmra.mxu0 %v2051
      %v2124 = vpop.f32.mrf.mxu0
      %v2125 = vadd.f32 %v1994, %v2124
      %2126 = vmatmul.f32.gmra.mxu0 %v2054
      %v2127 = vpop.f32.mrf.mxu0
      %v2128 = vadd.f32 %v1997, %v2127
      %2129 = vmatmul.f32.gmra.mxu0 %v2057
      %v2130 = vpop.f32.mrf.mxu0
      %v2131 = vadd.f32 %v2000, %v2130
      %2132 = vmatmul.f32.gmra.mxu0 %v2060
      %v2133 = vpop.f32.mrf.mxu0
      %v2134 = vadd.f32 %v2003, %v2133
      %2135 = vmatmul.f32.gmra.mxu0 %v2063
      %v2136 = vpop.f32.mrf.mxu0
      %v2137 = vadd.f32 %v2006, %v2136
      %2138 = vmatmul.f32.gmra.mxu0 %v2066
      %v2139 = vpop.f32.mrf.mxu0
      %v2140 = vadd.f32 %v2009, %v2139
      %2141 = vmatmul.f32.gmra.mxu0 %v2069
      %v2142 = vpop.f32.mrf.mxu0
      %v2143 = vadd.f32 %v2012, %v2142
      %2144 = vmatmul.f32.gmra.mxu0 %v2072
      %v2145 = vpop.f32.mrf.mxu0
      %v2146 = vadd.f32 %v2015, %v2145
      %2147 = vmatmul.f32.gmra.mxu0 %v2075
      %v2148 = vpop.f32.mrf.mxu0
      %v2149 = vadd.f32 %v2018, %v2148
      %2150 = vmatmul.f32.gmra.mxu0 %v2078
      %v2151 = vpop.f32.mrf.mxu0
      %v2152 = vadd.f32 %v2021, %v2151
      %2153 = vmatmul.f32.gmra.mxu0 %v2081
      %v2154 = vpop.f32.mrf.mxu0
      %v2155 = vadd.f32 %v2024, %v2154
      %2156 = vmatmul.f32.gmra.mxu0 %v2084
      %v2157 = vpop.f32.mrf.mxu0
      %v2158 = vadd.f32 %v2027, %v2157
      %2159 = vdwg.mxu0
      %s2160 = scalar_lea.vmem [#allocation2], 2
      %v2161 = vld [vmem:[%s2160] ss:$2 sm:$0xff]
      %s2162 = scalar_lea.vmem [#allocation2], 18
      %v2163 = vld [vmem:[%s2162] ss:$2 sm:$0xff]
      %s2164 = scalar_lea.vmem [#allocation2], 34
      %v2165 = vld [vmem:[%s2164] ss:$2 sm:$0xff]
      %s2166 = scalar_lea.vmem [#allocation2], 50
      %v2167 = vld [vmem:[%s2166] ss:$2 sm:$0xff]
      %s2168 = scalar_lea.vmem [#allocation2], 66
      %v2169 = vld [vmem:[%s2168] ss:$2 sm:$0xff]
      %s2170 = scalar_lea.vmem [#allocation2], 82
      %v2171 = vld [vmem:[%s2170] ss:$2 sm:$0xff]
      %s2172 = scalar_lea.vmem [#allocation2], 98
      %v2173 = vld [vmem:[%s2172] ss:$2 sm:$0xff]
      %s2174 = scalar_lea.vmem [#allocation2], 114
      %v2175 = vld [vmem:[%s2174] ss:$2 sm:$0xff]
      %s2176 = scalar_lea.vmem [#allocation2], 130
      %v2177 = vld [vmem:[%s2176] ss:$2 sm:$0xff]
      %s2178 = scalar_lea.vmem [#allocation2], 146
      %v2179 = vld [vmem:[%s2178] ss:$2 sm:$0xff]
      %s2180 = scalar_lea.vmem [#allocation2], 162
      %v2181 = vld [vmem:[%s2180] ss:$2 sm:$0xff]
      %s2182 = scalar_lea.vmem [#allocation2], 178
      %v2183 = vld [vmem:[%s2182] ss:$2 sm:$0xff]
      %s2184 = scalar_lea.vmem [#allocation2], 194
      %v2185 = vld [vmem:[%s2184] ss:$2 sm:$0xff]
      %s2186 = scalar_lea.vmem [#allocation2], 210
      %v2187 = vld [vmem:[%s2186] ss:$2 sm:$0xff]
      %s2188 = scalar_lea.vmem [#allocation2], 226
      %v2189 = vld [vmem:[%s2188] ss:$2 sm:$0xff]
      %s2190 = scalar_lea.vmem [#allocation2], 242
      %v2191 = vld [vmem:[%s2190] ss:$2 sm:$0xff]
      %s2192 = scalar_lea.vmem [#allocation2], 258
      %v2193 = vld [vmem:[%s2192] ss:$2 sm:$0xff]
      %s2194 = scalar_lea.vmem [#allocation2], 274
      %v2195 = vld [vmem:[%s2194] ss:$2 sm:$0xff]
      %s2196 = scalar_lea.vmem [#allocation2], 290
      %v2197 = vld [vmem:[%s2196] ss:$2 sm:$0xff]
      %s2198 = scalar_lea.vmem %s3, 64
      %v2199 = vld [vmem:[%s2198] sm:$0xff]
      %v2200 = vld [vmem:[%s2198 + $0x8] sm:$0xff]
      %v2201 = vld [vmem:[%s2198 + $0x10] sm:$0xff]
      %v2202 = vld [vmem:[%s2198 + $0x18] sm:$0xff]
      %v2204 = vsel %vm279, %v2161, 0
      %v2207 = vsel %vm279, %v2163, 0
      %v2210 = vsel %vm279, %v2165, 0
      %v2213 = vsel %vm279, %v2167, 0
      %v2216 = vsel %vm279, %v2169, 0
      %v2219 = vsel %vm279, %v2171, 0
      %v2222 = vsel %vm279, %v2173, 0
      %v2225 = vsel %vm279, %v2175, 0
      %v2228 = vsel %vm279, %v2177, 0
      %v2231 = vsel %vm279, %v2179, 0
      %v2234 = vsel %vm279, %v2181, 0
      %v2237 = vsel %vm279, %v2183, 0
      %v2240 = vsel %vm279, %v2185, 0
      %v2243 = vsel %vm279, %v2187, 0
      %v2246 = vsel %vm279, %v2189, 0
      %v2249 = vsel %vm279, %v2191, 0
      %v2252 = vsel %vm279, %v2193, 0
      %v2255 = vsel %vm279, %v2195, 0
      %v2258 = vsel %vm279, %v2197, 0
      %2260 = vmatpush.msra.mxu0 0.0
      %2261 = vmatpush.msra.mxu0 0.0
      %2262 = vmatpush.msra.mxu0 0.0
      %2263 = vmatpush.msra.mxu0 0.0
      %2264 = vmatpush.msra.mxu0 0.0
      %2265 = vmatpush.msra.mxu0 0.0
      %2266 = vmatpush.msra.mxu0 0.0
      %2267 = vmatpush.msra.mxu0 0.0
      %2268 = vmatpush.msra.mxu0 0.0
      %2269 = vmatpush.msra.mxu0 0.0
      %2270 = vmatpush.msra.mxu0 0.0
      %2271 = vmatpush.msra.mxu0 0.0
      %2272 = vmatpush.msra.mxu0 %v2202
      %2273 = vmatpush.msra.mxu0 %v2201
      %2274 = vmatpush.msra.mxu0 %v2200
      %2275 = vmatpush.msra.mxu0 %v2199
      %2276 = vmatmul.f32.gmra.mxu0 %v2204
      %v2277 = vpop.f32.mrf.mxu0
      %v2278 = vadd.f32 0.0, %v2277
      %2279 = vmatmul.f32.gmra.mxu0 %v2207
      %v2280 = vpop.f32.mrf.mxu0
      %v2281 = vadd.f32 0.0, %v2280
      %2282 = vmatmul.f32.gmra.mxu0 %v2210
      %v2283 = vpop.f32.mrf.mxu0
      %v2284 = vadd.f32 0.0, %v2283
      %2285 = vmatmul.f32.gmra.mxu0 %v2213
      %v2286 = vpop.f32.mrf.mxu0
      %v2287 = vadd.f32 0.0, %v2286
      %2288 = vmatmul.f32.gmra.mxu0 %v2216
      %v2289 = vpop.f32.mrf.mxu0
      %v2290 = vadd.f32 0.0, %v2289
      %2291 = vmatmul.f32.gmra.mxu0 %v2219
      %v2292 = vpop.f32.mrf.mxu0
      %v2293 = vadd.f32 0.0, %v2292
      %2294 = vmatmul.f32.gmra.mxu0 %v2222
      %v2295 = vpop.f32.mrf.mxu0
      %v2296 = vadd.f32 0.0, %v2295
      %2297 = vmatmul.f32.gmra.mxu0 %v2225
      %v2298 = vpop.f32.mrf.mxu0
      %v2299 = vadd.f32 0.0, %v2298
      %2300 = vmatmul.f32.gmra.mxu0 %v2228
      %v2301 = vpop.f32.mrf.mxu0
      %v2302 = vadd.f32 0.0, %v2301
      %2303 = vmatmul.f32.gmra.mxu0 %v2231
      %v2304 = vpop.f32.mrf.mxu0
      %v2305 = vadd.f32 0.0, %v2304
      %2306 = vmatmul.f32.gmra.mxu0 %v2234
      %v2307 = vpop.f32.mrf.mxu0
      %v2308 = vadd.f32 0.0, %v2307
      %2309 = vmatmul.f32.gmra.mxu0 %v2237
      %v2310 = vpop.f32.mrf.mxu0
      %v2311 = vadd.f32 0.0, %v2310
      %2312 = vmatmul.f32.gmra.mxu0 %v2240
      %v2313 = vpop.f32.mrf.mxu0
      %v2314 = vadd.f32 0.0, %v2313
      %2315 = vmatmul.f32.gmra.mxu0 %v2243
      %v2316 = vpop.f32.mrf.mxu0
      %v2317 = vadd.f32 0.0, %v2316
      %2318 = vmatmul.f32.gmra.mxu0 %v2246
      %v2319 = vpop.f32.mrf.mxu0
      %v2320 = vadd.f32 0.0, %v2319
      %2321 = vmatmul.f32.gmra.mxu0 %v2249
      %v2322 = vpop.f32.mrf.mxu0
      %v2323 = vadd.f32 0.0, %v2322
      %2324 = vmatmul.f32.gmra.mxu0 %v2252
      %v2325 = vpop.f32.mrf.mxu0
      %v2326 = vadd.f32 0.0, %v2325
      %2327 = vmatmul.f32.gmra.mxu0 %v2255
      %v2328 = vpop.f32.mrf.mxu0
      %v2329 = vadd.f32 0.0, %v2328
      %2330 = vmatmul.f32.gmra.mxu0 %v2258
      %v2331 = vpop.f32.mrf.mxu0
      %v2332 = vadd.f32 0.0, %v2331
      %2333 = vdwg.mxu0
      %v2334 = vadd.f32 %v2104, %v2278
      %v2335 = vadd.f32 %v2107, %v2281
      %v2336 = vadd.f32 %v2110, %v2284
      %v2337 = vadd.f32 %v2113, %v2287
      %v2338 = vadd.f32 %v2116, %v2290
      %v2339 = vadd.f32 %v2119, %v2293
      %v2340 = vadd.f32 %v2122, %v2296
      %v2341 = vadd.f32 %v2125, %v2299
      %v2342 = vadd.f32 %v2128, %v2302
      %v2343 = vadd.f32 %v2131, %v2305
      %v2344 = vadd.f32 %v2134, %v2308
      %v2345 = vadd.f32 %v2137, %v2311
      %v2346 = vadd.f32 %v2140, %v2314
      %v2347 = vadd.f32 %v2143, %v2317
      %v2348 = vadd.f32 %v2146, %v2320
      %v2349 = vadd.f32 %v2149, %v2323
      %v2350 = vadd.f32 %v2152, %v2326
      %v2351 = vadd.f32 %v2155, %v2329
      %v2352 = vadd.f32 %v2158, %v2332
      %s2353 = scalar_lea.vmem [#allocation2], 3
      %v2354 = vld [vmem:[%s2353] ss:$2 sm:$0xff]
      %s2355 = scalar_lea.vmem [#allocation2], 19
      %v2356 = vld [vmem:[%s2355] ss:$2 sm:$0xff]
      %s2357 = scalar_lea.vmem [#allocation2], 35
      %v2358 = vld [vmem:[%s2357] ss:$2 sm:$0xff]
      %s2359 = scalar_lea.vmem [#allocation2], 51
      %v2360 = vld [vmem:[%s2359] ss:$2 sm:$0xff]
      %s2361 = scalar_lea.vmem [#allocation2], 67
      %v2362 = vld [vmem:[%s2361] ss:$2 sm:$0xff]
      %s2363 = scalar_lea.vmem [#allocation2], 83
      %v2364 = vld [vmem:[%s2363] ss:$2 sm:$0xff]
      %s2365 = scalar_lea.vmem [#allocation2], 99
      %v2366 = vld [vmem:[%s2365] ss:$2 sm:$0xff]
      %s2367 = scalar_lea.vmem [#allocation2], 115
      %v2368 = vld [vmem:[%s2367] ss:$2 sm:$0xff]
      %s2369 = scalar_lea.vmem [#allocation2], 131
      %v2370 = vld [vmem:[%s2369] ss:$2 sm:$0xff]
      %s2371 = scalar_lea.vmem [#allocation2], 147
      %v2372 = vld [vmem:[%s2371] ss:$2 sm:$0xff]
      %s2373 = scalar_lea.vmem [#allocation2], 163
      %v2374 = vld [vmem:[%s2373] ss:$2 sm:$0xff]
      %s2375 = scalar_lea.vmem [#allocation2], 179
      %v2376 = vld [vmem:[%s2375] ss:$2 sm:$0xff]
      %s2377 = scalar_lea.vmem [#allocation2], 195
      %v2378 = vld [vmem:[%s2377] ss:$2 sm:$0xff]
      %s2379 = scalar_lea.vmem [#allocation2], 211
      %v2380 = vld [vmem:[%s2379] ss:$2 sm:$0xff]
      %s2381 = scalar_lea.vmem [#allocation2], 227
      %v2382 = vld [vmem:[%s2381] ss:$2 sm:$0xff]
      %s2383 = scalar_lea.vmem [#allocation2], 243
      %v2384 = vld [vmem:[%s2383] ss:$2 sm:$0xff]
      %s2385 = scalar_lea.vmem [#allocation2], 259
      %v2386 = vld [vmem:[%s2385] ss:$2 sm:$0xff]
      %s2387 = scalar_lea.vmem [#allocation2], 275
      %v2388 = vld [vmem:[%s2387] ss:$2 sm:$0xff]
      %s2389 = scalar_lea.vmem [#allocation2], 291
      %v2390 = vld [vmem:[%s2389] ss:$2 sm:$0xff]
      %s2391 = scalar_lea.vmem %s3, 96
      %v2392 = vld [vmem:[%s2391] sm:$0xff]
      %v2393 = vld [vmem:[%s2391 + $0x8] sm:$0xff]
      %v2394 = vld [vmem:[%s2391 + $0x10] sm:$0xff]
      %v2395 = vld [vmem:[%s2391 + $0x18] sm:$0xff]
      %v2397 = vsel %vm279, %v2354, 0
      %v2400 = vsel %vm279, %v2356, 0
      %v2403 = vsel %vm279, %v2358, 0
      %v2406 = vsel %vm279, %v2360, 0
      %v2409 = vsel %vm279, %v2362, 0
      %v2412 = vsel %vm279, %v2364, 0
      %v2415 = vsel %vm279, %v2366, 0
      %v2418 = vsel %vm279, %v2368, 0
      %v2421 = vsel %vm279, %v2370, 0
      %v2424 = vsel %vm279, %v2372, 0
      %v2427 = vsel %vm279, %v2374, 0
      %v2430 = vsel %vm279, %v2376, 0
      %v2433 = vsel %vm279, %v2378, 0
      %v2436 = vsel %vm279, %v2380, 0
      %v2439 = vsel %vm279, %v2382, 0
      %v2442 = vsel %vm279, %v2384, 0
      %v2445 = vsel %vm279, %v2386, 0
      %v2448 = vsel %vm279, %v2388, 0
      %v2451 = vsel %vm279, %v2390, 0
      %2453 = vmatpush.msra.mxu0 0.0
      %2454 = vmatpush.msra.mxu0 0.0
      %2455 = vmatpush.msra.mxu0 0.0
      %2456 = vmatpush.msra.mxu0 0.0
      %2457 = vmatpush.msra.mxu0 0.0
      %2458 = vmatpush.msra.mxu0 0.0
      %2459 = vmatpush.msra.mxu0 0.0
      %2460 = vmatpush.msra.mxu0 0.0
      %2461 = vmatpush.msra.mxu0 0.0
      %2462 = vmatpush.msra.mxu0 0.0
      %2463 = vmatpush.msra.mxu0 0.0
      %2464 = vmatpush.msra.mxu0 0.0
      %2465 = vmatpush.msra.mxu0 %v2395
      %2466 = vmatpush.msra.mxu0 %v2394
      %2467 = vmatpush.msra.mxu0 %v2393
      %2468 = vmatpush.msra.mxu0 %v2392
      %2469 = vmatmul.f32.gmra.mxu0 %v2397
      %v2470 = vpop.f32.mrf.mxu0
      %v2471 = vadd.f32 0.0, %v2470
      %2472 = vmatmul.f32.gmra.mxu0 %v2400
      %v2473 = vpop.f32.mrf.mxu0
      %v2474 = vadd.f32 0.0, %v2473
      %2475 = vmatmul.f32.gmra.mxu0 %v2403
      %v2476 = vpop.f32.mrf.mxu0
      %v2477 = vadd.f32 0.0, %v2476
      %2478 = vmatmul.f32.gmra.mxu0 %v2406
      %v2479 = vpop.f32.mrf.mxu0
      %v2480 = vadd.f32 0.0, %v2479
      %2481 = vmatmul.f32.gmra.mxu0 %v2409
      %v2482 = vpop.f32.mrf.mxu0
      %v2483 = vadd.f32 0.0, %v2482
      %2484 = vmatmul.f32.gmra.mxu0 %v2412
      %v2485 = vpop.f32.mrf.mxu0
      %v2486 = vadd.f32 0.0, %v2485
      %2487 = vmatmul.f32.gmra.mxu0 %v2415
      %v2488 = vpop.f32.mrf.mxu0
      %v2489 = vadd.f32 0.0, %v2488
      %2490 = vmatmul.f32.gmra.mxu0 %v2418
      %v2491 = vpop.f32.mrf.mxu0
      %v2492 = vadd.f32 0.0, %v2491
      %2493 = vmatmul.f32.gmra.mxu0 %v2421
      %v2494 = vpop.f32.mrf.mxu0
      %v2495 = vadd.f32 0.0, %v2494
      %2496 = vmatmul.f32.gmra.mxu0 %v2424
      %v2497 = vpop.f32.mrf.mxu0
      %v2498 = vadd.f32 0.0, %v2497
      %2499 = vmatmul.f32.gmra.mxu0 %v2427
      %v2500 = vpop.f32.mrf.mxu0
      %v2501 = vadd.f32 0.0, %v2500
      %2502 = vmatmul.f32.gmra.mxu0 %v2430
      %v2503 = vpop.f32.mrf.mxu0
      %v2504 = vadd.f32 0.0, %v2503
      %2505 = vmatmul.f32.gmra.mxu0 %v2433
      %v2506 = vpop.f32.mrf.mxu0
      %v2507 = vadd.f32 0.0, %v2506
      %2508 = vmatmul.f32.gmra.mxu0 %v2436
      %v2509 = vpop.f32.mrf.mxu0
      %v2510 = vadd.f32 0.0, %v2509
      %2511 = vmatmul.f32.gmra.mxu0 %v2439
      %v2512 = vpop.f32.mrf.mxu0
      %v2513 = vadd.f32 0.0, %v2512
      %2514 = vmatmul.f32.gmra.mxu0 %v2442
      %v2515 = vpop.f32.mrf.mxu0
      %v2516 = vadd.f32 0.0, %v2515
      %2517 = vmatmul.f32.gmra.mxu0 %v2445
      %v2518 = vpop.f32.mrf.mxu0
      %v2519 = vadd.f32 0.0, %v2518
      %2520 = vmatmul.f32.gmra.mxu0 %v2448
      %v2521 = vpop.f32.mrf.mxu0
      %v2522 = vadd.f32 0.0, %v2521
      %2523 = vmatmul.f32.gmra.mxu0 %v2451
      %v2524 = vpop.f32.mrf.mxu0
      %v2525 = vadd.f32 0.0, %v2524
      %2526 = vdwg.mxu0
      %v2527 = vadd.f32 %v2334, %v2471
      %v2528 = vadd.f32 %v2335, %v2474
      %v2529 = vadd.f32 %v2336, %v2477
      %v2530 = vadd.f32 %v2337, %v2480
      %v2531 = vadd.f32 %v2338, %v2483
      %v2532 = vadd.f32 %v2339, %v2486
      %v2533 = vadd.f32 %v2340, %v2489
      %v2534 = vadd.f32 %v2341, %v2492
      %v2535 = vadd.f32 %v2342, %v2495
      %v2536 = vadd.f32 %v2343, %v2498
      %v2537 = vadd.f32 %v2344, %v2501
      %v2538 = vadd.f32 %v2345, %v2504
      %v2539 = vadd.f32 %v2346, %v2507
      %v2540 = vadd.f32 %v2347, %v2510
      %v2541 = vadd.f32 %v2348, %v2513
      %v2542 = vadd.f32 %v2349, %v2516
      %v2543 = vadd.f32 %v2350, %v2519
      %v2544 = vadd.f32 %v2351, %v2522
      %v2545 = vadd.f32 %v2352, %v2525
      %v2546 = vld [vmem:[%s2355] ss:$2 sm:$0xff]
      %v2547 = vld [vmem:[%s2357] ss:$2 sm:$0xff]
      %v2548 = vld [vmem:[%s2359] ss:$2 sm:$0xff]
      %v2549 = vld [vmem:[%s2361] ss:$2 sm:$0xff]
      %v2550 = vld [vmem:[%s2363] ss:$2 sm:$0xff]
      %v2551 = vld [vmem:[%s2365] ss:$2 sm:$0xff]
      %v2552 = vld [vmem:[%s2367] ss:$2 sm:$0xff]
      %v2553 = vld [vmem:[%s2369] ss:$2 sm:$0xff]
      %v2554 = vld [vmem:[%s2371] ss:$2 sm:$0xff]
      %v2555 = vld [vmem:[%s2373] ss:$2 sm:$0xff]
      %v2556 = vld [vmem:[%s2375] ss:$2 sm:$0xff]
      %v2557 = vld [vmem:[%s2377] ss:$2 sm:$0xff]
      %v2558 = vld [vmem:[%s2379] ss:$2 sm:$0xff]
      %v2559 = vld [vmem:[%s2381] ss:$2 sm:$0xff]
      %v2560 = vld [vmem:[%s2383] ss:$2 sm:$0xff]
      %v2561 = vld [vmem:[%s2385] ss:$2 sm:$0xff]
      %v2562 = vld [vmem:[%s2387] ss:$2 sm:$0xff]
      %v2563 = vld [vmem:[%s2389] ss:$2 sm:$0xff]
      %s2564 = scalar_lea.vmem [#allocation2], 307
      %v2565 = vld [vmem:[%s2564] ss:$2 sm:$0xff]
      %s2566 = scalar_lea.vmem %s3, 128
      %v2567 = vld [vmem:[%s2566] sm:$0xff]
      %v2568 = vld [vmem:[%s2566 + $0x8] sm:$0xff]
      %v2569 = vld [vmem:[%s2566 + $0x10] sm:$0xff]
      %v2570 = vld [vmem:[%s2566 + $0x18] sm:$0xff]
      %v2572 = vsel %vm279, %v2546, 0
      %v2575 = vsel %vm279, %v2547, 0
      %v2578 = vsel %vm279, %v2548, 0
      %v2581 = vsel %vm279, %v2549, 0
      %v2584 = vsel %vm279, %v2550, 0
      %v2587 = vsel %vm279, %v2551, 0
      %v2590 = vsel %vm279, %v2552, 0
      %v2593 = vsel %vm279, %v2553, 0
      %v2596 = vsel %vm279, %v2554, 0
      %v2599 = vsel %vm279, %v2555, 0
      %v2602 = vsel %vm279, %v2556, 0
      %v2605 = vsel %vm279, %v2557, 0
      %v2608 = vsel %vm279, %v2558, 0
      %v2611 = vsel %vm279, %v2559, 0
      %v2614 = vsel %vm279, %v2560, 0
      %v2617 = vsel %vm279, %v2561, 0
      %v2620 = vsel %vm279, %v2562, 0
      %v2623 = vsel %vm279, %v2563, 0
      %v2626 = vsel %vm279, %v2565, 0
      %2628 = vmatpush.msra.mxu0 0.0
      %2629 = vmatpush.msra.mxu0 0.0
      %2630 = vmatpush.msra.mxu0 0.0
      %2631 = vmatpush.msra.mxu0 0.0
      %2632 = vmatpush.msra.mxu0 0.0
      %2633 = vmatpush.msra.mxu0 0.0
      %2634 = vmatpush.msra.mxu0 0.0
      %2635 = vmatpush.msra.mxu0 0.0
      %2636 = vmatpush.msra.mxu0 0.0
      %2637 = vmatpush.msra.mxu0 0.0
      %2638 = vmatpush.msra.mxu0 0.0
      %2639 = vmatpush.msra.mxu0 0.0
      %2640 = vmatpush.msra.mxu0 %v2570
      %2641 = vmatpush.msra.mxu0 %v2569
      %2642 = vmatpush.msra.mxu0 %v2568
      %2643 = vmatpush.msra.mxu0 %v2567
      %2644 = vmatmul.f32.gmra.mxu0 %v2572
      %v2645 = vpop.f32.mrf.mxu0
      %v2646 = vadd.f32 0.0, %v2645
      %2647 = vmatmul.f32.gmra.mxu0 %v2575
      %v2648 = vpop.f32.mrf.mxu0
      %v2649 = vadd.f32 0.0, %v2648
      %2650 = vmatmul.f32.gmra.mxu0 %v2578
      %v2651 = vpop.f32.mrf.mxu0
      %v2652 = vadd.f32 0.0, %v2651
      %2653 = vmatmul.f32.gmra.mxu0 %v2581
      %v2654 = vpop.f32.mrf.mxu0
      %v2655 = vadd.f32 0.0, %v2654
      %2656 = vmatmul.f32.gmra.mxu0 %v2584
      %v2657 = vpop.f32.mrf.mxu0
      %v2658 = vadd.f32 0.0, %v2657
      %2659 = vmatmul.f32.gmra.mxu0 %v2587
      %v2660 = vpop.f32.mrf.mxu0
      %v2661 = vadd.f32 0.0, %v2660
      %2662 = vmatmul.f32.gmra.mxu0 %v2590
      %v2663 = vpop.f32.mrf.mxu0
      %v2664 = vadd.f32 0.0, %v2663
      %2665 = vmatmul.f32.gmra.mxu0 %v2593
      %v2666 = vpop.f32.mrf.mxu0
      %v2667 = vadd.f32 0.0, %v2666
      %2668 = vmatmul.f32.gmra.mxu0 %v2596
      %v2669 = vpop.f32.mrf.mxu0
      %v2670 = vadd.f32 0.0, %v2669
      %2671 = vmatmul.f32.gmra.mxu0 %v2599
      %v2672 = vpop.f32.mrf.mxu0
      %v2673 = vadd.f32 0.0, %v2672
      %2674 = vmatmul.f32.gmra.mxu0 %v2602
      %v2675 = vpop.f32.mrf.mxu0
      %v2676 = vadd.f32 0.0, %v2675
      %2677 = vmatmul.f32.gmra.mxu0 %v2605
      %v2678 = vpop.f32.mrf.mxu0
      %v2679 = vadd.f32 0.0, %v2678
      %2680 = vmatmul.f32.gmra.mxu0 %v2608
      %v2681 = vpop.f32.mrf.mxu0
      %v2682 = vadd.f32 0.0, %v2681
      %2683 = vmatmul.f32.gmra.mxu0 %v2611
      %v2684 = vpop.f32.mrf.mxu0
      %v2685 = vadd.f32 0.0, %v2684
      %2686 = vmatmul.f32.gmra.mxu0 %v2614
      %v2687 = vpop.f32.mrf.mxu0
      %v2688 = vadd.f32 0.0, %v2687
      %2689 = vmatmul.f32.gmra.mxu0 %v2617
      %v2690 = vpop.f32.mrf.mxu0
      %v2691 = vadd.f32 0.0, %v2690
      %2692 = vmatmul.f32.gmra.mxu0 %v2620
      %v2693 = vpop.f32.mrf.mxu0
      %v2694 = vadd.f32 0.0, %v2693
      %2695 = vmatmul.f32.gmra.mxu0 %v2623
      %v2696 = vpop.f32.mrf.mxu0
      %v2697 = vadd.f32 0.0, %v2696
      %2698 = vmatmul.f32.gmra.mxu0 %v2626
      %v2699 = vpop.f32.mrf.mxu0
      %v2700 = vadd.f32 0.0, %v2699
      %2701 = vdwg.mxu0
      %v2702 = vadd.f32 %v2527, %v2646
      %v2703 = vadd.f32 %v2528, %v2649
      %v2704 = vadd.f32 %v2529, %v2652
      %v2705 = vadd.f32 %v2530, %v2655
      %v2706 = vadd.f32 %v2531, %v2658
      %v2707 = vadd.f32 %v2532, %v2661
      %v2708 = vadd.f32 %v2533, %v2664
      %v2709 = vadd.f32 %v2534, %v2667
      %v2710 = vadd.f32 %v2535, %v2670
      %v2711 = vadd.f32 %v2536, %v2673
      %v2712 = vadd.f32 %v2537, %v2676
      %v2713 = vadd.f32 %v2538, %v2679
      %v2714 = vadd.f32 %v2539, %v2682
      %v2715 = vadd.f32 %v2540, %v2685
      %v2716 = vadd.f32 %v2541, %v2688
      %v2717 = vadd.f32 %v2542, %v2691
      %v2718 = vadd.f32 %v2543, %v2694
      %v2719 = vadd.f32 %v2544, %v2697
      %v2720 = vadd.f32 %v2545, %v2700
      %s2721 = scalar_lea.vmem [#allocation2], 20
      %v2722 = vld [vmem:[%s2721] ss:$2 sm:$0xff]
      %s2723 = scalar_lea.vmem [#allocation2], 36
      %v2724 = vld [vmem:[%s2723] ss:$2 sm:$0xff]
      %s2725 = scalar_lea.vmem [#allocation2], 52
      %v2726 = vld [vmem:[%s2725] ss:$2 sm:$0xff]
      %s2727 = scalar_lea.vmem [#allocation2], 68
      %v2728 = vld [vmem:[%s2727] ss:$2 sm:$0xff]
      %s2729 = scalar_lea.vmem [#allocation2], 84
      %v2730 = vld [vmem:[%s2729] ss:$2 sm:$0xff]
      %s2731 = scalar_lea.vmem [#allocation2], 100
      %v2732 = vld [vmem:[%s2731] ss:$2 sm:$0xff]
      %s2733 = scalar_lea.vmem [#allocation2], 116
      %v2734 = vld [vmem:[%s2733] ss:$2 sm:$0xff]
      %s2735 = scalar_lea.vmem [#allocation2], 132
      %v2736 = vld [vmem:[%s2735] ss:$2 sm:$0xff]
      %s2737 = scalar_lea.vmem [#allocation2], 148
      %v2738 = vld [vmem:[%s2737] ss:$2 sm:$0xff]
      %s2739 = scalar_lea.vmem [#allocation2], 164
      %v2740 = vld [vmem:[%s2739] ss:$2 sm:$0xff]
      %s2741 = scalar_lea.vmem [#allocation2], 180
      %v2742 = vld [vmem:[%s2741] ss:$2 sm:$0xff]
      %s2743 = scalar_lea.vmem [#allocation2], 196
      %v2744 = vld [vmem:[%s2743] ss:$2 sm:$0xff]
      %s2745 = scalar_lea.vmem [#allocation2], 212
      %v2746 = vld [vmem:[%s2745] ss:$2 sm:$0xff]
      %s2747 = scalar_lea.vmem [#allocation2], 228
      %v2748 = vld [vmem:[%s2747] ss:$2 sm:$0xff]
      %s2749 = scalar_lea.vmem [#allocation2], 244
      %v2750 = vld [vmem:[%s2749] ss:$2 sm:$0xff]
      %s2751 = scalar_lea.vmem [#allocation2], 260
      %v2752 = vld [vmem:[%s2751] ss:$2 sm:$0xff]
      %s2753 = scalar_lea.vmem [#allocation2], 276
      %v2754 = vld [vmem:[%s2753] ss:$2 sm:$0xff]
      %s2755 = scalar_lea.vmem [#allocation2], 292
      %v2756 = vld [vmem:[%s2755] ss:$2 sm:$0xff]
      %s2757 = scalar_lea.vmem [#allocation2], 308
      %v2758 = vld [vmem:[%s2757] ss:$2 sm:$0xff]
      %s2759 = scalar_lea.vmem %s3, 160
      %v2760 = vld [vmem:[%s2759] sm:$0xff]
      %v2761 = vld [vmem:[%s2759 + $0x8] sm:$0xff]
      %v2762 = vld [vmem:[%s2759 + $0x10] sm:$0xff]
      %v2763 = vld [vmem:[%s2759 + $0x18] sm:$0xff]
      %v2765 = vsel %vm279, %v2722, 0
      %v2768 = vsel %vm279, %v2724, 0
      %v2771 = vsel %vm279, %v2726, 0
      %v2774 = vsel %vm279, %v2728, 0
      %v2777 = vsel %vm279, %v2730, 0
      %v2780 = vsel %vm279, %v2732, 0
      %v2783 = vsel %vm279, %v2734, 0
      %v2786 = vsel %vm279, %v2736, 0
      %v2789 = vsel %vm279, %v2738, 0
      %v2792 = vsel %vm279, %v2740, 0
      %v2795 = vsel %vm279, %v2742, 0
      %v2798 = vsel %vm279, %v2744, 0
      %v2801 = vsel %vm279, %v2746, 0
      %v2804 = vsel %vm279, %v2748, 0
      %v2807 = vsel %vm279, %v2750, 0
      %v2810 = vsel %vm279, %v2752, 0
      %v2813 = vsel %vm279, %v2754, 0
      %v2816 = vsel %vm279, %v2756, 0
      %v2819 = vsel %vm279, %v2758, 0
      %2821 = vmatpush.msra.mxu0 0.0
      %2822 = vmatpush.msra.mxu0 0.0
      %2823 = vmatpush.msra.mxu0 0.0
      %2824 = vmatpush.msra.mxu0 0.0
      %2825 = vmatpush.msra.mxu0 0.0
      %2826 = vmatpush.msra.mxu0 0.0
      %2827 = vmatpush.msra.mxu0 0.0
      %2828 = vmatpush.msra.mxu0 0.0
      %2829 = vmatpush.msra.mxu0 0.0
      %2830 = vmatpush.msra.mxu0 0.0
      %2831 = vmatpush.msra.mxu0 0.0
      %2832 = vmatpush.msra.mxu0 0.0
      %2833 = vmatpush.msra.mxu0 %v2763
      %2834 = vmatpush.msra.mxu0 %v2762
      %2835 = vmatpush.msra.mxu0 %v2761
      %2836 = vmatpush.msra.mxu0 %v2760
      %2837 = vmatmul.f32.gmra.mxu0 %v2765
      %v2838 = vpop.f32.mrf.mxu0
      %v2839 = vadd.f32 0.0, %v2838
      %2840 = vmatmul.f32.gmra.mxu0 %v2768
      %v2841 = vpop.f32.mrf.mxu0
      %v2842 = vadd.f32 0.0, %v2841
      %2843 = vmatmul.f32.gmra.mxu0 %v2771
      %v2844 = vpop.f32.mrf.mxu0
      %v2845 = vadd.f32 0.0, %v2844
      %2846 = vmatmul.f32.gmra.mxu0 %v2774
      %v2847 = vpop.f32.mrf.mxu0
      %v2848 = vadd.f32 0.0, %v2847
      %2849 = vmatmul.f32.gmra.mxu0 %v2777
      %v2850 = vpop.f32.mrf.mxu0
      %v2851 = vadd.f32 0.0, %v2850
      %2852 = vmatmul.f32.gmra.mxu0 %v2780
      %v2853 = vpop.f32.mrf.mxu0
      %v2854 = vadd.f32 0.0, %v2853
      %2855 = vmatmul.f32.gmra.mxu0 %v2783
      %v2856 = vpop.f32.mrf.mxu0
      %v2857 = vadd.f32 0.0, %v2856
      %2858 = vmatmul.f32.gmra.mxu0 %v2786
      %v2859 = vpop.f32.mrf.mxu0
      %v2860 = vadd.f32 0.0, %v2859
      %2861 = vmatmul.f32.gmra.mxu0 %v2789
      %v2862 = vpop.f32.mrf.mxu0
      %v2863 = vadd.f32 0.0, %v2862
      %2864 = vmatmul.f32.gmra.mxu0 %v2792
      %v2865 = vpop.f32.mrf.mxu0
      %v2866 = vadd.f32 0.0, %v2865
      %2867 = vmatmul.f32.gmra.mxu0 %v2795
      %v2868 = vpop.f32.mrf.mxu0
      %v2869 = vadd.f32 0.0, %v2868
      %2870 = vmatmul.f32.gmra.mxu0 %v2798
      %v2871 = vpop.f32.mrf.mxu0
      %v2872 = vadd.f32 0.0, %v2871
      %2873 = vmatmul.f32.gmra.mxu0 %v2801
      %v2874 = vpop.f32.mrf.mxu0
      %v2875 = vadd.f32 0.0, %v2874
      %2876 = vmatmul.f32.gmra.mxu0 %v2804
      %v2877 = vpop.f32.mrf.mxu0
      %v2878 = vadd.f32 0.0, %v2877
      %2879 = vmatmul.f32.gmra.mxu0 %v2807
      %v2880 = vpop.f32.mrf.mxu0
      %v2881 = vadd.f32 0.0, %v2880
      %2882 = vmatmul.f32.gmra.mxu0 %v2810
      %v2883 = vpop.f32.mrf.mxu0
      %v2884 = vadd.f32 0.0, %v2883
      %2885 = vmatmul.f32.gmra.mxu0 %v2813
      %v2886 = vpop.f32.mrf.mxu0
      %v2887 = vadd.f32 0.0, %v2886
      %2888 = vmatmul.f32.gmra.mxu0 %v2816
      %v2889 = vpop.f32.mrf.mxu0
      %v2890 = vadd.f32 0.0, %v2889
      %2891 = vmatmul.f32.gmra.mxu0 %v2819
      %v2892 = vpop.f32.mrf.mxu0
      %v2893 = vadd.f32 0.0, %v2892
      %2894 = vdwg.mxu0
      %v2895 = vadd.f32 %v2702, %v2839
      %v2896 = vadd.f32 %v2703, %v2842
      %v2897 = vadd.f32 %v2704, %v2845
      %v2898 = vadd.f32 %v2705, %v2848
      %v2899 = vadd.f32 %v2706, %v2851
      %v2900 = vadd.f32 %v2707, %v2854
      %v2901 = vadd.f32 %v2708, %v2857
      %v2902 = vadd.f32 %v2709, %v2860
      %v2903 = vadd.f32 %v2710, %v2863
      %v2904 = vadd.f32 %v2711, %v2866
      %v2905 = vadd.f32 %v2712, %v2869
      %v2906 = vadd.f32 %v2713, %v2872
      %v2907 = vadd.f32 %v2714, %v2875
      %v2908 = vadd.f32 %v2715, %v2878
      %v2909 = vadd.f32 %v2716, %v2881
      %v2910 = vadd.f32 %v2717, %v2884
      %v2911 = vadd.f32 %v2718, %v2887
      %v2912 = vadd.f32 %v2719, %v2890
      %v2913 = vadd.f32 %v2720, %v2893
      %s2914 = scalar_lea.vmem [#allocation2], 21
      %v2915 = vld [vmem:[%s2914] ss:$2 sm:$0xff]
      %s2916 = scalar_lea.vmem [#allocation2], 37
      %v2917 = vld [vmem:[%s2916] ss:$2 sm:$0xff]
      %s2918 = scalar_lea.vmem [#allocation2], 53
      %v2919 = vld [vmem:[%s2918] ss:$2 sm:$0xff]
      %s2920 = scalar_lea.vmem [#allocation2], 69
      %v2921 = vld [vmem:[%s2920] ss:$2 sm:$0xff]
      %s2922 = scalar_lea.vmem [#allocation2], 85
      %v2923 = vld [vmem:[%s2922] ss:$2 sm:$0xff]
      %s2924 = scalar_lea.vmem [#allocation2], 101
      %v2925 = vld [vmem:[%s2924] ss:$2 sm:$0xff]
      %s2926 = scalar_lea.vmem [#allocation2], 117
      %v2927 = vld [vmem:[%s2926] ss:$2 sm:$0xff]
      %s2928 = scalar_lea.vmem [#allocation2], 133
      %v2929 = vld [vmem:[%s2928] ss:$2 sm:$0xff]
      %s2930 = scalar_lea.vmem [#allocation2], 149
      %v2931 = vld [vmem:[%s2930] ss:$2 sm:$0xff]
      %s2932 = scalar_lea.vmem [#allocation2], 165
      %v2933 = vld [vmem:[%s2932] ss:$2 sm:$0xff]
      %s2934 = scalar_lea.vmem [#allocation2], 181
      %v2935 = vld [vmem:[%s2934] ss:$2 sm:$0xff]
      %s2936 = scalar_lea.vmem [#allocation2], 197
      %v2937 = vld [vmem:[%s2936] ss:$2 sm:$0xff]
      %s2938 = scalar_lea.vmem [#allocation2], 213
      %v2939 = vld [vmem:[%s2938] ss:$2 sm:$0xff]
      %s2940 = scalar_lea.vmem [#allocation2], 229
      %v2941 = vld [vmem:[%s2940] ss:$2 sm:$0xff]
      %s2942 = scalar_lea.vmem [#allocation2], 245
      %v2943 = vld [vmem:[%s2942] ss:$2 sm:$0xff]
      %s2944 = scalar_lea.vmem [#allocation2], 261
      %v2945 = vld [vmem:[%s2944] ss:$2 sm:$0xff]
      %s2946 = scalar_lea.vmem [#allocation2], 277
      %v2947 = vld [vmem:[%s2946] ss:$2 sm:$0xff]
      %s2948 = scalar_lea.vmem [#allocation2], 293
      %v2949 = vld [vmem:[%s2948] ss:$2 sm:$0xff]
      %s2950 = scalar_lea.vmem [#allocation2], 309
      %v2951 = vld [vmem:[%s2950] ss:$2 sm:$0xff]
      %s2952 = scalar_lea.vmem %s3, 192
      %v2953 = vld [vmem:[%s2952] sm:$0xff]
      %v2954 = vld [vmem:[%s2952 + $0x8] sm:$0xff]
      %v2955 = vld [vmem:[%s2952 + $0x10] sm:$0xff]
      %v2956 = vld [vmem:[%s2952 + $0x18] sm:$0xff]
      %v2958 = vsel %vm279, %v2915, 0
      %v2961 = vsel %vm279, %v2917, 0
      %v2964 = vsel %vm279, %v2919, 0
      %v2967 = vsel %vm279, %v2921, 0
      %v2970 = vsel %vm279, %v2923, 0
      %v2973 = vsel %vm279, %v2925, 0
      %v2976 = vsel %vm279, %v2927, 0
      %v2979 = vsel %vm279, %v2929, 0
      %v2982 = vsel %vm279, %v2931, 0
      %v2985 = vsel %vm279, %v2933, 0
      %v2988 = vsel %vm279, %v2935, 0
      %v2991 = vsel %vm279, %v2937, 0
      %v2994 = vsel %vm279, %v2939, 0
      %v2997 = vsel %vm279, %v2941, 0
      %v3000 = vsel %vm279, %v2943, 0
      %v3003 = vsel %vm279, %v2945, 0
      %v3006 = vsel %vm279, %v2947, 0
      %v3009 = vsel %vm279, %v2949, 0
      %v3012 = vsel %vm279, %v2951, 0
      %3014 = vmatpush.msra.mxu0 0.0
      %3015 = vmatpush.msra.mxu0 0.0
      %3016 = vmatpush.msra.mxu0 0.0
      %3017 = vmatpush.msra.mxu0 0.0
      %3018 = vmatpush.msra.mxu0 0.0
      %3019 = vmatpush.msra.mxu0 0.0
      %3020 = vmatpush.msra.mxu0 0.0
      %3021 = vmatpush.msra.mxu0 0.0
      %3022 = vmatpush.msra.mxu0 0.0
      %3023 = vmatpush.msra.mxu0 0.0
      %3024 = vmatpush.msra.mxu0 0.0
      %3025 = vmatpush.msra.mxu0 0.0
      %3026 = vmatpush.msra.mxu0 %v2956
      %3027 = vmatpush.msra.mxu0 %v2955
      %3028 = vmatpush.msra.mxu0 %v2954
      %3029 = vmatpush.msra.mxu0 %v2953
      %3030 = vmatmul.f32.gmra.mxu0 %v2958
      %v3031 = vpop.f32.mrf.mxu0
      %v3032 = vadd.f32 0.0, %v3031
      %3033 = vmatmul.f32.gmra.mxu0 %v2961
      %v3034 = vpop.f32.mrf.mxu0
      %v3035 = vadd.f32 0.0, %v3034
      %3036 = vmatmul.f32.gmra.mxu0 %v2964
      %v3037 = vpop.f32.mrf.mxu0
      %v3038 = vadd.f32 0.0, %v3037
      %3039 = vmatmul.f32.gmra.mxu0 %v2967
      %v3040 = vpop.f32.mrf.mxu0
      %v3041 = vadd.f32 0.0, %v3040
      %3042 = vmatmul.f32.gmra.mxu0 %v2970
      %v3043 = vpop.f32.mrf.mxu0
      %v3044 = vadd.f32 0.0, %v3043
      %3045 = vmatmul.f32.gmra.mxu0 %v2973
      %v3046 = vpop.f32.mrf.mxu0
      %v3047 = vadd.f32 0.0, %v3046
      %3048 = vmatmul.f32.gmra.mxu0 %v2976
      %v3049 = vpop.f32.mrf.mxu0
      %v3050 = vadd.f32 0.0, %v3049
      %3051 = vmatmul.f32.gmra.mxu0 %v2979
      %v3052 = vpop.f32.mrf.mxu0
      %v3053 = vadd.f32 0.0, %v3052
      %3054 = vmatmul.f32.gmra.mxu0 %v2982
      %v3055 = vpop.f32.mrf.mxu0
      %v3056 = vadd.f32 0.0, %v3055
      %3057 = vmatmul.f32.gmra.mxu0 %v2985
      %v3058 = vpop.f32.mrf.mxu0
      %v3059 = vadd.f32 0.0, %v3058
      %3060 = vmatmul.f32.gmra.mxu0 %v2988
      %v3061 = vpop.f32.mrf.mxu0
      %v3062 = vadd.f32 0.0, %v3061
      %3063 = vmatmul.f32.gmra.mxu0 %v2991
      %v3064 = vpop.f32.mrf.mxu0
      %v3065 = vadd.f32 0.0, %v3064
      %3066 = vmatmul.f32.gmra.mxu0 %v2994
      %v3067 = vpop.f32.mrf.mxu0
      %v3068 = vadd.f32 0.0, %v3067
      %3069 = vmatmul.f32.gmra.mxu0 %v2997
      %v3070 = vpop.f32.mrf.mxu0
      %v3071 = vadd.f32 0.0, %v3070
      %3072 = vmatmul.f32.gmra.mxu0 %v3000
      %v3073 = vpop.f32.mrf.mxu0
      %v3074 = vadd.f32 0.0, %v3073
      %3075 = vmatmul.f32.gmra.mxu0 %v3003
      %v3076 = vpop.f32.mrf.mxu0
      %v3077 = vadd.f32 0.0, %v3076
      %3078 = vmatmul.f32.gmra.mxu0 %v3006
      %v3079 = vpop.f32.mrf.mxu0
      %v3080 = vadd.f32 0.0, %v3079
      %3081 = vmatmul.f32.gmra.mxu0 %v3009
      %v3082 = vpop.f32.mrf.mxu0
      %v3083 = vadd.f32 0.0, %v3082
      %3084 = vmatmul.f32.gmra.mxu0 %v3012
      %v3085 = vpop.f32.mrf.mxu0
      %v3086 = vadd.f32 0.0, %v3085
      %3087 = vdwg.mxu0
      %v3088 = vadd.f32 %v2895, %v3032
      %v3089 = vadd.f32 %v2896, %v3035
      %v3090 = vadd.f32 %v2897, %v3038
      %v3091 = vadd.f32 %v2898, %v3041
      %v3092 = vadd.f32 %v2899, %v3044
      %v3093 = vadd.f32 %v2900, %v3047
      %v3094 = vadd.f32 %v2901, %v3050
      %v3095 = vadd.f32 %v2902, %v3053
      %v3096 = vadd.f32 %v2903, %v3056
      %v3097 = vadd.f32 %v2904, %v3059
      %v3098 = vadd.f32 %v2905, %v3062
      %v3099 = vadd.f32 %v2906, %v3065
      %v3100 = vadd.f32 %v2907, %v3068
      %v3101 = vadd.f32 %v2908, %v3071
      %v3102 = vadd.f32 %v2909, %v3074
      %v3103 = vadd.f32 %v2910, %v3077
      %v3104 = vadd.f32 %v2911, %v3080
      %v3105 = vadd.f32 %v2912, %v3083
      %v3106 = vadd.f32 %v2913, %v3086
      %s3107 = scalar_lea.vmem [#allocation2], 22
      %v3108 = vld [vmem:[%s3107] ss:$2 sm:$0xff]
      %s3109 = scalar_lea.vmem [#allocation2], 38
      %v3110 = vld [vmem:[%s3109] ss:$2 sm:$0xff]
      %s3111 = scalar_lea.vmem [#allocation2], 54
      %v3112 = vld [vmem:[%s3111] ss:$2 sm:$0xff]
      %s3113 = scalar_lea.vmem [#allocation2], 70
      %v3114 = vld [vmem:[%s3113] ss:$2 sm:$0xff]
      %s3115 = scalar_lea.vmem [#allocation2], 86
      %v3116 = vld [vmem:[%s3115] ss:$2 sm:$0xff]
      %s3117 = scalar_lea.vmem [#allocation2], 102
      %v3118 = vld [vmem:[%s3117] ss:$2 sm:$0xff]
      %s3119 = scalar_lea.vmem [#allocation2], 118
      %v3120 = vld [vmem:[%s3119] ss:$2 sm:$0xff]
      %s3121 = scalar_lea.vmem [#allocation2], 134
      %v3122 = vld [vmem:[%s3121] ss:$2 sm:$0xff]
      %s3123 = scalar_lea.vmem [#allocation2], 150
      %v3124 = vld [vmem:[%s3123] ss:$2 sm:$0xff]
      %s3125 = scalar_lea.vmem [#allocation2], 166
      %v3126 = vld [vmem:[%s3125] ss:$2 sm:$0xff]
      %s3127 = scalar_lea.vmem [#allocation2], 182
      %v3128 = vld [vmem:[%s3127] ss:$2 sm:$0xff]
      %s3129 = scalar_lea.vmem [#allocation2], 198
      %v3130 = vld [vmem:[%s3129] ss:$2 sm:$0xff]
      %s3131 = scalar_lea.vmem [#allocation2], 214
      %v3132 = vld [vmem:[%s3131] ss:$2 sm:$0xff]
      %s3133 = scalar_lea.vmem [#allocation2], 230
      %v3134 = vld [vmem:[%s3133] ss:$2 sm:$0xff]
      %s3135 = scalar_lea.vmem [#allocation2], 246
      %v3136 = vld [vmem:[%s3135] ss:$2 sm:$0xff]
      %s3137 = scalar_lea.vmem [#allocation2], 262
      %v3138 = vld [vmem:[%s3137] ss:$2 sm:$0xff]
      %s3139 = scalar_lea.vmem [#allocation2], 278
      %v3140 = vld [vmem:[%s3139] ss:$2 sm:$0xff]
      %s3141 = scalar_lea.vmem [#allocation2], 294
      %v3142 = vld [vmem:[%s3141] ss:$2 sm:$0xff]
      %s3143 = scalar_lea.vmem [#allocation2], 310
      %v3144 = vld [vmem:[%s3143] ss:$2 sm:$0xff]
      %s3145 = scalar_lea.vmem %s3, 224
      %v3146 = vld [vmem:[%s3145] sm:$0xff]
      %v3147 = vld [vmem:[%s3145 + $0x8] sm:$0xff]
      %v3148 = vld [vmem:[%s3145 + $0x10] sm:$0xff]
      %v3149 = vld [vmem:[%s3145 + $0x18] sm:$0xff]
      %v3151 = vsel %vm279, %v3108, 0
      %v3154 = vsel %vm279, %v3110, 0
      %v3157 = vsel %vm279, %v3112, 0
      %v3160 = vsel %vm279, %v3114, 0
      %v3163 = vsel %vm279, %v3116, 0
      %v3166 = vsel %vm279, %v3118, 0
      %v3169 = vsel %vm279, %v3120, 0
      %v3172 = vsel %vm279, %v3122, 0
      %v3175 = vsel %vm279, %v3124, 0
      %v3178 = vsel %vm279, %v3126, 0
      %v3181 = vsel %vm279, %v3128, 0
      %v3184 = vsel %vm279, %v3130, 0
      %v3187 = vsel %vm279, %v3132, 0
      %v3190 = vsel %vm279, %v3134, 0
      %v3193 = vsel %vm279, %v3136, 0
      %v3196 = vsel %vm279, %v3138, 0
      %v3199 = vsel %vm279, %v3140, 0
      %v3202 = vsel %vm279, %v3142, 0
      %v3205 = vsel %vm279, %v3144, 0
      %3207 = vmatpush.msra.mxu0 0.0
      %3208 = vmatpush.msra.mxu0 0.0
      %3209 = vmatpush.msra.mxu0 0.0
      %3210 = vmatpush.msra.mxu0 0.0
      %3211 = vmatpush.msra.mxu0 0.0
      %3212 = vmatpush.msra.mxu0 0.0
      %3213 = vmatpush.msra.mxu0 0.0
      %3214 = vmatpush.msra.mxu0 0.0
      %3215 = vmatpush.msra.mxu0 0.0
      %3216 = vmatpush.msra.mxu0 0.0
      %3217 = vmatpush.msra.mxu0 0.0
      %3218 = vmatpush.msra.mxu0 0.0
      %3219 = vmatpush.msra.mxu0 %v3149
      %3220 = vmatpush.msra.mxu0 %v3148
      %3221 = vmatpush.msra.mxu0 %v3147
      %3222 = vmatpush.msra.mxu0 %v3146
      %3223 = vmatmul.f32.gmra.mxu0 %v3151
      %v3224 = vpop.f32.mrf.mxu0
      %v3225 = vadd.f32 0.0, %v3224
      %3226 = vmatmul.f32.gmra.mxu0 %v3154
      %v3227 = vpop.f32.mrf.mxu0
      %v3228 = vadd.f32 0.0, %v3227
      %3229 = vmatmul.f32.gmra.mxu0 %v3157
      %v3230 = vpop.f32.mrf.mxu0
      %v3231 = vadd.f32 0.0, %v3230
      %3232 = vmatmul.f32.gmra.mxu0 %v3160
      %v3233 = vpop.f32.mrf.mxu0
      %v3234 = vadd.f32 0.0, %v3233
      %3235 = vmatmul.f32.gmra.mxu0 %v3163
      %v3236 = vpop.f32.mrf.mxu0
      %v3237 = vadd.f32 0.0, %v3236
      %3238 = vmatmul.f32.gmra.mxu0 %v3166
      %v3239 = vpop.f32.mrf.mxu0
      %v3240 = vadd.f32 0.0, %v3239
      %3241 = vmatmul.f32.gmra.mxu0 %v3169
      %v3242 = vpop.f32.mrf.mxu0
      %v3243 = vadd.f32 0.0, %v3242
      %3244 = vmatmul.f32.gmra.mxu0 %v3172
      %v3245 = vpop.f32.mrf.mxu0
      %v3246 = vadd.f32 0.0, %v3245
      %3247 = vmatmul.f32.gmra.mxu0 %v3175
      %v3248 = vpop.f32.mrf.mxu0
      %v3249 = vadd.f32 0.0, %v3248
      %3250 = vmatmul.f32.gmra.mxu0 %v3178
      %v3251 = vpop.f32.mrf.mxu0
      %v3252 = vadd.f32 0.0, %v3251
      %3253 = vmatmul.f32.gmra.mxu0 %v3181
      %v3254 = vpop.f32.mrf.mxu0
      %v3255 = vadd.f32 0.0, %v3254
      %3256 = vmatmul.f32.gmra.mxu0 %v3184
      %v3257 = vpop.f32.mrf.mxu0
      %v3258 = vadd.f32 0.0, %v3257
      %3259 = vmatmul.f32.gmra.mxu0 %v3187
      %v3260 = vpop.f32.mrf.mxu0
      %v3261 = vadd.f32 0.0, %v3260
      %3262 = vmatmul.f32.gmra.mxu0 %v3190
      %v3263 = vpop.f32.mrf.mxu0
      %v3264 = vadd.f32 0.0, %v3263
      %3265 = vmatmul.f32.gmra.mxu0 %v3193
      %v3266 = vpop.f32.mrf.mxu0
      %v3267 = vadd.f32 0.0, %v3266
      %3268 = vmatmul.f32.gmra.mxu0 %v3196
      %v3269 = vpop.f32.mrf.mxu0
      %v3270 = vadd.f32 0.0, %v3269
      %3271 = vmatmul.f32.gmra.mxu0 %v3199
      %v3272 = vpop.f32.mrf.mxu0
      %v3273 = vadd.f32 0.0, %v3272
      %3274 = vmatmul.f32.gmra.mxu0 %v3202
      %v3275 = vpop.f32.mrf.mxu0
      %v3276 = vadd.f32 0.0, %v3275
      %3277 = vmatmul.f32.gmra.mxu0 %v3205
      %v3278 = vpop.f32.mrf.mxu0
      %v3279 = vadd.f32 0.0, %v3278
      %3280 = vdwg.mxu0
      %v3281 = vadd.f32 %v3088, %v3225
      %v3282 = vadd.f32 %v3089, %v3228
      %v3283 = vadd.f32 %v3090, %v3231
      %v3284 = vadd.f32 %v3091, %v3234
      %v3285 = vadd.f32 %v3092, %v3237
      %v3286 = vadd.f32 %v3093, %v3240
      %v3287 = vadd.f32 %v3094, %v3243
      %v3288 = vadd.f32 %v3095, %v3246
      %v3289 = vadd.f32 %v3096, %v3249
      %v3290 = vadd.f32 %v3097, %v3252
      %v3291 = vadd.f32 %v3098, %v3255
      %v3292 = vadd.f32 %v3099, %v3258
      %v3293 = vadd.f32 %v3100, %v3261
      %v3294 = vadd.f32 %v3101, %v3264
      %v3295 = vadd.f32 %v3102, %v3267
      %v3296 = vadd.f32 %v3103, %v3270
      %v3297 = vadd.f32 %v3104, %v3273
      %v3298 = vadd.f32 %v3105, %v3276
      %v3299 = vadd.f32 %v3106, %v3279
      %v3300 = vld [vmem:[%s3109] ss:$2 sm:$0xff]
      %v3301 = vld [vmem:[%s3111] ss:$2 sm:$0xff]
      %v3302 = vld [vmem:[%s3113] ss:$2 sm:$0xff]
      %v3303 = vld [vmem:[%s3115] ss:$2 sm:$0xff]
      %v3304 = vld [vmem:[%s3117] ss:$2 sm:$0xff]
      %v3305 = vld [vmem:[%s3119] ss:$2 sm:$0xff]
      %v3306 = vld [vmem:[%s3121] ss:$2 sm:$0xff]
      %v3307 = vld [vmem:[%s3123] ss:$2 sm:$0xff]
      %v3308 = vld [vmem:[%s3125] ss:$2 sm:$0xff]
      %v3309 = vld [vmem:[%s3127] ss:$2 sm:$0xff]
      %v3310 = vld [vmem:[%s3129] ss:$2 sm:$0xff]
      %v3311 = vld [vmem:[%s3131] ss:$2 sm:$0xff]
      %v3312 = vld [vmem:[%s3133] ss:$2 sm:$0xff]
      %v3313 = vld [vmem:[%s3135] ss:$2 sm:$0xff]
      %v3314 = vld [vmem:[%s3137] ss:$2 sm:$0xff]
      %v3315 = vld [vmem:[%s3139] ss:$2 sm:$0xff]
      %v3316 = vld [vmem:[%s3141] ss:$2 sm:$0xff]
      %v3317 = vld [vmem:[%s3143] ss:$2 sm:$0xff]
      %s3318 = scalar_lea.vmem [#allocation2], 326
      %v3319 = vld [vmem:[%s3318] ss:$2 sm:$0xff]
      %s3320 = scalar_lea.vmem %s3, 256
      %v3321 = vld [vmem:[%s3320] sm:$0xff]
      %v3322 = vld [vmem:[%s3320 + $0x8] sm:$0xff]
      %v3323 = vld [vmem:[%s3320 + $0x10] sm:$0xff]
      %v3324 = vld [vmem:[%s3320 + $0x18] sm:$0xff]
      %v3326 = vsel %vm279, %v3300, 0
      %v3329 = vsel %vm279, %v3301, 0
      %v3332 = vsel %vm279, %v3302, 0
      %v3335 = vsel %vm279, %v3303, 0
      %v3338 = vsel %vm279, %v3304, 0
      %v3341 = vsel %vm279, %v3305, 0
      %v3344 = vsel %vm279, %v3306, 0
      %v3347 = vsel %vm279, %v3307, 0
      %v3350 = vsel %vm279, %v3308, 0
      %v3353 = vsel %vm279, %v3309, 0
      %v3356 = vsel %vm279, %v3310, 0
      %v3359 = vsel %vm279, %v3311, 0
      %v3362 = vsel %vm279, %v3312, 0
      %v3365 = vsel %vm279, %v3313, 0
      %v3368 = vsel %vm279, %v3314, 0
      %v3371 = vsel %vm279, %v3315, 0
      %v3374 = vsel %vm279, %v3316, 0
      %v3377 = vsel %vm279, %v3317, 0
      %v3380 = vsel %vm279, %v3319, 0
      %3382 = vmatpush.msra.mxu0 0.0
      %3383 = vmatpush.msra.mxu0 0.0
      %3384 = vmatpush.msra.mxu0 0.0
      %3385 = vmatpush.msra.mxu0 0.0
      %3386 = vmatpush.msra.mxu0 0.0
      %3387 = vmatpush.msra.mxu0 0.0
      %3388 = vmatpush.msra.mxu0 0.0
      %3389 = vmatpush.msra.mxu0 0.0
      %3390 = vmatpush.msra.mxu0 0.0
      %3391 = vmatpush.msra.mxu0 0.0
      %3392 = vmatpush.msra.mxu0 0.0
      %3393 = vmatpush.msra.mxu0 0.0
      %3394 = vmatpush.msra.mxu0 %v3324
      %3395 = vmatpush.msra.mxu0 %v3323
      %3396 = vmatpush.msra.mxu0 %v3322
      %3397 = vmatpush.msra.mxu0 %v3321
      %3398 = vmatmul.f32.gmra.mxu0 %v3326
      %v3399 = vpop.f32.mrf.mxu0
      %v3400 = vadd.f32 0.0, %v3399
      %3401 = vmatmul.f32.gmra.mxu0 %v3329
      %v3402 = vpop.f32.mrf.mxu0
      %v3403 = vadd.f32 0.0, %v3402
      %3404 = vmatmul.f32.gmra.mxu0 %v3332
      %v3405 = vpop.f32.mrf.mxu0
      %v3406 = vadd.f32 0.0, %v3405
      %3407 = vmatmul.f32.gmra.mxu0 %v3335
      %v3408 = vpop.f32.mrf.mxu0
      %v3409 = vadd.f32 0.0, %v3408
      %3410 = vmatmul.f32.gmra.mxu0 %v3338
      %v3411 = vpop.f32.mrf.mxu0
      %v3412 = vadd.f32 0.0, %v3411
      %3413 = vmatmul.f32.gmra.mxu0 %v3341
      %v3414 = vpop.f32.mrf.mxu0
      %v3415 = vadd.f32 0.0, %v3414
      %3416 = vmatmul.f32.gmra.mxu0 %v3344
      %v3417 = vpop.f32.mrf.mxu0
      %v3418 = vadd.f32 0.0, %v3417
      %3419 = vmatmul.f32.gmra.mxu0 %v3347
      %v3420 = vpop.f32.mrf.mxu0
      %v3421 = vadd.f32 0.0, %v3420
      %3422 = vmatmul.f32.gmra.mxu0 %v3350
      %v3423 = vpop.f32.mrf.mxu0
      %v3424 = vadd.f32 0.0, %v3423
      %3425 = vmatmul.f32.gmra.mxu0 %v3353
      %v3426 = vpop.f32.mrf.mxu0
      %v3427 = vadd.f32 0.0, %v3426
      %3428 = vmatmul.f32.gmra.mxu0 %v3356
      %v3429 = vpop.f32.mrf.mxu0
      %v3430 = vadd.f32 0.0, %v3429
      %3431 = vmatmul.f32.gmra.mxu0 %v3359
      %v3432 = vpop.f32.mrf.mxu0
      %v3433 = vadd.f32 0.0, %v3432
      %3434 = vmatmul.f32.gmra.mxu0 %v3362
      %v3435 = vpop.f32.mrf.mxu0
      %v3436 = vadd.f32 0.0, %v3435
      %3437 = vmatmul.f32.gmra.mxu0 %v3365
      %v3438 = vpop.f32.mrf.mxu0
      %v3439 = vadd.f32 0.0, %v3438
      %3440 = vmatmul.f32.gmra.mxu0 %v3368
      %v3441 = vpop.f32.mrf.mxu0
      %v3442 = vadd.f32 0.0, %v3441
      %3443 = vmatmul.f32.gmra.mxu0 %v3371
      %v3444 = vpop.f32.mrf.mxu0
      %v3445 = vadd.f32 0.0, %v3444
      %3446 = vmatmul.f32.gmra.mxu0 %v3374
      %v3447 = vpop.f32.mrf.mxu0
      %v3448 = vadd.f32 0.0, %v3447
      %3449 = vmatmul.f32.gmra.mxu0 %v3377
      %v3450 = vpop.f32.mrf.mxu0
      %v3451 = vadd.f32 0.0, %v3450
      %3452 = vmatmul.f32.gmra.mxu0 %v3380
      %v3453 = vpop.f32.mrf.mxu0
      %v3454 = vadd.f32 0.0, %v3453
      %3455 = vdwg.mxu0
      %v3456 = vadd.f32 %v3281, %v3400
      %v3457 = vadd.f32 %v3282, %v3403
      %v3458 = vadd.f32 %v3283, %v3406
      %v3459 = vadd.f32 %v3284, %v3409
      %v3460 = vadd.f32 %v3285, %v3412
      %v3461 = vadd.f32 %v3286, %v3415
      %v3462 = vadd.f32 %v3287, %v3418
      %v3463 = vadd.f32 %v3288, %v3421
      %v3464 = vadd.f32 %v3289, %v3424
      %v3465 = vadd.f32 %v3290, %v3427
      %v3466 = vadd.f32 %v3291, %v3430
      %v3467 = vadd.f32 %v3292, %v3433
      %v3468 = vadd.f32 %v3293, %v3436
      %v3469 = vadd.f32 %v3294, %v3439
      %v3470 = vadd.f32 %v3295, %v3442
      %v3471 = vadd.f32 %v3296, %v3445
      %v3472 = vadd.f32 %v3297, %v3448
      %v3473 = vadd.f32 %v3298, %v3451
      %v3474 = vadd.f32 %v3299, %v3454
      %s3475 = scalar_lea.vmem [#allocation2], 39
      %v3476 = vld [vmem:[%s3475] ss:$2 sm:$0xff]
      %s3477 = scalar_lea.vmem [#allocation2], 55
      %v3478 = vld [vmem:[%s3477] ss:$2 sm:$0xff]
      %s3479 = scalar_lea.vmem [#allocation2], 71
      %v3480 = vld [vmem:[%s3479] ss:$2 sm:$0xff]
      %s3481 = scalar_lea.vmem [#allocation2], 87
      %v3482 = vld [vmem:[%s3481] ss:$2 sm:$0xff]
      %s3483 = scalar_lea.vmem [#allocation2], 103
      %v3484 = vld [vmem:[%s3483] ss:$2 sm:$0xff]
      %s3485 = scalar_lea.vmem [#allocation2], 119
      %v3486 = vld [vmem:[%s3485] ss:$2 sm:$0xff]
      %s3487 = scalar_lea.vmem [#allocation2], 135
      %v3488 = vld [vmem:[%s3487] ss:$2 sm:$0xff]
      %s3489 = scalar_lea.vmem [#allocation2], 151
      %v3490 = vld [vmem:[%s3489] ss:$2 sm:$0xff]
      %s3491 = scalar_lea.vmem [#allocation2], 167
      %v3492 = vld [vmem:[%s3491] ss:$2 sm:$0xff]
      %s3493 = scalar_lea.vmem [#allocation2], 183
      %v3494 = vld [vmem:[%s3493] ss:$2 sm:$0xff]
      %s3495 = scalar_lea.vmem [#allocation2], 199
      %v3496 = vld [vmem:[%s3495] ss:$2 sm:$0xff]
      %s3497 = scalar_lea.vmem [#allocation2], 215
      %v3498 = vld [vmem:[%s3497] ss:$2 sm:$0xff]
      %s3499 = scalar_lea.vmem [#allocation2], 231
      %v3500 = vld [vmem:[%s3499] ss:$2 sm:$0xff]
      %s3501 = scalar_lea.vmem [#allocation2], 247
      %v3502 = vld [vmem:[%s3501] ss:$2 sm:$0xff]
      %s3503 = scalar_lea.vmem [#allocation2], 263
      %v3504 = vld [vmem:[%s3503] ss:$2 sm:$0xff]
      %s3505 = scalar_lea.vmem [#allocation2], 279
      %v3506 = vld [vmem:[%s3505] ss:$2 sm:$0xff]
      %s3507 = scalar_lea.vmem [#allocation2], 295
      %v3508 = vld [vmem:[%s3507] ss:$2 sm:$0xff]
      %s3509 = scalar_lea.vmem [#allocation2], 311
      %v3510 = vld [vmem:[%s3509] ss:$2 sm:$0xff]
      %s3511 = scalar_lea.vmem [#allocation2], 327
      %v3512 = vld [vmem:[%s3511] ss:$2 sm:$0xff]
      %s3513 = scalar_lea.vmem %s3, 288
      %v3514 = vld [vmem:[%s3513] sm:$0xff]
      %v3515 = vld [vmem:[%s3513 + $0x8] sm:$0xff]
      %v3516 = vld [vmem:[%s3513 + $0x10] sm:$0xff]
      %v3517 = vld [vmem:[%s3513 + $0x18] sm:$0xff]
      %v3519 = vsel %vm279, %v3476, 0
      %v3522 = vsel %vm279, %v3478, 0
      %v3525 = vsel %vm279, %v3480, 0
      %v3528 = vsel %vm279, %v3482, 0
      %v3531 = vsel %vm279, %v3484, 0
      %v3534 = vsel %vm279, %v3486, 0
      %v3537 = vsel %vm279, %v3488, 0
      %v3540 = vsel %vm279, %v3490, 0
      %v3543 = vsel %vm279, %v3492, 0
      %v3546 = vsel %vm279, %v3494, 0
      %v3549 = vsel %vm279, %v3496, 0
      %v3552 = vsel %vm279, %v3498, 0
      %v3555 = vsel %vm279, %v3500, 0
      %v3558 = vsel %vm279, %v3502, 0
      %v3561 = vsel %vm279, %v3504, 0
      %v3564 = vsel %vm279, %v3506, 0
      %v3567 = vsel %vm279, %v3508, 0
      %v3570 = vsel %vm279, %v3510, 0
      %v3573 = vsel %vm279, %v3512, 0
      %3575 = vmatpush.msra.mxu0 0.0
      %3576 = vmatpush.msra.mxu0 0.0
      %3577 = vmatpush.msra.mxu0 0.0
      %3578 = vmatpush.msra.mxu0 0.0
      %3579 = vmatpush.msra.mxu0 0.0
      %3580 = vmatpush.msra.mxu0 0.0
      %3581 = vmatpush.msra.mxu0 0.0
      %3582 = vmatpush.msra.mxu0 0.0
      %3583 = vmatpush.msra.mxu0 0.0
      %3584 = vmatpush.msra.mxu0 0.0
      %3585 = vmatpush.msra.mxu0 0.0
      %3586 = vmatpush.msra.mxu0 0.0
      %3587 = vmatpush.msra.mxu0 %v3517
      %3588 = vmatpush.msra.mxu0 %v3516
      %3589 = vmatpush.msra.mxu0 %v3515
      %3590 = vmatpush.msra.mxu0 %v3514
      %3591 = vmatmul.f32.gmra.mxu0 %v3519
      %v3592 = vpop.f32.mrf.mxu0
      %v3593 = vadd.f32 0.0, %v3592
      %3594 = vmatmul.f32.gmra.mxu0 %v3522
      %v3595 = vpop.f32.mrf.mxu0
      %v3596 = vadd.f32 0.0, %v3595
      %3597 = vmatmul.f32.gmra.mxu0 %v3525
      %v3598 = vpop.f32.mrf.mxu0
      %v3599 = vadd.f32 0.0, %v3598
      %3600 = vmatmul.f32.gmra.mxu0 %v3528
      %v3601 = vpop.f32.mrf.mxu0
      %v3602 = vadd.f32 0.0, %v3601
      %3603 = vmatmul.f32.gmra.mxu0 %v3531
      %v3604 = vpop.f32.mrf.mxu0
      %v3605 = vadd.f32 0.0, %v3604
      %3606 = vmatmul.f32.gmra.mxu0 %v3534
      %v3607 = vpop.f32.mrf.mxu0
      %v3608 = vadd.f32 0.0, %v3607
      %3609 = vmatmul.f32.gmra.mxu0 %v3537
      %v3610 = vpop.f32.mrf.mxu0
      %v3611 = vadd.f32 0.0, %v3610
      %3612 = vmatmul.f32.gmra.mxu0 %v3540
      %v3613 = vpop.f32.mrf.mxu0
      %v3614 = vadd.f32 0.0, %v3613
      %3615 = vmatmul.f32.gmra.mxu0 %v3543
      %v3616 = vpop.f32.mrf.mxu0
      %v3617 = vadd.f32 0.0, %v3616
      %3618 = vmatmul.f32.gmra.mxu0 %v3546
      %v3619 = vpop.f32.mrf.mxu0
      %v3620 = vadd.f32 0.0, %v3619
      %3621 = vmatmul.f32.gmra.mxu0 %v3549
      %v3622 = vpop.f32.mrf.mxu0
      %v3623 = vadd.f32 0.0, %v3622
      %3624 = vmatmul.f32.gmra.mxu0 %v3552
      %v3625 = vpop.f32.mrf.mxu0
      %v3626 = vadd.f32 0.0, %v3625
      %3627 = vmatmul.f32.gmra.mxu0 %v3555
      %v3628 = vpop.f32.mrf.mxu0
      %v3629 = vadd.f32 0.0, %v3628
      %3630 = vmatmul.f32.gmra.mxu0 %v3558
      %v3631 = vpop.f32.mrf.mxu0
      %v3632 = vadd.f32 0.0, %v3631
      %3633 = vmatmul.f32.gmra.mxu0 %v3561
      %v3634 = vpop.f32.mrf.mxu0
      %v3635 = vadd.f32 0.0, %v3634
      %3636 = vmatmul.f32.gmra.mxu0 %v3564
      %v3637 = vpop.f32.mrf.mxu0
      %v3638 = vadd.f32 0.0, %v3637
      %3639 = vmatmul.f32.gmra.mxu0 %v3567
      %v3640 = vpop.f32.mrf.mxu0
      %v3641 = vadd.f32 0.0, %v3640
      %3642 = vmatmul.f32.gmra.mxu0 %v3570
      %v3643 = vpop.f32.mrf.mxu0
      %v3644 = vadd.f32 0.0, %v3643
      %3645 = vmatmul.f32.gmra.mxu0 %v3573
      %v3646 = vpop.f32.mrf.mxu0
      %v3647 = vadd.f32 0.0, %v3646
      %3648 = vdwg.mxu0
      %v3649 = vadd.f32 %v3456, %v3593
      %v3650 = vadd.f32 %v3457, %v3596
      %v3651 = vadd.f32 %v3458, %v3599
      %v3652 = vadd.f32 %v3459, %v3602
      %v3653 = vadd.f32 %v3460, %v3605
      %v3654 = vadd.f32 %v3461, %v3608
      %v3655 = vadd.f32 %v3462, %v3611
      %v3656 = vadd.f32 %v3463, %v3614
      %v3657 = vadd.f32 %v3464, %v3617
      %v3658 = vadd.f32 %v3465, %v3620
      %v3659 = vadd.f32 %v3466, %v3623
      %v3660 = vadd.f32 %v3467, %v3626
      %v3661 = vadd.f32 %v3468, %v3629
      %v3662 = vadd.f32 %v3469, %v3632
      %v3663 = vadd.f32 %v3470, %v3635
      %v3664 = vadd.f32 %v3471, %v3638
      %v3665 = vadd.f32 %v3472, %v3641
      %v3666 = vadd.f32 %v3473, %v3644
      %v3667 = vadd.f32 %v3474, %v3647
      %s3668 = scalar_lea.vmem [#allocation2], 40
      %v3669 = vld [vmem:[%s3668] ss:$2 sm:$0xff]
      %s3670 = scalar_lea.vmem [#allocation2], 56
      %v3671 = vld [vmem:[%s3670] ss:$2 sm:$0xff]
      %s3672 = scalar_lea.vmem [#allocation2], 72
      %v3673 = vld [vmem:[%s3672] ss:$2 sm:$0xff]
      %s3674 = scalar_lea.vmem [#allocation2], 88
      %v3675 = vld [vmem:[%s3674] ss:$2 sm:$0xff]
      %s3676 = scalar_lea.vmem [#allocation2], 104
      %v3677 = vld [vmem:[%s3676] ss:$2 sm:$0xff]
      %s3678 = scalar_lea.vmem [#allocation2], 120
      %v3679 = vld [vmem:[%s3678] ss:$2 sm:$0xff]
      %s3680 = scalar_lea.vmem [#allocation2], 136
      %v3681 = vld [vmem:[%s3680] ss:$2 sm:$0xff]
      %s3682 = scalar_lea.vmem [#allocation2], 152
      %v3683 = vld [vmem:[%s3682] ss:$2 sm:$0xff]
      %s3684 = scalar_lea.vmem [#allocation2], 168
      %v3685 = vld [vmem:[%s3684] ss:$2 sm:$0xff]
      %s3686 = scalar_lea.vmem [#allocation2], 184
      %v3687 = vld [vmem:[%s3686] ss:$2 sm:$0xff]
      %s3688 = scalar_lea.vmem [#allocation2], 200
      %v3689 = vld [vmem:[%s3688] ss:$2 sm:$0xff]
      %s3690 = scalar_lea.vmem [#allocation2], 216
      %v3691 = vld [vmem:[%s3690] ss:$2 sm:$0xff]
      %s3692 = scalar_lea.vmem [#allocation2], 232
      %v3693 = vld [vmem:[%s3692] ss:$2 sm:$0xff]
      %s3694 = scalar_lea.vmem [#allocation2], 248
      %v3695 = vld [vmem:[%s3694] ss:$2 sm:$0xff]
      %s3696 = scalar_lea.vmem [#allocation2], 264
      %v3697 = vld [vmem:[%s3696] ss:$2 sm:$0xff]
      %s3698 = scalar_lea.vmem [#allocation2], 280
      %v3699 = vld [vmem:[%s3698] ss:$2 sm:$0xff]
      %s3700 = scalar_lea.vmem [#allocation2], 296
      %v3701 = vld [vmem:[%s3700] ss:$2 sm:$0xff]
      %s3702 = scalar_lea.vmem [#allocation2], 312
      %v3703 = vld [vmem:[%s3702] ss:$2 sm:$0xff]
      %s3704 = scalar_lea.vmem [#allocation2], 328
      %v3705 = vld [vmem:[%s3704] ss:$2 sm:$0xff]
      %s3706 = scalar_lea.vmem %s3, 320
      %v3707 = vld [vmem:[%s3706] sm:$0xff]
      %v3708 = vld [vmem:[%s3706 + $0x8] sm:$0xff]
      %v3709 = vld [vmem:[%s3706 + $0x10] sm:$0xff]
      %v3710 = vld [vmem:[%s3706 + $0x18] sm:$0xff]
      %v3712 = vsel %vm279, %v3669, 0
      %v3715 = vsel %vm279, %v3671, 0
      %v3718 = vsel %vm279, %v3673, 0
      %v3721 = vsel %vm279, %v3675, 0
      %v3724 = vsel %vm279, %v3677, 0
      %v3727 = vsel %vm279, %v3679, 0
      %v3730 = vsel %vm279, %v3681, 0
      %v3733 = vsel %vm279, %v3683, 0
      %v3736 = vsel %vm279, %v3685, 0
      %v3739 = vsel %vm279, %v3687, 0
      %v3742 = vsel %vm279, %v3689, 0
      %v3745 = vsel %vm279, %v3691, 0
      %v3748 = vsel %vm279, %v3693, 0
      %v3751 = vsel %vm279, %v3695, 0
      %v3754 = vsel %vm279, %v3697, 0
      %v3757 = vsel %vm279, %v3699, 0
      %v3760 = vsel %vm279, %v3701, 0
      %v3763 = vsel %vm279, %v3703, 0
      %v3766 = vsel %vm279, %v3705, 0
      %3768 = vmatpush.msra.mxu0 0.0
      %3769 = vmatpush.msra.mxu0 0.0
      %3770 = vmatpush.msra.mxu0 0.0
      %3771 = vmatpush.msra.mxu0 0.0
      %3772 = vmatpush.msra.mxu0 0.0
      %3773 = vmatpush.msra.mxu0 0.0
      %3774 = vmatpush.msra.mxu0 0.0
      %3775 = vmatpush.msra.mxu0 0.0
      %3776 = vmatpush.msra.mxu0 0.0
      %3777 = vmatpush.msra.mxu0 0.0
      %3778 = vmatpush.msra.mxu0 0.0
      %3779 = vmatpush.msra.mxu0 0.0
      %3780 = vmatpush.msra.mxu0 %v3710
      %3781 = vmatpush.msra.mxu0 %v3709
      %3782 = vmatpush.msra.mxu0 %v3708
      %3783 = vmatpush.msra.mxu0 %v3707
      %3784 = vmatmul.f32.gmra.mxu0 %v3712
      %v3785 = vpop.f32.mrf.mxu0
      %v3786 = vadd.f32 0.0, %v3785
      %3787 = vmatmul.f32.gmra.mxu0 %v3715
      %v3788 = vpop.f32.mrf.mxu0
      %v3789 = vadd.f32 0.0, %v3788
      %3790 = vmatmul.f32.gmra.mxu0 %v3718
      %v3791 = vpop.f32.mrf.mxu0
      %v3792 = vadd.f32 0.0, %v3791
      %3793 = vmatmul.f32.gmra.mxu0 %v3721
      %v3794 = vpop.f32.mrf.mxu0
      %v3795 = vadd.f32 0.0, %v3794
      %3796 = vmatmul.f32.gmra.mxu0 %v3724
      %v3797 = vpop.f32.mrf.mxu0
      %v3798 = vadd.f32 0.0, %v3797
      %3799 = vmatmul.f32.gmra.mxu0 %v3727
      %v3800 = vpop.f32.mrf.mxu0
      %v3801 = vadd.f32 0.0, %v3800
      %3802 = vmatmul.f32.gmra.mxu0 %v3730
      %v3803 = vpop.f32.mrf.mxu0
      %v3804 = vadd.f32 0.0, %v3803
      %3805 = vmatmul.f32.gmra.mxu0 %v3733
      %v3806 = vpop.f32.mrf.mxu0
      %v3807 = vadd.f32 0.0, %v3806
      %3808 = vmatmul.f32.gmra.mxu0 %v3736
      %v3809 = vpop.f32.mrf.mxu0
      %v3810 = vadd.f32 0.0, %v3809
      %3811 = vmatmul.f32.gmra.mxu0 %v3739
      %v3812 = vpop.f32.mrf.mxu0
      %v3813 = vadd.f32 0.0, %v3812
      %3814 = vmatmul.f32.gmra.mxu0 %v3742
      %v3815 = vpop.f32.mrf.mxu0
      %v3816 = vadd.f32 0.0, %v3815
      %3817 = vmatmul.f32.gmra.mxu0 %v3745
      %v3818 = vpop.f32.mrf.mxu0
      %v3819 = vadd.f32 0.0, %v3818
      %3820 = vmatmul.f32.gmra.mxu0 %v3748
      %v3821 = vpop.f32.mrf.mxu0
      %v3822 = vadd.f32 0.0, %v3821
      %3823 = vmatmul.f32.gmra.mxu0 %v3751
      %v3824 = vpop.f32.mrf.mxu0
      %v3825 = vadd.f32 0.0, %v3824
      %3826 = vmatmul.f32.gmra.mxu0 %v3754
      %v3827 = vpop.f32.mrf.mxu0
      %v3828 = vadd.f32 0.0, %v3827
      %3829 = vmatmul.f32.gmra.mxu0 %v3757
      %v3830 = vpop.f32.mrf.mxu0
      %v3831 = vadd.f32 0.0, %v3830
      %3832 = vmatmul.f32.gmra.mxu0 %v3760
      %v3833 = vpop.f32.mrf.mxu0
      %v3834 = vadd.f32 0.0, %v3833
      %3835 = vmatmul.f32.gmra.mxu0 %v3763
      %v3836 = vpop.f32.mrf.mxu0
      %v3837 = vadd.f32 0.0, %v3836
      %3838 = vmatmul.f32.gmra.mxu0 %v3766
      %v3839 = vpop.f32.mrf.mxu0
      %v3840 = vadd.f32 0.0, %v3839
      %3841 = vdwg.mxu0
      %v3842 = vadd.f32 %v3649, %v3786
      %v3843 = vadd.f32 %v3650, %v3789
      %v3844 = vadd.f32 %v3651, %v3792
      %v3845 = vadd.f32 %v3652, %v3795
      %v3846 = vadd.f32 %v3653, %v3798
      %v3847 = vadd.f32 %v3654, %v3801
      %v3848 = vadd.f32 %v3655, %v3804
      %v3849 = vadd.f32 %v3656, %v3807
      %v3850 = vadd.f32 %v3657, %v3810
      %v3851 = vadd.f32 %v3658, %v3813
      %v3852 = vadd.f32 %v3659, %v3816
      %v3853 = vadd.f32 %v3660, %v3819
      %v3854 = vadd.f32 %v3661, %v3822
      %v3855 = vadd.f32 %v3662, %v3825
      %v3856 = vadd.f32 %v3663, %v3828
      %v3857 = vadd.f32 %v3664, %v3831
      %v3858 = vadd.f32 %v3665, %v3834
      %v3859 = vadd.f32 %v3666, %v3837
      %v3860 = vadd.f32 %v3667, %v3840
      %s3861 = scalar_lea.vmem [#allocation2], 41
      %v3862 = vld [vmem:[%s3861] ss:$2 sm:$0xff]
      %s3863 = scalar_lea.vmem [#allocation2], 57
      %v3864 = vld [vmem:[%s3863] ss:$2 sm:$0xff]
      %s3865 = scalar_lea.vmem [#allocation2], 73
      %v3866 = vld [vmem:[%s3865] ss:$2 sm:$0xff]
      %s3867 = scalar_lea.vmem [#allocation2], 89
      %v3868 = vld [vmem:[%s3867] ss:$2 sm:$0xff]
      %s3869 = scalar_lea.vmem [#allocation2], 105
      %v3870 = vld [vmem:[%s3869] ss:$2 sm:$0xff]
      %s3871 = scalar_lea.vmem [#allocation2], 121
      %v3872 = vld [vmem:[%s3871] ss:$2 sm:$0xff]
      %s3873 = scalar_lea.vmem [#allocation2], 137
      %v3874 = vld [vmem:[%s3873] ss:$2 sm:$0xff]
      %s3875 = scalar_lea.vmem [#allocation2], 153
      %v3876 = vld [vmem:[%s3875] ss:$2 sm:$0xff]
      %s3877 = scalar_lea.vmem [#allocation2], 169
      %v3878 = vld [vmem:[%s3877] ss:$2 sm:$0xff]
      %s3879 = scalar_lea.vmem [#allocation2], 185
      %v3880 = vld [vmem:[%s3879] ss:$2 sm:$0xff]
      %s3881 = scalar_lea.vmem [#allocation2], 201
      %v3882 = vld [vmem:[%s3881] ss:$2 sm:$0xff]
      %s3883 = scalar_lea.vmem [#allocation2], 217
      %v3884 = vld [vmem:[%s3883] ss:$2 sm:$0xff]
      %s3885 = scalar_lea.vmem [#allocation2], 233
      %v3886 = vld [vmem:[%s3885] ss:$2 sm:$0xff]
      %s3887 = scalar_lea.vmem [#allocation2], 249
      %v3888 = vld [vmem:[%s3887] ss:$2 sm:$0xff]
      %s3889 = scalar_lea.vmem [#allocation2], 265
      %v3890 = vld [vmem:[%s3889] ss:$2 sm:$0xff]
      %s3891 = scalar_lea.vmem [#allocation2], 281
      %v3892 = vld [vmem:[%s3891] ss:$2 sm:$0xff]
      %s3893 = scalar_lea.vmem [#allocation2], 297
      %v3894 = vld [vmem:[%s3893] ss:$2 sm:$0xff]
      %s3895 = scalar_lea.vmem [#allocation2], 313
      %v3896 = vld [vmem:[%s3895] ss:$2 sm:$0xff]
      %s3897 = scalar_lea.vmem [#allocation2], 329
      %v3898 = vld [vmem:[%s3897] ss:$2 sm:$0xff]
      %s3899 = scalar_lea.vmem %s3, 352
      %v3900 = vld [vmem:[%s3899] sm:$0xff]
      %v3901 = vld [vmem:[%s3899 + $0x8] sm:$0xff]
      %v3902 = vld [vmem:[%s3899 + $0x10] sm:$0xff]
      %v3903 = vld [vmem:[%s3899 + $0x18] sm:$0xff]
      %v3905 = vsel %vm279, %v3862, 0
      %v3908 = vsel %vm279, %v3864, 0
      %v3911 = vsel %vm279, %v3866, 0
      %v3914 = vsel %vm279, %v3868, 0
      %v3917 = vsel %vm279, %v3870, 0
      %v3920 = vsel %vm279, %v3872, 0
      %v3923 = vsel %vm279, %v3874, 0
      %v3926 = vsel %vm279, %v3876, 0
      %v3929 = vsel %vm279, %v3878, 0
      %v3932 = vsel %vm279, %v3880, 0
      %v3935 = vsel %vm279, %v3882, 0
      %v3938 = vsel %vm279, %v3884, 0
      %v3941 = vsel %vm279, %v3886, 0
      %v3944 = vsel %vm279, %v3888, 0
      %v3947 = vsel %vm279, %v3890, 0
      %v3950 = vsel %vm279, %v3892, 0
      %v3953 = vsel %vm279, %v3894, 0
      %v3956 = vsel %vm279, %v3896, 0
      %v3959 = vsel %vm279, %v3898, 0
      %3961 = vmatpush.msra.mxu0 0.0
      %3962 = vmatpush.msra.mxu0 0.0
      %3963 = vmatpush.msra.mxu0 0.0
      %3964 = vmatpush.msra.mxu0 0.0
      %3965 = vmatpush.msra.mxu0 0.0
      %3966 = vmatpush.msra.mxu0 0.0
      %3967 = vmatpush.msra.mxu0 0.0
      %3968 = vmatpush.msra.mxu0 0.0
      %3969 = vmatpush.msra.mxu0 0.0
      %3970 = vmatpush.msra.mxu0 0.0
      %3971 = vmatpush.msra.mxu0 0.0
      %3972 = vmatpush.msra.mxu0 0.0
      %3973 = vmatpush.msra.mxu0 %v3903
      %3974 = vmatpush.msra.mxu0 %v3902
      %3975 = vmatpush.msra.mxu0 %v3901
      %3976 = vmatpush.msra.mxu0 %v3900
      %3977 = vmatmul.f32.gmra.mxu0 %v3905
      %v3978 = vpop.f32.mrf.mxu0
      %v3979 = vadd.f32 0.0, %v3978
      %3980 = vmatmul.f32.gmra.mxu0 %v3908
      %v3981 = vpop.f32.mrf.mxu0
      %v3982 = vadd.f32 0.0, %v3981
      %3983 = vmatmul.f32.gmra.mxu0 %v3911
      %v3984 = vpop.f32.mrf.mxu0
      %v3985 = vadd.f32 0.0, %v3984
      %3986 = vmatmul.f32.gmra.mxu0 %v3914
      %v3987 = vpop.f32.mrf.mxu0
      %v3988 = vadd.f32 0.0, %v3987
      %3989 = vmatmul.f32.gmra.mxu0 %v3917
      %v3990 = vpop.f32.mrf.mxu0
      %v3991 = vadd.f32 0.0, %v3990
      %3992 = vmatmul.f32.gmra.mxu0 %v3920
      %v3993 = vpop.f32.mrf.mxu0
      %v3994 = vadd.f32 0.0, %v3993
      %3995 = vmatmul.f32.gmra.mxu0 %v3923
      %v3996 = vpop.f32.mrf.mxu0
      %v3997 = vadd.f32 0.0, %v3996
      %3998 = vmatmul.f32.gmra.mxu0 %v3926
      %v3999 = vpop.f32.mrf.mxu0
      %v4000 = vadd.f32 0.0, %v3999
      %4001 = vmatmul.f32.gmra.mxu0 %v3929
      %v4002 = vpop.f32.mrf.mxu0
      %v4003 = vadd.f32 0.0, %v4002
      %4004 = vmatmul.f32.gmra.mxu0 %v3932
      %v4005 = vpop.f32.mrf.mxu0
      %v4006 = vadd.f32 0.0, %v4005
      %4007 = vmatmul.f32.gmra.mxu0 %v3935
      %v4008 = vpop.f32.mrf.mxu0
      %v4009 = vadd.f32 0.0, %v4008
      %4010 = vmatmul.f32.gmra.mxu0 %v3938
      %v4011 = vpop.f32.mrf.mxu0
      %v4012 = vadd.f32 0.0, %v4011
      %4013 = vmatmul.f32.gmra.mxu0 %v3941
      %v4014 = vpop.f32.mrf.mxu0
      %v4015 = vadd.f32 0.0, %v4014
      %4016 = vmatmul.f32.gmra.mxu0 %v3944
      %v4017 = vpop.f32.mrf.mxu0
      %v4018 = vadd.f32 0.0, %v4017
      %4019 = vmatmul.f32.gmra.mxu0 %v3947
      %v4020 = vpop.f32.mrf.mxu0
      %v4021 = vadd.f32 0.0, %v4020
      %4022 = vmatmul.f32.gmra.mxu0 %v3950
      %v4023 = vpop.f32.mrf.mxu0
      %v4024 = vadd.f32 0.0, %v4023
      %4025 = vmatmul.f32.gmra.mxu0 %v3953
      %v4026 = vpop.f32.mrf.mxu0
      %v4027 = vadd.f32 0.0, %v4026
      %4028 = vmatmul.f32.gmra.mxu0 %v3956
      %v4029 = vpop.f32.mrf.mxu0
      %v4030 = vadd.f32 0.0, %v4029
      %4031 = vmatmul.f32.gmra.mxu0 %v3959
      %v4032 = vpop.f32.mrf.mxu0
      %v4033 = vadd.f32 0.0, %v4032
      %4034 = vdwg.mxu0
      %v4035 = vadd.f32 %v3842, %v3979
      %v4036 = vadd.f32 %v3843, %v3982
      %v4037 = vadd.f32 %v3844, %v3985
      %v4038 = vadd.f32 %v3845, %v3988
      %v4039 = vadd.f32 %v3846, %v3991
      %v4040 = vadd.f32 %v3847, %v3994
      %v4041 = vadd.f32 %v3848, %v3997
      %v4042 = vadd.f32 %v3849, %v4000
      %v4043 = vadd.f32 %v3850, %v4003
      %v4044 = vadd.f32 %v3851, %v4006
      %v4045 = vadd.f32 %v3852, %v4009
      %v4046 = vadd.f32 %v3853, %v4012
      %v4047 = vadd.f32 %v3854, %v4015
      %v4048 = vadd.f32 %v3855, %v4018
      %v4049 = vadd.f32 %v3856, %v4021
      %v4050 = vadd.f32 %v3857, %v4024
      %v4051 = vadd.f32 %v3858, %v4027
      %v4052 = vadd.f32 %v3859, %v4030
      %v4053 = vadd.f32 %v3860, %v4033
      %v4054 = vld [vmem:[%s3863] ss:$2 sm:$0xff]
      %v4055 = vld [vmem:[%s3865] ss:$2 sm:$0xff]
      %v4056 = vld [vmem:[%s3867] ss:$2 sm:$0xff]
      %v4057 = vld [vmem:[%s3869] ss:$2 sm:$0xff]
      %v4058 = vld [vmem:[%s3871] ss:$2 sm:$0xff]
      %v4059 = vld [vmem:[%s3873] ss:$2 sm:$0xff]
      %v4060 = vld [vmem:[%s3875] ss:$2 sm:$0xff]
      %v4061 = vld [vmem:[%s3877] ss:$2 sm:$0xff]
      %v4062 = vld [vmem:[%s3879] ss:$2 sm:$0xff]
      %v4063 = vld [vmem:[%s3881] ss:$2 sm:$0xff]
      %v4064 = vld [vmem:[%s3883] ss:$2 sm:$0xff]
      %v4065 = vld [vmem:[%s3885] ss:$2 sm:$0xff]
      %v4066 = vld [vmem:[%s3887] ss:$2 sm:$0xff]
      %v4067 = vld [vmem:[%s3889] ss:$2 sm:$0xff]
      %v4068 = vld [vmem:[%s3891] ss:$2 sm:$0xff]
      %v4069 = vld [vmem:[%s3893] ss:$2 sm:$0xff]
      %v4070 = vld [vmem:[%s3895] ss:$2 sm:$0xff]
      %v4071 = vld [vmem:[%s3897] ss:$2 sm:$0xff]
      %s4072 = scalar_lea.vmem [#allocation2], 345
      %v4073 = vld [vmem:[%s4072] ss:$2 sm:$0xff]
      %s4074 = scalar_lea.vmem %s3, 384
      %v4075 = vld [vmem:[%s4074] sm:$0xff]
      %v4076 = vld [vmem:[%s4074 + $0x8] sm:$0xff]
      %v4077 = vld [vmem:[%s4074 + $0x10] sm:$0xff]
      %v4078 = vld [vmem:[%s4074 + $0x18] sm:$0xff]
      %v4080 = vsel %vm279, %v4054, 0
      %v4083 = vsel %vm279, %v4055, 0
      %v4086 = vsel %vm279, %v4056, 0
      %v4089 = vsel %vm279, %v4057, 0
      %v4092 = vsel %vm279, %v4058, 0
      %v4095 = vsel %vm279, %v4059, 0
      %v4098 = vsel %vm279, %v4060, 0
      %v4101 = vsel %vm279, %v4061, 0
      %v4104 = vsel %vm279, %v4062, 0
      %v4107 = vsel %vm279, %v4063, 0
      %v4110 = vsel %vm279, %v4064, 0
      %v4113 = vsel %vm279, %v4065, 0
      %v4116 = vsel %vm279, %v4066, 0
      %v4119 = vsel %vm279, %v4067, 0
      %v4122 = vsel %vm279, %v4068, 0
      %v4125 = vsel %vm279, %v4069, 0
      %v4128 = vsel %vm279, %v4070, 0
      %v4131 = vsel %vm279, %v4071, 0
      %v4134 = vsel %vm279, %v4073, 0
      %4136 = vmatpush.msra.mxu0 0.0
      %4137 = vmatpush.msra.mxu0 0.0
      %4138 = vmatpush.msra.mxu0 0.0
      %4139 = vmatpush.msra.mxu0 0.0
      %4140 = vmatpush.msra.mxu0 0.0
      %4141 = vmatpush.msra.mxu0 0.0
      %4142 = vmatpush.msra.mxu0 0.0
      %4143 = vmatpush.msra.mxu0 0.0
      %4144 = vmatpush.msra.mxu0 0.0
      %4145 = vmatpush.msra.mxu0 0.0
      %4146 = vmatpush.msra.mxu0 0.0
      %4147 = vmatpush.msra.mxu0 0.0
      %4148 = vmatpush.msra.mxu0 %v4078
      %4149 = vmatpush.msra.mxu0 %v4077
      %4150 = vmatpush.msra.mxu0 %v4076
      %4151 = vmatpush.msra.mxu0 %v4075
      %4152 = vmatmul.f32.gmra.mxu0 %v4080
      %v4153 = vpop.f32.mrf.mxu0
      %v4154 = vadd.f32 0.0, %v4153
      %4155 = vmatmul.f32.gmra.mxu0 %v4083
      %v4156 = vpop.f32.mrf.mxu0
      %v4157 = vadd.f32 0.0, %v4156
      %4158 = vmatmul.f32.gmra.mxu0 %v4086
      %v4159 = vpop.f32.mrf.mxu0
      %v4160 = vadd.f32 0.0, %v4159
      %4161 = vmatmul.f32.gmra.mxu0 %v4089
      %v4162 = vpop.f32.mrf.mxu0
      %v4163 = vadd.f32 0.0, %v4162
      %4164 = vmatmul.f32.gmra.mxu0 %v4092
      %v4165 = vpop.f32.mrf.mxu0
      %v4166 = vadd.f32 0.0, %v4165
      %4167 = vmatmul.f32.gmra.mxu0 %v4095
      %v4168 = vpop.f32.mrf.mxu0
      %v4169 = vadd.f32 0.0, %v4168
      %4170 = vmatmul.f32.gmra.mxu0 %v4098
      %v4171 = vpop.f32.mrf.mxu0
      %v4172 = vadd.f32 0.0, %v4171
      %4173 = vmatmul.f32.gmra.mxu0 %v4101
      %v4174 = vpop.f32.mrf.mxu0
      %v4175 = vadd.f32 0.0, %v4174
      %4176 = vmatmul.f32.gmra.mxu0 %v4104
      %v4177 = vpop.f32.mrf.mxu0
      %v4178 = vadd.f32 0.0, %v4177
      %4179 = vmatmul.f32.gmra.mxu0 %v4107
      %v4180 = vpop.f32.mrf.mxu0
      %v4181 = vadd.f32 0.0, %v4180
      %4182 = vmatmul.f32.gmra.mxu0 %v4110
      %v4183 = vpop.f32.mrf.mxu0
      %v4184 = vadd.f32 0.0, %v4183
      %4185 = vmatmul.f32.gmra.mxu0 %v4113
      %v4186 = vpop.f32.mrf.mxu0
      %v4187 = vadd.f32 0.0, %v4186
      %4188 = vmatmul.f32.gmra.mxu0 %v4116
      %v4189 = vpop.f32.mrf.mxu0
      %v4190 = vadd.f32 0.0, %v4189
      %4191 = vmatmul.f32.gmra.mxu0 %v4119
      %v4192 = vpop.f32.mrf.mxu0
      %v4193 = vadd.f32 0.0, %v4192
      %4194 = vmatmul.f32.gmra.mxu0 %v4122
      %v4195 = vpop.f32.mrf.mxu0
      %v4196 = vadd.f32 0.0, %v4195
      %4197 = vmatmul.f32.gmra.mxu0 %v4125
      %v4198 = vpop.f32.mrf.mxu0
      %v4199 = vadd.f32 0.0, %v4198
      %4200 = vmatmul.f32.gmra.mxu0 %v4128
      %v4201 = vpop.f32.mrf.mxu0
      %v4202 = vadd.f32 0.0, %v4201
      %4203 = vmatmul.f32.gmra.mxu0 %v4131
      %v4204 = vpop.f32.mrf.mxu0
      %v4205 = vadd.f32 0.0, %v4204
      %4206 = vmatmul.f32.gmra.mxu0 %v4134
      %v4207 = vpop.f32.mrf.mxu0
      %v4208 = vadd.f32 0.0, %v4207
      %4209 = vdwg.mxu0
      %v4210 = vadd.f32 %v4035, %v4154
      %v4211 = vadd.f32 %v4036, %v4157
      %v4212 = vadd.f32 %v4037, %v4160
      %v4213 = vadd.f32 %v4038, %v4163
      %v4214 = vadd.f32 %v4039, %v4166
      %v4215 = vadd.f32 %v4040, %v4169
      %v4216 = vadd.f32 %v4041, %v4172
      %v4217 = vadd.f32 %v4042, %v4175
      %v4218 = vadd.f32 %v4043, %v4178
      %v4219 = vadd.f32 %v4044, %v4181
      %v4220 = vadd.f32 %v4045, %v4184
      %v4221 = vadd.f32 %v4046, %v4187
      %v4222 = vadd.f32 %v4047, %v4190
      %v4223 = vadd.f32 %v4048, %v4193
      %v4224 = vadd.f32 %v4049, %v4196
      %v4225 = vadd.f32 %v4050, %v4199
      %v4226 = vadd.f32 %v4051, %v4202
      %v4227 = vadd.f32 %v4052, %v4205
      %v4228 = vadd.f32 %v4053, %v4208
      %s4229 = scalar_lea.vmem [#allocation2], 58
      %v4230 = vld [vmem:[%s4229] ss:$2 sm:$0xff]
      %s4231 = scalar_lea.vmem [#allocation2], 74
      %v4232 = vld [vmem:[%s4231] ss:$2 sm:$0xff]
      %s4233 = scalar_lea.vmem [#allocation2], 90
      %v4234 = vld [vmem:[%s4233] ss:$2 sm:$0xff]
      %s4235 = scalar_lea.vmem [#allocation2], 106
      %v4236 = vld [vmem:[%s4235] ss:$2 sm:$0xff]
      %s4237 = scalar_lea.vmem [#allocation2], 122
      %v4238 = vld [vmem:[%s4237] ss:$2 sm:$0xff]
      %s4239 = scalar_lea.vmem [#allocation2], 138
      %v4240 = vld [vmem:[%s4239] ss:$2 sm:$0xff]
      %s4241 = scalar_lea.vmem [#allocation2], 154
      %v4242 = vld [vmem:[%s4241] ss:$2 sm:$0xff]
      %s4243 = scalar_lea.vmem [#allocation2], 170
      %v4244 = vld [vmem:[%s4243] ss:$2 sm:$0xff]
      %s4245 = scalar_lea.vmem [#allocation2], 186
      %v4246 = vld [vmem:[%s4245] ss:$2 sm:$0xff]
      %s4247 = scalar_lea.vmem [#allocation2], 202
      %v4248 = vld [vmem:[%s4247] ss:$2 sm:$0xff]
      %s4249 = scalar_lea.vmem [#allocation2], 218
      %v4250 = vld [vmem:[%s4249] ss:$2 sm:$0xff]
      %s4251 = scalar_lea.vmem [#allocation2], 234
      %v4252 = vld [vmem:[%s4251] ss:$2 sm:$0xff]
      %s4253 = scalar_lea.vmem [#allocation2], 250
      %v4254 = vld [vmem:[%s4253] ss:$2 sm:$0xff]
      %s4255 = scalar_lea.vmem [#allocation2], 266
      %v4256 = vld [vmem:[%s4255] ss:$2 sm:$0xff]
      %s4257 = scalar_lea.vmem [#allocation2], 282
      %v4258 = vld [vmem:[%s4257] ss:$2 sm:$0xff]
      %s4259 = scalar_lea.vmem [#allocation2], 298
      %v4260 = vld [vmem:[%s4259] ss:$2 sm:$0xff]
      %s4261 = scalar_lea.vmem [#allocation2], 314
      %v4262 = vld [vmem:[%s4261] ss:$2 sm:$0xff]
      %s4263 = scalar_lea.vmem [#allocation2], 330
      %v4264 = vld [vmem:[%s4263] ss:$2 sm:$0xff]
      %s4265 = scalar_lea.vmem [#allocation2], 346
      %v4266 = vld [vmem:[%s4265] ss:$2 sm:$0xff]
      %s4267 = scalar_lea.vmem %s3, 416
      %v4268 = vld [vmem:[%s4267] sm:$0xff]
      %v4269 = vld [vmem:[%s4267 + $0x8] sm:$0xff]
      %v4270 = vld [vmem:[%s4267 + $0x10] sm:$0xff]
      %v4271 = vld [vmem:[%s4267 + $0x18] sm:$0xff]
      %v4273 = vsel %vm279, %v4230, 0
      %v4276 = vsel %vm279, %v4232, 0
      %v4279 = vsel %vm279, %v4234, 0
      %v4282 = vsel %vm279, %v4236, 0
      %v4285 = vsel %vm279, %v4238, 0
      %v4288 = vsel %vm279, %v4240, 0
      %v4291 = vsel %vm279, %v4242, 0
      %v4294 = vsel %vm279, %v4244, 0
      %v4297 = vsel %vm279, %v4246, 0
      %v4300 = vsel %vm279, %v4248, 0
      %v4303 = vsel %vm279, %v4250, 0
      %v4306 = vsel %vm279, %v4252, 0
      %v4309 = vsel %vm279, %v4254, 0
      %v4312 = vsel %vm279, %v4256, 0
      %v4315 = vsel %vm279, %v4258, 0
      %v4318 = vsel %vm279, %v4260, 0
      %v4321 = vsel %vm279, %v4262, 0
      %v4324 = vsel %vm279, %v4264, 0
      %v4327 = vsel %vm279, %v4266, 0
      %4329 = vmatpush.msra.mxu0 0.0
      %4330 = vmatpush.msra.mxu0 0.0
      %4331 = vmatpush.msra.mxu0 0.0
      %4332 = vmatpush.msra.mxu0 0.0
      %4333 = vmatpush.msra.mxu0 0.0
      %4334 = vmatpush.msra.mxu0 0.0
      %4335 = vmatpush.msra.mxu0 0.0
      %4336 = vmatpush.msra.mxu0 0.0
      %4337 = vmatpush.msra.mxu0 0.0
      %4338 = vmatpush.msra.mxu0 0.0
      %4339 = vmatpush.msra.mxu0 0.0
      %4340 = vmatpush.msra.mxu0 0.0
      %4341 = vmatpush.msra.mxu0 %v4271
      %4342 = vmatpush.msra.mxu0 %v4270
      %4343 = vmatpush.msra.mxu0 %v4269
      %4344 = vmatpush.msra.mxu0 %v4268
      %4345 = vmatmul.f32.gmra.mxu0 %v4273
      %v4346 = vpop.f32.mrf.mxu0
      %v4347 = vadd.f32 0.0, %v4346
      %4348 = vmatmul.f32.gmra.mxu0 %v4276
      %v4349 = vpop.f32.mrf.mxu0
      %v4350 = vadd.f32 0.0, %v4349
      %4351 = vmatmul.f32.gmra.mxu0 %v4279
      %v4352 = vpop.f32.mrf.mxu0
      %v4353 = vadd.f32 0.0, %v4352
      %4354 = vmatmul.f32.gmra.mxu0 %v4282
      %v4355 = vpop.f32.mrf.mxu0
      %v4356 = vadd.f32 0.0, %v4355
      %4357 = vmatmul.f32.gmra.mxu0 %v4285
      %v4358 = vpop.f32.mrf.mxu0
      %v4359 = vadd.f32 0.0, %v4358
      %4360 = vmatmul.f32.gmra.mxu0 %v4288
      %v4361 = vpop.f32.mrf.mxu0
      %v4362 = vadd.f32 0.0, %v4361
      %4363 = vmatmul.f32.gmra.mxu0 %v4291
      %v4364 = vpop.f32.mrf.mxu0
      %v4365 = vadd.f32 0.0, %v4364
      %4366 = vmatmul.f32.gmra.mxu0 %v4294
      %v4367 = vpop.f32.mrf.mxu0
      %v4368 = vadd.f32 0.0, %v4367
      %4369 = vmatmul.f32.gmra.mxu0 %v4297
      %v4370 = vpop.f32.mrf.mxu0
      %v4371 = vadd.f32 0.0, %v4370
      %4372 = vmatmul.f32.gmra.mxu0 %v4300
      %v4373 = vpop.f32.mrf.mxu0
      %v4374 = vadd.f32 0.0, %v4373
      %4375 = vmatmul.f32.gmra.mxu0 %v4303
      %v4376 = vpop.f32.mrf.mxu0
      %v4377 = vadd.f32 0.0, %v4376
      %4378 = vmatmul.f32.gmra.mxu0 %v4306
      %v4379 = vpop.f32.mrf.mxu0
      %v4380 = vadd.f32 0.0, %v4379
      %4381 = vmatmul.f32.gmra.mxu0 %v4309
      %v4382 = vpop.f32.mrf.mxu0
      %v4383 = vadd.f32 0.0, %v4382
      %4384 = vmatmul.f32.gmra.mxu0 %v4312
      %v4385 = vpop.f32.mrf.mxu0
      %v4386 = vadd.f32 0.0, %v4385
      %4387 = vmatmul.f32.gmra.mxu0 %v4315
      %v4388 = vpop.f32.mrf.mxu0
      %v4389 = vadd.f32 0.0, %v4388
      %4390 = vmatmul.f32.gmra.mxu0 %v4318
      %v4391 = vpop.f32.mrf.mxu0
      %v4392 = vadd.f32 0.0, %v4391
      %4393 = vmatmul.f32.gmra.mxu0 %v4321
      %v4394 = vpop.f32.mrf.mxu0
      %v4395 = vadd.f32 0.0, %v4394
      %4396 = vmatmul.f32.gmra.mxu0 %v4324
      %v4397 = vpop.f32.mrf.mxu0
      %v4398 = vadd.f32 0.0, %v4397
      %4399 = vmatmul.f32.gmra.mxu0 %v4327
      %v4400 = vpop.f32.mrf.mxu0
      %v4401 = vadd.f32 0.0, %v4400
      %4402 = vdwg.mxu0
      %v4403 = vadd.f32 %v4210, %v4347
      %v4404 = vadd.f32 %v4211, %v4350
      %v4405 = vadd.f32 %v4212, %v4353
      %v4406 = vadd.f32 %v4213, %v4356
      %v4407 = vadd.f32 %v4214, %v4359
      %v4408 = vadd.f32 %v4215, %v4362
      %v4409 = vadd.f32 %v4216, %v4365
      %v4410 = vadd.f32 %v4217, %v4368
      %v4411 = vadd.f32 %v4218, %v4371
      %v4412 = vadd.f32 %v4219, %v4374
      %v4413 = vadd.f32 %v4220, %v4377
      %v4414 = vadd.f32 %v4221, %v4380
      %v4415 = vadd.f32 %v4222, %v4383
      %v4416 = vadd.f32 %v4223, %v4386
      %v4417 = vadd.f32 %v4224, %v4389
      %v4418 = vadd.f32 %v4225, %v4392
      %v4419 = vadd.f32 %v4226, %v4395
      %v4420 = vadd.f32 %v4227, %v4398
      %v4421 = vadd.f32 %v4228, %v4401
      %s4422 = scalar_lea.vmem [#allocation2], 59
      %v4423 = vld [vmem:[%s4422] ss:$2 sm:$0xff]
      %s4424 = scalar_lea.vmem [#allocation2], 75
      %v4425 = vld [vmem:[%s4424] ss:$2 sm:$0xff]
      %s4426 = scalar_lea.vmem [#allocation2], 91
      %v4427 = vld [vmem:[%s4426] ss:$2 sm:$0xff]
      %s4428 = scalar_lea.vmem [#allocation2], 107
      %v4429 = vld [vmem:[%s4428] ss:$2 sm:$0xff]
      %s4430 = scalar_lea.vmem [#allocation2], 123
      %v4431 = vld [vmem:[%s4430] ss:$2 sm:$0xff]
      %s4432 = scalar_lea.vmem [#allocation2], 139
      %v4433 = vld [vmem:[%s4432] ss:$2 sm:$0xff]
      %s4434 = scalar_lea.vmem [#allocation2], 155
      %v4435 = vld [vmem:[%s4434] ss:$2 sm:$0xff]
      %s4436 = scalar_lea.vmem [#allocation2], 171
      %v4437 = vld [vmem:[%s4436] ss:$2 sm:$0xff]
      %s4438 = scalar_lea.vmem [#allocation2], 187
      %v4439 = vld [vmem:[%s4438] ss:$2 sm:$0xff]
      %s4440 = scalar_lea.vmem [#allocation2], 203
      %v4441 = vld [vmem:[%s4440] ss:$2 sm:$0xff]
      %s4442 = scalar_lea.vmem [#allocation2], 219
      %v4443 = vld [vmem:[%s4442] ss:$2 sm:$0xff]
      %s4444 = scalar_lea.vmem [#allocation2], 235
      %v4445 = vld [vmem:[%s4444] ss:$2 sm:$0xff]
      %s4446 = scalar_lea.vmem [#allocation2], 251
      %v4447 = vld [vmem:[%s4446] ss:$2 sm:$0xff]
      %s4448 = scalar_lea.vmem [#allocation2], 267
      %v4449 = vld [vmem:[%s4448] ss:$2 sm:$0xff]
      %s4450 = scalar_lea.vmem [#allocation2], 283
      %v4451 = vld [vmem:[%s4450] ss:$2 sm:$0xff]
      %s4452 = scalar_lea.vmem [#allocation2], 299
      %v4453 = vld [vmem:[%s4452] ss:$2 sm:$0xff]
      %s4454 = scalar_lea.vmem [#allocation2], 315
      %v4455 = vld [vmem:[%s4454] ss:$2 sm:$0xff]
      %s4456 = scalar_lea.vmem [#allocation2], 331
      %v4457 = vld [vmem:[%s4456] ss:$2 sm:$0xff]
      %s4458 = scalar_lea.vmem [#allocation2], 347
      %v4459 = vld [vmem:[%s4458] ss:$2 sm:$0xff]
      %s4460 = scalar_lea.vmem %s3, 448
      %v4461 = vld [vmem:[%s4460] sm:$0xff]
      %v4462 = vld [vmem:[%s4460 + $0x8] sm:$0xff]
      %v4463 = vld [vmem:[%s4460 + $0x10] sm:$0xff]
      %v4464 = vld [vmem:[%s4460 + $0x18] sm:$0xff]
      %v4466 = vsel %vm279, %v4423, 0
      %v4469 = vsel %vm279, %v4425, 0
      %v4472 = vsel %vm279, %v4427, 0
      %v4475 = vsel %vm279, %v4429, 0
      %v4478 = vsel %vm279, %v4431, 0
      %v4481 = vsel %vm279, %v4433, 0
      %v4484 = vsel %vm279, %v4435, 0
      %v4487 = vsel %vm279, %v4437, 0
      %v4490 = vsel %vm279, %v4439, 0
      %v4493 = vsel %vm279, %v4441, 0
      %v4496 = vsel %vm279, %v4443, 0
      %v4499 = vsel %vm279, %v4445, 0
      %v4502 = vsel %vm279, %v4447, 0
      %v4505 = vsel %vm279, %v4449, 0
      %v4508 = vsel %vm279, %v4451, 0
      %v4511 = vsel %vm279, %v4453, 0
      %v4514 = vsel %vm279, %v4455, 0
      %v4517 = vsel %vm279, %v4457, 0
      %v4520 = vsel %vm279, %v4459, 0
      %4522 = vmatpush.msra.mxu0 0.0
      %4523 = vmatpush.msra.mxu0 0.0
      %4524 = vmatpush.msra.mxu0 0.0
      %4525 = vmatpush.msra.mxu0 0.0
      %4526 = vmatpush.msra.mxu0 0.0
      %4527 = vmatpush.msra.mxu0 0.0
      %4528 = vmatpush.msra.mxu0 0.0
      %4529 = vmatpush.msra.mxu0 0.0
      %4530 = vmatpush.msra.mxu0 0.0
      %4531 = vmatpush.msra.mxu0 0.0
      %4532 = vmatpush.msra.mxu0 0.0
      %4533 = vmatpush.msra.mxu0 0.0
      %4534 = vmatpush.msra.mxu0 %v4464
      %4535 = vmatpush.msra.mxu0 %v4463
      %4536 = vmatpush.msra.mxu0 %v4462
      %4537 = vmatpush.msra.mxu0 %v4461
      %4538 = vmatmul.f32.gmra.mxu0 %v4466
      %v4539 = vpop.f32.mrf.mxu0
      %v4540 = vadd.f32 0.0, %v4539
      %4541 = vmatmul.f32.gmra.mxu0 %v4469
      %v4542 = vpop.f32.mrf.mxu0
      %v4543 = vadd.f32 0.0, %v4542
      %4544 = vmatmul.f32.gmra.mxu0 %v4472
      %v4545 = vpop.f32.mrf.mxu0
      %v4546 = vadd.f32 0.0, %v4545
      %4547 = vmatmul.f32.gmra.mxu0 %v4475
      %v4548 = vpop.f32.mrf.mxu0
      %v4549 = vadd.f32 0.0, %v4548
      %4550 = vmatmul.f32.gmra.mxu0 %v4478
      %v4551 = vpop.f32.mrf.mxu0
      %v4552 = vadd.f32 0.0, %v4551
      %4553 = vmatmul.f32.gmra.mxu0 %v4481
      %v4554 = vpop.f32.mrf.mxu0
      %v4555 = vadd.f32 0.0, %v4554
      %4556 = vmatmul.f32.gmra.mxu0 %v4484
      %v4557 = vpop.f32.mrf.mxu0
      %v4558 = vadd.f32 0.0, %v4557
      %4559 = vmatmul.f32.gmra.mxu0 %v4487
      %v4560 = vpop.f32.mrf.mxu0
      %v4561 = vadd.f32 0.0, %v4560
      %4562 = vmatmul.f32.gmra.mxu0 %v4490
      %v4563 = vpop.f32.mrf.mxu0
      %v4564 = vadd.f32 0.0, %v4563
      %4565 = vmatmul.f32.gmra.mxu0 %v4493
      %v4566 = vpop.f32.mrf.mxu0
      %v4567 = vadd.f32 0.0, %v4566
      %4568 = vmatmul.f32.gmra.mxu0 %v4496
      %v4569 = vpop.f32.mrf.mxu0
      %v4570 = vadd.f32 0.0, %v4569
      %4571 = vmatmul.f32.gmra.mxu0 %v4499
      %v4572 = vpop.f32.mrf.mxu0
      %v4573 = vadd.f32 0.0, %v4572
      %4574 = vmatmul.f32.gmra.mxu0 %v4502
      %v4575 = vpop.f32.mrf.mxu0
      %v4576 = vadd.f32 0.0, %v4575
      %4577 = vmatmul.f32.gmra.mxu0 %v4505
      %v4578 = vpop.f32.mrf.mxu0
      %v4579 = vadd.f32 0.0, %v4578
      %4580 = vmatmul.f32.gmra.mxu0 %v4508
      %v4581 = vpop.f32.mrf.mxu0
      %v4582 = vadd.f32 0.0, %v4581
      %4583 = vmatmul.f32.gmra.mxu0 %v4511
      %v4584 = vpop.f32.mrf.mxu0
      %v4585 = vadd.f32 0.0, %v4584
      %4586 = vmatmul.f32.gmra.mxu0 %v4514
      %v4587 = vpop.f32.mrf.mxu0
      %v4588 = vadd.f32 0.0, %v4587
      %4589 = vmatmul.f32.gmra.mxu0 %v4517
      %v4590 = vpop.f32.mrf.mxu0
      %v4591 = vadd.f32 0.0, %v4590
      %4592 = vmatmul.f32.gmra.mxu0 %v4520
      %v4593 = vpop.f32.mrf.mxu0
      %v4594 = vadd.f32 0.0, %v4593
      %4595 = vdwg.mxu0
      %v4596 = vadd.f32 %v4403, %v4540
      %v4597 = vadd.f32 %v4404, %v4543
      %v4598 = vadd.f32 %v4405, %v4546
      %v4599 = vadd.f32 %v4406, %v4549
      %v4600 = vadd.f32 %v4407, %v4552
      %v4601 = vadd.f32 %v4408, %v4555
      %v4602 = vadd.f32 %v4409, %v4558
      %v4603 = vadd.f32 %v4410, %v4561
      %v4604 = vadd.f32 %v4411, %v4564
      %v4605 = vadd.f32 %v4412, %v4567
      %v4606 = vadd.f32 %v4413, %v4570
      %v4607 = vadd.f32 %v4414, %v4573
      %v4608 = vadd.f32 %v4415, %v4576
      %v4609 = vadd.f32 %v4416, %v4579
      %v4610 = vadd.f32 %v4417, %v4582
      %v4611 = vadd.f32 %v4418, %v4585
      %v4612 = vadd.f32 %v4419, %v4588
      %v4613 = vadd.f32 %v4420, %v4591
      %v4614 = vadd.f32 %v4421, %v4594
      %s4615 = scalar_lea.vmem [#allocation2], 60
      %v4616 = vld [vmem:[%s4615] ss:$2 sm:$0xff]
      %s4617 = scalar_lea.vmem [#allocation2], 76
      %v4618 = vld [vmem:[%s4617] ss:$2 sm:$0xff]
      %s4619 = scalar_lea.vmem [#allocation2], 92
      %v4620 = vld [vmem:[%s4619] ss:$2 sm:$0xff]
      %s4621 = scalar_lea.vmem [#allocation2], 108
      %v4622 = vld [vmem:[%s4621] ss:$2 sm:$0xff]
      %s4623 = scalar_lea.vmem [#allocation2], 124
      %v4624 = vld [vmem:[%s4623] ss:$2 sm:$0xff]
      %s4625 = scalar_lea.vmem [#allocation2], 140
      %v4626 = vld [vmem:[%s4625] ss:$2 sm:$0xff]
      %s4627 = scalar_lea.vmem [#allocation2], 156
      %v4628 = vld [vmem:[%s4627] ss:$2 sm:$0xff]
      %s4629 = scalar_lea.vmem [#allocation2], 172
      %v4630 = vld [vmem:[%s4629] ss:$2 sm:$0xff]
      %s4631 = scalar_lea.vmem [#allocation2], 188
      %v4632 = vld [vmem:[%s4631] ss:$2 sm:$0xff]
      %s4633 = scalar_lea.vmem [#allocation2], 204
      %v4634 = vld [vmem:[%s4633] ss:$2 sm:$0xff]
      %s4635 = scalar_lea.vmem [#allocation2], 220
      %v4636 = vld [vmem:[%s4635] ss:$2 sm:$0xff]
      %s4637 = scalar_lea.vmem [#allocation2], 236
      %v4638 = vld [vmem:[%s4637] ss:$2 sm:$0xff]
      %s4639 = scalar_lea.vmem [#allocation2], 252
      %v4640 = vld [vmem:[%s4639] ss:$2 sm:$0xff]
      %s4641 = scalar_lea.vmem [#allocation2], 268
      %v4642 = vld [vmem:[%s4641] ss:$2 sm:$0xff]
      %s4643 = scalar_lea.vmem [#allocation2], 284
      %v4644 = vld [vmem:[%s4643] ss:$2 sm:$0xff]
      %s4645 = scalar_lea.vmem [#allocation2], 300
      %v4646 = vld [vmem:[%s4645] ss:$2 sm:$0xff]
      %s4647 = scalar_lea.vmem [#allocation2], 316
      %v4648 = vld [vmem:[%s4647] ss:$2 sm:$0xff]
      %s4649 = scalar_lea.vmem [#allocation2], 332
      %v4650 = vld [vmem:[%s4649] ss:$2 sm:$0xff]
      %s4651 = scalar_lea.vmem [#allocation2], 348
      %v4652 = vld [vmem:[%s4651] ss:$2 sm:$0xff]
      %s4653 = scalar_lea.vmem %s3, 480
      %v4654 = vld [vmem:[%s4653] sm:$0xff]
      %v4655 = vld [vmem:[%s4653 + $0x8] sm:$0xff]
      %v4656 = vld [vmem:[%s4653 + $0x10] sm:$0xff]
      %v4657 = vld [vmem:[%s4653 + $0x18] sm:$0xff]
      %v4659 = vsel %vm279, %v4616, 0
      %v4662 = vsel %vm279, %v4618, 0
      %v4665 = vsel %vm279, %v4620, 0
      %v4668 = vsel %vm279, %v4622, 0
      %v4671 = vsel %vm279, %v4624, 0
      %v4674 = vsel %vm279, %v4626, 0
      %v4677 = vsel %vm279, %v4628, 0
      %v4680 = vsel %vm279, %v4630, 0
      %v4683 = vsel %vm279, %v4632, 0
      %v4686 = vsel %vm279, %v4634, 0
      %v4689 = vsel %vm279, %v4636, 0
      %v4692 = vsel %vm279, %v4638, 0
      %v4695 = vsel %vm279, %v4640, 0
      %v4698 = vsel %vm279, %v4642, 0
      %v4701 = vsel %vm279, %v4644, 0
      %v4704 = vsel %vm279, %v4646, 0
      %v4707 = vsel %vm279, %v4648, 0
      %v4710 = vsel %vm279, %v4650, 0
      %v4713 = vsel %vm279, %v4652, 0
      %4715 = vmatpush.msra.mxu0 0.0
      %4716 = vmatpush.msra.mxu0 0.0
      %4717 = vmatpush.msra.mxu0 0.0
      %4718 = vmatpush.msra.mxu0 0.0
      %4719 = vmatpush.msra.mxu0 0.0
      %4720 = vmatpush.msra.mxu0 0.0
      %4721 = vmatpush.msra.mxu0 0.0
      %4722 = vmatpush.msra.mxu0 0.0
      %4723 = vmatpush.msra.mxu0 0.0
      %4724 = vmatpush.msra.mxu0 0.0
      %4725 = vmatpush.msra.mxu0 0.0
      %4726 = vmatpush.msra.mxu0 0.0
      %4727 = vmatpush.msra.mxu0 %v4657
      %4728 = vmatpush.msra.mxu0 %v4656
      %4729 = vmatpush.msra.mxu0 %v4655
      %4730 = vmatpush.msra.mxu0 %v4654
      %4731 = vmatmul.f32.gmra.mxu0 %v4659
      %v4732 = vpop.f32.mrf.mxu0
      %v4733 = vadd.f32 0.0, %v4732
      %4734 = vmatmul.f32.gmra.mxu0 %v4662
      %v4735 = vpop.f32.mrf.mxu0
      %v4736 = vadd.f32 0.0, %v4735
      %4737 = vmatmul.f32.gmra.mxu0 %v4665
      %v4738 = vpop.f32.mrf.mxu0
      %v4739 = vadd.f32 0.0, %v4738
      %4740 = vmatmul.f32.gmra.mxu0 %v4668
      %v4741 = vpop.f32.mrf.mxu0
      %v4742 = vadd.f32 0.0, %v4741
      %4743 = vmatmul.f32.gmra.mxu0 %v4671
      %v4744 = vpop.f32.mrf.mxu0
      %v4745 = vadd.f32 0.0, %v4744
      %4746 = vmatmul.f32.gmra.mxu0 %v4674
      %v4747 = vpop.f32.mrf.mxu0
      %v4748 = vadd.f32 0.0, %v4747
      %4749 = vmatmul.f32.gmra.mxu0 %v4677
      %v4750 = vpop.f32.mrf.mxu0
      %v4751 = vadd.f32 0.0, %v4750
      %4752 = vmatmul.f32.gmra.mxu0 %v4680
      %v4753 = vpop.f32.mrf.mxu0
      %v4754 = vadd.f32 0.0, %v4753
      %4755 = vmatmul.f32.gmra.mxu0 %v4683
      %v4756 = vpop.f32.mrf.mxu0
      %v4757 = vadd.f32 0.0, %v4756
      %4758 = vmatmul.f32.gmra.mxu0 %v4686
      %v4759 = vpop.f32.mrf.mxu0
      %v4760 = vadd.f32 0.0, %v4759
      %4761 = vmatmul.f32.gmra.mxu0 %v4689
      %v4762 = vpop.f32.mrf.mxu0
      %v4763 = vadd.f32 0.0, %v4762
      %4764 = vmatmul.f32.gmra.mxu0 %v4692
      %v4765 = vpop.f32.mrf.mxu0
      %v4766 = vadd.f32 0.0, %v4765
      %4767 = vmatmul.f32.gmra.mxu0 %v4695
      %v4768 = vpop.f32.mrf.mxu0
      %v4769 = vadd.f32 0.0, %v4768
      %4770 = vmatmul.f32.gmra.mxu0 %v4698
      %v4771 = vpop.f32.mrf.mxu0
      %v4772 = vadd.f32 0.0, %v4771
      %4773 = vmatmul.f32.gmra.mxu0 %v4701
      %v4774 = vpop.f32.mrf.mxu0
      %v4775 = vadd.f32 0.0, %v4774
      %4776 = vmatmul.f32.gmra.mxu0 %v4704
      %v4777 = vpop.f32.mrf.mxu0
      %v4778 = vadd.f32 0.0, %v4777
      %4779 = vmatmul.f32.gmra.mxu0 %v4707
      %v4780 = vpop.f32.mrf.mxu0
      %v4781 = vadd.f32 0.0, %v4780
      %4782 = vmatmul.f32.gmra.mxu0 %v4710
      %v4783 = vpop.f32.mrf.mxu0
      %v4784 = vadd.f32 0.0, %v4783
      %4785 = vmatmul.f32.gmra.mxu0 %v4713
      %v4786 = vpop.f32.mrf.mxu0
      %v4787 = vadd.f32 0.0, %v4786
      %4788 = vdwg.mxu0
      %v4789 = vadd.f32 %v4596, %v4733
      %v4790 = vadd.f32 %v4597, %v4736
      %v4791 = vadd.f32 %v4598, %v4739
      %v4792 = vadd.f32 %v4599, %v4742
      %v4793 = vadd.f32 %v4600, %v4745
      %v4794 = vadd.f32 %v4601, %v4748
      %v4795 = vadd.f32 %v4602, %v4751
      %v4796 = vadd.f32 %v4603, %v4754
      %v4797 = vadd.f32 %v4604, %v4757
      %v4798 = vadd.f32 %v4605, %v4760
      %v4799 = vadd.f32 %v4606, %v4763
      %v4800 = vadd.f32 %v4607, %v4766
      %v4801 = vadd.f32 %v4608, %v4769
      %v4802 = vadd.f32 %v4609, %v4772
      %v4803 = vadd.f32 %v4610, %v4775
      %v4804 = vadd.f32 %v4611, %v4778
      %v4805 = vadd.f32 %v4612, %v4781
      %v4806 = vadd.f32 %v4613, %v4784
      %v4807 = vadd.f32 %v4614, %v4787
      %v4808 = vld [vmem:[%s4] sm:$0x1]
      %v4810 = vperm.slane %v4808, 0
      %v4812 = vadd.f32 %v4789, %v4810
      %v4813 = vadd.f32 %v4790, %v4810
      %v4814 = vadd.f32 %v4791, %v4810
      %v4815 = vadd.f32 %v4792, %v4810
      %v4816 = vadd.f32 %v4793, %v4810
      %v4817 = vadd.f32 %v4794, %v4810
      %v4818 = vadd.f32 %v4795, %v4810
      %v4819 = vadd.f32 %v4796, %v4810
      %v4820 = vadd.f32 %v4797, %v4810
      %v4821 = vadd.f32 %v4798, %v4810
      %v4822 = vadd.f32 %v4799, %v4810
      %v4823 = vadd.f32 %v4800, %v4810
      %v4824 = vadd.f32 %v4801, %v4810
      %v4825 = vadd.f32 %v4802, %v4810
      %v4826 = vadd.f32 %v4803, %v4810
      %v4827 = vadd.f32 %v4804, %v4810
      %v4828 = vadd.f32 %v4805, %v4810
      %v4829 = vadd.f32 %v4806, %v4810
      %v4830 = vadd.f32 %v4807, %v4810
      %v4831 = vmax.f32 %v4812, 0.0
      %v4832 = vmax.f32 %v4813, 0.0
      %v4833 = vmax.f32 %v4814, 0.0
      %v4834 = vmax.f32 %v4815, 0.0
      %v4835 = vmax.f32 %v4816, 0.0
      %v4836 = vmax.f32 %v4817, 0.0
      %v4837 = vmax.f32 %v4818, 0.0
      %v4838 = vmax.f32 %v4819, 0.0
      %v4839 = vmax.f32 %v4820, 0.0
      %v4840 = vmax.f32 %v4821, 0.0
      %v4841 = vmax.f32 %v4822, 0.0
      %v4842 = vmax.f32 %v4823, 0.0
      %v4843 = vmax.f32 %v4824, 0.0
      %v4844 = vmax.f32 %v4825, 0.0
      %v4845 = vmax.f32 %v4826, 0.0
      %v4846 = vmax.f32 %v4827, 0.0
      %v4847 = vmax.f32 %v4828, 0.0
      %v4848 = vmax.f32 %v4829, 0.0
      %v4849 = vmax.f32 %v4830, 0.0
      %4850 = vst.msk [vmem:[#allocation3] sm:$0xff] %vm285, %v4831
      %4851 = vst.msk [vmem:[#allocation3 + $0x8] sm:$0xff] %vm285, %v4832
      %4852 = vst.msk [vmem:[#allocation3 + $0x10] sm:$0xff] %vm285, %v4833
      %4853 = vst.msk [vmem:[#allocation3 + $0x18] sm:$0xff] %vm285, %v4834
      %4854 = vst.msk [vmem:[#allocation3 + $0x20] sm:$0xff] %vm285, %v4835
      %4855 = vst.msk [vmem:[#allocation3 + $0x28] sm:$0xff] %vm285, %v4836
      %4856 = vst.msk [vmem:[#allocation3 + $0x30] sm:$0xff] %vm285, %v4837
      %4857 = vst.msk [vmem:[#allocation3 + $0x38] sm:$0xff] %vm285, %v4838
      %4858 = vst.msk [vmem:[#allocation3 + $0x40] sm:$0xff] %vm285, %v4839
      %4859 = vst.msk [vmem:[#allocation3 + $0x48] sm:$0xff] %vm285, %v4840
      %4860 = vst.msk [vmem:[#allocation3 + $0x50] sm:$0xff] %vm285, %v4841
      %4861 = vst.msk [vmem:[#allocation3 + $0x58] sm:$0xff] %vm285, %v4842
      %4862 = vst.msk [vmem:[#allocation3 + $0x60] sm:$0xff] %vm285, %v4843
      %4863 = vst.msk [vmem:[#allocation3 + $0x68] sm:$0xff] %vm285, %v4844
      %4864 = vst.msk [vmem:[#allocation3 + $0x70] sm:$0xff] %vm285, %v4845
      %4865 = vst.msk [vmem:[#allocation3 + $0x78] sm:$0xff] %vm285, %v4846
      %4866 = vst.msk [vmem:[#allocation3 + $0x80] sm:$0xff] %vm285, %v4847
      %4867 = vst.msk [vmem:[#allocation3 + $0x88] sm:$0xff] %vm285, %v4848
      %4868 = vst.msk [vmem:[#allocation3 + $0x90] sm:$0xff] %vm285, %v4849
      %v4869 = vld [vmem:[#allocation3] sm:$0xff]
      %v4870 = vld [vmem:[#allocation3 + $0x8] sm:$0xff]
      %v4871 = vld [vmem:[#allocation3 + $0x10] sm:$0xff]
      %v4872 = vld [vmem:[#allocation3 + $0x18] sm:$0xff]
      %v4873 = vld [vmem:[#allocation3 + $0x20] sm:$0xff]
      %v4874 = vld [vmem:[#allocation3 + $0x28] sm:$0xff]
      %v4875 = vld [vmem:[#allocation3 + $0x30] sm:$0xff]
      %v4876 = vld [vmem:[#allocation3 + $0x38] sm:$0xff]
      %v4877 = vld [vmem:[#allocation3 + $0x40] sm:$0xff]
      %v4878 = vld [vmem:[#allocation3 + $0x48] sm:$0xff]
      %v4879 = vld [vmem:[#allocation3 + $0x50] sm:$0xff]
      %v4880 = vld [vmem:[#allocation3 + $0x58] sm:$0xff]
      %v4881 = vld [vmem:[#allocation3 + $0x60] sm:$0xff]
      %v4882 = vld [vmem:[#allocation3 + $0x68] sm:$0xff]
      %v4883 = vld [vmem:[#allocation3 + $0x70] sm:$0x3]
      %v4884 = vld [vmem:[%s5] sm:$0xff]
      %v4885 = vld [vmem:[%s5 + $0x8] sm:$0xff]
      %v4886 = vld [vmem:[%s5 + $0x10] sm:$0xff]
      %v4887 = vld [vmem:[%s5 + $0x18] sm:$0xff]
      %v4888 = vld [vmem:[%s5 + $0x20] sm:$0xff]
      %v4889 = vld [vmem:[%s5 + $0x28] sm:$0xff]
      %v4890 = vld [vmem:[%s5 + $0x30] sm:$0xff]
      %v4891 = vld [vmem:[%s5 + $0x38] sm:$0xff]
      %v4892 = vld [vmem:[#allocation3 + $0x1] sm:$0xff]
      %v4893 = vld [vmem:[#allocation3 + $0x9] sm:$0xff]
      %v4894 = vld [vmem:[#allocation3 + $0x11] sm:$0xff]
      %v4895 = vld [vmem:[#allocation3 + $0x19] sm:$0xff]
      %v4896 = vld [vmem:[#allocation3 + $0x21] sm:$0xff]
      %v4897 = vld [vmem:[#allocation3 + $0x29] sm:$0xff]
      %v4898 = vld [vmem:[#allocation3 + $0x31] sm:$0xff]
      %v4899 = vld [vmem:[#allocation3 + $0x39] sm:$0xff]
      %v4900 = vld [vmem:[#allocation3 + $0x41] sm:$0xff]
      %v4901 = vld [vmem:[#allocation3 + $0x49] sm:$0xff]
      %v4902 = vld [vmem:[#allocation3 + $0x51] sm:$0xff]
      %v4903 = vld [vmem:[#allocation3 + $0x59] sm:$0xff]
      %v4904 = vld [vmem:[#allocation3 + $0x61] sm:$0xff]
      %v4905 = vld [vmem:[#allocation3 + $0x69] sm:$0xff]
      %v4906 = vld [vmem:[#allocation3 + $0x71] sm:$0x3]
      %s4907 = scalar_lea.vmem %s5, 64
      %v4908 = vld [vmem:[%s4907] sm:$0xff]
      %v4909 = vld [vmem:[%s4907 + $0x8] sm:$0xff]
      %v4910 = vld [vmem:[%s4907 + $0x10] sm:$0xff]
      %v4911 = vld [vmem:[%s4907 + $0x18] sm:$0xff]
      %v4912 = vld [vmem:[%s4907 + $0x20] sm:$0xff]
      %v4913 = vld [vmem:[%s4907 + $0x28] sm:$0xff]
      %v4914 = vld [vmem:[%s4907 + $0x30] sm:$0xff]
      %v4915 = vld [vmem:[%s4907 + $0x38] sm:$0xff]
      %v4917 = vsel %vm285, %v4892, 0
      %v4920 = vsel %vm285, %v4893, 0
      %v4923 = vsel %vm285, %v4894, 0
      %v4926 = vsel %vm285, %v4895, 0
      %v4929 = vsel %vm285, %v4896, 0
      %v4932 = vsel %vm285, %v4897, 0
      %v4935 = vsel %vm285, %v4898, 0
      %v4938 = vsel %vm285, %v4899, 0
      %v4941 = vsel %vm285, %v4900, 0
      %v4944 = vsel %vm285, %v4901, 0
      %v4947 = vsel %vm285, %v4902, 0
      %v4950 = vsel %vm285, %v4903, 0
      %v4953 = vsel %vm285, %v4904, 0
      %v4956 = vsel %vm285, %v4905, 0
      %v4959 = vsel %vm285, %v4906, 0
      %4961 = vmatpush.msra.mxu0 0.0
      %4962 = vmatpush.msra.mxu0 0.0
      %4963 = vmatpush.msra.mxu0 0.0
      %4964 = vmatpush.msra.mxu0 0.0
      %4965 = vmatpush.msra.mxu0 0.0
      %4966 = vmatpush.msra.mxu0 0.0
      %4967 = vmatpush.msra.mxu0 0.0
      %4968 = vmatpush.msra.mxu0 0.0
      %4969 = vmatpush.msra.mxu0 %v4915
      %4970 = vmatpush.msra.mxu0 %v4914
      %4971 = vmatpush.msra.mxu0 %v4913
      %4972 = vmatpush.msra.mxu0 %v4912
      %4973 = vmatpush.msra.mxu0 %v4911
      %4974 = vmatpush.msra.mxu0 %v4910
      %4975 = vmatpush.msra.mxu0 %v4909
      %4976 = vmatpush.msra.mxu0 %v4908
      %4977 = vmatmul.f32.gmra.mxu0 %v4917
      %v4978 = vpop.f32.mrf.mxu0
      %v4979 = vadd.f32 0.0, %v4978
      %4980 = vmatmul.f32.gmra.mxu0 %v4920
      %v4981 = vpop.f32.mrf.mxu0
      %v4982 = vadd.f32 0.0, %v4981
      %4983 = vmatmul.f32.gmra.mxu0 %v4923
      %v4984 = vpop.f32.mrf.mxu0
      %v4985 = vadd.f32 0.0, %v4984
      %4986 = vmatmul.f32.gmra.mxu0 %v4926
      %v4987 = vpop.f32.mrf.mxu0
      %v4988 = vadd.f32 0.0, %v4987
      %4989 = vmatmul.f32.gmra.mxu0 %v4929
      %v4990 = vpop.f32.mrf.mxu0
      %v4991 = vadd.f32 0.0, %v4990
      %4992 = vmatmul.f32.gmra.mxu0 %v4932
      %v4993 = vpop.f32.mrf.mxu0
      %v4994 = vadd.f32 0.0, %v4993
      %4995 = vmatmul.f32.gmra.mxu0 %v4935
      %v4996 = vpop.f32.mrf.mxu0
      %v4997 = vadd.f32 0.0, %v4996
      %4998 = vmatmul.f32.gmra.mxu0 %v4938
      %v4999 = vpop.f32.mrf.mxu0
      %v5000 = vadd.f32 0.0, %v4999
      %5001 = vmatmul.f32.gmra.mxu0 %v4941
      %v5002 = vpop.f32.mrf.mxu0
      %v5003 = vadd.f32 0.0, %v5002
      %5004 = vmatmul.f32.gmra.mxu0 %v4944
      %v5005 = vpop.f32.mrf.mxu0
      %v5006 = vadd.f32 0.0, %v5005
      %5007 = vmatmul.f32.gmra.mxu0 %v4947
      %v5008 = vpop.f32.mrf.mxu0
      %v5009 = vadd.f32 0.0, %v5008
      %5010 = vmatmul.f32.gmra.mxu0 %v4950
      %v5011 = vpop.f32.mrf.mxu0
      %v5012 = vadd.f32 0.0, %v5011
      %5013 = vmatmul.f32.gmra.mxu0 %v4953
      %v5014 = vpop.f32.mrf.mxu0
      %v5015 = vadd.f32 0.0, %v5014
      %5016 = vmatmul.f32.gmra.mxu0 %v4956
      %v5017 = vpop.f32.mrf.mxu0
      %v5018 = vadd.f32 0.0, %v5017
      %5019 = vmatmul.f32.gmra.mxu0 %v4959
      %v5020 = vpop.f32.mrf.mxu0
      %v5021 = vadd.f32 0.0, %v5020
      %5022 = vdwg.mxu0
      %v5024 = vsel %vm285, %v4869, 0
      %v5027 = vsel %vm285, %v4870, 0
      %v5030 = vsel %vm285, %v4871, 0
      %v5033 = vsel %vm285, %v4872, 0
      %v5036 = vsel %vm285, %v4873, 0
      %v5039 = vsel %vm285, %v4874, 0
      %v5042 = vsel %vm285, %v4875, 0
      %v5045 = vsel %vm285, %v4876, 0
      %v5048 = vsel %vm285, %v4877, 0
      %v5051 = vsel %vm285, %v4878, 0
      %v5054 = vsel %vm285, %v4879, 0
      %v5057 = vsel %vm285, %v4880, 0
      %v5060 = vsel %vm285, %v4881, 0
      %v5063 = vsel %vm285, %v4882, 0
      %v5066 = vsel %vm285, %v4883, 0
      %5068 = vmatpush.msra.mxu0 0.0
      %5069 = vmatpush.msra.mxu0 0.0
      %5070 = vmatpush.msra.mxu0 0.0
      %5071 = vmatpush.msra.mxu0 0.0
      %5072 = vmatpush.msra.mxu0 0.0
      %5073 = vmatpush.msra.mxu0 0.0
      %5074 = vmatpush.msra.mxu0 0.0
      %5075 = vmatpush.msra.mxu0 0.0
      %5076 = vmatpush.msra.mxu0 %v4891
      %5077 = vmatpush.msra.mxu0 %v4890
      %5078 = vmatpush.msra.mxu0 %v4889
      %5079 = vmatpush.msra.mxu0 %v4888
      %5080 = vmatpush.msra.mxu0 %v4887
      %5081 = vmatpush.msra.mxu0 %v4886
      %5082 = vmatpush.msra.mxu0 %v4885
      %5083 = vmatpush.msra.mxu0 %v4884
      %5084 = vmatmul.f32.gmra.mxu0 %v5024
      %v5085 = vpop.f32.mrf.mxu0
      %v5086 = vadd.f32 %v4979, %v5085
      %5087 = vmatmul.f32.gmra.mxu0 %v5027
      %v5088 = vpop.f32.mrf.mxu0
      %v5089 = vadd.f32 %v4982, %v5088
      %5090 = vmatmul.f32.gmra.mxu0 %v5030
      %v5091 = vpop.f32.mrf.mxu0
      %v5092 = vadd.f32 %v4985, %v5091
      %5093 = vmatmul.f32.gmra.mxu0 %v5033
      %v5094 = vpop.f32.mrf.mxu0
      %v5095 = vadd.f32 %v4988, %v5094
      %5096 = vmatmul.f32.gmra.mxu0 %v5036
      %v5097 = vpop.f32.mrf.mxu0
      %v5098 = vadd.f32 %v4991, %v5097
      %5099 = vmatmul.f32.gmra.mxu0 %v5039
      %v5100 = vpop.f32.mrf.mxu0
      %v5101 = vadd.f32 %v4994, %v5100
      %5102 = vmatmul.f32.gmra.mxu0 %v5042
      %v5103 = vpop.f32.mrf.mxu0
      %v5104 = vadd.f32 %v4997, %v5103
      %5105 = vmatmul.f32.gmra.mxu0 %v5045
      %v5106 = vpop.f32.mrf.mxu0
      %v5107 = vadd.f32 %v5000, %v5106
      %5108 = vmatmul.f32.gmra.mxu0 %v5048
      %v5109 = vpop.f32.mrf.mxu0
      %v5110 = vadd.f32 %v5003, %v5109
      %5111 = vmatmul.f32.gmra.mxu0 %v5051
      %v5112 = vpop.f32.mrf.mxu0
      %v5113 = vadd.f32 %v5006, %v5112
      %5114 = vmatmul.f32.gmra.mxu0 %v5054
      %v5115 = vpop.f32.mrf.mxu0
      %v5116 = vadd.f32 %v5009, %v5115
      %5117 = vmatmul.f32.gmra.mxu0 %v5057
      %v5118 = vpop.f32.mrf.mxu0
      %v5119 = vadd.f32 %v5012, %v5118
      %5120 = vmatmul.f32.gmra.mxu0 %v5060
      %v5121 = vpop.f32.mrf.mxu0
      %v5122 = vadd.f32 %v5015, %v5121
      %5123 = vmatmul.f32.gmra.mxu0 %v5063
      %v5124 = vpop.f32.mrf.mxu0
      %v5125 = vadd.f32 %v5018, %v5124
      %5126 = vmatmul.f32.gmra.mxu0 %v5066
      %v5127 = vpop.f32.mrf.mxu0
      %v5128 = vadd.f32 %v5021, %v5127
      %5129 = vdwg.mxu0
      %v5130 = vld [vmem:[#allocation3 + $0x2] sm:$0xff]
      %v5131 = vld [vmem:[#allocation3 + $0xa] sm:$0xff]
      %v5132 = vld [vmem:[#allocation3 + $0x12] sm:$0xff]
      %v5133 = vld [vmem:[#allocation3 + $0x1a] sm:$0xff]
      %v5134 = vld [vmem:[#allocation3 + $0x22] sm:$0xff]
      %v5135 = vld [vmem:[#allocation3 + $0x2a] sm:$0xff]
      %v5136 = vld [vmem:[#allocation3 + $0x32] sm:$0xff]
      %v5137 = vld [vmem:[#allocation3 + $0x3a] sm:$0xff]
      %v5138 = vld [vmem:[#allocation3 + $0x42] sm:$0xff]
      %v5139 = vld [vmem:[#allocation3 + $0x4a] sm:$0xff]
      %v5140 = vld [vmem:[#allocation3 + $0x52] sm:$0xff]
      %v5141 = vld [vmem:[#allocation3 + $0x5a] sm:$0xff]
      %v5142 = vld [vmem:[#allocation3 + $0x62] sm:$0xff]
      %v5143 = vld [vmem:[#allocation3 + $0x6a] sm:$0xff]
      %v5144 = vld [vmem:[#allocation3 + $0x72] sm:$0x3]
      %s5145 = scalar_lea.vmem %s5, 128
      %v5146 = vld [vmem:[%s5145] sm:$0xff]
      %v5147 = vld [vmem:[%s5145 + $0x8] sm:$0xff]
      %v5148 = vld [vmem:[%s5145 + $0x10] sm:$0xff]
      %v5149 = vld [vmem:[%s5145 + $0x18] sm:$0xff]
      %v5150 = vld [vmem:[%s5145 + $0x20] sm:$0xff]
      %v5151 = vld [vmem:[%s5145 + $0x28] sm:$0xff]
      %v5152 = vld [vmem:[%s5145 + $0x30] sm:$0xff]
      %v5153 = vld [vmem:[%s5145 + $0x38] sm:$0xff]
      %v5155 = vsel %vm285, %v5130, 0
      %v5158 = vsel %vm285, %v5131, 0
      %v5161 = vsel %vm285, %v5132, 0
      %v5164 = vsel %vm285, %v5133, 0
      %v5167 = vsel %vm285, %v5134, 0
      %v5170 = vsel %vm285, %v5135, 0
      %v5173 = vsel %vm285, %v5136, 0
      %v5176 = vsel %vm285, %v5137, 0
      %v5179 = vsel %vm285, %v5138, 0
      %v5182 = vsel %vm285, %v5139, 0
      %v5185 = vsel %vm285, %v5140, 0
      %v5188 = vsel %vm285, %v5141, 0
      %v5191 = vsel %vm285, %v5142, 0
      %v5194 = vsel %vm285, %v5143, 0
      %v5197 = vsel %vm285, %v5144, 0
      %5199 = vmatpush.msra.mxu0 0.0
      %5200 = vmatpush.msra.mxu0 0.0
      %5201 = vmatpush.msra.mxu0 0.0
      %5202 = vmatpush.msra.mxu0 0.0
      %5203 = vmatpush.msra.mxu0 0.0
      %5204 = vmatpush.msra.mxu0 0.0
      %5205 = vmatpush.msra.mxu0 0.0
      %5206 = vmatpush.msra.mxu0 0.0
      %5207 = vmatpush.msra.mxu0 %v5153
      %5208 = vmatpush.msra.mxu0 %v5152
      %5209 = vmatpush.msra.mxu0 %v5151
      %5210 = vmatpush.msra.mxu0 %v5150
      %5211 = vmatpush.msra.mxu0 %v5149
      %5212 = vmatpush.msra.mxu0 %v5148
      %5213 = vmatpush.msra.mxu0 %v5147
      %5214 = vmatpush.msra.mxu0 %v5146
      %5215 = vmatmul.f32.gmra.mxu0 %v5155
      %v5216 = vpop.f32.mrf.mxu0
      %v5217 = vadd.f32 0.0, %v5216
      %5218 = vmatmul.f32.gmra.mxu0 %v5158
      %v5219 = vpop.f32.mrf.mxu0
      %v5220 = vadd.f32 0.0, %v5219
      %5221 = vmatmul.f32.gmra.mxu0 %v5161
      %v5222 = vpop.f32.mrf.mxu0
      %v5223 = vadd.f32 0.0, %v5222
      %5224 = vmatmul.f32.gmra.mxu0 %v5164
      %v5225 = vpop.f32.mrf.mxu0
      %v5226 = vadd.f32 0.0, %v5225
      %5227 = vmatmul.f32.gmra.mxu0 %v5167
      %v5228 = vpop.f32.mrf.mxu0
      %v5229 = vadd.f32 0.0, %v5228
      %5230 = vmatmul.f32.gmra.mxu0 %v5170
      %v5231 = vpop.f32.mrf.mxu0
      %v5232 = vadd.f32 0.0, %v5231
      %5233 = vmatmul.f32.gmra.mxu0 %v5173
      %v5234 = vpop.f32.mrf.mxu0
      %v5235 = vadd.f32 0.0, %v5234
      %5236 = vmatmul.f32.gmra.mxu0 %v5176
      %v5237 = vpop.f32.mrf.mxu0
      %v5238 = vadd.f32 0.0, %v5237
      %5239 = vmatmul.f32.gmra.mxu0 %v5179
      %v5240 = vpop.f32.mrf.mxu0
      %v5241 = vadd.f32 0.0, %v5240
      %5242 = vmatmul.f32.gmra.mxu0 %v5182
      %v5243 = vpop.f32.mrf.mxu0
      %v5244 = vadd.f32 0.0, %v5243
      %5245 = vmatmul.f32.gmra.mxu0 %v5185
      %v5246 = vpop.f32.mrf.mxu0
      %v5247 = vadd.f32 0.0, %v5246
      %5248 = vmatmul.f32.gmra.mxu0 %v5188
      %v5249 = vpop.f32.mrf.mxu0
      %v5250 = vadd.f32 0.0, %v5249
      %5251 = vmatmul.f32.gmra.mxu0 %v5191
      %v5252 = vpop.f32.mrf.mxu0
      %v5253 = vadd.f32 0.0, %v5252
      %5254 = vmatmul.f32.gmra.mxu0 %v5194
      %v5255 = vpop.f32.mrf.mxu0
      %v5256 = vadd.f32 0.0, %v5255
      %5257 = vmatmul.f32.gmra.mxu0 %v5197
      %v5258 = vpop.f32.mrf.mxu0
      %v5259 = vadd.f32 0.0, %v5258
      %5260 = vdwg.mxu0
      %v5261 = vadd.f32 %v5086, %v5217
      %v5262 = vadd.f32 %v5089, %v5220
      %v5263 = vadd.f32 %v5092, %v5223
      %v5264 = vadd.f32 %v5095, %v5226
      %v5265 = vadd.f32 %v5098, %v5229
      %v5266 = vadd.f32 %v5101, %v5232
      %v5267 = vadd.f32 %v5104, %v5235
      %v5268 = vadd.f32 %v5107, %v5238
      %v5269 = vadd.f32 %v5110, %v5241
      %v5270 = vadd.f32 %v5113, %v5244
      %v5271 = vadd.f32 %v5116, %v5247
      %v5272 = vadd.f32 %v5119, %v5250
      %v5273 = vadd.f32 %v5122, %v5253
      %v5274 = vadd.f32 %v5125, %v5256
      %v5275 = vadd.f32 %v5128, %v5259
      %v5276 = vld [vmem:[#allocation3 + $0x13] sm:$0xff]
      %v5277 = vld [vmem:[#allocation3 + $0x1b] sm:$0xff]
      %v5278 = vld [vmem:[#allocation3 + $0x23] sm:$0xff]
      %v5279 = vld [vmem:[#allocation3 + $0x2b] sm:$0xff]
      %v5280 = vld [vmem:[#allocation3 + $0x33] sm:$0xff]
      %v5281 = vld [vmem:[#allocation3 + $0x3b] sm:$0xff]
      %v5282 = vld [vmem:[#allocation3 + $0x43] sm:$0xff]
      %v5283 = vld [vmem:[#allocation3 + $0x4b] sm:$0xff]
      %v5284 = vld [vmem:[#allocation3 + $0x53] sm:$0xff]
      %v5285 = vld [vmem:[#allocation3 + $0x5b] sm:$0xff]
      %v5286 = vld [vmem:[#allocation3 + $0x63] sm:$0xff]
      %v5287 = vld [vmem:[#allocation3 + $0x6b] sm:$0xff]
      %v5288 = vld [vmem:[#allocation3 + $0x73] sm:$0xff]
      %v5289 = vld [vmem:[#allocation3 + $0x7b] sm:$0xff]
      %v5290 = vld [vmem:[#allocation3 + $0x83] sm:$0x3]
      %s5291 = scalar_lea.vmem %s5, 192
      %v5292 = vld [vmem:[%s5291] sm:$0xff]
      %v5293 = vld [vmem:[%s5291 + $0x8] sm:$0xff]
      %v5294 = vld [vmem:[%s5291 + $0x10] sm:$0xff]
      %v5295 = vld [vmem:[%s5291 + $0x18] sm:$0xff]
      %v5296 = vld [vmem:[%s5291 + $0x20] sm:$0xff]
      %v5297 = vld [vmem:[%s5291 + $0x28] sm:$0xff]
      %v5298 = vld [vmem:[%s5291 + $0x30] sm:$0xff]
      %v5299 = vld [vmem:[%s5291 + $0x38] sm:$0xff]
      %v5301 = vsel %vm285, %v5276, 0
      %v5304 = vsel %vm285, %v5277, 0
      %v5307 = vsel %vm285, %v5278, 0
      %v5310 = vsel %vm285, %v5279, 0
      %v5313 = vsel %vm285, %v5280, 0
      %v5316 = vsel %vm285, %v5281, 0
      %v5319 = vsel %vm285, %v5282, 0
      %v5322 = vsel %vm285, %v5283, 0
      %v5325 = vsel %vm285, %v5284, 0
      %v5328 = vsel %vm285, %v5285, 0
      %v5331 = vsel %vm285, %v5286, 0
      %v5334 = vsel %vm285, %v5287, 0
      %v5337 = vsel %vm285, %v5288, 0
      %v5340 = vsel %vm285, %v5289, 0
      %v5343 = vsel %vm285, %v5290, 0
      %5345 = vmatpush.msra.mxu0 0.0
      %5346 = vmatpush.msra.mxu0 0.0
      %5347 = vmatpush.msra.mxu0 0.0
      %5348 = vmatpush.msra.mxu0 0.0
      %5349 = vmatpush.msra.mxu0 0.0
      %5350 = vmatpush.msra.mxu0 0.0
      %5351 = vmatpush.msra.mxu0 0.0
      %5352 = vmatpush.msra.mxu0 0.0
      %5353 = vmatpush.msra.mxu0 %v5299
      %5354 = vmatpush.msra.mxu0 %v5298
      %5355 = vmatpush.msra.mxu0 %v5297
      %5356 = vmatpush.msra.mxu0 %v5296
      %5357 = vmatpush.msra.mxu0 %v5295
      %5358 = vmatpush.msra.mxu0 %v5294
      %5359 = vmatpush.msra.mxu0 %v5293
      %5360 = vmatpush.msra.mxu0 %v5292
      %5361 = vmatmul.f32.gmra.mxu0 %v5301
      %v5362 = vpop.f32.mrf.mxu0
      %v5363 = vadd.f32 0.0, %v5362
      %5364 = vmatmul.f32.gmra.mxu0 %v5304
      %v5365 = vpop.f32.mrf.mxu0
      %v5366 = vadd.f32 0.0, %v5365
      %5367 = vmatmul.f32.gmra.mxu0 %v5307
      %v5368 = vpop.f32.mrf.mxu0
      %v5369 = vadd.f32 0.0, %v5368
      %5370 = vmatmul.f32.gmra.mxu0 %v5310
      %v5371 = vpop.f32.mrf.mxu0
      %v5372 = vadd.f32 0.0, %v5371
      %5373 = vmatmul.f32.gmra.mxu0 %v5313
      %v5374 = vpop.f32.mrf.mxu0
      %v5375 = vadd.f32 0.0, %v5374
      %5376 = vmatmul.f32.gmra.mxu0 %v5316
      %v5377 = vpop.f32.mrf.mxu0
      %v5378 = vadd.f32 0.0, %v5377
      %5379 = vmatmul.f32.gmra.mxu0 %v5319
      %v5380 = vpop.f32.mrf.mxu0
      %v5381 = vadd.f32 0.0, %v5380
      %5382 = vmatmul.f32.gmra.mxu0 %v5322
      %v5383 = vpop.f32.mrf.mxu0
      %v5384 = vadd.f32 0.0, %v5383
      %5385 = vmatmul.f32.gmra.mxu0 %v5325
      %v5386 = vpop.f32.mrf.mxu0
      %v5387 = vadd.f32 0.0, %v5386
      %5388 = vmatmul.f32.gmra.mxu0 %v5328
      %v5389 = vpop.f32.mrf.mxu0
      %v5390 = vadd.f32 0.0, %v5389
      %5391 = vmatmul.f32.gmra.mxu0 %v5331
      %v5392 = vpop.f32.mrf.mxu0
      %v5393 = vadd.f32 0.0, %v5392
      %5394 = vmatmul.f32.gmra.mxu0 %v5334
      %v5395 = vpop.f32.mrf.mxu0
      %v5396 = vadd.f32 0.0, %v5395
      %5397 = vmatmul.f32.gmra.mxu0 %v5337
      %v5398 = vpop.f32.mrf.mxu0
      %v5399 = vadd.f32 0.0, %v5398
      %5400 = vmatmul.f32.gmra.mxu0 %v5340
      %v5401 = vpop.f32.mrf.mxu0
      %v5402 = vadd.f32 0.0, %v5401
      %5403 = vmatmul.f32.gmra.mxu0 %v5343
      %v5404 = vpop.f32.mrf.mxu0
      %v5405 = vadd.f32 0.0, %v5404
      %5406 = vdwg.mxu0
      %v5407 = vadd.f32 %v5261, %v5363
      %v5408 = vadd.f32 %v5262, %v5366
      %v5409 = vadd.f32 %v5263, %v5369
      %v5410 = vadd.f32 %v5264, %v5372
      %v5411 = vadd.f32 %v5265, %v5375
      %v5412 = vadd.f32 %v5266, %v5378
      %v5413 = vadd.f32 %v5267, %v5381
      %v5414 = vadd.f32 %v5268, %v5384
      %v5415 = vadd.f32 %v5269, %v5387
      %v5416 = vadd.f32 %v5270, %v5390
      %v5417 = vadd.f32 %v5271, %v5393
      %v5418 = vadd.f32 %v5272, %v5396
      %v5419 = vadd.f32 %v5273, %v5399
      %v5420 = vadd.f32 %v5274, %v5402
      %v5421 = vadd.f32 %v5275, %v5405
      %v5422 = vld [vmem:[#allocation3 + $0x14] sm:$0xff]
      %v5423 = vld [vmem:[#allocation3 + $0x1c] sm:$0xff]
      %v5424 = vld [vmem:[#allocation3 + $0x24] sm:$0xff]
      %v5425 = vld [vmem:[#allocation3 + $0x2c] sm:$0xff]
      %v5426 = vld [vmem:[#allocation3 + $0x34] sm:$0xff]
      %v5427 = vld [vmem:[#allocation3 + $0x3c] sm:$0xff]
      %v5428 = vld [vmem:[#allocation3 + $0x44] sm:$0xff]
      %v5429 = vld [vmem:[#allocation3 + $0x4c] sm:$0xff]
      %v5430 = vld [vmem:[#allocation3 + $0x54] sm:$0xff]
      %v5431 = vld [vmem:[#allocation3 + $0x5c] sm:$0xff]
      %v5432 = vld [vmem:[#allocation3 + $0x64] sm:$0xff]
      %v5433 = vld [vmem:[#allocation3 + $0x6c] sm:$0xff]
      %v5434 = vld [vmem:[#allocation3 + $0x74] sm:$0xff]
      %v5435 = vld [vmem:[#allocation3 + $0x7c] sm:$0xff]
      %v5436 = vld [vmem:[#allocation3 + $0x84] sm:$0x3]
      %s5437 = scalar_lea.vmem %s5, 256
      %v5438 = vld [vmem:[%s5437] sm:$0xff]
      %v5439 = vld [vmem:[%s5437 + $0x8] sm:$0xff]
      %v5440 = vld [vmem:[%s5437 + $0x10] sm:$0xff]
      %v5441 = vld [vmem:[%s5437 + $0x18] sm:$0xff]
      %v5442 = vld [vmem:[%s5437 + $0x20] sm:$0xff]
      %v5443 = vld [vmem:[%s5437 + $0x28] sm:$0xff]
      %v5444 = vld [vmem:[%s5437 + $0x30] sm:$0xff]
      %v5445 = vld [vmem:[%s5437 + $0x38] sm:$0xff]
      %v5447 = vsel %vm285, %v5422, 0
      %v5450 = vsel %vm285, %v5423, 0
      %v5453 = vsel %vm285, %v5424, 0
      %v5456 = vsel %vm285, %v5425, 0
      %v5459 = vsel %vm285, %v5426, 0
      %v5462 = vsel %vm285, %v5427, 0
      %v5465 = vsel %vm285, %v5428, 0
      %v5468 = vsel %vm285, %v5429, 0
      %v5471 = vsel %vm285, %v5430, 0
      %v5474 = vsel %vm285, %v5431, 0
      %v5477 = vsel %vm285, %v5432, 0
      %v5480 = vsel %vm285, %v5433, 0
      %v5483 = vsel %vm285, %v5434, 0
      %v5486 = vsel %vm285, %v5435, 0
      %v5489 = vsel %vm285, %v5436, 0
      %5491 = vmatpush.msra.mxu0 0.0
      %5492 = vmatpush.msra.mxu0 0.0
      %5493 = vmatpush.msra.mxu0 0.0
      %5494 = vmatpush.msra.mxu0 0.0
      %5495 = vmatpush.msra.mxu0 0.0
      %5496 = vmatpush.msra.mxu0 0.0
      %5497 = vmatpush.msra.mxu0 0.0
      %5498 = vmatpush.msra.mxu0 0.0
      %5499 = vmatpush.msra.mxu0 %v5445
      %5500 = vmatpush.msra.mxu0 %v5444
      %5501 = vmatpush.msra.mxu0 %v5443
      %5502 = vmatpush.msra.mxu0 %v5442
      %5503 = vmatpush.msra.mxu0 %v5441
      %5504 = vmatpush.msra.mxu0 %v5440
      %5505 = vmatpush.msra.mxu0 %v5439
      %5506 = vmatpush.msra.mxu0 %v5438
      %5507 = vmatmul.f32.gmra.mxu0 %v5447
      %v5508 = vpop.f32.mrf.mxu0
      %v5509 = vadd.f32 0.0, %v5508
      %5510 = vmatmul.f32.gmra.mxu0 %v5450
      %v5511 = vpop.f32.mrf.mxu0
      %v5512 = vadd.f32 0.0, %v5511
      %5513 = vmatmul.f32.gmra.mxu0 %v5453
      %v5514 = vpop.f32.mrf.mxu0
      %v5515 = vadd.f32 0.0, %v5514
      %5516 = vmatmul.f32.gmra.mxu0 %v5456
      %v5517 = vpop.f32.mrf.mxu0
      %v5518 = vadd.f32 0.0, %v5517
      %5519 = vmatmul.f32.gmra.mxu0 %v5459
      %v5520 = vpop.f32.mrf.mxu0
      %v5521 = vadd.f32 0.0, %v5520
      %5522 = vmatmul.f32.gmra.mxu0 %v5462
      %v5523 = vpop.f32.mrf.mxu0
      %v5524 = vadd.f32 0.0, %v5523
      %5525 = vmatmul.f32.gmra.mxu0 %v5465
      %v5526 = vpop.f32.mrf.mxu0
      %v5527 = vadd.f32 0.0, %v5526
      %5528 = vmatmul.f32.gmra.mxu0 %v5468
      %v5529 = vpop.f32.mrf.mxu0
      %v5530 = vadd.f32 0.0, %v5529
      %5531 = vmatmul.f32.gmra.mxu0 %v5471
      %v5532 = vpop.f32.mrf.mxu0
      %v5533 = vadd.f32 0.0, %v5532
      %5534 = vmatmul.f32.gmra.mxu0 %v5474
      %v5535 = vpop.f32.mrf.mxu0
      %v5536 = vadd.f32 0.0, %v5535
      %5537 = vmatmul.f32.gmra.mxu0 %v5477
      %v5538 = vpop.f32.mrf.mxu0
      %v5539 = vadd.f32 0.0, %v5538
      %5540 = vmatmul.f32.gmra.mxu0 %v5480
      %v5541 = vpop.f32.mrf.mxu0
      %v5542 = vadd.f32 0.0, %v5541
      %5543 = vmatmul.f32.gmra.mxu0 %v5483
      %v5544 = vpop.f32.mrf.mxu0
      %v5545 = vadd.f32 0.0, %v5544
      %5546 = vmatmul.f32.gmra.mxu0 %v5486
      %v5547 = vpop.f32.mrf.mxu0
      %v5548 = vadd.f32 0.0, %v5547
      %5549 = vmatmul.f32.gmra.mxu0 %v5489
      %v5550 = vpop.f32.mrf.mxu0
      %v5551 = vadd.f32 0.0, %v5550
      %5552 = vdwg.mxu0
      %v5553 = vadd.f32 %v5407, %v5509
      %v5554 = vadd.f32 %v5408, %v5512
      %v5555 = vadd.f32 %v5409, %v5515
      %v5556 = vadd.f32 %v5410, %v5518
      %v5557 = vadd.f32 %v5411, %v5521
      %v5558 = vadd.f32 %v5412, %v5524
      %v5559 = vadd.f32 %v5413, %v5527
      %v5560 = vadd.f32 %v5414, %v5530
      %v5561 = vadd.f32 %v5415, %v5533
      %v5562 = vadd.f32 %v5416, %v5536
      %v5563 = vadd.f32 %v5417, %v5539
      %v5564 = vadd.f32 %v5418, %v5542
      %v5565 = vadd.f32 %v5419, %v5545
      %v5566 = vadd.f32 %v5420, %v5548
      %v5567 = vadd.f32 %v5421, %v5551
      %v5568 = vld [vmem:[#allocation3 + $0x15] sm:$0xff]
      %v5569 = vld [vmem:[#allocation3 + $0x1d] sm:$0xff]
      %v5570 = vld [vmem:[#allocation3 + $0x25] sm:$0xff]
      %v5571 = vld [vmem:[#allocation3 + $0x2d] sm:$0xff]
      %v5572 = vld [vmem:[#allocation3 + $0x35] sm:$0xff]
      %v5573 = vld [vmem:[#allocation3 + $0x3d] sm:$0xff]
      %v5574 = vld [vmem:[#allocation3 + $0x45] sm:$0xff]
      %v5575 = vld [vmem:[#allocation3 + $0x4d] sm:$0xff]
      %v5576 = vld [vmem:[#allocation3 + $0x55] sm:$0xff]
      %v5577 = vld [vmem:[#allocation3 + $0x5d] sm:$0xff]
      %v5578 = vld [vmem:[#allocation3 + $0x65] sm:$0xff]
      %v5579 = vld [vmem:[#allocation3 + $0x6d] sm:$0xff]
      %v5580 = vld [vmem:[#allocation3 + $0x75] sm:$0xff]
      %v5581 = vld [vmem:[#allocation3 + $0x7d] sm:$0xff]
      %v5582 = vld [vmem:[#allocation3 + $0x85] sm:$0x3]
      %s5583 = scalar_lea.vmem %s5, 320
      %v5584 = vld [vmem:[%s5583] sm:$0xff]
      %v5585 = vld [vmem:[%s5583 + $0x8] sm:$0xff]
      %v5586 = vld [vmem:[%s5583 + $0x10] sm:$0xff]
      %v5587 = vld [vmem:[%s5583 + $0x18] sm:$0xff]
      %v5588 = vld [vmem:[%s5583 + $0x20] sm:$0xff]
      %v5589 = vld [vmem:[%s5583 + $0x28] sm:$0xff]
      %v5590 = vld [vmem:[%s5583 + $0x30] sm:$0xff]
      %v5591 = vld [vmem:[%s5583 + $0x38] sm:$0xff]
      %v5593 = vsel %vm285, %v5568, 0
      %v5596 = vsel %vm285, %v5569, 0
      %v5599 = vsel %vm285, %v5570, 0
      %v5602 = vsel %vm285, %v5571, 0
      %v5605 = vsel %vm285, %v5572, 0
      %v5608 = vsel %vm285, %v5573, 0
      %v5611 = vsel %vm285, %v5574, 0
      %v5614 = vsel %vm285, %v5575, 0
      %v5617 = vsel %vm285, %v5576, 0
      %v5620 = vsel %vm285, %v5577, 0
      %v5623 = vsel %vm285, %v5578, 0
      %v5626 = vsel %vm285, %v5579, 0
      %v5629 = vsel %vm285, %v5580, 0
      %v5632 = vsel %vm285, %v5581, 0
      %v5635 = vsel %vm285, %v5582, 0
      %5637 = vmatpush.msra.mxu0 0.0
      %5638 = vmatpush.msra.mxu0 0.0
      %5639 = vmatpush.msra.mxu0 0.0
      %5640 = vmatpush.msra.mxu0 0.0
      %5641 = vmatpush.msra.mxu0 0.0
      %5642 = vmatpush.msra.mxu0 0.0
      %5643 = vmatpush.msra.mxu0 0.0
      %5644 = vmatpush.msra.mxu0 0.0
      %5645 = vmatpush.msra.mxu0 %v5591
      %5646 = vmatpush.msra.mxu0 %v5590
      %5647 = vmatpush.msra.mxu0 %v5589
      %5648 = vmatpush.msra.mxu0 %v5588
      %5649 = vmatpush.msra.mxu0 %v5587
      %5650 = vmatpush.msra.mxu0 %v5586
      %5651 = vmatpush.msra.mxu0 %v5585
      %5652 = vmatpush.msra.mxu0 %v5584
      %5653 = vmatmul.f32.gmra.mxu0 %v5593
      %v5654 = vpop.f32.mrf.mxu0
      %v5655 = vadd.f32 0.0, %v5654
      %5656 = vmatmul.f32.gmra.mxu0 %v5596
      %v5657 = vpop.f32.mrf.mxu0
      %v5658 = vadd.f32 0.0, %v5657
      %5659 = vmatmul.f32.gmra.mxu0 %v5599
      %v5660 = vpop.f32.mrf.mxu0
      %v5661 = vadd.f32 0.0, %v5660
      %5662 = vmatmul.f32.gmra.mxu0 %v5602
      %v5663 = vpop.f32.mrf.mxu0
      %v5664 = vadd.f32 0.0, %v5663
      %5665 = vmatmul.f32.gmra.mxu0 %v5605
      %v5666 = vpop.f32.mrf.mxu0
      %v5667 = vadd.f32 0.0, %v5666
      %5668 = vmatmul.f32.gmra.mxu0 %v5608
      %v5669 = vpop.f32.mrf.mxu0
      %v5670 = vadd.f32 0.0, %v5669
      %5671 = vmatmul.f32.gmra.mxu0 %v5611
      %v5672 = vpop.f32.mrf.mxu0
      %v5673 = vadd.f32 0.0, %v5672
      %5674 = vmatmul.f32.gmra.mxu0 %v5614
      %v5675 = vpop.f32.mrf.mxu0
      %v5676 = vadd.f32 0.0, %v5675
      %5677 = vmatmul.f32.gmra.mxu0 %v5617
      %v5678 = vpop.f32.mrf.mxu0
      %v5679 = vadd.f32 0.0, %v5678
      %5680 = vmatmul.f32.gmra.mxu0 %v5620
      %v5681 = vpop.f32.mrf.mxu0
      %v5682 = vadd.f32 0.0, %v5681
      %5683 = vmatmul.f32.gmra.mxu0 %v5623
      %v5684 = vpop.f32.mrf.mxu0
      %v5685 = vadd.f32 0.0, %v5684
      %5686 = vmatmul.f32.gmra.mxu0 %v5626
      %v5687 = vpop.f32.mrf.mxu0
      %v5688 = vadd.f32 0.0, %v5687
      %5689 = vmatmul.f32.gmra.mxu0 %v5629
      %v5690 = vpop.f32.mrf.mxu0
      %v5691 = vadd.f32 0.0, %v5690
      %5692 = vmatmul.f32.gmra.mxu0 %v5632
      %v5693 = vpop.f32.mrf.mxu0
      %v5694 = vadd.f32 0.0, %v5693
      %5695 = vmatmul.f32.gmra.mxu0 %v5635
      %v5696 = vpop.f32.mrf.mxu0
      %v5697 = vadd.f32 0.0, %v5696
      %5698 = vdwg.mxu0
      %v5699 = vadd.f32 %v5553, %v5655
      %v5700 = vadd.f32 %v5554, %v5658
      %v5701 = vadd.f32 %v5555, %v5661
      %v5702 = vadd.f32 %v5556, %v5664
      %v5703 = vadd.f32 %v5557, %v5667
      %v5704 = vadd.f32 %v5558, %v5670
      %v5705 = vadd.f32 %v5559, %v5673
      %v5706 = vadd.f32 %v5560, %v5676
      %v5707 = vadd.f32 %v5561, %v5679
      %v5708 = vadd.f32 %v5562, %v5682
      %v5709 = vadd.f32 %v5563, %v5685
      %v5710 = vadd.f32 %v5564, %v5688
      %v5711 = vadd.f32 %v5565, %v5691
      %v5712 = vadd.f32 %v5566, %v5694
      %v5713 = vadd.f32 %v5567, %v5697
      %v5714 = vld [vmem:[#allocation3 + $0x26] sm:$0xff]
      %v5715 = vld [vmem:[#allocation3 + $0x2e] sm:$0xff]
      %v5716 = vld [vmem:[#allocation3 + $0x36] sm:$0xff]
      %v5717 = vld [vmem:[#allocation3 + $0x3e] sm:$0xff]
      %v5718 = vld [vmem:[#allocation3 + $0x46] sm:$0xff]
      %v5719 = vld [vmem:[#allocation3 + $0x4e] sm:$0xff]
      %v5720 = vld [vmem:[#allocation3 + $0x56] sm:$0xff]
      %v5721 = vld [vmem:[#allocation3 + $0x5e] sm:$0xff]
      %v5722 = vld [vmem:[#allocation3 + $0x66] sm:$0xff]
      %v5723 = vld [vmem:[#allocation3 + $0x6e] sm:$0xff]
      %v5724 = vld [vmem:[#allocation3 + $0x76] sm:$0xff]
      %v5725 = vld [vmem:[#allocation3 + $0x7e] sm:$0xff]
      %v5726 = vld [vmem:[#allocation3 + $0x86] sm:$0xff]
      %v5727 = vld [vmem:[#allocation3 + $0x8e] sm:$0xff]
      %v5728 = vld [vmem:[#allocation3 + $0x96] sm:$0x3]
      %s5729 = scalar_lea.vmem %s5, 384
      %v5730 = vld [vmem:[%s5729] sm:$0xff]
      %v5731 = vld [vmem:[%s5729 + $0x8] sm:$0xff]
      %v5732 = vld [vmem:[%s5729 + $0x10] sm:$0xff]
      %v5733 = vld [vmem:[%s5729 + $0x18] sm:$0xff]
      %v5734 = vld [vmem:[%s5729 + $0x20] sm:$0xff]
      %v5735 = vld [vmem:[%s5729 + $0x28] sm:$0xff]
      %v5736 = vld [vmem:[%s5729 + $0x30] sm:$0xff]
      %v5737 = vld [vmem:[%s5729 + $0x38] sm:$0xff]
      %v5739 = vsel %vm285, %v5714, 0
      %v5742 = vsel %vm285, %v5715, 0
      %v5745 = vsel %vm285, %v5716, 0
      %v5748 = vsel %vm285, %v5717, 0
      %v5751 = vsel %vm285, %v5718, 0
      %v5754 = vsel %vm285, %v5719, 0
      %v5757 = vsel %vm285, %v5720, 0
      %v5760 = vsel %vm285, %v5721, 0
      %v5763 = vsel %vm285, %v5722, 0
      %v5766 = vsel %vm285, %v5723, 0
      %v5769 = vsel %vm285, %v5724, 0
      %v5772 = vsel %vm285, %v5725, 0
      %v5775 = vsel %vm285, %v5726, 0
      %v5778 = vsel %vm285, %v5727, 0
      %v5781 = vsel %vm285, %v5728, 0
      %5783 = vmatpush.msra.mxu0 0.0
      %5784 = vmatpush.msra.mxu0 0.0
      %5785 = vmatpush.msra.mxu0 0.0
      %5786 = vmatpush.msra.mxu0 0.0
      %5787 = vmatpush.msra.mxu0 0.0
      %5788 = vmatpush.msra.mxu0 0.0
      %5789 = vmatpush.msra.mxu0 0.0
      %5790 = vmatpush.msra.mxu0 0.0
      %5791 = vmatpush.msra.mxu0 %v5737
      %5792 = vmatpush.msra.mxu0 %v5736
      %5793 = vmatpush.msra.mxu0 %v5735
      %5794 = vmatpush.msra.mxu0 %v5734
      %5795 = vmatpush.msra.mxu0 %v5733
      %5796 = vmatpush.msra.mxu0 %v5732
      %5797 = vmatpush.msra.mxu0 %v5731
      %5798 = vmatpush.msra.mxu0 %v5730
      %5799 = vmatmul.f32.gmra.mxu0 %v5739
      %v5800 = vpop.f32.mrf.mxu0
      %v5801 = vadd.f32 0.0, %v5800
      %5802 = vmatmul.f32.gmra.mxu0 %v5742
      %v5803 = vpop.f32.mrf.mxu0
      %v5804 = vadd.f32 0.0, %v5803
      %5805 = vmatmul.f32.gmra.mxu0 %v5745
      %v5806 = vpop.f32.mrf.mxu0
      %v5807 = vadd.f32 0.0, %v5806
      %5808 = vmatmul.f32.gmra.mxu0 %v5748
      %v5809 = vpop.f32.mrf.mxu0
      %v5810 = vadd.f32 0.0, %v5809
      %5811 = vmatmul.f32.gmra.mxu0 %v5751
      %v5812 = vpop.f32.mrf.mxu0
      %v5813 = vadd.f32 0.0, %v5812
      %5814 = vmatmul.f32.gmra.mxu0 %v5754
      %v5815 = vpop.f32.mrf.mxu0
      %v5816 = vadd.f32 0.0, %v5815
      %5817 = vmatmul.f32.gmra.mxu0 %v5757
      %v5818 = vpop.f32.mrf.mxu0
      %v5819 = vadd.f32 0.0, %v5818
      %5820 = vmatmul.f32.gmra.mxu0 %v5760
      %v5821 = vpop.f32.mrf.mxu0
      %v5822 = vadd.f32 0.0, %v5821
      %5823 = vmatmul.f32.gmra.mxu0 %v5763
      %v5824 = vpop.f32.mrf.mxu0
      %v5825 = vadd.f32 0.0, %v5824
      %5826 = vmatmul.f32.gmra.mxu0 %v5766
      %v5827 = vpop.f32.mrf.mxu0
      %v5828 = vadd.f32 0.0, %v5827
      %5829 = vmatmul.f32.gmra.mxu0 %v5769
      %v5830 = vpop.f32.mrf.mxu0
      %v5831 = vadd.f32 0.0, %v5830
      %5832 = vmatmul.f32.gmra.mxu0 %v5772
      %v5833 = vpop.f32.mrf.mxu0
      %v5834 = vadd.f32 0.0, %v5833
      %5835 = vmatmul.f32.gmra.mxu0 %v5775
      %v5836 = vpop.f32.mrf.mxu0
      %v5837 = vadd.f32 0.0, %v5836
      %5838 = vmatmul.f32.gmra.mxu0 %v5778
      %v5839 = vpop.f32.mrf.mxu0
      %v5840 = vadd.f32 0.0, %v5839
      %5841 = vmatmul.f32.gmra.mxu0 %v5781
      %v5842 = vpop.f32.mrf.mxu0
      %v5843 = vadd.f32 0.0, %v5842
      %5844 = vdwg.mxu0
      %v5845 = vadd.f32 %v5699, %v5801
      %v5846 = vadd.f32 %v5700, %v5804
      %v5847 = vadd.f32 %v5701, %v5807
      %v5848 = vadd.f32 %v5702, %v5810
      %v5849 = vadd.f32 %v5703, %v5813
      %v5850 = vadd.f32 %v5704, %v5816
      %v5851 = vadd.f32 %v5705, %v5819
      %v5852 = vadd.f32 %v5706, %v5822
      %v5853 = vadd.f32 %v5707, %v5825
      %v5854 = vadd.f32 %v5708, %v5828
      %v5855 = vadd.f32 %v5709, %v5831
      %v5856 = vadd.f32 %v5710, %v5834
      %v5857 = vadd.f32 %v5711, %v5837
      %v5858 = vadd.f32 %v5712, %v5840
      %v5859 = vadd.f32 %v5713, %v5843
      %v5860 = vld [vmem:[#allocation3 + $0x27] sm:$0xff]
      %v5861 = vld [vmem:[#allocation3 + $0x2f] sm:$0xff]
      %v5862 = vld [vmem:[#allocation3 + $0x37] sm:$0xff]
      %v5863 = vld [vmem:[#allocation3 + $0x3f] sm:$0xff]
      %v5864 = vld [vmem:[#allocation3 + $0x47] sm:$0xff]
      %v5865 = vld [vmem:[#allocation3 + $0x4f] sm:$0xff]
      %v5866 = vld [vmem:[#allocation3 + $0x57] sm:$0xff]
      %v5867 = vld [vmem:[#allocation3 + $0x5f] sm:$0xff]
      %v5868 = vld [vmem:[#allocation3 + $0x67] sm:$0xff]
      %v5869 = vld [vmem:[#allocation3 + $0x6f] sm:$0xff]
      %v5870 = vld [vmem:[#allocation3 + $0x77] sm:$0xff]
      %v5871 = vld [vmem:[#allocation3 + $0x7f] sm:$0xff]
      %v5872 = vld [vmem:[#allocation3 + $0x87] sm:$0xff]
      %v5873 = vld [vmem:[#allocation3 + $0x8f] sm:$0xff]
      %v5874 = vld [vmem:[#allocation3 + $0x97] sm:$0x3]
      %s5875 = scalar_lea.vmem %s5, 448
      %v5876 = vld [vmem:[%s5875] sm:$0xff]
      %v5877 = vld [vmem:[%s5875 + $0x8] sm:$0xff]
      %v5878 = vld [vmem:[%s5875 + $0x10] sm:$0xff]
      %v5879 = vld [vmem:[%s5875 + $0x18] sm:$0xff]
      %v5880 = vld [vmem:[%s5875 + $0x20] sm:$0xff]
      %v5881 = vld [vmem:[%s5875 + $0x28] sm:$0xff]
      %v5882 = vld [vmem:[%s5875 + $0x30] sm:$0xff]
      %v5883 = vld [vmem:[%s5875 + $0x38] sm:$0xff]
      %v5885 = vsel %vm285, %v5860, 0
      %v5888 = vsel %vm285, %v5861, 0
      %v5891 = vsel %vm285, %v5862, 0
      %v5894 = vsel %vm285, %v5863, 0
      %v5897 = vsel %vm285, %v5864, 0
      %v5900 = vsel %vm285, %v5865, 0
      %v5903 = vsel %vm285, %v5866, 0
      %v5906 = vsel %vm285, %v5867, 0
      %v5909 = vsel %vm285, %v5868, 0
      %v5912 = vsel %vm285, %v5869, 0
      %v5915 = vsel %vm285, %v5870, 0
      %v5918 = vsel %vm285, %v5871, 0
      %v5921 = vsel %vm285, %v5872, 0
      %v5924 = vsel %vm285, %v5873, 0
      %v5927 = vsel %vm285, %v5874, 0
      %5929 = vmatpush.msra.mxu0 0.0
      %5930 = vmatpush.msra.mxu0 0.0
      %5931 = vmatpush.msra.mxu0 0.0
      %5932 = vmatpush.msra.mxu0 0.0
      %5933 = vmatpush.msra.mxu0 0.0
      %5934 = vmatpush.msra.mxu0 0.0
      %5935 = vmatpush.msra.mxu0 0.0
      %5936 = vmatpush.msra.mxu0 0.0
      %5937 = vmatpush.msra.mxu0 %v5883
      %5938 = vmatpush.msra.mxu0 %v5882
      %5939 = vmatpush.msra.mxu0 %v5881
      %5940 = vmatpush.msra.mxu0 %v5880
      %5941 = vmatpush.msra.mxu0 %v5879
      %5942 = vmatpush.msra.mxu0 %v5878
      %5943 = vmatpush.msra.mxu0 %v5877
      %5944 = vmatpush.msra.mxu0 %v5876
      %5945 = vmatmul.f32.gmra.mxu0 %v5885
      %v5946 = vpop.f32.mrf.mxu0
      %v5947 = vadd.f32 0.0, %v5946
      %5948 = vmatmul.f32.gmra.mxu0 %v5888
      %v5949 = vpop.f32.mrf.mxu0
      %v5950 = vadd.f32 0.0, %v5949
      %5951 = vmatmul.f32.gmra.mxu0 %v5891
      %v5952 = vpop.f32.mrf.mxu0
      %v5953 = vadd.f32 0.0, %v5952
      %5954 = vmatmul.f32.gmra.mxu0 %v5894
      %v5955 = vpop.f32.mrf.mxu0
      %v5956 = vadd.f32 0.0, %v5955
      %5957 = vmatmul.f32.gmra.mxu0 %v5897
      %v5958 = vpop.f32.mrf.mxu0
      %v5959 = vadd.f32 0.0, %v5958
      %5960 = vmatmul.f32.gmra.mxu0 %v5900
      %v5961 = vpop.f32.mrf.mxu0
      %v5962 = vadd.f32 0.0, %v5961
      %5963 = vmatmul.f32.gmra.mxu0 %v5903
      %v5964 = vpop.f32.mrf.mxu0
      %v5965 = vadd.f32 0.0, %v5964
      %5966 = vmatmul.f32.gmra.mxu0 %v5906
      %v5967 = vpop.f32.mrf.mxu0
      %v5968 = vadd.f32 0.0, %v5967
      %5969 = vmatmul.f32.gmra.mxu0 %v5909
      %v5970 = vpop.f32.mrf.mxu0
      %v5971 = vadd.f32 0.0, %v5970
      %5972 = vmatmul.f32.gmra.mxu0 %v5912
      %v5973 = vpop.f32.mrf.mxu0
      %v5974 = vadd.f32 0.0, %v5973
      %5975 = vmatmul.f32.gmra.mxu0 %v5915
      %v5976 = vpop.f32.mrf.mxu0
      %v5977 = vadd.f32 0.0, %v5976
      %5978 = vmatmul.f32.gmra.mxu0 %v5918
      %v5979 = vpop.f32.mrf.mxu0
      %v5980 = vadd.f32 0.0, %v5979
      %5981 = vmatmul.f32.gmra.mxu0 %v5921
      %v5982 = vpop.f32.mrf.mxu0
      %v5983 = vadd.f32 0.0, %v5982
      %5984 = vmatmul.f32.gmra.mxu0 %v5924
      %v5985 = vpop.f32.mrf.mxu0
      %v5986 = vadd.f32 0.0, %v5985
      %5987 = vmatmul.f32.gmra.mxu0 %v5927
      %v5988 = vpop.f32.mrf.mxu0
      %v5989 = vadd.f32 0.0, %v5988
      %5990 = vdwg.mxu0
      %v5991 = vadd.f32 %v5845, %v5947
      %v5992 = vadd.f32 %v5846, %v5950
      %v5993 = vadd.f32 %v5847, %v5953
      %v5994 = vadd.f32 %v5848, %v5956
      %v5995 = vadd.f32 %v5849, %v5959
      %v5996 = vadd.f32 %v5850, %v5962
      %v5997 = vadd.f32 %v5851, %v5965
      %v5998 = vadd.f32 %v5852, %v5968
      %v5999 = vadd.f32 %v5853, %v5971
      %v6000 = vadd.f32 %v5854, %v5974
      %v6001 = vadd.f32 %v5855, %v5977
      %v6002 = vadd.f32 %v5856, %v5980
      %v6003 = vadd.f32 %v5857, %v5983
      %v6004 = vadd.f32 %v5858, %v5986
      %v6005 = vadd.f32 %v5859, %v5989
      %v6006 = vld [vmem:[#allocation3 + $0x28] sm:$0xff]
      %v6007 = vld [vmem:[#allocation3 + $0x30] sm:$0xff]
      %v6008 = vld [vmem:[#allocation3 + $0x38] sm:$0xff]
      %v6009 = vld [vmem:[#allocation3 + $0x40] sm:$0xff]
      %v6010 = vld [vmem:[#allocation3 + $0x48] sm:$0xff]
      %v6011 = vld [vmem:[#allocation3 + $0x50] sm:$0xff]
      %v6012 = vld [vmem:[#allocation3 + $0x58] sm:$0xff]
      %v6013 = vld [vmem:[#allocation3 + $0x60] sm:$0xff]
      %v6014 = vld [vmem:[#allocation3 + $0x68] sm:$0xff]
      %v6015 = vld [vmem:[#allocation3 + $0x70] sm:$0xff]
      %v6016 = vld [vmem:[#allocation3 + $0x78] sm:$0xff]
      %v6017 = vld [vmem:[#allocation3 + $0x80] sm:$0xff]
      %v6018 = vld [vmem:[#allocation3 + $0x88] sm:$0xff]
      %v6019 = vld [vmem:[#allocation3 + $0x90] sm:$0xff]
      %v6020 = vld [vmem:[#allocation3 + $0x98] sm:$0x3]
      %s6021 = scalar_lea.vmem %s5, 512
      %v6022 = vld [vmem:[%s6021] sm:$0xff]
      %v6023 = vld [vmem:[%s6021 + $0x8] sm:$0xff]
      %v6024 = vld [vmem:[%s6021 + $0x10] sm:$0xff]
      %v6025 = vld [vmem:[%s6021 + $0x18] sm:$0xff]
      %v6026 = vld [vmem:[%s6021 + $0x20] sm:$0xff]
      %v6027 = vld [vmem:[%s6021 + $0x28] sm:$0xff]
      %v6028 = vld [vmem:[%s6021 + $0x30] sm:$0xff]
      %v6029 = vld [vmem:[%s6021 + $0x38] sm:$0xff]
      %v6031 = vsel %vm285, %v6006, 0
      %v6034 = vsel %vm285, %v6007, 0
      %v6037 = vsel %vm285, %v6008, 0
      %v6040 = vsel %vm285, %v6009, 0
      %v6043 = vsel %vm285, %v6010, 0
      %v6046 = vsel %vm285, %v6011, 0
      %v6049 = vsel %vm285, %v6012, 0
      %v6052 = vsel %vm285, %v6013, 0
      %v6055 = vsel %vm285, %v6014, 0
      %v6058 = vsel %vm285, %v6015, 0
      %v6061 = vsel %vm285, %v6016, 0
      %v6064 = vsel %vm285, %v6017, 0
      %v6067 = vsel %vm285, %v6018, 0
      %v6070 = vsel %vm285, %v6019, 0
      %v6073 = vsel %vm285, %v6020, 0
      %6075 = vmatpush.msra.mxu0 0.0
      %6076 = vmatpush.msra.mxu0 0.0
      %6077 = vmatpush.msra.mxu0 0.0
      %6078 = vmatpush.msra.mxu0 0.0
      %6079 = vmatpush.msra.mxu0 0.0
      %6080 = vmatpush.msra.mxu0 0.0
      %6081 = vmatpush.msra.mxu0 0.0
      %6082 = vmatpush.msra.mxu0 0.0
      %6083 = vmatpush.msra.mxu0 %v6029
      %6084 = vmatpush.msra.mxu0 %v6028
      %6085 = vmatpush.msra.mxu0 %v6027
      %6086 = vmatpush.msra.mxu0 %v6026
      %6087 = vmatpush.msra.mxu0 %v6025
      %6088 = vmatpush.msra.mxu0 %v6024
      %6089 = vmatpush.msra.mxu0 %v6023
      %6090 = vmatpush.msra.mxu0 %v6022
      %6091 = vmatmul.f32.gmra.mxu0 %v6031
      %v6092 = vpop.f32.mrf.mxu0
      %v6093 = vadd.f32 0.0, %v6092
      %6094 = vmatmul.f32.gmra.mxu0 %v6034
      %v6095 = vpop.f32.mrf.mxu0
      %v6096 = vadd.f32 0.0, %v6095
      %6097 = vmatmul.f32.gmra.mxu0 %v6037
      %v6098 = vpop.f32.mrf.mxu0
      %v6099 = vadd.f32 0.0, %v6098
      %6100 = vmatmul.f32.gmra.mxu0 %v6040
      %v6101 = vpop.f32.mrf.mxu0
      %v6102 = vadd.f32 0.0, %v6101
      %6103 = vmatmul.f32.gmra.mxu0 %v6043
      %v6104 = vpop.f32.mrf.mxu0
      %v6105 = vadd.f32 0.0, %v6104
      %6106 = vmatmul.f32.gmra.mxu0 %v6046
      %v6107 = vpop.f32.mrf.mxu0
      %v6108 = vadd.f32 0.0, %v6107
      %6109 = vmatmul.f32.gmra.mxu0 %v6049
      %v6110 = vpop.f32.mrf.mxu0
      %v6111 = vadd.f32 0.0, %v6110
      %6112 = vmatmul.f32.gmra.mxu0 %v6052
      %v6113 = vpop.f32.mrf.mxu0
      %v6114 = vadd.f32 0.0, %v6113
      %6115 = vmatmul.f32.gmra.mxu0 %v6055
      %v6116 = vpop.f32.mrf.mxu0
      %v6117 = vadd.f32 0.0, %v6116
      %6118 = vmatmul.f32.gmra.mxu0 %v6058
      %v6119 = vpop.f32.mrf.mxu0
      %v6120 = vadd.f32 0.0, %v6119
      %6121 = vmatmul.f32.gmra.mxu0 %v6061
      %v6122 = vpop.f32.mrf.mxu0
      %v6123 = vadd.f32 0.0, %v6122
      %6124 = vmatmul.f32.gmra.mxu0 %v6064
      %v6125 = vpop.f32.mrf.mxu0
      %v6126 = vadd.f32 0.0, %v6125
      %6127 = vmatmul.f32.gmra.mxu0 %v6067
      %v6128 = vpop.f32.mrf.mxu0
      %v6129 = vadd.f32 0.0, %v6128
      %6130 = vmatmul.f32.gmra.mxu0 %v6070
      %v6131 = vpop.f32.mrf.mxu0
      %v6132 = vadd.f32 0.0, %v6131
      %6133 = vmatmul.f32.gmra.mxu0 %v6073
      %v6134 = vpop.f32.mrf.mxu0
      %v6135 = vadd.f32 0.0, %v6134
      %6136 = vdwg.mxu0
      %v6137 = vadd.f32 %v5991, %v6093
      %v6138 = vadd.f32 %v5992, %v6096
      %v6139 = vadd.f32 %v5993, %v6099
      %v6140 = vadd.f32 %v5994, %v6102
      %v6141 = vadd.f32 %v5995, %v6105
      %v6142 = vadd.f32 %v5996, %v6108
      %v6143 = vadd.f32 %v5997, %v6111
      %v6144 = vadd.f32 %v5998, %v6114
      %v6145 = vadd.f32 %v5999, %v6117
      %v6146 = vadd.f32 %v6000, %v6120
      %v6147 = vadd.f32 %v6001, %v6123
      %v6148 = vadd.f32 %v6002, %v6126
      %v6149 = vadd.f32 %v6003, %v6129
      %v6150 = vadd.f32 %v6004, %v6132
      %v6151 = vadd.f32 %v6005, %v6135
      %v6152 = vld [vmem:[%s6] sm:$0x1]
      %v6154 = vperm.slane %v6152, 0
      %v6156 = vadd.f32 %v6137, %v6154
      %v6157 = vadd.f32 %v6138, %v6154
      %v6158 = vadd.f32 %v6139, %v6154
      %v6159 = vadd.f32 %v6140, %v6154
      %v6160 = vadd.f32 %v6141, %v6154
      %v6161 = vadd.f32 %v6142, %v6154
      %v6162 = vadd.f32 %v6143, %v6154
      %v6163 = vadd.f32 %v6144, %v6154
      %v6164 = vadd.f32 %v6145, %v6154
      %v6165 = vadd.f32 %v6146, %v6154
      %v6166 = vadd.f32 %v6147, %v6154
      %v6167 = vadd.f32 %v6148, %v6154
      %v6168 = vadd.f32 %v6149, %v6154
      %v6169 = vadd.f32 %v6150, %v6154
      %v6170 = vadd.f32 %v6151, %v6154
      %v6171 = vmax.f32 %v6156, 0.0
      %v6172 = vmax.f32 %v6157, 0.0
      %v6173 = vmax.f32 %v6158, 0.0
      %v6174 = vmax.f32 %v6159, 0.0
      %v6175 = vmax.f32 %v6160, 0.0
      %v6176 = vmax.f32 %v6161, 0.0
      %v6177 = vmax.f32 %v6162, 0.0
      %v6178 = vmax.f32 %v6163, 0.0
      %v6179 = vmax.f32 %v6164, 0.0
      %v6180 = vmax.f32 %v6165, 0.0
      %v6181 = vmax.f32 %v6166, 0.0
      %v6182 = vmax.f32 %v6167, 0.0
      %v6183 = vmax.f32 %v6168, 0.0
      %v6184 = vmax.f32 %v6169, 0.0
      %v6185 = vmax.f32 %v6170, 0.0
      %6186 = vst.msk [vmem:[#allocation4] sm:$0xff] %vm285, %v6171
      %6187 = vst.msk [vmem:[#allocation4 + $0x8] sm:$0xff] %vm285, %v6172
      %6188 = vst.msk [vmem:[#allocation4 + $0x10] sm:$0xff] %vm285, %v6173
      %6189 = vst.msk [vmem:[#allocation4 + $0x18] sm:$0xff] %vm285, %v6174
      %6190 = vst.msk [vmem:[#allocation4 + $0x20] sm:$0xff] %vm285, %v6175
      %6191 = vst.msk [vmem:[#allocation4 + $0x28] sm:$0xff] %vm285, %v6176
      %6192 = vst.msk [vmem:[#allocation4 + $0x30] sm:$0xff] %vm285, %v6177
      %6193 = vst.msk [vmem:[#allocation4 + $0x38] sm:$0xff] %vm285, %v6178
      %6194 = vst.msk [vmem:[#allocation4 + $0x40] sm:$0xff] %vm285, %v6179
      %6195 = vst.msk [vmem:[#allocation4 + $0x48] sm:$0xff] %vm285, %v6180
      %6196 = vst.msk [vmem:[#allocation4 + $0x50] sm:$0xff] %vm285, %v6181
      %6197 = vst.msk [vmem:[#allocation4 + $0x58] sm:$0xff] %vm285, %v6182
      %6198 = vst.msk [vmem:[#allocation4 + $0x60] sm:$0xff] %vm285, %v6183
      %6199 = vst.msk [vmem:[#allocation4 + $0x68] sm:$0xff] %vm285, %v6184
      %vm6200 = vcmask 517120
      %6201 = vst.msk [vmem:[#allocation4 + $0x70] sm:$0x3] %vm6200, %v6185
      %v6202 = vld [vmem:[#allocation4] sm:$0x3f]
      %vm6203 = vcmask 521216
      %6204 = vst.msk [vmem:[%s278] sm:$0x3f] %vm6203, %v6202
      %v6205 = vld [vmem:[#allocation4 + $0x13] sm:$0x3f]
      %s6206 = scalar_lea.vmem %s278, 8
      %6207 = vst.msk [vmem:[%s6206] sm:$0x3f] %vm6203, %v6205
      %v6208 = vld [vmem:[#allocation4 + $0x26] sm:$0x3f]
      %s6209 = scalar_lea.vmem %s278, 16
      %6210 = vst.msk [vmem:[%s6209] sm:$0x3f] %vm6203, %v6208
      %v6211 = vld [vmem:[#allocation4 + $0x39] sm:$0x3f]
      %s6212 = scalar_lea.vmem %s278, 24
      %6213 = vst.msk [vmem:[%s6212] sm:$0x3f] %vm6203, %v6211
      %v6214 = vld [vmem:[#allocation4 + $0x4c] sm:$0x3f]
      %s6215 = scalar_lea.vmem %s278, 32
      %6216 = vst.msk [vmem:[%s6215] sm:$0x3f] %vm6203, %v6214
      %v6217 = vld [vmem:[#allocation4 + $0x5f] sm:$0x3f]
      %s6218 = scalar_lea.vmem %s278, 40
      %6219 = vst.msk [vmem:[%s6218] sm:$0x3f] %vm6203, %v6217
      %p6220 = scmp.lt.s32.totalorder %s18, 1
      %s6221 = scalar_select %p6220, %s18, 1
      %s6222 = smul.addr %s6221, 6
      %s6223 = smul.addr %s6222, 8
      %s6224 = scalar_lea.vmem %s7, %s6223
      // Predicated region
      $region49: #{model_forward.2} parent=47 // pred_check
        %p6225 = pneg %p188
      $region50: #{model_forward.2} parent=47 // pred_check_branch
        %6227 = sbr.rel (%p6225) target = $region52
      $region51: #{model_forward.2} parent=47 // pred_region
        _
      $region52: #{model_forward.2} parent=47 // pred_fallthru
        _
    $region48: #{model_forward.2} parent=5 // pred_fallthru
      _
    %p6228 = scmp.le.s32.totalorder 2, %s13
    // Predicated region
    $region53: #{model_forward.2} parent=5 // pred_check
      %p6229 = pneg %p6228
    $region54: #{model_forward.2} parent=5 // pred_check_branch
      %6231 = sbr.rel (%p6229) target = $region56
    $region55: #{model_forward.2} parent=5 // pred_region
      %s6232 = ssub.s32 %s13, 2
      // Predicated region
      $region57: #{model_forward.2} parent=55 // pred_check
        %p6233 = pneg %p194
      $region58: #{model_forward.2} parent=55 // pred_check_branch
        %6235 = sbr.rel (%p6233) target = $region60
      $region59: #{model_forward.2} parent=55 // pred_region
        %p6236 = scmp.lt.s32.totalorder %s19, 1
        %s6237 = scalar_select %p6236, %s19, 1
        %s6238 = smul.addr %s6237, 6
        %s6239 = smul.addr %s6238, 8
        %s6240 = scalar_lea.vmem %s7, %s6239
      $region60: #{model_forward.2} parent=55 // pred_fallthru
        _
    $region56: #{model_forward.2} parent=5 // pred_fallthru
      _
  $region6: #{model_forward.2} parent=0 // loop_footer
    %s17 = sadd.s32 1, %s13
  $region7: #{model_forward.2} parent=0 // loop_footer_branch
    %12 = sbr.rel target = $region3
  $region8: #{model_forward.2} parent=0 // loop_exit
    _

</llo_original>
